<compile_context>
chip_gen: v6e
topology: v6e:2x2x1
jax: 0.10.0
libtpu: 0.0.40
codegen_flags: <defaults>
</compile_context>

<pallas_src>
import jax
import jax.numpy as jnp
from jax import lax
from jax.experimental import pallas as pl
from jax.experimental.pallas import tpu as pltpu

# Network constants (fixed by the PyTorch module: 28x28x1 input).
IMG = 28
C1, C2 = 4, 4
KH = KW = 3
POOL = 12                      # 24 / 2
FC1_OUT, FC2_OUT = 32, 9

# Flattened-lane working widths for each stage (all slices stay in-bounds):
_W_IN = 896                    # 28*28 = 784 real lanes, zero-padded to 7*128
_W_C1 = 768                    # conv1 lanes kept (needs x[k+s], s<=58 -> <=826)
_W_C2 = 704                    # conv2 lanes kept (needs y1[k+s], s<=58 -> <=762)
_W_RM = 648                    # row-pair max     (needs y2[k+28]     -> <=675)
_W_CM = 640                    # 2x2 window max; pooled values at 56*pi+2*pj<=638


# -----------------------------------------------------------------------------
# Fused kernel
# -----------------------------------------------------------------------------
def _cnn_fused_kernel(x_ref, w1_ref, b1_ref, w2_ref, b2_ref,
                      m_ref, fb1_ref, w2t_ref, fb2_ref, o_ref):
    """Whole CNN forward for one (block_b, 896) batch tile."""
    x = x_ref[...]                                           # (bt, 896) f32
    bt = x.shape[0]

    # ---- conv1 (1 -> 4, 3x3, valid) + ReLU: shifted-slice FMAs (VPU) --------
    acc1 = [jnp.zeros((bt, _W_C1), jnp.float32) for _ in range(C1)]
    for di in range(KH):
        for dj in range(KW):
            s = di * IMG + dj
            t = x[:, s:s + _W_C1]                            # x[k + s]
            for co in range(C1):
                acc1[co] = acc1[co] + w1_ref[co, di * KW + dj] * t
    y1 = [jnp.maximum(acc1[co] + b1_ref[co], 0.0) for co in range(C1)]

    # ---- conv2 (4 -> 4, 3x3, valid) + ReLU ----------------------------------
    acc2 = [jnp.zeros((bt, _W_C2), jnp.float32) for _ in range(C2)]
    for ci in range(C1):
        for di in range(KH):
            for dj in range(KW):
                s = di * IMG + dj
                t = y1[ci][:, s:s + _W_C2]                   # y1[k + s]
                for co in range(C2):
                    acc2[co] = acc2[co] + w2_ref[co * C1 + ci, di * KW + dj] * t
    y2 = [jnp.maximum(acc2[co] + b2_ref[co], 0.0) for co in range(C2)]

    # ---- maxpool 2x2 + flatten + fc1, folded into per-channel matmuls ------
    # cm[k] = max(y2[k], y2[k+1], y2[k+28], y2[k+29]); pooled value for output
    # pixel (pi, pj) sits at lane k = 56*pi + 2*pj.  M[c] has the fc1 weights
    # scattered to exactly those lanes (zeros elsewhere), so pool-selection,
    # flatten (C,H,W order) and fc1 collapse into cm_c @ M[c].
    h = jnp.zeros((bt, FC1_OUT), jnp.float32)
    for c in range(C2):
        rm = jnp.maximum(y2[c][:, 0:_W_RM], y2[c][:, IMG:IMG + _W_RM])
        cm = jnp.maximum(rm[:, 0:_W_CM], rm[:, 1:1 + _W_CM])
        h = h + jnp.dot(cm, m_ref[c], preferred_element_type=jnp.float32)
    h = jnp.maximum(h + fb1_ref[...], 0.0)                   # (bt, 32)

    # ---- fc2 ----------------------------------------------------------------
    out = jnp.dot(h, w2t_ref[...], preferred_element_type=jnp.float32)
    o_ref[...] = (out + fb2_ref[...]).astype(o_ref.dtype)


# -----------------------------------------------------------------------------
# Wrapper: weight preprocessing (host) + single pallas_call
# -----------------------------------------------------------------------------
def cnn_forward(params, x, *, block_b=8):
    """x: (N, 1, 28, 28) f32 (NCHW, like PyTorch) -> (N, 9) f32."""
    N = x.shape[0]
    assert x.shape[1:] == (1, IMG, IMG), x.shape
    Np = pl.cdiv(N, block_b) * block_b

    # Input: flatten spatial dims into lanes, pad rows to Np, lanes to 896.
    xf = x.reshape(N, IMG * IMG).astype(jnp.float32)
    xf = jnp.pad(xf, ((0, Np - N), (0, _W_IN - IMG * IMG)))

    # Conv weights / biases -> scalar tables (SMEM).
    w1s = params["conv1_w"].astype(jnp.float32).reshape(C1, KH * KW)       # (4, 9)
    b1s = params["conv1_b"].astype(jnp.float32)                            # (4,)
    w2s = params["conv2_w"].astype(jnp.float32).reshape(C2 * C1, KH * KW)  # (16, 9)
    b2s = params["conv2_b"].astype(jnp.float32)                            # (4,)

    # fc1 weights scattered to pooled lane positions: M[c, 56*pi + 2*pj, o].
    w1fc = params["fc1_w"].astype(jnp.float32).reshape(FC1_OUT, C2, POOL, POOL)
    w1fc = jnp.transpose(w1fc, (1, 2, 3, 0)).reshape(C2, POOL * POOL, FC1_OUT)
    k_idx = (2 * IMG * jnp.arange(POOL)[:, None]
             + 2 * jnp.arange(POOL)[None, :]).reshape(-1)                  # (144,)
    m = jnp.zeros((C2, _W_CM, FC1_OUT), jnp.float32).at[:, k_idx, :].set(w1fc)

    fb1 = params["fc1_b"].astype(jnp.float32).reshape(1, FC1_OUT)
    w2t = params["fc2_w"].astype(jnp.float32).T                            # (32, 9)
    fb2 = params["fc2_b"].astype(jnp.float32).reshape(1, FC2_OUT)

    smem = pl.BlockSpec(memory_space=pltpu.MemorySpace.SMEM)
    out = pl.pallas_call(
        _cnn_fused_kernel,
        out_shape=jax.ShapeDtypeStruct((Np, FC2_OUT), jnp.float32),
        grid=(Np // block_b,),
        in_specs=[
            pl.BlockSpec((block_b, _W_IN), lambda i: (i, 0)),              # images
            smem, smem, smem, smem,                                        # conv w/b
            pl.BlockSpec((C2, _W_CM, FC1_OUT), lambda i: (0, 0, 0)),       # fc1 (folded)
            pl.BlockSpec((1, FC1_OUT), lambda i: (0, 0)),                  # fc1 bias
            pl.BlockSpec((FC1_OUT, FC2_OUT), lambda i: (0, 0)),            # fc2 weight
            pl.BlockSpec((1, FC2_OUT), lambda i: (0, 0)),                  # fc2 bias
        ],
        out_specs=pl.BlockSpec((block_b, FC2_OUT), lambda i: (i, 0)),
        compiler_params=pltpu.CompilerParams(
            dimension_semantics=("parallel",)),
    )(xf, w1s, b1s, w2s, b2s, m, fb1, w2t, fb2)
    return out[:N]


# -----------------------------------------------------------------------------
# Parameters + pure-JAX reference (for the self-check)
# -----------------------------------------------------------------------------
def init_params(key):
    """Deterministic torch-style (uniform +-1/sqrt(fan_in)) init."""
    ks = jax.random.split(key, 8)

    def u(k, shape, fan_in):
        bound = 1.0 / jnp.sqrt(jnp.float32(fan_in))
        return jax.random.uniform(k, shape, jnp.float32, -bound, bound)

    return dict(
        conv1_w=u(ks[0], (4, 1, 3, 3), 1 * 3 * 3),
        conv1_b=u(ks[1], (4,), 1 * 3 * 3),
        conv2_w=u(ks[2], (4, 4, 3, 3), 4 * 3 * 3),
        conv2_b=u(ks[3], (4,), 4 * 3 * 3),
        fc1_w=u(ks[4], (32, 576), 576),
        fc1_b=u(ks[5], (32,), 576),
        fc2_w=u(ks[6], (9, 32), 32),
        fc2_b=u(ks[7], (9,), 32),
    )


def cnn_reference(params, x):
    """Pure-JAX reference with identical semantics (high-precision)."""
    hp = lax.Precision.HIGHEST
    y = lax.conv_general_dilated(x, params["conv1_w"], (1, 1), "VALID",
                                 dimension_numbers=("NCHW", "OIHW", "NCHW"),
                                 precision=hp)
    y = jax.nn.relu(y + params["conv1_b"][None, :, None, None])
    y = lax.conv_general_dilated(y, params["conv2_w"], (1, 1), "VALID",
                                 dimension_numbers=("NCHW", "OIHW", "NCHW"),
                                 precision=hp)
    y = jax.nn.relu(y + params["conv2_b"][None, :, None, None])
    y = lax.reduce_window(y, -jnp.inf, lax.max,
                          (1, 1, 2, 2), (1, 1, 2, 2), "VALID")
    flat = y.reshape(y.shape[0], -1)
    h = jax.nn.relu(jnp.dot(flat, params["fc1_w"].T, precision=hp)
                    + params["fc1_b"])
    return jnp.dot(h, params["fc2_w"].T, precision=hp) + params["fc2_b"]


if __name__ == "__main__":
    key = jax.random.PRNGKey(0)
    pkey, xkey = jax.random.split(key)
    params = init_params(pkey)
    x = jax.random.normal(xkey, (2, 1, 28, 28), jnp.float32)   # NCHW like torch

    out = jax.block_until_ready(jax.jit(cnn_forward)(params, x))
    ref = jax.block_until_ready(cnn_reference(params, x))

    assert out.shape == (2, 9), out.shape
    err = float(jnp.max(jnp.abs(out - ref)))
    assert err < 2e-4, err
    print("KERNEL_OK")
</pallas_src>

<mosaic_0001>
module attributes {stable_mosaic.version = 11 : i64} {
  func.func @_cnn_fused_kernel(%arg0: i32, %arg1: memref<8x896xf32, #tpu.memory_space<vmem>>, %arg2: memref<4x9xf32, #tpu.memory_space<smem>>, %arg3: memref<4xf32, #tpu.memory_space<smem>>, %arg4: memref<16x9xf32, #tpu.memory_space<smem>>, %arg5: memref<4xf32, #tpu.memory_space<smem>>, %arg6: memref<4x640x32xf32, #tpu.memory_space<vmem>>, %arg7: memref<1x32xf32, #tpu.memory_space<vmem>>, %arg8: memref<32x9xf32, #tpu.memory_space<vmem>>, %arg9: memref<1x9xf32, #tpu.memory_space<vmem>>, %arg10: memref<8x9xf32, #tpu.memory_space<vmem>>) attributes {dimension_semantics = [#tpu.dimension_semantics<parallel>], iteration_bounds = array<i64: 1>, scalar_prefetch = 0 : i64, scratch_operands = 0 : i64, tpu.core_type = #tpu.core_type<tc>, window_params = [{transform_indices = @transform_0, window_bounds = array<i64: 8, 896>}, {transform_indices = @transform_1, window_bounds = array<i64: 4, 9>}, {transform_indices = @transform_2, window_bounds = array<i64: 4>}, {transform_indices = @transform_3, window_bounds = array<i64: 16, 9>}, {transform_indices = @transform_4, window_bounds = array<i64: 4>}, {pipeline_mode = #tpu.pipeline_mode<synchronous>, transform_indices = @transform_5, window_bounds = array<i64: 4, 640, 32>}, {pipeline_mode = #tpu.pipeline_mode<synchronous>, transform_indices = @transform_6, window_bounds = array<i64: 1, 32>}, {pipeline_mode = #tpu.pipeline_mode<synchronous>, transform_indices = @transform_7, window_bounds = array<i64: 32, 9>}, {pipeline_mode = #tpu.pipeline_mode<synchronous>, transform_indices = @transform_8, window_bounds = array<i64: 1, 9>}, {transform_indices = @transform_9, window_bounds = array<i64: 8, 9>}]} {
    %c0 = arith.constant 0 : index
    %c0_0 = arith.constant 0 : index
    %0 = vector.load %arg1[%c0, %c0_0] : memref<8x896xf32, #tpu.memory_space<vmem>>, vector<8x896xf32>
    %cst = arith.constant 0.000000e+00 : f32
    %1 = vector.broadcast %cst : f32 to vector<8x768xf32>
    %cst_1 = arith.constant 0.000000e+00 : f32
    %2 = vector.broadcast %cst_1 : f32 to vector<8x768xf32>
    %cst_2 = arith.constant 0.000000e+00 : f32
    %3 = vector.broadcast %cst_2 : f32 to vector<8x768xf32>
    %cst_3 = arith.constant 0.000000e+00 : f32
    %4 = vector.broadcast %cst_3 : f32 to vector<8x768xf32>
    %5 = vector.extract_strided_slice %0 {offsets = [0, 0], sizes = [8, 768], strides = [1, 1]} : vector<8x896xf32> to vector<8x768xf32>
    %c0_4 = arith.constant 0 : index
    %c0_5 = arith.constant 0 : index
    %6 = memref.load %arg2[%c0_4, %c0_5] : memref<4x9xf32, #tpu.memory_space<smem>>
    %7 = vector.broadcast %6 : f32 to vector<8x768xf32>
    %8 = arith.mulf %7, %5 : vector<8x768xf32>
    %9 = arith.addf %1, %8 : vector<8x768xf32>
    %c1 = arith.constant 1 : index
    %c0_6 = arith.constant 0 : index
    %10 = memref.load %arg2[%c1, %c0_6] : memref<4x9xf32, #tpu.memory_space<smem>>
    %11 = vector.broadcast %10 : f32 to vector<8x768xf32>
    %12 = arith.mulf %11, %5 : vector<8x768xf32>
    %13 = arith.addf %2, %12 : vector<8x768xf32>
    %c2 = arith.constant 2 : index
    %c0_7 = arith.constant 0 : index
    %14 = memref.load %arg2[%c2, %c0_7] : memref<4x9xf32, #tpu.memory_space<smem>>
    %15 = vector.broadcast %14 : f32 to vector<8x768xf32>
    %16 = arith.mulf %15, %5 : vector<8x768xf32>
    %17 = arith.addf %3, %16 : vector<8x768xf32>
    %c3 = arith.constant 3 : index
    %c0_8 = arith.constant 0 : index
    %18 = memref.load %arg2[%c3, %c0_8] : memref<4x9xf32, #tpu.memory_space<smem>>
    %19 = vector.broadcast %18 : f32 to vector<8x768xf32>
    %20 = arith.mulf %19, %5 : vector<8x768xf32>
    %21 = arith.addf %4, %20 : vector<8x768xf32>
    %22 = vector.extract_strided_slice %0 {offsets = [0, 1], sizes = [8, 768], strides = [1, 1]} : vector<8x896xf32> to vector<8x768xf32>
    %c0_9 = arith.constant 0 : index
    %c1_10 = arith.constant 1 : index
    %23 = memref.load %arg2[%c0_9, %c1_10] : memref<4x9xf32, #tpu.memory_space<smem>>
    %24 = vector.broadcast %23 : f32 to vector<8x768xf32>
    %25 = arith.mulf %24, %22 : vector<8x768xf32>
    %26 = arith.addf %9, %25 : vector<8x768xf32>
    %c1_11 = arith.constant 1 : index
    %c1_12 = arith.constant 1 : index
    %27 = memref.load %arg2[%c1_11, %c1_12] : memref<4x9xf32, #tpu.memory_space<smem>>
    %28 = vector.broadcast %27 : f32 to vector<8x768xf32>
    %29 = arith.mulf %28, %22 : vector<8x768xf32>
    %30 = arith.addf %13, %29 : vector<8x768xf32>
    %c2_13 = arith.constant 2 : index
    %c1_14 = arith.constant 1 : index
    %31 = memref.load %arg2[%c2_13, %c1_14] : memref<4x9xf32, #tpu.memory_space<smem>>
    %32 = vector.broadcast %31 : f32 to vector<8x768xf32>
    %33 = arith.mulf %32, %22 : vector<8x768xf32>
    %34 = arith.addf %17, %33 : vector<8x768xf32>
    %c3_15 = arith.constant 3 : index
    %c1_16 = arith.constant 1 : index
    %35 = memref.load %arg2[%c3_15, %c1_16] : memref<4x9xf32, #tpu.memory_space<smem>>
    %36 = vector.broadcast %35 : f32 to vector<8x768xf32>
    %37 = arith.mulf %36, %22 : vector<8x768xf32>
    %38 = arith.addf %21, %37 : vector<8x768xf32>
    %39 = vector.extract_strided_slice %0 {offsets = [0, 2], sizes = [8, 768], strides = [1, 1]} : vector<8x896xf32> to vector<8x768xf32>
    %c0_17 = arith.constant 0 : index
    %c2_18 = arith.constant 2 : index
    %40 = memref.load %arg2[%c0_17, %c2_18] : memref<4x9xf32, #tpu.memory_space<smem>>
    %41 = vector.broadcast %40 : f32 to vector<8x768xf32>
    %42 = arith.mulf %41, %39 : vector<8x768xf32>
    %43 = arith.addf %26, %42 : vector<8x768xf32>
    %c1_19 = arith.constant 1 : index
    %c2_20 = arith.constant 2 : index
    %44 = memref.load %arg2[%c1_19, %c2_20] : memref<4x9xf32, #tpu.memory_space<smem>>
    %45 = vector.broadcast %44 : f32 to vector<8x768xf32>
    %46 = arith.mulf %45, %39 : vector<8x768xf32>
    %47 = arith.addf %30, %46 : vector<8x768xf32>
    %c2_21 = arith.constant 2 : index
    %c2_22 = arith.constant 2 : index
    %48 = memref.load %arg2[%c2_21, %c2_22] : memref<4x9xf32, #tpu.memory_space<smem>>
    %49 = vector.broadcast %48 : f32 to vector<8x768xf32>
    %50 = arith.mulf %49, %39 : vector<8x768xf32>
    %51 = arith.addf %34, %50 : vector<8x768xf32>
    %c3_23 = arith.constant 3 : index
    %c2_24 = arith.constant 2 : index
    %52 = memref.load %arg2[%c3_23, %c2_24] : memref<4x9xf32, #tpu.memory_space<smem>>
    %53 = vector.broadcast %52 : f32 to vector<8x768xf32>
    %54 = arith.mulf %53, %39 : vector<8x768xf32>
    %55 = arith.addf %38, %54 : vector<8x768xf32>
    %56 = vector.extract_strided_slice %0 {offsets = [0, 28], sizes = [8, 768], strides = [1, 1]} : vector<8x896xf32> to vector<8x768xf32>
    %c0_25 = arith.constant 0 : index
    %c3_26 = arith.constant 3 : index
    %57 = memref.load %arg2[%c0_25, %c3_26] : memref<4x9xf32, #tpu.memory_space<smem>>
    %58 = vector.broadcast %57 : f32 to vector<8x768xf32>
    %59 = arith.mulf %58, %56 : vector<8x768xf32>
    %60 = arith.addf %43, %59 : vector<8x768xf32>
    %c1_27 = arith.constant 1 : index
    %c3_28 = arith.constant 3 : index
    %61 = memref.load %arg2[%c1_27, %c3_28] : memref<4x9xf32, #tpu.memory_space<smem>>
    %62 = vector.broadcast %61 : f32 to vector<8x768xf32>
    %63 = arith.mulf %62, %56 : vector<8x768xf32>
    %64 = arith.addf %47, %63 : vector<8x768xf32>
    %c2_29 = arith.constant 2 : index
    %c3_30 = arith.constant 3 : index
    %65 = memref.load %arg2[%c2_29, %c3_30] : memref<4x9xf32, #tpu.memory_space<smem>>
    %66 = vector.broadcast %65 : f32 to vector<8x768xf32>
    %67 = arith.mulf %66, %56 : vector<8x768xf32>
    %68 = arith.addf %51, %67 : vector<8x768xf32>
    %c3_31 = arith.constant 3 : index
    %c3_32 = arith.constant 3 : index
    %69 = memref.load %arg2[%c3_31, %c3_32] : memref<4x9xf32, #tpu.memory_space<smem>>
    %70 = vector.broadcast %69 : f32 to vector<8x768xf32>
    %71 = arith.mulf %70, %56 : vector<8x768xf32>
    %72 = arith.addf %55, %71 : vector<8x768xf32>
    %73 = vector.extract_strided_slice %0 {offsets = [0, 29], sizes = [8, 768], strides = [1, 1]} : vector<8x896xf32> to vector<8x768xf32>
    %c0_33 = arith.constant 0 : index
    %c4 = arith.constant 4 : index
    %74 = memref.load %arg2[%c0_33, %c4] : memref<4x9xf32, #tpu.memory_space<smem>>
    %75 = vector.broadcast %74 : f32 to vector<8x768xf32>
    %76 = arith.mulf %75, %73 : vector<8x768xf32>
    %77 = arith.addf %60, %76 : vector<8x768xf32>
    %c1_34 = arith.constant 1 : index
    %c4_35 = arith.constant 4 : index
    %78 = memref.load %arg2[%c1_34, %c4_35] : memref<4x9xf32, #tpu.memory_space<smem>>
    %79 = vector.broadcast %78 : f32 to vector<8x768xf32>
    %80 = arith.mulf %79, %73 : vector<8x768xf32>
    %81 = arith.addf %64, %80 : vector<8x768xf32>
    %c2_36 = arith.constant 2 : index
    %c4_37 = arith.constant 4 : index
    %82 = memref.load %arg2[%c2_36, %c4_37] : memref<4x9xf32, #tpu.memory_space<smem>>
    %83 = vector.broadcast %82 : f32 to vector<8x768xf32>
    %84 = arith.mulf %83, %73 : vector<8x768xf32>
    %85 = arith.addf %68, %84 : vector<8x768xf32>
    %c3_38 = arith.constant 3 : index
    %c4_39 = arith.constant 4 : index
    %86 = memref.load %arg2[%c3_38, %c4_39] : memref<4x9xf32, #tpu.memory_space<smem>>
    %87 = vector.broadcast %86 : f32 to vector<8x768xf32>
    %88 = arith.mulf %87, %73 : vector<8x768xf32>
    %89 = arith.addf %72, %88 : vector<8x768xf32>
    %90 = vector.extract_strided_slice %0 {offsets = [0, 30], sizes = [8, 768], strides = [1, 1]} : vector<8x896xf32> to vector<8x768xf32>
    %c0_40 = arith.constant 0 : index
    %c5 = arith.constant 5 : index
    %91 = memref.load %arg2[%c0_40, %c5] : memref<4x9xf32, #tpu.memory_space<smem>>
    %92 = vector.broadcast %91 : f32 to vector<8x768xf32>
    %93 = arith.mulf %92, %90 : vector<8x768xf32>
    %94 = arith.addf %77, %93 : vector<8x768xf32>
    %c1_41 = arith.constant 1 : index
    %c5_42 = arith.constant 5 : index
    %95 = memref.load %arg2[%c1_41, %c5_42] : memref<4x9xf32, #tpu.memory_space<smem>>
    %96 = vector.broadcast %95 : f32 to vector<8x768xf32>
    %97 = arith.mulf %96, %90 : vector<8x768xf32>
    %98 = arith.addf %81, %97 : vector<8x768xf32>
    %c2_43 = arith.constant 2 : index
    %c5_44 = arith.constant 5 : index
    %99 = memref.load %arg2[%c2_43, %c5_44] : memref<4x9xf32, #tpu.memory_space<smem>>
    %100 = vector.broadcast %99 : f32 to vector<8x768xf32>
    %101 = arith.mulf %100, %90 : vector<8x768xf32>
    %102 = arith.addf %85, %101 : vector<8x768xf32>
    %c3_45 = arith.constant 3 : index
    %c5_46 = arith.constant 5 : index
    %103 = memref.load %arg2[%c3_45, %c5_46] : memref<4x9xf32, #tpu.memory_space<smem>>
    %104 = vector.broadcast %103 : f32 to vector<8x768xf32>
    %105 = arith.mulf %104, %90 : vector<8x768xf32>
    %106 = arith.addf %89, %105 : vector<8x768xf32>
    %107 = vector.extract_strided_slice %0 {offsets = [0, 56], sizes = [8, 768], strides = [1, 1]} : vector<8x896xf32> to vector<8x768xf32>
    %c0_47 = arith.constant 0 : index
    %c6 = arith.constant 6 : index
    %108 = memref.load %arg2[%c0_47, %c6] : memref<4x9xf32, #tpu.memory_space<smem>>
    %109 = vector.broadcast %108 : f32 to vector<8x768xf32>
    %110 = arith.mulf %109, %107 : vector<8x768xf32>
    %111 = arith.addf %94, %110 : vector<8x768xf32>
    %c1_48 = arith.constant 1 : index
    %c6_49 = arith.constant 6 : index
    %112 = memref.load %arg2[%c1_48, %c6_49] : memref<4x9xf32, #tpu.memory_space<smem>>
    %113 = vector.broadcast %112 : f32 to vector<8x768xf32>
    %114 = arith.mulf %113, %107 : vector<8x768xf32>
    %115 = arith.addf %98, %114 : vector<8x768xf32>
    %c2_50 = arith.constant 2 : index
    %c6_51 = arith.constant 6 : index
    %116 = memref.load %arg2[%c2_50, %c6_51] : memref<4x9xf32, #tpu.memory_space<smem>>
    %117 = vector.broadcast %116 : f32 to vector<8x768xf32>
    %118 = arith.mulf %117, %107 : vector<8x768xf32>
    %119 = arith.addf %102, %118 : vector<8x768xf32>
    %c3_52 = arith.constant 3 : index
    %c6_53 = arith.constant 6 : index
    %120 = memref.load %arg2[%c3_52, %c6_53] : memref<4x9xf32, #tpu.memory_space<smem>>
    %121 = vector.broadcast %120 : f32 to vector<8x768xf32>
    %122 = arith.mulf %121, %107 : vector<8x768xf32>
    %123 = arith.addf %106, %122 : vector<8x768xf32>
    %124 = vector.extract_strided_slice %0 {offsets = [0, 57], sizes = [8, 768], strides = [1, 1]} : vector<8x896xf32> to vector<8x768xf32>
    %c0_54 = arith.constant 0 : index
    %c7 = arith.constant 7 : index
    %125 = memref.load %arg2[%c0_54, %c7] : memref<4x9xf32, #tpu.memory_space<smem>>
    %126 = vector.broadcast %125 : f32 to vector<8x768xf32>
    %127 = arith.mulf %126, %124 : vector<8x768xf32>
    %128 = arith.addf %111, %127 : vector<8x768xf32>
    %c1_55 = arith.constant 1 : index
    %c7_56 = arith.constant 7 : index
    %129 = memref.load %arg2[%c1_55, %c7_56] : memref<4x9xf32, #tpu.memory_space<smem>>
    %130 = vector.broadcast %129 : f32 to vector<8x768xf32>
    %131 = arith.mulf %130, %124 : vector<8x768xf32>
    %132 = arith.addf %115, %131 : vector<8x768xf32>
    %c2_57 = arith.constant 2 : index
    %c7_58 = arith.constant 7 : index
    %133 = memref.load %arg2[%c2_57, %c7_58] : memref<4x9xf32, #tpu.memory_space<smem>>
    %134 = vector.broadcast %133 : f32 to vector<8x768xf32>
    %135 = arith.mulf %134, %124 : vector<8x768xf32>
    %136 = arith.addf %119, %135 : vector<8x768xf32>
    %c3_59 = arith.constant 3 : index
    %c7_60 = arith.constant 7 : index
    %137 = memref.load %arg2[%c3_59, %c7_60] : memref<4x9xf32, #tpu.memory_space<smem>>
    %138 = vector.broadcast %137 : f32 to vector<8x768xf32>
    %139 = arith.mulf %138, %124 : vector<8x768xf32>
    %140 = arith.addf %123, %139 : vector<8x768xf32>
    %141 = vector.extract_strided_slice %0 {offsets = [0, 58], sizes = [8, 768], strides = [1, 1]} : vector<8x896xf32> to vector<8x768xf32>
    %c0_61 = arith.constant 0 : index
    %c8 = arith.constant 8 : index
    %142 = memref.load %arg2[%c0_61, %c8] : memref<4x9xf32, #tpu.memory_space<smem>>
    %143 = vector.broadcast %142 : f32 to vector<8x768xf32>
    %144 = arith.mulf %143, %141 : vector<8x768xf32>
    %145 = arith.addf %128, %144 : vector<8x768xf32>
    %c1_62 = arith.constant 1 : index
    %c8_63 = arith.constant 8 : index
    %146 = memref.load %arg2[%c1_62, %c8_63] : memref<4x9xf32, #tpu.memory_space<smem>>
    %147 = vector.broadcast %146 : f32 to vector<8x768xf32>
    %148 = arith.mulf %147, %141 : vector<8x768xf32>
    %149 = arith.addf %132, %148 : vector<8x768xf32>
    %c2_64 = arith.constant 2 : index
    %c8_65 = arith.constant 8 : index
    %150 = memref.load %arg2[%c2_64, %c8_65] : memref<4x9xf32, #tpu.memory_space<smem>>
    %151 = vector.broadcast %150 : f32 to vector<8x768xf32>
    %152 = arith.mulf %151, %141 : vector<8x768xf32>
    %153 = arith.addf %136, %152 : vector<8x768xf32>
    %c3_66 = arith.constant 3 : index
    %c8_67 = arith.constant 8 : index
    %154 = memref.load %arg2[%c3_66, %c8_67] : memref<4x9xf32, #tpu.memory_space<smem>>
    %155 = vector.broadcast %154 : f32 to vector<8x768xf32>
    %156 = arith.mulf %155, %141 : vector<8x768xf32>
    %157 = arith.addf %140, %156 : vector<8x768xf32>
    %c0_68 = arith.constant 0 : index
    %158 = memref.load %arg3[%c0_68] : memref<4xf32, #tpu.memory_space<smem>>
    %159 = vector.broadcast %158 : f32 to vector<8x768xf32>
    %160 = arith.addf %145, %159 : vector<8x768xf32>
    %cst_69 = arith.constant 0.000000e+00 : f32
    %161 = vector.broadcast %cst_69 : f32 to vector<8x768xf32>
    %162 = arith.maximumf %160, %161 : vector<8x768xf32>
    %c1_70 = arith.constant 1 : index
    %163 = memref.load %arg3[%c1_70] : memref<4xf32, #tpu.memory_space<smem>>
    %164 = vector.broadcast %163 : f32 to vector<8x768xf32>
    %165 = arith.addf %149, %164 : vector<8x768xf32>
    %cst_71 = arith.constant 0.000000e+00 : f32
    %166 = vector.broadcast %cst_71 : f32 to vector<8x768xf32>
    %167 = arith.maximumf %165, %166 : vector<8x768xf32>
    %c2_72 = arith.constant 2 : index
    %168 = memref.load %arg3[%c2_72] : memref<4xf32, #tpu.memory_space<smem>>
    %169 = vector.broadcast %168 : f32 to vector<8x768xf32>
    %170 = arith.addf %153, %169 : vector<8x768xf32>
    %cst_73 = arith.constant 0.000000e+00 : f32
    %171 = vector.broadcast %cst_73 : f32 to vector<8x768xf32>
    %172 = arith.maximumf %170, %171 : vector<8x768xf32>
    %c3_74 = arith.constant 3 : index
    %173 = memref.load %arg3[%c3_74] : memref<4xf32, #tpu.memory_space<smem>>
    %174 = vector.broadcast %173 : f32 to vector<8x768xf32>
    %175 = arith.addf %157, %174 : vector<8x768xf32>
    %cst_75 = arith.constant 0.000000e+00 : f32
    %176 = vector.broadcast %cst_75 : f32 to vector<8x768xf32>
    %177 = arith.maximumf %175, %176 : vector<8x768xf32>
    %cst_76 = arith.constant 0.000000e+00 : f32
    %178 = vector.broadcast %cst_76 : f32 to vector<8x704xf32>
    %cst_77 = arith.constant 0.000000e+00 : f32
    %179 = vector.broadcast %cst_77 : f32 to vector<8x704xf32>
    %cst_78 = arith.constant 0.000000e+00 : f32
    %180 = vector.broadcast %cst_78 : f32 to vector<8x704xf32>
    %cst_79 = arith.constant 0.000000e+00 : f32
    %181 = vector.broadcast %cst_79 : f32 to vector<8x704xf32>
    %182 = vector.extract_strided_slice %162 {offsets = [0, 0], sizes = [8, 704], strides = [1, 1]} : vector<8x768xf32> to vector<8x704xf32>
    %c0_80 = arith.constant 0 : index
    %c0_81 = arith.constant 0 : index
    %183 = memref.load %arg4[%c0_80, %c0_81] : memref<16x9xf32, #tpu.memory_space<smem>>
    %184 = vector.broadcast %183 : f32 to vector<8x704xf32>
    %185 = arith.mulf %184, %182 : vector<8x704xf32>
    %186 = arith.addf %178, %185 : vector<8x704xf32>
    %c4_82 = arith.constant 4 : index
    %c0_83 = arith.constant 0 : index
    %187 = memref.load %arg4[%c4_82, %c0_83] : memref<16x9xf32, #tpu.memory_space<smem>>
    %188 = vector.broadcast %187 : f32 to vector<8x704xf32>
    %189 = arith.mulf %188, %182 : vector<8x704xf32>
    %190 = arith.addf %179, %189 : vector<8x704xf32>
    %c8_84 = arith.constant 8 : index
    %c0_85 = arith.constant 0 : index
    %191 = memref.load %arg4[%c8_84, %c0_85] : memref<16x9xf32, #tpu.memory_space<smem>>
    %192 = vector.broadcast %191 : f32 to vector<8x704xf32>
    %193 = arith.mulf %192, %182 : vector<8x704xf32>
    %194 = arith.addf %180, %193 : vector<8x704xf32>
    %c12 = arith.constant 12 : index
    %c0_86 = arith.constant 0 : index
    %195 = memref.load %arg4[%c12, %c0_86] : memref<16x9xf32, #tpu.memory_space<smem>>
    %196 = vector.broadcast %195 : f32 to vector<8x704xf32>
    %197 = arith.mulf %196, %182 : vector<8x704xf32>
    %198 = arith.addf %181, %197 : vector<8x704xf32>
    %199 = vector.extract_strided_slice %162 {offsets = [0, 1], sizes = [8, 704], strides = [1, 1]} : vector<8x768xf32> to vector<8x704xf32>
    %c0_87 = arith.constant 0 : index
    %c1_88 = arith.constant 1 : index
    %200 = memref.load %arg4[%c0_87, %c1_88] : memref<16x9xf32, #tpu.memory_space<smem>>
    %201 = vector.broadcast %200 : f32 to vector<8x704xf32>
    %202 = arith.mulf %201, %199 : vector<8x704xf32>
    %203 = arith.addf %186, %202 : vector<8x704xf32>
    %c4_89 = arith.constant 4 : index
    %c1_90 = arith.constant 1 : index
    %204 = memref.load %arg4[%c4_89, %c1_90] : memref<16x9xf32, #tpu.memory_space<smem>>
    %205 = vector.broadcast %204 : f32 to vector<8x704xf32>
    %206 = arith.mulf %205, %199 : vector<8x704xf32>
    %207 = arith.addf %190, %206 : vector<8x704xf32>
    %c8_91 = arith.constant 8 : index
    %c1_92 = arith.constant 1 : index
    %208 = memref.load %arg4[%c8_91, %c1_92] : memref<16x9xf32, #tpu.memory_space<smem>>
    %209 = vector.broadcast %208 : f32 to vector<8x704xf32>
    %210 = arith.mulf %209, %199 : vector<8x704xf32>
    %211 = arith.addf %194, %210 : vector<8x704xf32>
    %c12_93 = arith.constant 12 : index
    %c1_94 = arith.constant 1 : index
    %212 = memref.load %arg4[%c12_93, %c1_94] : memref<16x9xf32, #tpu.memory_space<smem>>
    %213 = vector.broadcast %212 : f32 to vector<8x704xf32>
    %214 = arith.mulf %213, %199 : vector<8x704xf32>
    %215 = arith.addf %198, %214 : vector<8x704xf32>
    %216 = vector.extract_strided_slice %162 {offsets = [0, 2], sizes = [8, 704], strides = [1, 1]} : vector<8x768xf32> to vector<8x704xf32>
    %c0_95 = arith.constant 0 : index
    %c2_96 = arith.constant 2 : index
    %217 = memref.load %arg4[%c0_95, %c2_96] : memref<16x9xf32, #tpu.memory_space<smem>>
    %218 = vector.broadcast %217 : f32 to vector<8x704xf32>
    %219 = arith.mulf %218, %216 : vector<8x704xf32>
    %220 = arith.addf %203, %219 : vector<8x704xf32>
    %c4_97 = arith.constant 4 : index
    %c2_98 = arith.constant 2 : index
    %221 = memref.load %arg4[%c4_97, %c2_98] : memref<16x9xf32, #tpu.memory_space<smem>>
    %222 = vector.broadcast %221 : f32 to vector<8x704xf32>
    %223 = arith.mulf %222, %216 : vector<8x704xf32>
    %224 = arith.addf %207, %223 : vector<8x704xf32>
    %c8_99 = arith.constant 8 : index
    %c2_100 = arith.constant 2 : index
    %225 = memref.load %arg4[%c8_99, %c2_100] : memref<16x9xf32, #tpu.memory_space<smem>>
    %226 = vector.broadcast %225 : f32 to vector<8x704xf32>
    %227 = arith.mulf %226, %216 : vector<8x704xf32>
    %228 = arith.addf %211, %227 : vector<8x704xf32>
    %c12_101 = arith.constant 12 : index
    %c2_102 = arith.constant 2 : index
    %229 = memref.load %arg4[%c12_101, %c2_102] : memref<16x9xf32, #tpu.memory_space<smem>>
    %230 = vector.broadcast %229 : f32 to vector<8x704xf32>
    %231 = arith.mulf %230, %216 : vector<8x704xf32>
    %232 = arith.addf %215, %231 : vector<8x704xf32>
    %233 = vector.extract_strided_slice %162 {offsets = [0, 28], sizes = [8, 704], strides = [1, 1]} : vector<8x768xf32> to vector<8x704xf32>
    %c0_103 = arith.constant 0 : index
    %c3_104 = arith.constant 3 : index
    %234 = memref.load %arg4[%c0_103, %c3_104] : memref<16x9xf32, #tpu.memory_space<smem>>
    %235 = vector.broadcast %234 : f32 to vector<8x704xf32>
    %236 = arith.mulf %235, %233 : vector<8x704xf32>
    %237 = arith.addf %220, %236 : vector<8x704xf32>
    %c4_105 = arith.constant 4 : index
    %c3_106 = arith.constant 3 : index
    %238 = memref.load %arg4[%c4_105, %c3_106] : memref<16x9xf32, #tpu.memory_space<smem>>
    %239 = vector.broadcast %238 : f32 to vector<8x704xf32>
    %240 = arith.mulf %239, %233 : vector<8x704xf32>
    %241 = arith.addf %224, %240 : vector<8x704xf32>
    %c8_107 = arith.constant 8 : index
    %c3_108 = arith.constant 3 : index
    %242 = memref.load %arg4[%c8_107, %c3_108] : memref<16x9xf32, #tpu.memory_space<smem>>
    %243 = vector.broadcast %242 : f32 to vector<8x704xf32>
    %244 = arith.mulf %243, %233 : vector<8x704xf32>
    %245 = arith.addf %228, %244 : vector<8x704xf32>
    %c12_109 = arith.constant 12 : index
    %c3_110 = arith.constant 3 : index
    %246 = memref.load %arg4[%c12_109, %c3_110] : memref<16x9xf32, #tpu.memory_space<smem>>
    %247 = vector.broadcast %246 : f32 to vector<8x704xf32>
    %248 = arith.mulf %247, %233 : vector<8x704xf32>
    %249 = arith.addf %232, %248 : vector<8x704xf32>
    %250 = vector.extract_strided_slice %162 {offsets = [0, 29], sizes = [8, 704], strides = [1, 1]} : vector<8x768xf32> to vector<8x704xf32>
    %c0_111 = arith.constant 0 : index
    %c4_112 = arith.constant 4 : index
    %251 = memref.load %arg4[%c0_111, %c4_112] : memref<16x9xf32, #tpu.memory_space<smem>>
    %252 = vector.broadcast %251 : f32 to vector<8x704xf32>
    %253 = arith.mulf %252, %250 : vector<8x704xf32>
    %254 = arith.addf %237, %253 : vector<8x704xf32>
    %c4_113 = arith.constant 4 : index
    %c4_114 = arith.constant 4 : index
    %255 = memref.load %arg4[%c4_113, %c4_114] : memref<16x9xf32, #tpu.memory_space<smem>>
    %256 = vector.broadcast %255 : f32 to vector<8x704xf32>
    %257 = arith.mulf %256, %250 : vector<8x704xf32>
    %258 = arith.addf %241, %257 : vector<8x704xf32>
    %c8_115 = arith.constant 8 : index
    %c4_116 = arith.constant 4 : index
    %259 = memref.load %arg4[%c8_115, %c4_116] : memref<16x9xf32, #tpu.memory_space<smem>>
    %260 = vector.broadcast %259 : f32 to vector<8x704xf32>
    %261 = arith.mulf %260, %250 : vector<8x704xf32>
    %262 = arith.addf %245, %261 : vector<8x704xf32>
    %c12_117 = arith.constant 12 : index
    %c4_118 = arith.constant 4 : index
    %263 = memref.load %arg4[%c12_117, %c4_118] : memref<16x9xf32, #tpu.memory_space<smem>>
    %264 = vector.broadcast %263 : f32 to vector<8x704xf32>
    %265 = arith.mulf %264, %250 : vector<8x704xf32>
    %266 = arith.addf %249, %265 : vector<8x704xf32>
    %267 = vector.extract_strided_slice %162 {offsets = [0, 30], sizes = [8, 704], strides = [1, 1]} : vector<8x768xf32> to vector<8x704xf32>
    %c0_119 = arith.constant 0 : index
    %c5_120 = arith.constant 5 : index
    %268 = memref.load %arg4[%c0_119, %c5_120] : memref<16x9xf32, #tpu.memory_space<smem>>
    %269 = vector.broadcast %268 : f32 to vector<8x704xf32>
    %270 = arith.mulf %269, %267 : vector<8x704xf32>
    %271 = arith.addf %254, %270 : vector<8x704xf32>
    %c4_121 = arith.constant 4 : index
    %c5_122 = arith.constant 5 : index
    %272 = memref.load %arg4[%c4_121, %c5_122] : memref<16x9xf32, #tpu.memory_space<smem>>
    %273 = vector.broadcast %272 : f32 to vector<8x704xf32>
    %274 = arith.mulf %273, %267 : vector<8x704xf32>
    %275 = arith.addf %258, %274 : vector<8x704xf32>
    %c8_123 = arith.constant 8 : index
    %c5_124 = arith.constant 5 : index
    %276 = memref.load %arg4[%c8_123, %c5_124] : memref<16x9xf32, #tpu.memory_space<smem>>
    %277 = vector.broadcast %276 : f32 to vector<8x704xf32>
    %278 = arith.mulf %277, %267 : vector<8x704xf32>
    %279 = arith.addf %262, %278 : vector<8x704xf32>
    %c12_125 = arith.constant 12 : index
    %c5_126 = arith.constant 5 : index
    %280 = memref.load %arg4[%c12_125, %c5_126] : memref<16x9xf32, #tpu.memory_space<smem>>
    %281 = vector.broadcast %280 : f32 to vector<8x704xf32>
    %282 = arith.mulf %281, %267 : vector<8x704xf32>
    %283 = arith.addf %266, %282 : vector<8x704xf32>
    %284 = vector.extract_strided_slice %162 {offsets = [0, 56], sizes = [8, 704], strides = [1, 1]} : vector<8x768xf32> to vector<8x704xf32>
    %c0_127 = arith.constant 0 : index
    %c6_128 = arith.constant 6 : index
    %285 = memref.load %arg4[%c0_127, %c6_128] : memref<16x9xf32, #tpu.memory_space<smem>>
    %286 = vector.broadcast %285 : f32 to vector<8x704xf32>
    %287 = arith.mulf %286, %284 : vector<8x704xf32>
    %288 = arith.addf %271, %287 : vector<8x704xf32>
    %c4_129 = arith.constant 4 : index
    %c6_130 = arith.constant 6 : index
    %289 = memref.load %arg4[%c4_129, %c6_130] : memref<16x9xf32, #tpu.memory_space<smem>>
    %290 = vector.broadcast %289 : f32 to vector<8x704xf32>
    %291 = arith.mulf %290, %284 : vector<8x704xf32>
    %292 = arith.addf %275, %291 : vector<8x704xf32>
    %c8_131 = arith.constant 8 : index
    %c6_132 = arith.constant 6 : index
    %293 = memref.load %arg4[%c8_131, %c6_132] : memref<16x9xf32, #tpu.memory_space<smem>>
    %294 = vector.broadcast %293 : f32 to vector<8x704xf32>
    %295 = arith.mulf %294, %284 : vector<8x704xf32>
    %296 = arith.addf %279, %295 : vector<8x704xf32>
    %c12_133 = arith.constant 12 : index
    %c6_134 = arith.constant 6 : index
    %297 = memref.load %arg4[%c12_133, %c6_134] : memref<16x9xf32, #tpu.memory_space<smem>>
    %298 = vector.broadcast %297 : f32 to vector<8x704xf32>
    %299 = arith.mulf %298, %284 : vector<8x704xf32>
    %300 = arith.addf %283, %299 : vector<8x704xf32>
    %301 = vector.extract_strided_slice %162 {offsets = [0, 57], sizes = [8, 704], strides = [1, 1]} : vector<8x768xf32> to vector<8x704xf32>
    %c0_135 = arith.constant 0 : index
    %c7_136 = arith.constant 7 : index
    %302 = memref.load %arg4[%c0_135, %c7_136] : memref<16x9xf32, #tpu.memory_space<smem>>
    %303 = vector.broadcast %302 : f32 to vector<8x704xf32>
    %304 = arith.mulf %303, %301 : vector<8x704xf32>
    %305 = arith.addf %288, %304 : vector<8x704xf32>
    %c4_137 = arith.constant 4 : index
    %c7_138 = arith.constant 7 : index
    %306 = memref.load %arg4[%c4_137, %c7_138] : memref<16x9xf32, #tpu.memory_space<smem>>
    %307 = vector.broadcast %306 : f32 to vector<8x704xf32>
    %308 = arith.mulf %307, %301 : vector<8x704xf32>
    %309 = arith.addf %292, %308 : vector<8x704xf32>
    %c8_139 = arith.constant 8 : index
    %c7_140 = arith.constant 7 : index
    %310 = memref.load %arg4[%c8_139, %c7_140] : memref<16x9xf32, #tpu.memory_space<smem>>
    %311 = vector.broadcast %310 : f32 to vector<8x704xf32>
    %312 = arith.mulf %311, %301 : vector<8x704xf32>
    %313 = arith.addf %296, %312 : vector<8x704xf32>
    %c12_141 = arith.constant 12 : index
    %c7_142 = arith.constant 7 : index
    %314 = memref.load %arg4[%c12_141, %c7_142] : memref<16x9xf32, #tpu.memory_space<smem>>
    %315 = vector.broadcast %314 : f32 to vector<8x704xf32>
    %316 = arith.mulf %315, %301 : vector<8x704xf32>
    %317 = arith.addf %300, %316 : vector<8x704xf32>
    %318 = vector.extract_strided_slice %162 {offsets = [0, 58], sizes = [8, 704], strides = [1, 1]} : vector<8x768xf32> to vector<8x704xf32>
    %c0_143 = arith.constant 0 : index
    %c8_144 = arith.constant 8 : index
    %319 = memref.load %arg4[%c0_143, %c8_144] : memref<16x9xf32, #tpu.memory_space<smem>>
    %320 = vector.broadcast %319 : f32 to vector<8x704xf32>
    %321 = arith.mulf %320, %318 : vector<8x704xf32>
    %322 = arith.addf %305, %321 : vector<8x704xf32>
    %c4_145 = arith.constant 4 : index
    %c8_146 = arith.constant 8 : index
    %323 = memref.load %arg4[%c4_145, %c8_146] : memref<16x9xf32, #tpu.memory_space<smem>>
    %324 = vector.broadcast %323 : f32 to vector<8x704xf32>
    %325 = arith.mulf %324, %318 : vector<8x704xf32>
    %326 = arith.addf %309, %325 : vector<8x704xf32>
    %c8_147 = arith.constant 8 : index
    %c8_148 = arith.constant 8 : index
    %327 = memref.load %arg4[%c8_147, %c8_148] : memref<16x9xf32, #tpu.memory_space<smem>>
    %328 = vector.broadcast %327 : f32 to vector<8x704xf32>
    %329 = arith.mulf %328, %318 : vector<8x704xf32>
    %330 = arith.addf %313, %329 : vector<8x704xf32>
    %c12_149 = arith.constant 12 : index
    %c8_150 = arith.constant 8 : index
    %331 = memref.load %arg4[%c12_149, %c8_150] : memref<16x9xf32, #tpu.memory_space<smem>>
    %332 = vector.broadcast %331 : f32 to vector<8x704xf32>
    %333 = arith.mulf %332, %318 : vector<8x704xf32>
    %334 = arith.addf %317, %333 : vector<8x704xf32>
    %335 = vector.extract_strided_slice %167 {offsets = [0, 0], sizes = [8, 704], strides = [1, 1]} : vector<8x768xf32> to vector<8x704xf32>
    %c1_151 = arith.constant 1 : index
    %c0_152 = arith.constant 0 : index
    %336 = memref.load %arg4[%c1_151, %c0_152] : memref<16x9xf32, #tpu.memory_space<smem>>
    %337 = vector.broadcast %336 : f32 to vector<8x704xf32>
    %338 = arith.mulf %337, %335 : vector<8x704xf32>
    %339 = arith.addf %322, %338 : vector<8x704xf32>
    %c5_153 = arith.constant 5 : index
    %c0_154 = arith.constant 0 : index
    %340 = memref.load %arg4[%c5_153, %c0_154] : memref<16x9xf32, #tpu.memory_space<smem>>
    %341 = vector.broadcast %340 : f32 to vector<8x704xf32>
    %342 = arith.mulf %341, %335 : vector<8x704xf32>
    %343 = arith.addf %326, %342 : vector<8x704xf32>
    %c9 = arith.constant 9 : index
    %c0_155 = arith.constant 0 : index
    %344 = memref.load %arg4[%c9, %c0_155] : memref<16x9xf32, #tpu.memory_space<smem>>
    %345 = vector.broadcast %344 : f32 to vector<8x704xf32>
    %346 = arith.mulf %345, %335 : vector<8x704xf32>
    %347 = arith.addf %330, %346 : vector<8x704xf32>
    %c13 = arith.constant 13 : index
    %c0_156 = arith.constant 0 : index
    %348 = memref.load %arg4[%c13, %c0_156] : memref<16x9xf32, #tpu.memory_space<smem>>
    %349 = vector.broadcast %348 : f32 to vector<8x704xf32>
    %350 = arith.mulf %349, %335 : vector<8x704xf32>
    %351 = arith.addf %334, %350 : vector<8x704xf32>
    %352 = vector.extract_strided_slice %167 {offsets = [0, 1], sizes = [8, 704], strides = [1, 1]} : vector<8x768xf32> to vector<8x704xf32>
    %c1_157 = arith.constant 1 : index
    %c1_158 = arith.constant 1 : index
    %353 = memref.load %arg4[%c1_157, %c1_158] : memref<16x9xf32, #tpu.memory_space<smem>>
    %354 = vector.broadcast %353 : f32 to vector<8x704xf32>
    %355 = arith.mulf %354, %352 : vector<8x704xf32>
    %356 = arith.addf %339, %355 : vector<8x704xf32>
    %c5_159 = arith.constant 5 : index
    %c1_160 = arith.constant 1 : index
    %357 = memref.load %arg4[%c5_159, %c1_160] : memref<16x9xf32, #tpu.memory_space<smem>>
    %358 = vector.broadcast %357 : f32 to vector<8x704xf32>
    %359 = arith.mulf %358, %352 : vector<8x704xf32>
    %360 = arith.addf %343, %359 : vector<8x704xf32>
    %c9_161 = arith.constant 9 : index
    %c1_162 = arith.constant 1 : index
    %361 = memref.load %arg4[%c9_161, %c1_162] : memref<16x9xf32, #tpu.memory_space<smem>>
    %362 = vector.broadcast %361 : f32 to vector<8x704xf32>
    %363 = arith.mulf %362, %352 : vector<8x704xf32>
    %364 = arith.addf %347, %363 : vector<8x704xf32>
    %c13_163 = arith.constant 13 : index
    %c1_164 = arith.constant 1 : index
    %365 = memref.load %arg4[%c13_163, %c1_164] : memref<16x9xf32, #tpu.memory_space<smem>>
    %366 = vector.broadcast %365 : f32 to vector<8x704xf32>
    %367 = arith.mulf %366, %352 : vector<8x704xf32>
    %368 = arith.addf %351, %367 : vector<8x704xf32>
    %369 = vector.extract_strided_slice %167 {offsets = [0, 2], sizes = [8, 704], strides = [1, 1]} : vector<8x768xf32> to vector<8x704xf32>
    %c1_165 = arith.constant 1 : index
    %c2_166 = arith.constant 2 : index
    %370 = memref.load %arg4[%c1_165, %c2_166] : memref<16x9xf32, #tpu.memory_space<smem>>
    %371 = vector.broadcast %370 : f32 to vector<8x704xf32>
    %372 = arith.mulf %371, %369 : vector<8x704xf32>
    %373 = arith.addf %356, %372 : vector<8x704xf32>
    %c5_167 = arith.constant 5 : index
    %c2_168 = arith.constant 2 : index
    %374 = memref.load %arg4[%c5_167, %c2_168] : memref<16x9xf32, #tpu.memory_space<smem>>
    %375 = vector.broadcast %374 : f32 to vector<8x704xf32>
    %376 = arith.mulf %375, %369 : vector<8x704xf32>
    %377 = arith.addf %360, %376 : vector<8x704xf32>
    %c9_169 = arith.constant 9 : index
    %c2_170 = arith.constant 2 : index
    %378 = memref.load %arg4[%c9_169, %c2_170] : memref<16x9xf32, #tpu.memory_space<smem>>
    %379 = vector.broadcast %378 : f32 to vector<8x704xf32>
    %380 = arith.mulf %379, %369 : vector<8x704xf32>
    %381 = arith.addf %364, %380 : vector<8x704xf32>
    %c13_171 = arith.constant 13 : index
    %c2_172 = arith.constant 2 : index
    %382 = memref.load %arg4[%c13_171, %c2_172] : memref<16x9xf32, #tpu.memory_space<smem>>
    %383 = vector.broadcast %382 : f32 to vector<8x704xf32>
    %384 = arith.mulf %383, %369 : vector<8x704xf32>
    %385 = arith.addf %368, %384 : vector<8x704xf32>
    %386 = vector.extract_strided_slice %167 {offsets = [0, 28], sizes = [8, 704], strides = [1, 1]} : vector<8x768xf32> to vector<8x704xf32>
    %c1_173 = arith.constant 1 : index
    %c3_174 = arith.constant 3 : index
    %387 = memref.load %arg4[%c1_173, %c3_174] : memref<16x9xf32, #tpu.memory_space<smem>>
    %388 = vector.broadcast %387 : f32 to vector<8x704xf32>
    %389 = arith.mulf %388, %386 : vector<8x704xf32>
    %390 = arith.addf %373, %389 : vector<8x704xf32>
    %c5_175 = arith.constant 5 : index
    %c3_176 = arith.constant 3 : index
    %391 = memref.load %arg4[%c5_175, %c3_176] : memref<16x9xf32, #tpu.memory_space<smem>>
    %392 = vector.broadcast %391 : f32 to vector<8x704xf32>
    %393 = arith.mulf %392, %386 : vector<8x704xf32>
    %394 = arith.addf %377, %393 : vector<8x704xf32>
    %c9_177 = arith.constant 9 : index
    %c3_178 = arith.constant 3 : index
    %395 = memref.load %arg4[%c9_177, %c3_178] : memref<16x9xf32, #tpu.memory_space<smem>>
    %396 = vector.broadcast %395 : f32 to vector<8x704xf32>
    %397 = arith.mulf %396, %386 : vector<8x704xf32>
    %398 = arith.addf %381, %397 : vector<8x704xf32>
    %c13_179 = arith.constant 13 : index
    %c3_180 = arith.constant 3 : index
    %399 = memref.load %arg4[%c13_179, %c3_180] : memref<16x9xf32, #tpu.memory_space<smem>>
    %400 = vector.broadcast %399 : f32 to vector<8x704xf32>
    %401 = arith.mulf %400, %386 : vector<8x704xf32>
    %402 = arith.addf %385, %401 : vector<8x704xf32>
    %403 = vector.extract_strided_slice %167 {offsets = [0, 29], sizes = [8, 704], strides = [1, 1]} : vector<8x768xf32> to vector<8x704xf32>
    %c1_181 = arith.constant 1 : index
    %c4_182 = arith.constant 4 : index
    %404 = memref.load %arg4[%c1_181, %c4_182] : memref<16x9xf32, #tpu.memory_space<smem>>
    %405 = vector.broadcast %404 : f32 to vector<8x704xf32>
    %406 = arith.mulf %405, %403 : vector<8x704xf32>
    %407 = arith.addf %390, %406 : vector<8x704xf32>
    %c5_183 = arith.constant 5 : index
    %c4_184 = arith.constant 4 : index
    %408 = memref.load %arg4[%c5_183, %c4_184] : memref<16x9xf32, #tpu.memory_space<smem>>
    %409 = vector.broadcast %408 : f32 to vector<8x704xf32>
    %410 = arith.mulf %409, %403 : vector<8x704xf32>
    %411 = arith.addf %394, %410 : vector<8x704xf32>
    %c9_185 = arith.constant 9 : index
    %c4_186 = arith.constant 4 : index
    %412 = memref.load %arg4[%c9_185, %c4_186] : memref<16x9xf32, #tpu.memory_space<smem>>
    %413 = vector.broadcast %412 : f32 to vector<8x704xf32>
    %414 = arith.mulf %413, %403 : vector<8x704xf32>
    %415 = arith.addf %398, %414 : vector<8x704xf32>
    %c13_187 = arith.constant 13 : index
    %c4_188 = arith.constant 4 : index
    %416 = memref.load %arg4[%c13_187, %c4_188] : memref<16x9xf32, #tpu.memory_space<smem>>
    %417 = vector.broadcast %416 : f32 to vector<8x704xf32>
    %418 = arith.mulf %417, %403 : vector<8x704xf32>
    %419 = arith.addf %402, %418 : vector<8x704xf32>
    %420 = vector.extract_strided_slice %167 {offsets = [0, 30], sizes = [8, 704], strides = [1, 1]} : vector<8x768xf32> to vector<8x704xf32>
    %c1_189 = arith.constant 1 : index
    %c5_190 = arith.constant 5 : index
    %421 = memref.load %arg4[%c1_189, %c5_190] : memref<16x9xf32, #tpu.memory_space<smem>>
    %422 = vector.broadcast %421 : f32 to vector<8x704xf32>
    %423 = arith.mulf %422, %420 : vector<8x704xf32>
    %424 = arith.addf %407, %423 : vector<8x704xf32>
    %c5_191 = arith.constant 5 : index
    %c5_192 = arith.constant 5 : index
    %425 = memref.load %arg4[%c5_191, %c5_192] : memref<16x9xf32, #tpu.memory_space<smem>>
    %426 = vector.broadcast %425 : f32 to vector<8x704xf32>
    %427 = arith.mulf %426, %420 : vector<8x704xf32>
    %428 = arith.addf %411, %427 : vector<8x704xf32>
    %c9_193 = arith.constant 9 : index
    %c5_194 = arith.constant 5 : index
    %429 = memref.load %arg4[%c9_193, %c5_194] : memref<16x9xf32, #tpu.memory_space<smem>>
    %430 = vector.broadcast %429 : f32 to vector<8x704xf32>
    %431 = arith.mulf %430, %420 : vector<8x704xf32>
    %432 = arith.addf %415, %431 : vector<8x704xf32>
    %c13_195 = arith.constant 13 : index
    %c5_196 = arith.constant 5 : index
    %433 = memref.load %arg4[%c13_195, %c5_196] : memref<16x9xf32, #tpu.memory_space<smem>>
    %434 = vector.broadcast %433 : f32 to vector<8x704xf32>
    %435 = arith.mulf %434, %420 : vector<8x704xf32>
    %436 = arith.addf %419, %435 : vector<8x704xf32>
    %437 = vector.extract_strided_slice %167 {offsets = [0, 56], sizes = [8, 704], strides = [1, 1]} : vector<8x768xf32> to vector<8x704xf32>
    %c1_197 = arith.constant 1 : index
    %c6_198 = arith.constant 6 : index
    %438 = memref.load %arg4[%c1_197, %c6_198] : memref<16x9xf32, #tpu.memory_space<smem>>
    %439 = vector.broadcast %438 : f32 to vector<8x704xf32>
    %440 = arith.mulf %439, %437 : vector<8x704xf32>
    %441 = arith.addf %424, %440 : vector<8x704xf32>
    %c5_199 = arith.constant 5 : index
    %c6_200 = arith.constant 6 : index
    %442 = memref.load %arg4[%c5_199, %c6_200] : memref<16x9xf32, #tpu.memory_space<smem>>
    %443 = vector.broadcast %442 : f32 to vector<8x704xf32>
    %444 = arith.mulf %443, %437 : vector<8x704xf32>
    %445 = arith.addf %428, %444 : vector<8x704xf32>
    %c9_201 = arith.constant 9 : index
    %c6_202 = arith.constant 6 : index
    %446 = memref.load %arg4[%c9_201, %c6_202] : memref<16x9xf32, #tpu.memory_space<smem>>
    %447 = vector.broadcast %446 : f32 to vector<8x704xf32>
    %448 = arith.mulf %447, %437 : vector<8x704xf32>
    %449 = arith.addf %432, %448 : vector<8x704xf32>
    %c13_203 = arith.constant 13 : index
    %c6_204 = arith.constant 6 : index
    %450 = memref.load %arg4[%c13_203, %c6_204] : memref<16x9xf32, #tpu.memory_space<smem>>
    %451 = vector.broadcast %450 : f32 to vector<8x704xf32>
    %452 = arith.mulf %451, %437 : vector<8x704xf32>
    %453 = arith.addf %436, %452 : vector<8x704xf32>
    %454 = vector.extract_strided_slice %167 {offsets = [0, 57], sizes = [8, 704], strides = [1, 1]} : vector<8x768xf32> to vector<8x704xf32>
    %c1_205 = arith.constant 1 : index
    %c7_206 = arith.constant 7 : index
    %455 = memref.load %arg4[%c1_205, %c7_206] : memref<16x9xf32, #tpu.memory_space<smem>>
    %456 = vector.broadcast %455 : f32 to vector<8x704xf32>
    %457 = arith.mulf %456, %454 : vector<8x704xf32>
    %458 = arith.addf %441, %457 : vector<8x704xf32>
    %c5_207 = arith.constant 5 : index
    %c7_208 = arith.constant 7 : index
    %459 = memref.load %arg4[%c5_207, %c7_208] : memref<16x9xf32, #tpu.memory_space<smem>>
    %460 = vector.broadcast %459 : f32 to vector<8x704xf32>
    %461 = arith.mulf %460, %454 : vector<8x704xf32>
    %462 = arith.addf %445, %461 : vector<8x704xf32>
    %c9_209 = arith.constant 9 : index
    %c7_210 = arith.constant 7 : index
    %463 = memref.load %arg4[%c9_209, %c7_210] : memref<16x9xf32, #tpu.memory_space<smem>>
    %464 = vector.broadcast %463 : f32 to vector<8x704xf32>
    %465 = arith.mulf %464, %454 : vector<8x704xf32>
    %466 = arith.addf %449, %465 : vector<8x704xf32>
    %c13_211 = arith.constant 13 : index
    %c7_212 = arith.constant 7 : index
    %467 = memref.load %arg4[%c13_211, %c7_212] : memref<16x9xf32, #tpu.memory_space<smem>>
    %468 = vector.broadcast %467 : f32 to vector<8x704xf32>
    %469 = arith.mulf %468, %454 : vector<8x704xf32>
    %470 = arith.addf %453, %469 : vector<8x704xf32>
    %471 = vector.extract_strided_slice %167 {offsets = [0, 58], sizes = [8, 704], strides = [1, 1]} : vector<8x768xf32> to vector<8x704xf32>
    %c1_213 = arith.constant 1 : index
    %c8_214 = arith.constant 8 : index
    %472 = memref.load %arg4[%c1_213, %c8_214] : memref<16x9xf32, #tpu.memory_space<smem>>
    %473 = vector.broadcast %472 : f32 to vector<8x704xf32>
    %474 = arith.mulf %473, %471 : vector<8x704xf32>
    %475 = arith.addf %458, %474 : vector<8x704xf32>
    %c5_215 = arith.constant 5 : index
    %c8_216 = arith.constant 8 : index
    %476 = memref.load %arg4[%c5_215, %c8_216] : memref<16x9xf32, #tpu.memory_space<smem>>
    %477 = vector.broadcast %476 : f32 to vector<8x704xf32>
    %478 = arith.mulf %477, %471 : vector<8x704xf32>
    %479 = arith.addf %462, %478 : vector<8x704xf32>
    %c9_217 = arith.constant 9 : index
    %c8_218 = arith.constant 8 : index
    %480 = memref.load %arg4[%c9_217, %c8_218] : memref<16x9xf32, #tpu.memory_space<smem>>
    %481 = vector.broadcast %480 : f32 to vector<8x704xf32>
    %482 = arith.mulf %481, %471 : vector<8x704xf32>
    %483 = arith.addf %466, %482 : vector<8x704xf32>
    %c13_219 = arith.constant 13 : index
    %c8_220 = arith.constant 8 : index
    %484 = memref.load %arg4[%c13_219, %c8_220] : memref<16x9xf32, #tpu.memory_space<smem>>
    %485 = vector.broadcast %484 : f32 to vector<8x704xf32>
    %486 = arith.mulf %485, %471 : vector<8x704xf32>
    %487 = arith.addf %470, %486 : vector<8x704xf32>
    %488 = vector.extract_strided_slice %172 {offsets = [0, 0], sizes = [8, 704], strides = [1, 1]} : vector<8x768xf32> to vector<8x704xf32>
    %c2_221 = arith.constant 2 : index
    %c0_222 = arith.constant 0 : index
    %489 = memref.load %arg4[%c2_221, %c0_222] : memref<16x9xf32, #tpu.memory_space<smem>>
    %490 = vector.broadcast %489 : f32 to vector<8x704xf32>
    %491 = arith.mulf %490, %488 : vector<8x704xf32>
    %492 = arith.addf %475, %491 : vector<8x704xf32>
    %c6_223 = arith.constant 6 : index
    %c0_224 = arith.constant 0 : index
    %493 = memref.load %arg4[%c6_223, %c0_224] : memref<16x9xf32, #tpu.memory_space<smem>>
    %494 = vector.broadcast %493 : f32 to vector<8x704xf32>
    %495 = arith.mulf %494, %488 : vector<8x704xf32>
    %496 = arith.addf %479, %495 : vector<8x704xf32>
    %c10 = arith.constant 10 : index
    %c0_225 = arith.constant 0 : index
    %497 = memref.load %arg4[%c10, %c0_225] : memref<16x9xf32, #tpu.memory_space<smem>>
    %498 = vector.broadcast %497 : f32 to vector<8x704xf32>
    %499 = arith.mulf %498, %488 : vector<8x704xf32>
    %500 = arith.addf %483, %499 : vector<8x704xf32>
    %c14 = arith.constant 14 : index
    %c0_226 = arith.constant 0 : index
    %501 = memref.load %arg4[%c14, %c0_226] : memref<16x9xf32, #tpu.memory_space<smem>>
    %502 = vector.broadcast %501 : f32 to vector<8x704xf32>
    %503 = arith.mulf %502, %488 : vector<8x704xf32>
    %504 = arith.addf %487, %503 : vector<8x704xf32>
    %505 = vector.extract_strided_slice %172 {offsets = [0, 1], sizes = [8, 704], strides = [1, 1]} : vector<8x768xf32> to vector<8x704xf32>
    %c2_227 = arith.constant 2 : index
    %c1_228 = arith.constant 1 : index
    %506 = memref.load %arg4[%c2_227, %c1_228] : memref<16x9xf32, #tpu.memory_space<smem>>
    %507 = vector.broadcast %506 : f32 to vector<8x704xf32>
    %508 = arith.mulf %507, %505 : vector<8x704xf32>
    %509 = arith.addf %492, %508 : vector<8x704xf32>
    %c6_229 = arith.constant 6 : index
    %c1_230 = arith.constant 1 : index
    %510 = memref.load %arg4[%c6_229, %c1_230] : memref<16x9xf32, #tpu.memory_space<smem>>
    %511 = vector.broadcast %510 : f32 to vector<8x704xf32>
    %512 = arith.mulf %511, %505 : vector<8x704xf32>
    %513 = arith.addf %496, %512 : vector<8x704xf32>
    %c10_231 = arith.constant 10 : index
    %c1_232 = arith.constant 1 : index
    %514 = memref.load %arg4[%c10_231, %c1_232] : memref<16x9xf32, #tpu.memory_space<smem>>
    %515 = vector.broadcast %514 : f32 to vector<8x704xf32>
    %516 = arith.mulf %515, %505 : vector<8x704xf32>
    %517 = arith.addf %500, %516 : vector<8x704xf32>
    %c14_233 = arith.constant 14 : index
    %c1_234 = arith.constant 1 : index
    %518 = memref.load %arg4[%c14_233, %c1_234] : memref<16x9xf32, #tpu.memory_space<smem>>
    %519 = vector.broadcast %518 : f32 to vector<8x704xf32>
    %520 = arith.mulf %519, %505 : vector<8x704xf32>
    %521 = arith.addf %504, %520 : vector<8x704xf32>
    %522 = vector.extract_strided_slice %172 {offsets = [0, 2], sizes = [8, 704], strides = [1, 1]} : vector<8x768xf32> to vector<8x704xf32>
    %c2_235 = arith.constant 2 : index
    %c2_236 = arith.constant 2 : index
    %523 = memref.load %arg4[%c2_235, %c2_236] : memref<16x9xf32, #tpu.memory_space<smem>>
    %524 = vector.broadcast %523 : f32 to vector<8x704xf32>
    %525 = arith.mulf %524, %522 : vector<8x704xf32>
    %526 = arith.addf %509, %525 : vector<8x704xf32>
    %c6_237 = arith.constant 6 : index
    %c2_238 = arith.constant 2 : index
    %527 = memref.load %arg4[%c6_237, %c2_238] : memref<16x9xf32, #tpu.memory_space<smem>>
    %528 = vector.broadcast %527 : f32 to vector<8x704xf32>
    %529 = arith.mulf %528, %522 : vector<8x704xf32>
    %530 = arith.addf %513, %529 : vector<8x704xf32>
    %c10_239 = arith.constant 10 : index
    %c2_240 = arith.constant 2 : index
    %531 = memref.load %arg4[%c10_239, %c2_240] : memref<16x9xf32, #tpu.memory_space<smem>>
    %532 = vector.broadcast %531 : f32 to vector<8x704xf32>
    %533 = arith.mulf %532, %522 : vector<8x704xf32>
    %534 = arith.addf %517, %533 : vector<8x704xf32>
    %c14_241 = arith.constant 14 : index
    %c2_242 = arith.constant 2 : index
    %535 = memref.load %arg4[%c14_241, %c2_242] : memref<16x9xf32, #tpu.memory_space<smem>>
    %536 = vector.broadcast %535 : f32 to vector<8x704xf32>
    %537 = arith.mulf %536, %522 : vector<8x704xf32>
    %538 = arith.addf %521, %537 : vector<8x704xf32>
    %539 = vector.extract_strided_slice %172 {offsets = [0, 28], sizes = [8, 704], strides = [1, 1]} : vector<8x768xf32> to vector<8x704xf32>
    %c2_243 = arith.constant 2 : index
    %c3_244 = arith.constant 3 : index
    %540 = memref.load %arg4[%c2_243, %c3_244] : memref<16x9xf32, #tpu.memory_space<smem>>
    %541 = vector.broadcast %540 : f32 to vector<8x704xf32>
    %542 = arith.mulf %541, %539 : vector<8x704xf32>
    %543 = arith.addf %526, %542 : vector<8x704xf32>
    %c6_245 = arith.constant 6 : index
    %c3_246 = arith.constant 3 : index
    %544 = memref.load %arg4[%c6_245, %c3_246] : memref<16x9xf32, #tpu.memory_space<smem>>
    %545 = vector.broadcast %544 : f32 to vector<8x704xf32>
    %546 = arith.mulf %545, %539 : vector<8x704xf32>
    %547 = arith.addf %530, %546 : vector<8x704xf32>
    %c10_247 = arith.constant 10 : index
    %c3_248 = arith.constant 3 : index
    %548 = memref.load %arg4[%c10_247, %c3_248] : memref<16x9xf32, #tpu.memory_space<smem>>
    %549 = vector.broadcast %548 : f32 to vector<8x704xf32>
    %550 = arith.mulf %549, %539 : vector<8x704xf32>
    %551 = arith.addf %534, %550 : vector<8x704xf32>
    %c14_249 = arith.constant 14 : index
    %c3_250 = arith.constant 3 : index
    %552 = memref.load %arg4[%c14_249, %c3_250] : memref<16x9xf32, #tpu.memory_space<smem>>
    %553 = vector.broadcast %552 : f32 to vector<8x704xf32>
    %554 = arith.mulf %553, %539 : vector<8x704xf32>
    %555 = arith.addf %538, %554 : vector<8x704xf32>
    %556 = vector.extract_strided_slice %172 {offsets = [0, 29], sizes = [8, 704], strides = [1, 1]} : vector<8x768xf32> to vector<8x704xf32>
    %c2_251 = arith.constant 2 : index
    %c4_252 = arith.constant 4 : index
    %557 = memref.load %arg4[%c2_251, %c4_252] : memref<16x9xf32, #tpu.memory_space<smem>>
    %558 = vector.broadcast %557 : f32 to vector<8x704xf32>
    %559 = arith.mulf %558, %556 : vector<8x704xf32>
    %560 = arith.addf %543, %559 : vector<8x704xf32>
    %c6_253 = arith.constant 6 : index
    %c4_254 = arith.constant 4 : index
    %561 = memref.load %arg4[%c6_253, %c4_254] : memref<16x9xf32, #tpu.memory_space<smem>>
    %562 = vector.broadcast %561 : f32 to vector<8x704xf32>
    %563 = arith.mulf %562, %556 : vector<8x704xf32>
    %564 = arith.addf %547, %563 : vector<8x704xf32>
    %c10_255 = arith.constant 10 : index
    %c4_256 = arith.constant 4 : index
    %565 = memref.load %arg4[%c10_255, %c4_256] : memref<16x9xf32, #tpu.memory_space<smem>>
    %566 = vector.broadcast %565 : f32 to vector<8x704xf32>
    %567 = arith.mulf %566, %556 : vector<8x704xf32>
    %568 = arith.addf %551, %567 : vector<8x704xf32>
    %c14_257 = arith.constant 14 : index
    %c4_258 = arith.constant 4 : index
    %569 = memref.load %arg4[%c14_257, %c4_258] : memref<16x9xf32, #tpu.memory_space<smem>>
    %570 = vector.broadcast %569 : f32 to vector<8x704xf32>
    %571 = arith.mulf %570, %556 : vector<8x704xf32>
    %572 = arith.addf %555, %571 : vector<8x704xf32>
    %573 = vector.extract_strided_slice %172 {offsets = [0, 30], sizes = [8, 704], strides = [1, 1]} : vector<8x768xf32> to vector<8x704xf32>
    %c2_259 = arith.constant 2 : index
    %c5_260 = arith.constant 5 : index
    %574 = memref.load %arg4[%c2_259, %c5_260] : memref<16x9xf32, #tpu.memory_space<smem>>
    %575 = vector.broadcast %574 : f32 to vector<8x704xf32>
    %576 = arith.mulf %575, %573 : vector<8x704xf32>
    %577 = arith.addf %560, %576 : vector<8x704xf32>
    %c6_261 = arith.constant 6 : index
    %c5_262 = arith.constant 5 : index
    %578 = memref.load %arg4[%c6_261, %c5_262] : memref<16x9xf32, #tpu.memory_space<smem>>
    %579 = vector.broadcast %578 : f32 to vector<8x704xf32>
    %580 = arith.mulf %579, %573 : vector<8x704xf32>
    %581 = arith.addf %564, %580 : vector<8x704xf32>
    %c10_263 = arith.constant 10 : index
    %c5_264 = arith.constant 5 : index
    %582 = memref.load %arg4[%c10_263, %c5_264] : memref<16x9xf32, #tpu.memory_space<smem>>
    %583 = vector.broadcast %582 : f32 to vector<8x704xf32>
    %584 = arith.mulf %583, %573 : vector<8x704xf32>
    %585 = arith.addf %568, %584 : vector<8x704xf32>
    %c14_265 = arith.constant 14 : index
    %c5_266 = arith.constant 5 : index
    %586 = memref.load %arg4[%c14_265, %c5_266] : memref<16x9xf32, #tpu.memory_space<smem>>
    %587 = vector.broadcast %586 : f32 to vector<8x704xf32>
    %588 = arith.mulf %587, %573 : vector<8x704xf32>
    %589 = arith.addf %572, %588 : vector<8x704xf32>
    %590 = vector.extract_strided_slice %172 {offsets = [0, 56], sizes = [8, 704], strides = [1, 1]} : vector<8x768xf32> to vector<8x704xf32>
    %c2_267 = arith.constant 2 : index
    %c6_268 = arith.constant 6 : index
    %591 = memref.load %arg4[%c2_267, %c6_268] : memref<16x9xf32, #tpu.memory_space<smem>>
    %592 = vector.broadcast %591 : f32 to vector<8x704xf32>
    %593 = arith.mulf %592, %590 : vector<8x704xf32>
    %594 = arith.addf %577, %593 : vector<8x704xf32>
    %c6_269 = arith.constant 6 : index
    %c6_270 = arith.constant 6 : index
    %595 = memref.load %arg4[%c6_269, %c6_270] : memref<16x9xf32, #tpu.memory_space<smem>>
    %596 = vector.broadcast %595 : f32 to vector<8x704xf32>
    %597 = arith.mulf %596, %590 : vector<8x704xf32>
    %598 = arith.addf %581, %597 : vector<8x704xf32>
    %c10_271 = arith.constant 10 : index
    %c6_272 = arith.constant 6 : index
    %599 = memref.load %arg4[%c10_271, %c6_272] : memref<16x9xf32, #tpu.memory_space<smem>>
    %600 = vector.broadcast %599 : f32 to vector<8x704xf32>
    %601 = arith.mulf %600, %590 : vector<8x704xf32>
    %602 = arith.addf %585, %601 : vector<8x704xf32>
    %c14_273 = arith.constant 14 : index
    %c6_274 = arith.constant 6 : index
    %603 = memref.load %arg4[%c14_273, %c6_274] : memref<16x9xf32, #tpu.memory_space<smem>>
    %604 = vector.broadcast %603 : f32 to vector<8x704xf32>
    %605 = arith.mulf %604, %590 : vector<8x704xf32>
    %606 = arith.addf %589, %605 : vector<8x704xf32>
    %607 = vector.extract_strided_slice %172 {offsets = [0, 57], sizes = [8, 704], strides = [1, 1]} : vector<8x768xf32> to vector<8x704xf32>
    %c2_275 = arith.constant 2 : index
    %c7_276 = arith.constant 7 : index
    %608 = memref.load %arg4[%c2_275, %c7_276] : memref<16x9xf32, #tpu.memory_space<smem>>
    %609 = vector.broadcast %608 : f32 to vector<8x704xf32>
    %610 = arith.mulf %609, %607 : vector<8x704xf32>
    %611 = arith.addf %594, %610 : vector<8x704xf32>
    %c6_277 = arith.constant 6 : index
    %c7_278 = arith.constant 7 : index
    %612 = memref.load %arg4[%c6_277, %c7_278] : memref<16x9xf32, #tpu.memory_space<smem>>
    %613 = vector.broadcast %612 : f32 to vector<8x704xf32>
    %614 = arith.mulf %613, %607 : vector<8x704xf32>
    %615 = arith.addf %598, %614 : vector<8x704xf32>
    %c10_279 = arith.constant 10 : index
    %c7_280 = arith.constant 7 : index
    %616 = memref.load %arg4[%c10_279, %c7_280] : memref<16x9xf32, #tpu.memory_space<smem>>
    %617 = vector.broadcast %616 : f32 to vector<8x704xf32>
    %618 = arith.mulf %617, %607 : vector<8x704xf32>
    %619 = arith.addf %602, %618 : vector<8x704xf32>
    %c14_281 = arith.constant 14 : index
    %c7_282 = arith.constant 7 : index
    %620 = memref.load %arg4[%c14_281, %c7_282] : memref<16x9xf32, #tpu.memory_space<smem>>
    %621 = vector.broadcast %620 : f32 to vector<8x704xf32>
    %622 = arith.mulf %621, %607 : vector<8x704xf32>
    %623 = arith.addf %606, %622 : vector<8x704xf32>
    %624 = vector.extract_strided_slice %172 {offsets = [0, 58], sizes = [8, 704], strides = [1, 1]} : vector<8x768xf32> to vector<8x704xf32>
    %c2_283 = arith.constant 2 : index
    %c8_284 = arith.constant 8 : index
    %625 = memref.load %arg4[%c2_283, %c8_284] : memref<16x9xf32, #tpu.memory_space<smem>>
    %626 = vector.broadcast %625 : f32 to vector<8x704xf32>
    %627 = arith.mulf %626, %624 : vector<8x704xf32>
    %628 = arith.addf %611, %627 : vector<8x704xf32>
    %c6_285 = arith.constant 6 : index
    %c8_286 = arith.constant 8 : index
    %629 = memref.load %arg4[%c6_285, %c8_286] : memref<16x9xf32, #tpu.memory_space<smem>>
    %630 = vector.broadcast %629 : f32 to vector<8x704xf32>
    %631 = arith.mulf %630, %624 : vector<8x704xf32>
    %632 = arith.addf %615, %631 : vector<8x704xf32>
    %c10_287 = arith.constant 10 : index
    %c8_288 = arith.constant 8 : index
    %633 = memref.load %arg4[%c10_287, %c8_288] : memref<16x9xf32, #tpu.memory_space<smem>>
    %634 = vector.broadcast %633 : f32 to vector<8x704xf32>
    %635 = arith.mulf %634, %624 : vector<8x704xf32>
    %636 = arith.addf %619, %635 : vector<8x704xf32>
    %c14_289 = arith.constant 14 : index
    %c8_290 = arith.constant 8 : index
    %637 = memref.load %arg4[%c14_289, %c8_290] : memref<16x9xf32, #tpu.memory_space<smem>>
    %638 = vector.broadcast %637 : f32 to vector<8x704xf32>
    %639 = arith.mulf %638, %624 : vector<8x704xf32>
    %640 = arith.addf %623, %639 : vector<8x704xf32>
    %641 = vector.extract_strided_slice %177 {offsets = [0, 0], sizes = [8, 704], strides = [1, 1]} : vector<8x768xf32> to vector<8x704xf32>
    %c3_291 = arith.constant 3 : index
    %c0_292 = arith.constant 0 : index
    %642 = memref.load %arg4[%c3_291, %c0_292] : memref<16x9xf32, #tpu.memory_space<smem>>
    %643 = vector.broadcast %642 : f32 to vector<8x704xf32>
    %644 = arith.mulf %643, %641 : vector<8x704xf32>
    %645 = arith.addf %628, %644 : vector<8x704xf32>
    %c7_293 = arith.constant 7 : index
    %c0_294 = arith.constant 0 : index
    %646 = memref.load %arg4[%c7_293, %c0_294] : memref<16x9xf32, #tpu.memory_space<smem>>
    %647 = vector.broadcast %646 : f32 to vector<8x704xf32>
    %648 = arith.mulf %647, %641 : vector<8x704xf32>
    %649 = arith.addf %632, %648 : vector<8x704xf32>
    %c11 = arith.constant 11 : index
    %c0_295 = arith.constant 0 : index
    %650 = memref.load %arg4[%c11, %c0_295] : memref<16x9xf32, #tpu.memory_space<smem>>
    %651 = vector.broadcast %650 : f32 to vector<8x704xf32>
    %652 = arith.mulf %651, %641 : vector<8x704xf32>
    %653 = arith.addf %636, %652 : vector<8x704xf32>
    %c15 = arith.constant 15 : index
    %c0_296 = arith.constant 0 : index
    %654 = memref.load %arg4[%c15, %c0_296] : memref<16x9xf32, #tpu.memory_space<smem>>
    %655 = vector.broadcast %654 : f32 to vector<8x704xf32>
    %656 = arith.mulf %655, %641 : vector<8x704xf32>
    %657 = arith.addf %640, %656 : vector<8x704xf32>
    %658 = vector.extract_strided_slice %177 {offsets = [0, 1], sizes = [8, 704], strides = [1, 1]} : vector<8x768xf32> to vector<8x704xf32>
    %c3_297 = arith.constant 3 : index
    %c1_298 = arith.constant 1 : index
    %659 = memref.load %arg4[%c3_297, %c1_298] : memref<16x9xf32, #tpu.memory_space<smem>>
    %660 = vector.broadcast %659 : f32 to vector<8x704xf32>
    %661 = arith.mulf %660, %658 : vector<8x704xf32>
    %662 = arith.addf %645, %661 : vector<8x704xf32>
    %c7_299 = arith.constant 7 : index
    %c1_300 = arith.constant 1 : index
    %663 = memref.load %arg4[%c7_299, %c1_300] : memref<16x9xf32, #tpu.memory_space<smem>>
    %664 = vector.broadcast %663 : f32 to vector<8x704xf32>
    %665 = arith.mulf %664, %658 : vector<8x704xf32>
    %666 = arith.addf %649, %665 : vector<8x704xf32>
    %c11_301 = arith.constant 11 : index
    %c1_302 = arith.constant 1 : index
    %667 = memref.load %arg4[%c11_301, %c1_302] : memref<16x9xf32, #tpu.memory_space<smem>>
    %668 = vector.broadcast %667 : f32 to vector<8x704xf32>
    %669 = arith.mulf %668, %658 : vector<8x704xf32>
    %670 = arith.addf %653, %669 : vector<8x704xf32>
    %c15_303 = arith.constant 15 : index
    %c1_304 = arith.constant 1 : index
    %671 = memref.load %arg4[%c15_303, %c1_304] : memref<16x9xf32, #tpu.memory_space<smem>>
    %672 = vector.broadcast %671 : f32 to vector<8x704xf32>
    %673 = arith.mulf %672, %658 : vector<8x704xf32>
    %674 = arith.addf %657, %673 : vector<8x704xf32>
    %675 = vector.extract_strided_slice %177 {offsets = [0, 2], sizes = [8, 704], strides = [1, 1]} : vector<8x768xf32> to vector<8x704xf32>
    %c3_305 = arith.constant 3 : index
    %c2_306 = arith.constant 2 : index
    %676 = memref.load %arg4[%c3_305, %c2_306] : memref<16x9xf32, #tpu.memory_space<smem>>
    %677 = vector.broadcast %676 : f32 to vector<8x704xf32>
    %678 = arith.mulf %677, %675 : vector<8x704xf32>
    %679 = arith.addf %662, %678 : vector<8x704xf32>
    %c7_307 = arith.constant 7 : index
    %c2_308 = arith.constant 2 : index
    %680 = memref.load %arg4[%c7_307, %c2_308] : memref<16x9xf32, #tpu.memory_space<smem>>
    %681 = vector.broadcast %680 : f32 to vector<8x704xf32>
    %682 = arith.mulf %681, %675 : vector<8x704xf32>
    %683 = arith.addf %666, %682 : vector<8x704xf32>
    %c11_309 = arith.constant 11 : index
    %c2_310 = arith.constant 2 : index
    %684 = memref.load %arg4[%c11_309, %c2_310] : memref<16x9xf32, #tpu.memory_space<smem>>
    %685 = vector.broadcast %684 : f32 to vector<8x704xf32>
    %686 = arith.mulf %685, %675 : vector<8x704xf32>
    %687 = arith.addf %670, %686 : vector<8x704xf32>
    %c15_311 = arith.constant 15 : index
    %c2_312 = arith.constant 2 : index
    %688 = memref.load %arg4[%c15_311, %c2_312] : memref<16x9xf32, #tpu.memory_space<smem>>
    %689 = vector.broadcast %688 : f32 to vector<8x704xf32>
    %690 = arith.mulf %689, %675 : vector<8x704xf32>
    %691 = arith.addf %674, %690 : vector<8x704xf32>
    %692 = vector.extract_strided_slice %177 {offsets = [0, 28], sizes = [8, 704], strides = [1, 1]} : vector<8x768xf32> to vector<8x704xf32>
    %c3_313 = arith.constant 3 : index
    %c3_314 = arith.constant 3 : index
    %693 = memref.load %arg4[%c3_313, %c3_314] : memref<16x9xf32, #tpu.memory_space<smem>>
    %694 = vector.broadcast %693 : f32 to vector<8x704xf32>
    %695 = arith.mulf %694, %692 : vector<8x704xf32>
    %696 = arith.addf %679, %695 : vector<8x704xf32>
    %c7_315 = arith.constant 7 : index
    %c3_316 = arith.constant 3 : index
    %697 = memref.load %arg4[%c7_315, %c3_316] : memref<16x9xf32, #tpu.memory_space<smem>>
    %698 = vector.broadcast %697 : f32 to vector<8x704xf32>
    %699 = arith.mulf %698, %692 : vector<8x704xf32>
    %700 = arith.addf %683, %699 : vector<8x704xf32>
    %c11_317 = arith.constant 11 : index
    %c3_318 = arith.constant 3 : index
    %701 = memref.load %arg4[%c11_317, %c3_318] : memref<16x9xf32, #tpu.memory_space<smem>>
    %702 = vector.broadcast %701 : f32 to vector<8x704xf32>
    %703 = arith.mulf %702, %692 : vector<8x704xf32>
    %704 = arith.addf %687, %703 : vector<8x704xf32>
    %c15_319 = arith.constant 15 : index
    %c3_320 = arith.constant 3 : index
    %705 = memref.load %arg4[%c15_319, %c3_320] : memref<16x9xf32, #tpu.memory_space<smem>>
    %706 = vector.broadcast %705 : f32 to vector<8x704xf32>
    %707 = arith.mulf %706, %692 : vector<8x704xf32>
    %708 = arith.addf %691, %707 : vector<8x704xf32>
    %709 = vector.extract_strided_slice %177 {offsets = [0, 29], sizes = [8, 704], strides = [1, 1]} : vector<8x768xf32> to vector<8x704xf32>
    %c3_321 = arith.constant 3 : index
    %c4_322 = arith.constant 4 : index
    %710 = memref.load %arg4[%c3_321, %c4_322] : memref<16x9xf32, #tpu.memory_space<smem>>
    %711 = vector.broadcast %710 : f32 to vector<8x704xf32>
    %712 = arith.mulf %711, %709 : vector<8x704xf32>
    %713 = arith.addf %696, %712 : vector<8x704xf32>
    %c7_323 = arith.constant 7 : index
    %c4_324 = arith.constant 4 : index
    %714 = memref.load %arg4[%c7_323, %c4_324] : memref<16x9xf32, #tpu.memory_space<smem>>
    %715 = vector.broadcast %714 : f32 to vector<8x704xf32>
    %716 = arith.mulf %715, %709 : vector<8x704xf32>
    %717 = arith.addf %700, %716 : vector<8x704xf32>
    %c11_325 = arith.constant 11 : index
    %c4_326 = arith.constant 4 : index
    %718 = memref.load %arg4[%c11_325, %c4_326] : memref<16x9xf32, #tpu.memory_space<smem>>
    %719 = vector.broadcast %718 : f32 to vector<8x704xf32>
    %720 = arith.mulf %719, %709 : vector<8x704xf32>
    %721 = arith.addf %704, %720 : vector<8x704xf32>
    %c15_327 = arith.constant 15 : index
    %c4_328 = arith.constant 4 : index
    %722 = memref.load %arg4[%c15_327, %c4_328] : memref<16x9xf32, #tpu.memory_space<smem>>
    %723 = vector.broadcast %722 : f32 to vector<8x704xf32>
    %724 = arith.mulf %723, %709 : vector<8x704xf32>
    %725 = arith.addf %708, %724 : vector<8x704xf32>
    %726 = vector.extract_strided_slice %177 {offsets = [0, 30], sizes = [8, 704], strides = [1, 1]} : vector<8x768xf32> to vector<8x704xf32>
    %c3_329 = arith.constant 3 : index
    %c5_330 = arith.constant 5 : index
    %727 = memref.load %arg4[%c3_329, %c5_330] : memref<16x9xf32, #tpu.memory_space<smem>>
    %728 = vector.broadcast %727 : f32 to vector<8x704xf32>
    %729 = arith.mulf %728, %726 : vector<8x704xf32>
    %730 = arith.addf %713, %729 : vector<8x704xf32>
    %c7_331 = arith.constant 7 : index
    %c5_332 = arith.constant 5 : index
    %731 = memref.load %arg4[%c7_331, %c5_332] : memref<16x9xf32, #tpu.memory_space<smem>>
    %732 = vector.broadcast %731 : f32 to vector<8x704xf32>
    %733 = arith.mulf %732, %726 : vector<8x704xf32>
    %734 = arith.addf %717, %733 : vector<8x704xf32>
    %c11_333 = arith.constant 11 : index
    %c5_334 = arith.constant 5 : index
    %735 = memref.load %arg4[%c11_333, %c5_334] : memref<16x9xf32, #tpu.memory_space<smem>>
    %736 = vector.broadcast %735 : f32 to vector<8x704xf32>
    %737 = arith.mulf %736, %726 : vector<8x704xf32>
    %738 = arith.addf %721, %737 : vector<8x704xf32>
    %c15_335 = arith.constant 15 : index
    %c5_336 = arith.constant 5 : index
    %739 = memref.load %arg4[%c15_335, %c5_336] : memref<16x9xf32, #tpu.memory_space<smem>>
    %740 = vector.broadcast %739 : f32 to vector<8x704xf32>
    %741 = arith.mulf %740, %726 : vector<8x704xf32>
    %742 = arith.addf %725, %741 : vector<8x704xf32>
    %743 = vector.extract_strided_slice %177 {offsets = [0, 56], sizes = [8, 704], strides = [1, 1]} : vector<8x768xf32> to vector<8x704xf32>
    %c3_337 = arith.constant 3 : index
    %c6_338 = arith.constant 6 : index
    %744 = memref.load %arg4[%c3_337, %c6_338] : memref<16x9xf32, #tpu.memory_space<smem>>
    %745 = vector.broadcast %744 : f32 to vector<8x704xf32>
    %746 = arith.mulf %745, %743 : vector<8x704xf32>
    %747 = arith.addf %730, %746 : vector<8x704xf32>
    %c7_339 = arith.constant 7 : index
    %c6_340 = arith.constant 6 : index
    %748 = memref.load %arg4[%c7_339, %c6_340] : memref<16x9xf32, #tpu.memory_space<smem>>
    %749 = vector.broadcast %748 : f32 to vector<8x704xf32>
    %750 = arith.mulf %749, %743 : vector<8x704xf32>
    %751 = arith.addf %734, %750 : vector<8x704xf32>
    %c11_341 = arith.constant 11 : index
    %c6_342 = arith.constant 6 : index
    %752 = memref.load %arg4[%c11_341, %c6_342] : memref<16x9xf32, #tpu.memory_space<smem>>
    %753 = vector.broadcast %752 : f32 to vector<8x704xf32>
    %754 = arith.mulf %753, %743 : vector<8x704xf32>
    %755 = arith.addf %738, %754 : vector<8x704xf32>
    %c15_343 = arith.constant 15 : index
    %c6_344 = arith.constant 6 : index
    %756 = memref.load %arg4[%c15_343, %c6_344] : memref<16x9xf32, #tpu.memory_space<smem>>
    %757 = vector.broadcast %756 : f32 to vector<8x704xf32>
    %758 = arith.mulf %757, %743 : vector<8x704xf32>
    %759 = arith.addf %742, %758 : vector<8x704xf32>
    %760 = vector.extract_strided_slice %177 {offsets = [0, 57], sizes = [8, 704], strides = [1, 1]} : vector<8x768xf32> to vector<8x704xf32>
    %c3_345 = arith.constant 3 : index
    %c7_346 = arith.constant 7 : index
    %761 = memref.load %arg4[%c3_345, %c7_346] : memref<16x9xf32, #tpu.memory_space<smem>>
    %762 = vector.broadcast %761 : f32 to vector<8x704xf32>
    %763 = arith.mulf %762, %760 : vector<8x704xf32>
    %764 = arith.addf %747, %763 : vector<8x704xf32>
    %c7_347 = arith.constant 7 : index
    %c7_348 = arith.constant 7 : index
    %765 = memref.load %arg4[%c7_347, %c7_348] : memref<16x9xf32, #tpu.memory_space<smem>>
    %766 = vector.broadcast %765 : f32 to vector<8x704xf32>
    %767 = arith.mulf %766, %760 : vector<8x704xf32>
    %768 = arith.addf %751, %767 : vector<8x704xf32>
    %c11_349 = arith.constant 11 : index
    %c7_350 = arith.constant 7 : index
    %769 = memref.load %arg4[%c11_349, %c7_350] : memref<16x9xf32, #tpu.memory_space<smem>>
    %770 = vector.broadcast %769 : f32 to vector<8x704xf32>
    %771 = arith.mulf %770, %760 : vector<8x704xf32>
    %772 = arith.addf %755, %771 : vector<8x704xf32>
    %c15_351 = arith.constant 15 : index
    %c7_352 = arith.constant 7 : index
    %773 = memref.load %arg4[%c15_351, %c7_352] : memref<16x9xf32, #tpu.memory_space<smem>>
    %774 = vector.broadcast %773 : f32 to vector<8x704xf32>
    %775 = arith.mulf %774, %760 : vector<8x704xf32>
    %776 = arith.addf %759, %775 : vector<8x704xf32>
    %777 = vector.extract_strided_slice %177 {offsets = [0, 58], sizes = [8, 704], strides = [1, 1]} : vector<8x768xf32> to vector<8x704xf32>
    %c3_353 = arith.constant 3 : index
    %c8_354 = arith.constant 8 : index
    %778 = memref.load %arg4[%c3_353, %c8_354] : memref<16x9xf32, #tpu.memory_space<smem>>
    %779 = vector.broadcast %778 : f32 to vector<8x704xf32>
    %780 = arith.mulf %779, %777 : vector<8x704xf32>
    %781 = arith.addf %764, %780 : vector<8x704xf32>
    %c7_355 = arith.constant 7 : index
    %c8_356 = arith.constant 8 : index
    %782 = memref.load %arg4[%c7_355, %c8_356] : memref<16x9xf32, #tpu.memory_space<smem>>
    %783 = vector.broadcast %782 : f32 to vector<8x704xf32>
    %784 = arith.mulf %783, %777 : vector<8x704xf32>
    %785 = arith.addf %768, %784 : vector<8x704xf32>
    %c11_357 = arith.constant 11 : index
    %c8_358 = arith.constant 8 : index
    %786 = memref.load %arg4[%c11_357, %c8_358] : memref<16x9xf32, #tpu.memory_space<smem>>
    %787 = vector.broadcast %786 : f32 to vector<8x704xf32>
    %788 = arith.mulf %787, %777 : vector<8x704xf32>
    %789 = arith.addf %772, %788 : vector<8x704xf32>
    %c15_359 = arith.constant 15 : index
    %c8_360 = arith.constant 8 : index
    %790 = memref.load %arg4[%c15_359, %c8_360] : memref<16x9xf32, #tpu.memory_space<smem>>
    %791 = vector.broadcast %790 : f32 to vector<8x704xf32>
    %792 = arith.mulf %791, %777 : vector<8x704xf32>
    %793 = arith.addf %776, %792 : vector<8x704xf32>
    %c0_361 = arith.constant 0 : index
    %794 = memref.load %arg5[%c0_361] : memref<4xf32, #tpu.memory_space<smem>>
    %795 = vector.broadcast %794 : f32 to vector<8x704xf32>
    %796 = arith.addf %781, %795 : vector<8x704xf32>
    %cst_362 = arith.constant 0.000000e+00 : f32
    %797 = vector.broadcast %cst_362 : f32 to vector<8x704xf32>
    %798 = arith.maximumf %796, %797 : vector<8x704xf32>
    %c1_363 = arith.constant 1 : index
    %799 = memref.load %arg5[%c1_363] : memref<4xf32, #tpu.memory_space<smem>>
    %800 = vector.broadcast %799 : f32 to vector<8x704xf32>
    %801 = arith.addf %785, %800 : vector<8x704xf32>
    %cst_364 = arith.constant 0.000000e+00 : f32
    %802 = vector.broadcast %cst_364 : f32 to vector<8x704xf32>
    %803 = arith.maximumf %801, %802 : vector<8x704xf32>
    %c2_365 = arith.constant 2 : index
    %804 = memref.load %arg5[%c2_365] : memref<4xf32, #tpu.memory_space<smem>>
    %805 = vector.broadcast %804 : f32 to vector<8x704xf32>
    %806 = arith.addf %789, %805 : vector<8x704xf32>
    %cst_366 = arith.constant 0.000000e+00 : f32
    %807 = vector.broadcast %cst_366 : f32 to vector<8x704xf32>
    %808 = arith.maximumf %806, %807 : vector<8x704xf32>
    %c3_367 = arith.constant 3 : index
    %809 = memref.load %arg5[%c3_367] : memref<4xf32, #tpu.memory_space<smem>>
    %810 = vector.broadcast %809 : f32 to vector<8x704xf32>
    %811 = arith.addf %793, %810 : vector<8x704xf32>
    %cst_368 = arith.constant 0.000000e+00 : f32
    %812 = vector.broadcast %cst_368 : f32 to vector<8x704xf32>
    %813 = arith.maximumf %811, %812 : vector<8x704xf32>
    %cst_369 = arith.constant 0.000000e+00 : f32
    %814 = vector.broadcast %cst_369 : f32 to vector<8x32xf32>
    %815 = vector.extract_strided_slice %798 {offsets = [0, 0], sizes = [8, 648], strides = [1, 1]} : vector<8x704xf32> to vector<8x648xf32>
    %816 = vector.extract_strided_slice %798 {offsets = [0, 28], sizes = [8, 648], strides = [1, 1]} : vector<8x704xf32> to vector<8x648xf32>
    %817 = arith.maximumf %815, %816 : vector<8x648xf32>
    %818 = vector.extract_strided_slice %817 {offsets = [0, 0], sizes = [8, 640], strides = [1, 1]} : vector<8x648xf32> to vector<8x640xf32>
    %819 = vector.extract_strided_slice %817 {offsets = [0, 1], sizes = [8, 640], strides = [1, 1]} : vector<8x648xf32> to vector<8x640xf32>
    %820 = arith.maximumf %818, %819 : vector<8x640xf32>
    %c0_370 = arith.constant 0 : index
    %c0_371 = arith.constant 0 : index
    %c0_372 = arith.constant 0 : index
    %821 = vector.load %arg6[%c0_370, %c0_371, %c0_372] : memref<4x640x32xf32, #tpu.memory_space<vmem>>, vector<1x640x32xf32>
    %822 = vector.shape_cast %821 : vector<1x640x32xf32> to vector<640x32xf32>
    %cst_373 = arith.constant dense<0.000000e+00> : vector<8x32xf32>
    %823 = tpu.matmul %820, %822, %cst_373 {dimension_numbers = #tpu.dot_dimension_numbers<[1], [0], [0], [1], [0, 0, 1, 1], [], []>} : vector<8x640xf32>, vector<640x32xf32>, vector<8x32xf32> -> vector<8x32xf32>
    %824 = arith.addf %814, %823 : vector<8x32xf32>
    %825 = vector.extract_strided_slice %803 {offsets = [0, 0], sizes = [8, 648], strides = [1, 1]} : vector<8x704xf32> to vector<8x648xf32>
    %826 = vector.extract_strided_slice %803 {offsets = [0, 28], sizes = [8, 648], strides = [1, 1]} : vector<8x704xf32> to vector<8x648xf32>
    %827 = arith.maximumf %825, %826 : vector<8x648xf32>
    %828 = vector.extract_strided_slice %827 {offsets = [0, 0], sizes = [8, 640], strides = [1, 1]} : vector<8x648xf32> to vector<8x640xf32>
    %829 = vector.extract_strided_slice %827 {offsets = [0, 1], sizes = [8, 640], strides = [1, 1]} : vector<8x648xf32> to vector<8x640xf32>
    %830 = arith.maximumf %828, %829 : vector<8x640xf32>
    %c1_374 = arith.constant 1 : index
    %c0_375 = arith.constant 0 : index
    %c0_376 = arith.constant 0 : index
    %831 = vector.load %arg6[%c1_374, %c0_375, %c0_376] : memref<4x640x32xf32, #tpu.memory_space<vmem>>, vector<1x640x32xf32>
    %832 = vector.shape_cast %831 : vector<1x640x32xf32> to vector<640x32xf32>
    %cst_377 = arith.constant dense<0.000000e+00> : vector<8x32xf32>
    %833 = tpu.matmul %830, %832, %cst_377 {dimension_numbers = #tpu.dot_dimension_numbers<[1], [0], [0], [1], [0, 0, 1, 1], [], []>} : vector<8x640xf32>, vector<640x32xf32>, vector<8x32xf32> -> vector<8x32xf32>
    %834 = arith.addf %824, %833 : vector<8x32xf32>
    %835 = vector.extract_strided_slice %808 {offsets = [0, 0], sizes = [8, 648], strides = [1, 1]} : vector<8x704xf32> to vector<8x648xf32>
    %836 = vector.extract_strided_slice %808 {offsets = [0, 28], sizes = [8, 648], strides = [1, 1]} : vector<8x704xf32> to vector<8x648xf32>
    %837 = arith.maximumf %835, %836 : vector<8x648xf32>
    %838 = vector.extract_strided_slice %837 {offsets = [0, 0], sizes = [8, 640], strides = [1, 1]} : vector<8x648xf32> to vector<8x640xf32>
    %839 = vector.extract_strided_slice %837 {offsets = [0, 1], sizes = [8, 640], strides = [1, 1]} : vector<8x648xf32> to vector<8x640xf32>
    %840 = arith.maximumf %838, %839 : vector<8x640xf32>
    %c2_378 = arith.constant 2 : index
    %c0_379 = arith.constant 0 : index
    %c0_380 = arith.constant 0 : index
    %841 = vector.load %arg6[%c2_378, %c0_379, %c0_380] : memref<4x640x32xf32, #tpu.memory_space<vmem>>, vector<1x640x32xf32>
    %842 = vector.shape_cast %841 : vector<1x640x32xf32> to vector<640x32xf32>
    %cst_381 = arith.constant dense<0.000000e+00> : vector<8x32xf32>
    %843 = tpu.matmul %840, %842, %cst_381 {dimension_numbers = #tpu.dot_dimension_numbers<[1], [0], [0], [1], [0, 0, 1, 1], [], []>} : vector<8x640xf32>, vector<640x32xf32>, vector<8x32xf32> -> vector<8x32xf32>
    %844 = arith.addf %834, %843 : vector<8x32xf32>
    %845 = vector.extract_strided_slice %813 {offsets = [0, 0], sizes = [8, 648], strides = [1, 1]} : vector<8x704xf32> to vector<8x648xf32>
    %846 = vector.extract_strided_slice %813 {offsets = [0, 28], sizes = [8, 648], strides = [1, 1]} : vector<8x704xf32> to vector<8x648xf32>
    %847 = arith.maximumf %845, %846 : vector<8x648xf32>
    %848 = vector.extract_strided_slice %847 {offsets = [0, 0], sizes = [8, 640], strides = [1, 1]} : vector<8x648xf32> to vector<8x640xf32>
    %849 = vector.extract_strided_slice %847 {offsets = [0, 1], sizes = [8, 640], strides = [1, 1]} : vector<8x648xf32> to vector<8x640xf32>
    %850 = arith.maximumf %848, %849 : vector<8x640xf32>
    %c3_382 = arith.constant 3 : index
    %c0_383 = arith.constant 0 : index
    %c0_384 = arith.constant 0 : index
    %851 = vector.load %arg6[%c3_382, %c0_383, %c0_384] : memref<4x640x32xf32, #tpu.memory_space<vmem>>, vector<1x640x32xf32>
    %852 = vector.shape_cast %851 : vector<1x640x32xf32> to vector<640x32xf32>
    %cst_385 = arith.constant dense<0.000000e+00> : vector<8x32xf32>
    %853 = tpu.matmul %850, %852, %cst_385 {dimension_numbers = #tpu.dot_dimension_numbers<[1], [0], [0], [1], [0, 0, 1, 1], [], []>} : vector<8x640xf32>, vector<640x32xf32>, vector<8x32xf32> -> vector<8x32xf32>
    %854 = arith.addf %844, %853 : vector<8x32xf32>
    %c0_386 = arith.constant 0 : index
    %c0_387 = arith.constant 0 : index
    %855 = vector.load %arg7[%c0_386, %c0_387] : memref<1x32xf32, #tpu.memory_space<vmem>>, vector<1x32xf32>
    %856 = vector.broadcast %855 : vector<1x32xf32> to vector<8x32xf32>
    %857 = arith.addf %854, %856 : vector<8x32xf32>
    %cst_388 = arith.constant 0.000000e+00 : f32
    %858 = vector.broadcast %cst_388 : f32 to vector<8x32xf32>
    %859 = arith.maximumf %857, %858 : vector<8x32xf32>
    %c0_389 = arith.constant 0 : index
    %c0_390 = arith.constant 0 : index
    %860 = vector.load %arg8[%c0_389, %c0_390] : memref<32x9xf32, #tpu.memory_space<vmem>>, vector<32x9xf32>
    %cst_391 = arith.constant dense<0.000000e+00> : vector<8x9xf32>
    %861 = tpu.matmul %859, %860, %cst_391 {dimension_numbers = #tpu.dot_dimension_numbers<[1], [0], [0], [1], [0, 0, 1, 1], [], []>} : vector<8x32xf32>, vector<32x9xf32>, vector<8x9xf32> -> vector<8x9xf32>
    %c0_392 = arith.constant 0 : index
    %c0_393 = arith.constant 0 : index
    %862 = vector.load %arg9[%c0_392, %c0_393] : memref<1x9xf32, #tpu.memory_space<vmem>>, vector<1x9xf32>
    %863 = vector.broadcast %862 : vector<1x9xf32> to vector<8x9xf32>
    %864 = arith.addf %861, %863 : vector<8x9xf32>
    %c0_394 = arith.constant 0 : index
    %c0_395 = arith.constant 0 : index
    %865 = vector.load %arg10[%c0_394, %c0_395] : memref<8x9xf32, #tpu.memory_space<vmem>>, vector<8x9xf32>
    tpu.vector_store %arg10[%c0_394, %c0_395], %864 {strides = array<i32>} : memref<8x9xf32, #tpu.memory_space<vmem>>, vector<8x9xf32>,
    return
  }
  func.func @transform_0(%arg0: i32) -> (i32, i32) {
    %c0_i32 = arith.constant 0 : i32
    %c0_i32_0 = arith.constant 0 : i32
    return %arg0, %c0_i32 : i32, i32
  }
  func.func @transform_1(%arg0: i32) -> (i32, i32) {
    %c0_i32 = arith.constant 0 : i32
    %c0_i32_0 = arith.constant 0 : i32
    %c0_i32_1 = arith.constant 0 : i32
    return %c0_i32, %c0_i32_0 : i32, i32
  }
  func.func @transform_2(%arg0: i32) -> i32 {
    %c0_i32 = arith.constant 0 : i32
    %c0_i32_0 = arith.constant 0 : i32
    return %c0_i32 : i32
  }
  func.func @transform_3(%arg0: i32) -> (i32, i32) {
    %c0_i32 = arith.constant 0 : i32
    %c0_i32_0 = arith.constant 0 : i32
    %c0_i32_1 = arith.constant 0 : i32
    return %c0_i32, %c0_i32_0 : i32, i32
  }
  func.func @transform_4(%arg0: i32) -> i32 {
    %c0_i32 = arith.constant 0 : i32
    %c0_i32_0 = arith.constant 0 : i32
    return %c0_i32 : i32
  }
  func.func @transform_5(%arg0: i32) -> (i32, i32, i32) {
    %c0_i32 = arith.constant 0 : i32
    %c0_i32_0 = arith.constant 0 : i32
    %c0_i32_1 = arith.constant 0 : i32
    %c0_i32_2 = arith.constant 0 : i32
    return %c0_i32, %c0_i32_0, %c0_i32_1 : i32, i32, i32
  }
  func.func @transform_6(%arg0: i32) -> (i32, i32) {
    %c0_i32 = arith.constant 0 : i32
    %c0_i32_0 = arith.constant 0 : i32
    %c0_i32_1 = arith.constant 0 : i32
    return %c0_i32, %c0_i32_0 : i32, i32
  }
  func.func @transform_7(%arg0: i32) -> (i32, i32) {
    %c0_i32 = arith.constant 0 : i32
    %c0_i32_0 = arith.constant 0 : i32
    %c0_i32_1 = arith.constant 0 : i32
    return %c0_i32, %c0_i32_0 : i32, i32
  }
  func.func @transform_8(%arg0: i32) -> (i32, i32) {
    %c0_i32 = arith.constant 0 : i32
    %c0_i32_0 = arith.constant 0 : i32
    %c0_i32_1 = arith.constant 0 : i32
    return %c0_i32, %c0_i32_0 : i32, i32
  }
  func.func @transform_9(%arg0: i32) -> (i32, i32) {
    %c0_i32 = arith.constant 0 : i32
    %c0_i32_0 = arith.constant 0 : i32
    return %arg0, %c0_i32 : i32, i32
  }
}

</mosaic_0001>

<llo_original>
// kernel: cnn_forward.1
$region0: #{cnn_forward.1}
  #allocation0 [shape = 'u32[]', space=smem, size = 0x4, offset = 0x4, fixed_abs, tag = 'smem constant byte address 0x4 - core index']
  #allocation1 [shape = 'u32[144,128]{1,0:T(1,128)}', space=vmem, size = 0x12000, scoped, tag = 'internal scratch']
  %s0 = inlined_call_operand.vmem [shape: f32[8,896], index: 0, kind: input, shape index: {}]
  %s1 = inlined_call_operand.vmem [shape: f32[4,9], index: 1, kind: input, shape index: {}]
  %s2 = inlined_call_operand.vmem [shape: f32[4], index: 2, kind: input, shape index: {}]
  %s3 = inlined_call_operand.vmem [shape: f32[16,9], index: 3, kind: input, shape index: {}]
  %s4 = inlined_call_operand.vmem [shape: f32[4], index: 4, kind: input, shape index: {}]
  %s5 = inlined_call_operand.vmem [shape: f32[4,640,32], index: 5, kind: input, shape index: {}]
  %s6 = inlined_call_operand.vmem [shape: f32[1,32], index: 6, kind: input, shape index: {}]
  %s7 = inlined_call_operand.vmem [shape: f32[32,9], index: 7, kind: input, shape index: {}]
  %s8 = inlined_call_operand.vmem [shape: f32[1,9], index: 8, kind: input, shape index: {}]
  %s9 = inlined_call_operand.vmem [shape: f32[8,9], index: 9, kind: output, shape index: {}]
  %s10 = sld [smem:[#allocation0]]
  $region62: #{cnn_forward.1} parent=0
    _
  %s12 = ssub.s32 1, %s10
  %s13 = scalar_select 0, %s12, %s10
  $region1: #{cnn_forward.1} parent=0
    #allocation2 [shape = 'u8[2048]{0}', space=smem, size = 0x800, scoped, tag = 'input window, operand 1, single buffered']
    #allocation3 [shape = 's32[1]{0}', space=sflag, size = 0x4, scoped, tag = 'scoped memory for cnn_forward.1']
    #allocation4 [shape = 'u8[512]{0}', space=smem, size = 0x200, scoped, tag = 'input window, operand 2, single buffered']
    #allocation5 [shape = 's32[1]{0}', space=sflag, size = 0x4, scoped, tag = 'scoped memory for cnn_forward.1']
    #allocation6 [shape = 'u8[8192]{0}', space=smem, size = 0x2000, scoped, tag = 'input window, operand 3, single buffered']
    #allocation7 [shape = 'u8[512]{0}', space=smem, size = 0x200, scoped, tag = 'input window, operand 4, single buffered']
    #allocation8 [shape = 's32[1]{0}', space=sflag, size = 0x4, scoped, tag = 'scoped memory for cnn_forward.1']
    %14 = vsyncpa [#allocation3], 0
    %15 = vsyncpa [#allocation5], 0
    %16 = vsyncpa [#allocation8], 0
    // Predicated region
    $region2: #{cnn_forward.1} parent=1 // pred_check
      _
    $region3: #{cnn_forward.1} parent=1 // pred_check_branch
      %18 = sbr.rel (0) target = $region5
    $region4: #{cnn_forward.1} parent=1 // pred_region
      _
    $region5: #{cnn_forward.1} parent=1 // pred_fallthru
      _
    // Predicated region
    $region6: #{cnn_forward.1} parent=1 // pred_check
      _
    $region7: #{cnn_forward.1} parent=1 // pred_check_branch
      %20 = sbr.rel (0) target = $region9
    $region8: #{cnn_forward.1} parent=1 // pred_region
      %s22 = ssub.s32 64, 64
      %23 = vsyncadd [#allocation3], %s22
      %s25 = sshll.u32 %s1, 4
      %s26 = int_to_ptr.vmem [resolvable:$true] %s25
      %28 = dma.vmem_to_smem %s26, 64, [#allocation2], [#allocation3]
    $region9: #{cnn_forward.1} parent=1 // pred_fallthru
      _
    // Predicated region
    $region10: #{cnn_forward.1} parent=1 // pred_check
      _
    $region11: #{cnn_forward.1} parent=1 // pred_check_branch
      %30 = sbr.rel (0) target = $region13
    $region12: #{cnn_forward.1} parent=1 // pred_region
      %s32 = ssub.s32 16, 16
      %33 = vsyncadd [#allocation5], %s32
      %s35 = sshll.u32 %s2, 4
      %s36 = int_to_ptr.vmem [resolvable:$true] %s35
      %38 = dma.vmem_to_smem %s36, 16, [#allocation4], [#allocation5]
    $region13: #{cnn_forward.1} parent=1 // pred_fallthru
      _
    // Predicated region
    $region14: #{cnn_forward.1} parent=1 // pred_check
      _
    $region15: #{cnn_forward.1} parent=1 // pred_check_branch
      %40 = sbr.rel (0) target = $region17
    $region16: #{cnn_forward.1} parent=1 // pred_region
      %s42 = ssub.s32 256, 256
      %43 = vsyncadd [#allocation5], %s42
      %s44 = sshll.u32 %s3, 4
      %s45 = int_to_ptr.vmem [resolvable:$true] %s44
      %50 = dma.vmem_to_smem %s45, 256, [#allocation6], [#allocation5], 128, 128, 8
    $region17: #{cnn_forward.1} parent=1 // pred_fallthru
      _
    // Predicated region
    $region18: #{cnn_forward.1} parent=1 // pred_check
      _
    $region19: #{cnn_forward.1} parent=1 // pred_check_branch
      %52 = sbr.rel (0) target = $region21
    $region20: #{cnn_forward.1} parent=1 // pred_region
      %s54 = ssub.s32 16, 16
      %55 = vsyncadd [#allocation8], %s54
      %s57 = sshll.u32 %s4, 4
      %s58 = int_to_ptr.vmem [resolvable:$true] %s57
      %60 = dma.vmem_to_smem %s58, 16, [#allocation7], [#allocation8]
    $region21: #{cnn_forward.1} parent=1 // pred_fallthru
      _
    // Predicated region
    $region22: #{cnn_forward.1} parent=1 // pred_check
      _
    $region23: #{cnn_forward.1} parent=1 // pred_check_branch
      %62 = sbr.rel (0) target = $region25
    $region24: #{cnn_forward.1} parent=1 // pred_region
      _
    $region25: #{cnn_forward.1} parent=1 // pred_fallthru
      _
    // Predicated region
    $region26: #{cnn_forward.1} parent=1 // pred_check
      _
    $region27: #{cnn_forward.1} parent=1 // pred_check_branch
      %64 = sbr.rel (0) target = $region29
    $region28: #{cnn_forward.1} parent=1 // pred_region
      _
    $region29: #{cnn_forward.1} parent=1 // pred_fallthru
      _
    // Predicated region
    $region30: #{cnn_forward.1} parent=1 // pred_check
      _
    $region31: #{cnn_forward.1} parent=1 // pred_check_branch
      %66 = sbr.rel (0) target = $region33
    $region32: #{cnn_forward.1} parent=1 // pred_region
      _
    $region33: #{cnn_forward.1} parent=1 // pred_fallthru
      _
    // Predicated region
    $region34: #{cnn_forward.1} parent=1 // pred_check
      _
    $region35: #{cnn_forward.1} parent=1 // pred_check_branch
      %68 = sbr.rel (0) target = $region37
    $region36: #{cnn_forward.1} parent=1 // pred_region
      _
    $region37: #{cnn_forward.1} parent=1 // pred_fallthru
      _
    // Predicated region
    $region38: #{cnn_forward.1} parent=1 // pred_check
      _
    $region39: #{cnn_forward.1} parent=1 // pred_check_branch
      %70 = sbr.rel (0) target = $region41
    $region40: #{cnn_forward.1} parent=1 // pred_region
      %71 = dma.done [#allocation3], 64
    $region41: #{cnn_forward.1} parent=1 // pred_fallthru
      _
    // Predicated region
    $region42: #{cnn_forward.1} parent=1 // pred_check
      _
    $region43: #{cnn_forward.1} parent=1 // pred_check_branch
      %73 = sbr.rel (0) target = $region45
    $region44: #{cnn_forward.1} parent=1 // pred_region
      %74 = dma.done [#allocation5], 16
    $region45: #{cnn_forward.1} parent=1 // pred_fallthru
      _
    // Predicated region
    $region46: #{cnn_forward.1} parent=1 // pred_check
      _
    $region47: #{cnn_forward.1} parent=1 // pred_check_branch
      %76 = sbr.rel (0) target = $region49
    $region48: #{cnn_forward.1} parent=1 // pred_region
      %77 = dma.done [#allocation5], 256
    $region49: #{cnn_forward.1} parent=1 // pred_fallthru
      _
    // Predicated region
    $region50: #{cnn_forward.1} parent=1 // pred_check
      _
    $region51: #{cnn_forward.1} parent=1 // pred_check_branch
      %79 = sbr.rel (0) target = $region53
    $region52: #{cnn_forward.1} parent=1 // pred_region
      %80 = dma.done [#allocation8], 16
    $region53: #{cnn_forward.1} parent=1 // pred_fallthru
      _
    %81 = sfence
    %v82 = vld [vmem:[%s0] sm:$0xff]
    %v83 = vld [vmem:[%s0 + $0x8] sm:$0xff]
    %v84 = vld [vmem:[%s0 + $0x10] sm:$0xff]
    %v85 = vld [vmem:[%s0 + $0x18] sm:$0xff]
    %v86 = vld [vmem:[%s0 + $0x20] sm:$0xff]
    %v87 = vld [vmem:[%s0 + $0x28] sm:$0xff]
    %v88 = vld [vmem:[%s0 + $0x30] sm:$0xff]
    %s89 = sld [smem:[#allocation2]]
    %v90 = vstv %s89
    %v91 = vmul.f32 %v90, %v82
    %v92 = vmul.f32 %v90, %v83
    %v93 = vmul.f32 %v90, %v84
    %v94 = vmul.f32 %v90, %v85
    %v95 = vmul.f32 %v90, %v86
    %v96 = vmul.f32 %v90, %v87
    %v97 = vadd.f32 %v91, 0.0
    %v98 = vadd.f32 %v92, 0.0
    %v99 = vadd.f32 %v93, 0.0
    %v100 = vadd.f32 %v94, 0.0
    %v101 = vadd.f32 %v95, 0.0
    %v102 = vadd.f32 %v96, 0.0
    %s103 = sld [smem:[#allocation2 + $0x80]]
    %v104 = vstv %s103
    %v105 = vmul.f32 %v104, %v82
    %v106 = vmul.f32 %v104, %v83
    %v107 = vmul.f32 %v104, %v84
    %v108 = vmul.f32 %v104, %v85
    %v109 = vmul.f32 %v104, %v86
    %v110 = vmul.f32 %v104, %v87
    %v111 = vadd.f32 %v105, 0.0
    %v112 = vadd.f32 %v106, 0.0
    %v113 = vadd.f32 %v107, 0.0
    %v114 = vadd.f32 %v108, 0.0
    %v115 = vadd.f32 %v109, 0.0
    %v116 = vadd.f32 %v110, 0.0
    %s117 = sld [smem:[#allocation2 + $0x100]]
    %v118 = vstv %s117
    %v119 = vmul.f32 %v118, %v82
    %v120 = vmul.f32 %v118, %v83
    %v121 = vmul.f32 %v118, %v84
    %v122 = vmul.f32 %v118, %v85
    %v123 = vmul.f32 %v118, %v86
    %v124 = vmul.f32 %v118, %v87
    %v125 = vadd.f32 %v119, 0.0
    %v126 = vadd.f32 %v120, 0.0
    %v127 = vadd.f32 %v121, 0.0
    %v128 = vadd.f32 %v122, 0.0
    %v129 = vadd.f32 %v123, 0.0
    %v130 = vadd.f32 %v124, 0.0
    %s131 = sld [smem:[#allocation2 + $0x180]]
    %v132 = vstv %s131
    %v133 = vmul.f32 %v132, %v82
    %v134 = vmul.f32 %v132, %v83
    %v135 = vmul.f32 %v132, %v84
    %v136 = vmul.f32 %v132, %v85
    %v137 = vmul.f32 %v132, %v86
    %v138 = vmul.f32 %v132, %v87
    %v139 = vadd.f32 %v133, 0.0
    %v140 = vadd.f32 %v134, 0.0
    %v141 = vadd.f32 %v135, 0.0
    %v142 = vadd.f32 %v136, 0.0
    %v143 = vadd.f32 %v137, 0.0
    %v144 = vadd.f32 %v138, 0.0
    %s145 = sld [smem:[#allocation2 + $0x1]]
    %v146 = vstv %s145
    %v147 = vmul.f32 %v146, %v82
    %v148 = vmul.f32 %v146, %v83
    %v149 = vmul.f32 %v146, %v84
    %v150 = vmul.f32 %v146, %v85
    %v151 = vmul.f32 %v146, %v86
    %v152 = vmul.f32 %v146, %v87
    %v153 = vmul.f32 %v146, %v88
    %161 = vrot.lane.b32.xlu0 %v147, 127
    %v162 = vpop.permute.xlu0 %161
    %163 = vrot.lane.b32.xlu0 %v148, 127
    %v164 = vpop.permute.xlu0 %163
    %165 = vrot.lane.b32.xlu0 %v149, 127
    %v166 = vpop.permute.xlu0 %165
    %167 = vrot.lane.b32.xlu0 %v150, 127
    %v168 = vpop.permute.xlu0 %167
    %169 = vrot.lane.b32.xlu0 %v151, 127
    %v170 = vpop.permute.xlu0 %169
    %171 = vrot.lane.b32.xlu0 %v152, 127
    %v172 = vpop.permute.xlu0 %171
    %173 = vrot.lane.b32.xlu0 %v153, 127
    %v174 = vpop.permute.xlu0 %173
    %vm175 = vcmask 1039360
    %v176 = vsel %vm175, %v162, %v164
    %v177 = vsel %vm175, %v164, %v166
    %v178 = vsel %vm175, %v166, %v168
    %v179 = vsel %vm175, %v168, %v170
    %v180 = vsel %vm175, %v170, %v172
    %v181 = vsel %vm175, %v172, %v174
    %v188 = vadd.f32 %v97, %v176
    %v189 = vadd.f32 %v98, %v177
    %v190 = vadd.f32 %v99, %v178
    %v191 = vadd.f32 %v100, %v179
    %v192 = vadd.f32 %v101, %v180
    %v193 = vadd.f32 %v102, %v181
    %s194 = sld [smem:[#allocation2 + $0x81]]
    %v195 = vstv %s194
    %v196 = vmul.f32 %v195, %v82
    %v197 = vmul.f32 %v195, %v83
    %v198 = vmul.f32 %v195, %v84
    %v199 = vmul.f32 %v195, %v85
    %v200 = vmul.f32 %v195, %v86
    %v201 = vmul.f32 %v195, %v87
    %v202 = vmul.f32 %v195, %v88
    %210 = vrot.lane.b32.xlu0 %v196, 127
    %v211 = vpop.permute.xlu0 %210
    %212 = vrot.lane.b32.xlu0 %v197, 127
    %v213 = vpop.permute.xlu0 %212
    %214 = vrot.lane.b32.xlu0 %v198, 127
    %v215 = vpop.permute.xlu0 %214
    %216 = vrot.lane.b32.xlu0 %v199, 127
    %v217 = vpop.permute.xlu0 %216
    %218 = vrot.lane.b32.xlu0 %v200, 127
    %v219 = vpop.permute.xlu0 %218
    %220 = vrot.lane.b32.xlu0 %v201, 127
    %v221 = vpop.permute.xlu0 %220
    %222 = vrot.lane.b32.xlu0 %v202, 127
    %v223 = vpop.permute.xlu0 %222
    %v224 = vsel %vm175, %v211, %v213
    %v225 = vsel %vm175, %v213, %v215
    %v226 = vsel %vm175, %v215, %v217
    %v227 = vsel %vm175, %v217, %v219
    %v228 = vsel %vm175, %v219, %v221
    %v229 = vsel %vm175, %v221, %v223
    %v236 = vadd.f32 %v111, %v224
    %v237 = vadd.f32 %v112, %v225
    %v238 = vadd.f32 %v113, %v226
    %v239 = vadd.f32 %v114, %v227
    %v240 = vadd.f32 %v115, %v228
    %v241 = vadd.f32 %v116, %v229
    %s242 = sld [smem:[#allocation2 + $0x101]]
    %v243 = vstv %s242
    %v244 = vmul.f32 %v243, %v82
    %v245 = vmul.f32 %v243, %v83
    %v246 = vmul.f32 %v243, %v84
    %v247 = vmul.f32 %v243, %v85
    %v248 = vmul.f32 %v243, %v86
    %v249 = vmul.f32 %v243, %v87
    %v250 = vmul.f32 %v243, %v88
    %258 = vrot.lane.b32.xlu0 %v244, 127
    %v259 = vpop.permute.xlu0 %258
    %260 = vrot.lane.b32.xlu0 %v245, 127
    %v261 = vpop.permute.xlu0 %260
    %262 = vrot.lane.b32.xlu0 %v246, 127
    %v263 = vpop.permute.xlu0 %262
    %264 = vrot.lane.b32.xlu0 %v247, 127
    %v265 = vpop.permute.xlu0 %264
    %266 = vrot.lane.b32.xlu0 %v248, 127
    %v267 = vpop.permute.xlu0 %266
    %268 = vrot.lane.b32.xlu0 %v249, 127
    %v269 = vpop.permute.xlu0 %268
    %270 = vrot.lane.b32.xlu0 %v250, 127
    %v271 = vpop.permute.xlu0 %270
    %v272 = vsel %vm175, %v259, %v261
    %v273 = vsel %vm175, %v261, %v263
    %v274 = vsel %vm175, %v263, %v265
    %v275 = vsel %vm175, %v265, %v267
    %v276 = vsel %vm175, %v267, %v269
    %v277 = vsel %vm175, %v269, %v271
    %v284 = vadd.f32 %v125, %v272
    %v285 = vadd.f32 %v126, %v273
    %v286 = vadd.f32 %v127, %v274
    %v287 = vadd.f32 %v128, %v275
    %v288 = vadd.f32 %v129, %v276
    %v289 = vadd.f32 %v130, %v277
    %s290 = sld [smem:[#allocation2 + $0x181]]
    %v291 = vstv %s290
    %v292 = vmul.f32 %v291, %v82
    %v293 = vmul.f32 %v291, %v83
    %v294 = vmul.f32 %v291, %v84
    %v295 = vmul.f32 %v291, %v85
    %v296 = vmul.f32 %v291, %v86
    %v297 = vmul.f32 %v291, %v87
    %v298 = vmul.f32 %v291, %v88
    %306 = vrot.lane.b32.xlu0 %v292, 127
    %v307 = vpop.permute.xlu0 %306
    %308 = vrot.lane.b32.xlu0 %v293, 127
    %v309 = vpop.permute.xlu0 %308
    %310 = vrot.lane.b32.xlu0 %v294, 127
    %v311 = vpop.permute.xlu0 %310
    %312 = vrot.lane.b32.xlu0 %v295, 127
    %v313 = vpop.permute.xlu0 %312
    %314 = vrot.lane.b32.xlu0 %v296, 127
    %v315 = vpop.permute.xlu0 %314
    %316 = vrot.lane.b32.xlu0 %v297, 127
    %v317 = vpop.permute.xlu0 %316
    %318 = vrot.lane.b32.xlu0 %v298, 127
    %v319 = vpop.permute.xlu0 %318
    %v320 = vsel %vm175, %v307, %v309
    %v321 = vsel %vm175, %v309, %v311
    %v322 = vsel %vm175, %v311, %v313
    %v323 = vsel %vm175, %v313, %v315
    %v324 = vsel %vm175, %v315, %v317
    %v325 = vsel %vm175, %v317, %v319
    %v332 = vadd.f32 %v139, %v320
    %v333 = vadd.f32 %v140, %v321
    %v334 = vadd.f32 %v141, %v322
    %v335 = vadd.f32 %v142, %v323
    %v336 = vadd.f32 %v143, %v324
    %v337 = vadd.f32 %v144, %v325
    %s338 = sld [smem:[#allocation2 + $0x2]]
    %v339 = vstv %s338
    %v340 = vmul.f32 %v339, %v82
    %v341 = vmul.f32 %v339, %v83
    %v342 = vmul.f32 %v339, %v84
    %v343 = vmul.f32 %v339, %v85
    %v344 = vmul.f32 %v339, %v86
    %v345 = vmul.f32 %v339, %v87
    %v346 = vmul.f32 %v339, %v88
    %354 = vrot.lane.b32.xlu0 %v340, 126
    %v355 = vpop.permute.xlu0 %354
    %356 = vrot.lane.b32.xlu0 %v341, 126
    %v357 = vpop.permute.xlu0 %356
    %358 = vrot.lane.b32.xlu0 %v342, 126
    %v359 = vpop.permute.xlu0 %358
    %360 = vrot.lane.b32.xlu0 %v343, 126
    %v361 = vpop.permute.xlu0 %360
    %362 = vrot.lane.b32.xlu0 %v344, 126
    %v363 = vpop.permute.xlu0 %362
    %364 = vrot.lane.b32.xlu0 %v345, 126
    %v365 = vpop.permute.xlu0 %364
    %366 = vrot.lane.b32.xlu0 %v346, 126
    %v367 = vpop.permute.xlu0 %366
    %vm368 = vcmask 1031168
    %v369 = vsel %vm368, %v355, %v357
    %v370 = vsel %vm368, %v357, %v359
    %v371 = vsel %vm368, %v359, %v361
    %v372 = vsel %vm368, %v361, %v363
    %v373 = vsel %vm368, %v363, %v365
    %v374 = vsel %vm368, %v365, %v367
    %v381 = vadd.f32 %v188, %v369
    %v382 = vadd.f32 %v189, %v370
    %v383 = vadd.f32 %v190, %v371
    %v384 = vadd.f32 %v191, %v372
    %v385 = vadd.f32 %v192, %v373
    %v386 = vadd.f32 %v193, %v374
    %s387 = sld [smem:[#allocation2 + $0x82]]
    %v388 = vstv %s387
    %v389 = vmul.f32 %v388, %v82
    %v390 = vmul.f32 %v388, %v83
    %v391 = vmul.f32 %v388, %v84
    %v392 = vmul.f32 %v388, %v85
    %v393 = vmul.f32 %v388, %v86
    %v394 = vmul.f32 %v388, %v87
    %v395 = vmul.f32 %v388, %v88
    %403 = vrot.lane.b32.xlu0 %v389, 126
    %v404 = vpop.permute.xlu0 %403
    %405 = vrot.lane.b32.xlu0 %v390, 126
    %v406 = vpop.permute.xlu0 %405
    %407 = vrot.lane.b32.xlu0 %v391, 126
    %v408 = vpop.permute.xlu0 %407
    %409 = vrot.lane.b32.xlu0 %v392, 126
    %v410 = vpop.permute.xlu0 %409
    %411 = vrot.lane.b32.xlu0 %v393, 126
    %v412 = vpop.permute.xlu0 %411
    %413 = vrot.lane.b32.xlu0 %v394, 126
    %v414 = vpop.permute.xlu0 %413
    %415 = vrot.lane.b32.xlu0 %v395, 126
    %v416 = vpop.permute.xlu0 %415
    %v417 = vsel %vm368, %v404, %v406
    %v418 = vsel %vm368, %v406, %v408
    %v419 = vsel %vm368, %v408, %v410
    %v420 = vsel %vm368, %v410, %v412
    %v421 = vsel %vm368, %v412, %v414
    %v422 = vsel %vm368, %v414, %v416
    %v429 = vadd.f32 %v236, %v417
    %v430 = vadd.f32 %v237, %v418
    %v431 = vadd.f32 %v238, %v419
    %v432 = vadd.f32 %v239, %v420
    %v433 = vadd.f32 %v240, %v421
    %v434 = vadd.f32 %v241, %v422
    %s435 = sld [smem:[#allocation2 + $0x102]]
    %v436 = vstv %s435
    %v437 = vmul.f32 %v436, %v82
    %v438 = vmul.f32 %v436, %v83
    %v439 = vmul.f32 %v436, %v84
    %v440 = vmul.f32 %v436, %v85
    %v441 = vmul.f32 %v436, %v86
    %v442 = vmul.f32 %v436, %v87
    %v443 = vmul.f32 %v436, %v88
    %451 = vrot.lane.b32.xlu0 %v437, 126
    %v452 = vpop.permute.xlu0 %451
    %453 = vrot.lane.b32.xlu0 %v438, 126
    %v454 = vpop.permute.xlu0 %453
    %455 = vrot.lane.b32.xlu0 %v439, 126
    %v456 = vpop.permute.xlu0 %455
    %457 = vrot.lane.b32.xlu0 %v440, 126
    %v458 = vpop.permute.xlu0 %457
    %459 = vrot.lane.b32.xlu0 %v441, 126
    %v460 = vpop.permute.xlu0 %459
    %461 = vrot.lane.b32.xlu0 %v442, 126
    %v462 = vpop.permute.xlu0 %461
    %463 = vrot.lane.b32.xlu0 %v443, 126
    %v464 = vpop.permute.xlu0 %463
    %v465 = vsel %vm368, %v452, %v454
    %v466 = vsel %vm368, %v454, %v456
    %v467 = vsel %vm368, %v456, %v458
    %v468 = vsel %vm368, %v458, %v460
    %v469 = vsel %vm368, %v460, %v462
    %v470 = vsel %vm368, %v462, %v464
    %v477 = vadd.f32 %v284, %v465
    %v478 = vadd.f32 %v285, %v466
    %v479 = vadd.f32 %v286, %v467
    %v480 = vadd.f32 %v287, %v468
    %v481 = vadd.f32 %v288, %v469
    %v482 = vadd.f32 %v289, %v470
    %s483 = sld [smem:[#allocation2 + $0x182]]
    %v484 = vstv %s483
    %v485 = vmul.f32 %v484, %v82
    %v486 = vmul.f32 %v484, %v83
    %v487 = vmul.f32 %v484, %v84
    %v488 = vmul.f32 %v484, %v85
    %v489 = vmul.f32 %v484, %v86
    %v490 = vmul.f32 %v484, %v87
    %v491 = vmul.f32 %v484, %v88
    %499 = vrot.lane.b32.xlu0 %v485, 126
    %v500 = vpop.permute.xlu0 %499
    %501 = vrot.lane.b32.xlu0 %v486, 126
    %v502 = vpop.permute.xlu0 %501
    %503 = vrot.lane.b32.xlu0 %v487, 126
    %v504 = vpop.permute.xlu0 %503
    %505 = vrot.lane.b32.xlu0 %v488, 126
    %v506 = vpop.permute.xlu0 %505
    %507 = vrot.lane.b32.xlu0 %v489, 126
    %v508 = vpop.permute.xlu0 %507
    %509 = vrot.lane.b32.xlu0 %v490, 126
    %v510 = vpop.permute.xlu0 %509
    %511 = vrot.lane.b32.xlu0 %v491, 126
    %v512 = vpop.permute.xlu0 %511
    %v513 = vsel %vm368, %v500, %v502
    %v514 = vsel %vm368, %v502, %v504
    %v515 = vsel %vm368, %v504, %v506
    %v516 = vsel %vm368, %v506, %v508
    %v517 = vsel %vm368, %v508, %v510
    %v518 = vsel %vm368, %v510, %v512
    %v525 = vadd.f32 %v332, %v513
    %v526 = vadd.f32 %v333, %v514
    %v527 = vadd.f32 %v334, %v515
    %v528 = vadd.f32 %v335, %v516
    %v529 = vadd.f32 %v336, %v517
    %v530 = vadd.f32 %v337, %v518
    %s531 = sld [smem:[#allocation2 + $0x3]]
    %v532 = vstv %s531
    %v533 = vmul.f32 %v532, %v82
    %v534 = vmul.f32 %v532, %v83
    %v535 = vmul.f32 %v532, %v84
    %v536 = vmul.f32 %v532, %v85
    %v537 = vmul.f32 %v532, %v86
    %v538 = vmul.f32 %v532, %v87
    %v539 = vmul.f32 %v532, %v88
    %547 = vrot.lane.b32.xlu0 %v533, 100
    %v548 = vpop.permute.xlu0 %547
    %549 = vrot.lane.b32.xlu0 %v534, 100
    %v550 = vpop.permute.xlu0 %549
    %551 = vrot.lane.b32.xlu0 %v535, 100
    %v552 = vpop.permute.xlu0 %551
    %553 = vrot.lane.b32.xlu0 %v536, 100
    %v554 = vpop.permute.xlu0 %553
    %555 = vrot.lane.b32.xlu0 %v537, 100
    %v556 = vpop.permute.xlu0 %555
    %557 = vrot.lane.b32.xlu0 %v538, 100
    %v558 = vpop.permute.xlu0 %557
    %559 = vrot.lane.b32.xlu0 %v539, 100
    %v560 = vpop.permute.xlu0 %559
    %vm561 = vcmask 818176
    %v562 = vsel %vm561, %v548, %v550
    %v563 = vsel %vm561, %v550, %v552
    %v564 = vsel %vm561, %v552, %v554
    %v565 = vsel %vm561, %v554, %v556
    %v566 = vsel %vm561, %v556, %v558
    %v567 = vsel %vm561, %v558, %v560
    %v574 = vadd.f32 %v381, %v562
    %v575 = vadd.f32 %v382, %v563
    %v576 = vadd.f32 %v383, %v564
    %v577 = vadd.f32 %v384, %v565
    %v578 = vadd.f32 %v385, %v566
    %v579 = vadd.f32 %v386, %v567
    %s580 = sld [smem:[#allocation2 + $0x83]]
    %v581 = vstv %s580
    %v582 = vmul.f32 %v581, %v82
    %v583 = vmul.f32 %v581, %v83
    %v584 = vmul.f32 %v581, %v84
    %v585 = vmul.f32 %v581, %v85
    %v586 = vmul.f32 %v581, %v86
    %v587 = vmul.f32 %v581, %v87
    %v588 = vmul.f32 %v581, %v88
    %596 = vrot.lane.b32.xlu0 %v582, 100
    %v597 = vpop.permute.xlu0 %596
    %598 = vrot.lane.b32.xlu0 %v583, 100
    %v599 = vpop.permute.xlu0 %598
    %600 = vrot.lane.b32.xlu0 %v584, 100
    %v601 = vpop.permute.xlu0 %600
    %602 = vrot.lane.b32.xlu0 %v585, 100
    %v603 = vpop.permute.xlu0 %602
    %604 = vrot.lane.b32.xlu0 %v586, 100
    %v605 = vpop.permute.xlu0 %604
    %606 = vrot.lane.b32.xlu0 %v587, 100
    %v607 = vpop.permute.xlu0 %606
    %608 = vrot.lane.b32.xlu0 %v588, 100
    %v609 = vpop.permute.xlu0 %608
    %v610 = vsel %vm561, %v597, %v599
    %v611 = vsel %vm561, %v599, %v601
    %v612 = vsel %vm561, %v601, %v603
    %v613 = vsel %vm561, %v603, %v605
    %v614 = vsel %vm561, %v605, %v607
    %v615 = vsel %vm561, %v607, %v609
    %v622 = vadd.f32 %v429, %v610
    %v623 = vadd.f32 %v430, %v611
    %v624 = vadd.f32 %v431, %v612
    %v625 = vadd.f32 %v432, %v613
    %v626 = vadd.f32 %v433, %v614
    %v627 = vadd.f32 %v434, %v615
    %s628 = sld [smem:[#allocation2 + $0x103]]
    %v629 = vstv %s628
    %v630 = vmul.f32 %v629, %v82
    %v631 = vmul.f32 %v629, %v83
    %v632 = vmul.f32 %v629, %v84
    %v633 = vmul.f32 %v629, %v85
    %v634 = vmul.f32 %v629, %v86
    %v635 = vmul.f32 %v629, %v87
    %v636 = vmul.f32 %v629, %v88
    %644 = vrot.lane.b32.xlu0 %v630, 100
    %v645 = vpop.permute.xlu0 %644
    %646 = vrot.lane.b32.xlu0 %v631, 100
    %v647 = vpop.permute.xlu0 %646
    %648 = vrot.lane.b32.xlu0 %v632, 100
    %v649 = vpop.permute.xlu0 %648
    %650 = vrot.lane.b32.xlu0 %v633, 100
    %v651 = vpop.permute.xlu0 %650
    %652 = vrot.lane.b32.xlu0 %v634, 100
    %v653 = vpop.permute.xlu0 %652
    %654 = vrot.lane.b32.xlu0 %v635, 100
    %v655 = vpop.permute.xlu0 %654
    %656 = vrot.lane.b32.xlu0 %v636, 100
    %v657 = vpop.permute.xlu0 %656
    %v658 = vsel %vm561, %v645, %v647
    %v659 = vsel %vm561, %v647, %v649
    %v660 = vsel %vm561, %v649, %v651
    %v661 = vsel %vm561, %v651, %v653
    %v662 = vsel %vm561, %v653, %v655
    %v663 = vsel %vm561, %v655, %v657
    %v670 = vadd.f32 %v477, %v658
    %v671 = vadd.f32 %v478, %v659
    %v672 = vadd.f32 %v479, %v660
    %v673 = vadd.f32 %v480, %v661
    %v674 = vadd.f32 %v481, %v662
    %v675 = vadd.f32 %v482, %v663
    %s676 = sld [smem:[#allocation2 + $0x183]]
    %v677 = vstv %s676
    %v678 = vmul.f32 %v677, %v82
    %v679 = vmul.f32 %v677, %v83
    %v680 = vmul.f32 %v677, %v84
    %v681 = vmul.f32 %v677, %v85
    %v682 = vmul.f32 %v677, %v86
    %v683 = vmul.f32 %v677, %v87
    %v684 = vmul.f32 %v677, %v88
    %692 = vrot.lane.b32.xlu0 %v678, 100
    %v693 = vpop.permute.xlu0 %692
    %694 = vrot.lane.b32.xlu0 %v679, 100
    %v695 = vpop.permute.xlu0 %694
    %696 = vrot.lane.b32.xlu0 %v680, 100
    %v697 = vpop.permute.xlu0 %696
    %698 = vrot.lane.b32.xlu0 %v681, 100
    %v699 = vpop.permute.xlu0 %698
    %700 = vrot.lane.b32.xlu0 %v682, 100
    %v701 = vpop.permute.xlu0 %700
    %702 = vrot.lane.b32.xlu0 %v683, 100
    %v703 = vpop.permute.xlu0 %702
    %704 = vrot.lane.b32.xlu0 %v684, 100
    %v705 = vpop.permute.xlu0 %704
    %v706 = vsel %vm561, %v693, %v695
    %v707 = vsel %vm561, %v695, %v697
    %v708 = vsel %vm561, %v697, %v699
    %v709 = vsel %vm561, %v699, %v701
    %v710 = vsel %vm561, %v701, %v703
    %v711 = vsel %vm561, %v703, %v705
    %v718 = vadd.f32 %v525, %v706
    %v719 = vadd.f32 %v526, %v707
    %v720 = vadd.f32 %v527, %v708
    %v721 = vadd.f32 %v528, %v709
    %v722 = vadd.f32 %v529, %v710
    %v723 = vadd.f32 %v530, %v711
    %s724 = sld [smem:[#allocation2 + $0x4]]
    %v725 = vstv %s724
    %v726 = vmul.f32 %v725, %v82
    %v727 = vmul.f32 %v725, %v83
    %v728 = vmul.f32 %v725, %v84
    %v729 = vmul.f32 %v725, %v85
    %v730 = vmul.f32 %v725, %v86
    %v731 = vmul.f32 %v725, %v87
    %v732 = vmul.f32 %v725, %v88
    %740 = vrot.lane.b32.xlu0 %v726, 99
    %v741 = vpop.permute.xlu0 %740
    %742 = vrot.lane.b32.xlu0 %v727, 99
    %v743 = vpop.permute.xlu0 %742
    %744 = vrot.lane.b32.xlu0 %v728, 99
    %v745 = vpop.permute.xlu0 %744
    %746 = vrot.lane.b32.xlu0 %v729, 99
    %v747 = vpop.permute.xlu0 %746
    %748 = vrot.lane.b32.xlu0 %v730, 99
    %v749 = vpop.permute.xlu0 %748
    %750 = vrot.lane.b32.xlu0 %v731, 99
    %v751 = vpop.permute.xlu0 %750
    %752 = vrot.lane.b32.xlu0 %v732, 99
    %v753 = vpop.permute.xlu0 %752
    %vm754 = vcmask 809984
    %v755 = vsel %vm754, %v741, %v743
    %v756 = vsel %vm754, %v743, %v745
    %v757 = vsel %vm754, %v745, %v747
    %v758 = vsel %vm754, %v747, %v749
    %v759 = vsel %vm754, %v749, %v751
    %v760 = vsel %vm754, %v751, %v753
    %v767 = vadd.f32 %v574, %v755
    %v768 = vadd.f32 %v575, %v756
    %v769 = vadd.f32 %v576, %v757
    %v770 = vadd.f32 %v577, %v758
    %v771 = vadd.f32 %v578, %v759
    %v772 = vadd.f32 %v579, %v760
    %s773 = sld [smem:[#allocation2 + $0x84]]
    %v774 = vstv %s773
    %v775 = vmul.f32 %v774, %v82
    %v776 = vmul.f32 %v774, %v83
    %v777 = vmul.f32 %v774, %v84
    %v778 = vmul.f32 %v774, %v85
    %v779 = vmul.f32 %v774, %v86
    %v780 = vmul.f32 %v774, %v87
    %v781 = vmul.f32 %v774, %v88
    %789 = vrot.lane.b32.xlu0 %v775, 99
    %v790 = vpop.permute.xlu0 %789
    %791 = vrot.lane.b32.xlu0 %v776, 99
    %v792 = vpop.permute.xlu0 %791
    %793 = vrot.lane.b32.xlu0 %v777, 99
    %v794 = vpop.permute.xlu0 %793
    %795 = vrot.lane.b32.xlu0 %v778, 99
    %v796 = vpop.permute.xlu0 %795
    %797 = vrot.lane.b32.xlu0 %v779, 99
    %v798 = vpop.permute.xlu0 %797
    %799 = vrot.lane.b32.xlu0 %v780, 99
    %v800 = vpop.permute.xlu0 %799
    %801 = vrot.lane.b32.xlu0 %v781, 99
    %v802 = vpop.permute.xlu0 %801
    %v803 = vsel %vm754, %v790, %v792
    %v804 = vsel %vm754, %v792, %v794
    %v805 = vsel %vm754, %v794, %v796
    %v806 = vsel %vm754, %v796, %v798
    %v807 = vsel %vm754, %v798, %v800
    %v808 = vsel %vm754, %v800, %v802
    %v815 = vadd.f32 %v622, %v803
    %v816 = vadd.f32 %v623, %v804
    %v817 = vadd.f32 %v624, %v805
    %v818 = vadd.f32 %v625, %v806
    %v819 = vadd.f32 %v626, %v807
    %v820 = vadd.f32 %v627, %v808
    %s821 = sld [smem:[#allocation2 + $0x104]]
    %v822 = vstv %s821
    %v823 = vmul.f32 %v822, %v82
    %v824 = vmul.f32 %v822, %v83
    %v825 = vmul.f32 %v822, %v84
    %v826 = vmul.f32 %v822, %v85
    %v827 = vmul.f32 %v822, %v86
    %v828 = vmul.f32 %v822, %v87
    %v829 = vmul.f32 %v822, %v88
    %837 = vrot.lane.b32.xlu0 %v823, 99
    %v838 = vpop.permute.xlu0 %837
    %839 = vrot.lane.b32.xlu0 %v824, 99
    %v840 = vpop.permute.xlu0 %839
    %841 = vrot.lane.b32.xlu0 %v825, 99
    %v842 = vpop.permute.xlu0 %841
    %843 = vrot.lane.b32.xlu0 %v826, 99
    %v844 = vpop.permute.xlu0 %843
    %845 = vrot.lane.b32.xlu0 %v827, 99
    %v846 = vpop.permute.xlu0 %845
    %847 = vrot.lane.b32.xlu0 %v828, 99
    %v848 = vpop.permute.xlu0 %847
    %849 = vrot.lane.b32.xlu0 %v829, 99
    %v850 = vpop.permute.xlu0 %849
    %v851 = vsel %vm754, %v838, %v840
    %v852 = vsel %vm754, %v840, %v842
    %v853 = vsel %vm754, %v842, %v844
    %v854 = vsel %vm754, %v844, %v846
    %v855 = vsel %vm754, %v846, %v848
    %v856 = vsel %vm754, %v848, %v850
    %v863 = vadd.f32 %v670, %v851
    %v864 = vadd.f32 %v671, %v852
    %v865 = vadd.f32 %v672, %v853
    %v866 = vadd.f32 %v673, %v854
    %v867 = vadd.f32 %v674, %v855
    %v868 = vadd.f32 %v675, %v856
    %s869 = sld [smem:[#allocation2 + $0x184]]
    %v870 = vstv %s869
    %v871 = vmul.f32 %v870, %v82
    %v872 = vmul.f32 %v870, %v83
    %v873 = vmul.f32 %v870, %v84
    %v874 = vmul.f32 %v870, %v85
    %v875 = vmul.f32 %v870, %v86
    %v876 = vmul.f32 %v870, %v87
    %v877 = vmul.f32 %v870, %v88
    %885 = vrot.lane.b32.xlu0 %v871, 99
    %v886 = vpop.permute.xlu0 %885
    %887 = vrot.lane.b32.xlu0 %v872, 99
    %v888 = vpop.permute.xlu0 %887
    %889 = vrot.lane.b32.xlu0 %v873, 99
    %v890 = vpop.permute.xlu0 %889
    %891 = vrot.lane.b32.xlu0 %v874, 99
    %v892 = vpop.permute.xlu0 %891
    %893 = vrot.lane.b32.xlu0 %v875, 99
    %v894 = vpop.permute.xlu0 %893
    %895 = vrot.lane.b32.xlu0 %v876, 99
    %v896 = vpop.permute.xlu0 %895
    %897 = vrot.lane.b32.xlu0 %v877, 99
    %v898 = vpop.permute.xlu0 %897
    %v899 = vsel %vm754, %v886, %v888
    %v900 = vsel %vm754, %v888, %v890
    %v901 = vsel %vm754, %v890, %v892
    %v902 = vsel %vm754, %v892, %v894
    %v903 = vsel %vm754, %v894, %v896
    %v904 = vsel %vm754, %v896, %v898
    %v911 = vadd.f32 %v718, %v899
    %v912 = vadd.f32 %v719, %v900
    %v913 = vadd.f32 %v720, %v901
    %v914 = vadd.f32 %v721, %v902
    %v915 = vadd.f32 %v722, %v903
    %v916 = vadd.f32 %v723, %v904
    %s917 = sld [smem:[#allocation2 + $0x5]]
    %v918 = vstv %s917
    %v919 = vmul.f32 %v918, %v82
    %v920 = vmul.f32 %v918, %v83
    %v921 = vmul.f32 %v918, %v84
    %v922 = vmul.f32 %v918, %v85
    %v923 = vmul.f32 %v918, %v86
    %v924 = vmul.f32 %v918, %v87
    %v925 = vmul.f32 %v918, %v88
    %933 = vrot.lane.b32.xlu0 %v919, 98
    %v934 = vpop.permute.xlu0 %933
    %935 = vrot.lane.b32.xlu0 %v920, 98
    %v936 = vpop.permute.xlu0 %935
    %937 = vrot.lane.b32.xlu0 %v921, 98
    %v938 = vpop.permute.xlu0 %937
    %939 = vrot.lane.b32.xlu0 %v922, 98
    %v940 = vpop.permute.xlu0 %939
    %941 = vrot.lane.b32.xlu0 %v923, 98
    %v942 = vpop.permute.xlu0 %941
    %943 = vrot.lane.b32.xlu0 %v924, 98
    %v944 = vpop.permute.xlu0 %943
    %945 = vrot.lane.b32.xlu0 %v925, 98
    %v946 = vpop.permute.xlu0 %945
    %vm947 = vcmask 801792
    %v948 = vsel %vm947, %v934, %v936
    %v949 = vsel %vm947, %v936, %v938
    %v950 = vsel %vm947, %v938, %v940
    %v951 = vsel %vm947, %v940, %v942
    %v952 = vsel %vm947, %v942, %v944
    %v953 = vsel %vm947, %v944, %v946
    %v960 = vadd.f32 %v767, %v948
    %v961 = vadd.f32 %v768, %v949
    %v962 = vadd.f32 %v769, %v950
    %v963 = vadd.f32 %v770, %v951
    %v964 = vadd.f32 %v771, %v952
    %v965 = vadd.f32 %v772, %v953
    %s966 = sld [smem:[#allocation2 + $0x85]]
    %v967 = vstv %s966
    %v968 = vmul.f32 %v967, %v82
    %v969 = vmul.f32 %v967, %v83
    %v970 = vmul.f32 %v967, %v84
    %v971 = vmul.f32 %v967, %v85
    %v972 = vmul.f32 %v967, %v86
    %v973 = vmul.f32 %v967, %v87
    %v974 = vmul.f32 %v967, %v88
    %982 = vrot.lane.b32.xlu0 %v968, 98
    %v983 = vpop.permute.xlu0 %982
    %984 = vrot.lane.b32.xlu0 %v969, 98
    %v985 = vpop.permute.xlu0 %984
    %986 = vrot.lane.b32.xlu0 %v970, 98
    %v987 = vpop.permute.xlu0 %986
    %988 = vrot.lane.b32.xlu0 %v971, 98
    %v989 = vpop.permute.xlu0 %988
    %990 = vrot.lane.b32.xlu0 %v972, 98
    %v991 = vpop.permute.xlu0 %990
    %992 = vrot.lane.b32.xlu0 %v973, 98
    %v993 = vpop.permute.xlu0 %992
    %994 = vrot.lane.b32.xlu0 %v974, 98
    %v995 = vpop.permute.xlu0 %994
    %v996 = vsel %vm947, %v983, %v985
    %v997 = vsel %vm947, %v985, %v987
    %v998 = vsel %vm947, %v987, %v989
    %v999 = vsel %vm947, %v989, %v991
    %v1000 = vsel %vm947, %v991, %v993
    %v1001 = vsel %vm947, %v993, %v995
    %v1008 = vadd.f32 %v815, %v996
    %v1009 = vadd.f32 %v816, %v997
    %v1010 = vadd.f32 %v817, %v998
    %v1011 = vadd.f32 %v818, %v999
    %v1012 = vadd.f32 %v819, %v1000
    %v1013 = vadd.f32 %v820, %v1001
    %s1014 = sld [smem:[#allocation2 + $0x105]]
    %v1015 = vstv %s1014
    %v1016 = vmul.f32 %v1015, %v82
    %v1017 = vmul.f32 %v1015, %v83
    %v1018 = vmul.f32 %v1015, %v84
    %v1019 = vmul.f32 %v1015, %v85
    %v1020 = vmul.f32 %v1015, %v86
    %v1021 = vmul.f32 %v1015, %v87
    %v1022 = vmul.f32 %v1015, %v88
    %1030 = vrot.lane.b32.xlu0 %v1016, 98
    %v1031 = vpop.permute.xlu0 %1030
    %1032 = vrot.lane.b32.xlu0 %v1017, 98
    %v1033 = vpop.permute.xlu0 %1032
    %1034 = vrot.lane.b32.xlu0 %v1018, 98
    %v1035 = vpop.permute.xlu0 %1034
    %1036 = vrot.lane.b32.xlu0 %v1019, 98
    %v1037 = vpop.permute.xlu0 %1036
    %1038 = vrot.lane.b32.xlu0 %v1020, 98
    %v1039 = vpop.permute.xlu0 %1038
    %1040 = vrot.lane.b32.xlu0 %v1021, 98
    %v1041 = vpop.permute.xlu0 %1040
    %1042 = vrot.lane.b32.xlu0 %v1022, 98
    %v1043 = vpop.permute.xlu0 %1042
    %v1044 = vsel %vm947, %v1031, %v1033
    %v1045 = vsel %vm947, %v1033, %v1035
    %v1046 = vsel %vm947, %v1035, %v1037
    %v1047 = vsel %vm947, %v1037, %v1039
    %v1048 = vsel %vm947, %v1039, %v1041
    %v1049 = vsel %vm947, %v1041, %v1043
    %v1056 = vadd.f32 %v863, %v1044
    %v1057 = vadd.f32 %v864, %v1045
    %v1058 = vadd.f32 %v865, %v1046
    %v1059 = vadd.f32 %v866, %v1047
    %v1060 = vadd.f32 %v867, %v1048
    %v1061 = vadd.f32 %v868, %v1049
    %s1062 = sld [smem:[#allocation2 + $0x185]]
    %v1063 = vstv %s1062
    %v1064 = vmul.f32 %v1063, %v82
    %v1065 = vmul.f32 %v1063, %v83
    %v1066 = vmul.f32 %v1063, %v84
    %v1067 = vmul.f32 %v1063, %v85
    %v1068 = vmul.f32 %v1063, %v86
    %v1069 = vmul.f32 %v1063, %v87
    %v1070 = vmul.f32 %v1063, %v88
    %1078 = vrot.lane.b32.xlu0 %v1064, 98
    %v1079 = vpop.permute.xlu0 %1078
    %1080 = vrot.lane.b32.xlu0 %v1065, 98
    %v1081 = vpop.permute.xlu0 %1080
    %1082 = vrot.lane.b32.xlu0 %v1066, 98
    %v1083 = vpop.permute.xlu0 %1082
    %1084 = vrot.lane.b32.xlu0 %v1067, 98
    %v1085 = vpop.permute.xlu0 %1084
    %1086 = vrot.lane.b32.xlu0 %v1068, 98
    %v1087 = vpop.permute.xlu0 %1086
    %1088 = vrot.lane.b32.xlu0 %v1069, 98
    %v1089 = vpop.permute.xlu0 %1088
    %1090 = vrot.lane.b32.xlu0 %v1070, 98
    %v1091 = vpop.permute.xlu0 %1090
    %v1092 = vsel %vm947, %v1079, %v1081
    %v1093 = vsel %vm947, %v1081, %v1083
    %v1094 = vsel %vm947, %v1083, %v1085
    %v1095 = vsel %vm947, %v1085, %v1087
    %v1096 = vsel %vm947, %v1087, %v1089
    %v1097 = vsel %vm947, %v1089, %v1091
    %v1104 = vadd.f32 %v911, %v1092
    %v1105 = vadd.f32 %v912, %v1093
    %v1106 = vadd.f32 %v913, %v1094
    %v1107 = vadd.f32 %v914, %v1095
    %v1108 = vadd.f32 %v915, %v1096
    %v1109 = vadd.f32 %v916, %v1097
    %s1110 = sld [smem:[#allocation2 + $0x6]]
    %v1111 = vstv %s1110
    %v1112 = vmul.f32 %v1111, %v82
    %v1113 = vmul.f32 %v1111, %v83
    %v1114 = vmul.f32 %v1111, %v84
    %v1115 = vmul.f32 %v1111, %v85
    %v1116 = vmul.f32 %v1111, %v86
    %v1117 = vmul.f32 %v1111, %v87
    %v1118 = vmul.f32 %v1111, %v88
    %1126 = vrot.lane.b32.xlu0 %v1112, 72
    %v1127 = vpop.permute.xlu0 %1126
    %1128 = vrot.lane.b32.xlu0 %v1113, 72
    %v1129 = vpop.permute.xlu0 %1128
    %1130 = vrot.lane.b32.xlu0 %v1114, 72
    %v1131 = vpop.permute.xlu0 %1130
    %1132 = vrot.lane.b32.xlu0 %v1115, 72
    %v1133 = vpop.permute.xlu0 %1132
    %1134 = vrot.lane.b32.xlu0 %v1116, 72
    %v1135 = vpop.permute.xlu0 %1134
    %1136 = vrot.lane.b32.xlu0 %v1117, 72
    %v1137 = vpop.permute.xlu0 %1136
    %1138 = vrot.lane.b32.xlu0 %v1118, 72
    %v1139 = vpop.permute.xlu0 %1138
    %vm1140 = vcmask 588800
    %v1141 = vsel %vm1140, %v1127, %v1129
    %v1142 = vsel %vm1140, %v1129, %v1131
    %v1143 = vsel %vm1140, %v1131, %v1133
    %v1144 = vsel %vm1140, %v1133, %v1135
    %v1145 = vsel %vm1140, %v1135, %v1137
    %v1146 = vsel %vm1140, %v1137, %v1139
    %v1153 = vadd.f32 %v960, %v1141
    %v1154 = vadd.f32 %v961, %v1142
    %v1155 = vadd.f32 %v962, %v1143
    %v1156 = vadd.f32 %v963, %v1144
    %v1157 = vadd.f32 %v964, %v1145
    %v1158 = vadd.f32 %v965, %v1146
    %s1159 = sld [smem:[#allocation2 + $0x86]]
    %v1160 = vstv %s1159
    %v1161 = vmul.f32 %v1160, %v82
    %v1162 = vmul.f32 %v1160, %v83
    %v1163 = vmul.f32 %v1160, %v84
    %v1164 = vmul.f32 %v1160, %v85
    %v1165 = vmul.f32 %v1160, %v86
    %v1166 = vmul.f32 %v1160, %v87
    %v1167 = vmul.f32 %v1160, %v88
    %1175 = vrot.lane.b32.xlu0 %v1161, 72
    %v1176 = vpop.permute.xlu0 %1175
    %1177 = vrot.lane.b32.xlu0 %v1162, 72
    %v1178 = vpop.permute.xlu0 %1177
    %1179 = vrot.lane.b32.xlu0 %v1163, 72
    %v1180 = vpop.permute.xlu0 %1179
    %1181 = vrot.lane.b32.xlu0 %v1164, 72
    %v1182 = vpop.permute.xlu0 %1181
    %1183 = vrot.lane.b32.xlu0 %v1165, 72
    %v1184 = vpop.permute.xlu0 %1183
    %1185 = vrot.lane.b32.xlu0 %v1166, 72
    %v1186 = vpop.permute.xlu0 %1185
    %1187 = vrot.lane.b32.xlu0 %v1167, 72
    %v1188 = vpop.permute.xlu0 %1187
    %v1189 = vsel %vm1140, %v1176, %v1178
    %v1190 = vsel %vm1140, %v1178, %v1180
    %v1191 = vsel %vm1140, %v1180, %v1182
    %v1192 = vsel %vm1140, %v1182, %v1184
    %v1193 = vsel %vm1140, %v1184, %v1186
    %v1194 = vsel %vm1140, %v1186, %v1188
    %v1201 = vadd.f32 %v1008, %v1189
    %v1202 = vadd.f32 %v1009, %v1190
    %v1203 = vadd.f32 %v1010, %v1191
    %v1204 = vadd.f32 %v1011, %v1192
    %v1205 = vadd.f32 %v1012, %v1193
    %v1206 = vadd.f32 %v1013, %v1194
    %s1207 = sld [smem:[#allocation2 + $0x106]]
    %v1208 = vstv %s1207
    %v1209 = vmul.f32 %v1208, %v82
    %v1210 = vmul.f32 %v1208, %v83
    %v1211 = vmul.f32 %v1208, %v84
    %v1212 = vmul.f32 %v1208, %v85
    %v1213 = vmul.f32 %v1208, %v86
    %v1214 = vmul.f32 %v1208, %v87
    %v1215 = vmul.f32 %v1208, %v88
    %1223 = vrot.lane.b32.xlu0 %v1209, 72
    %v1224 = vpop.permute.xlu0 %1223
    %1225 = vrot.lane.b32.xlu0 %v1210, 72
    %v1226 = vpop.permute.xlu0 %1225
    %1227 = vrot.lane.b32.xlu0 %v1211, 72
    %v1228 = vpop.permute.xlu0 %1227
    %1229 = vrot.lane.b32.xlu0 %v1212, 72
    %v1230 = vpop.permute.xlu0 %1229
    %1231 = vrot.lane.b32.xlu0 %v1213, 72
    %v1232 = vpop.permute.xlu0 %1231
    %1233 = vrot.lane.b32.xlu0 %v1214, 72
    %v1234 = vpop.permute.xlu0 %1233
    %1235 = vrot.lane.b32.xlu0 %v1215, 72
    %v1236 = vpop.permute.xlu0 %1235
    %v1237 = vsel %vm1140, %v1224, %v1226
    %v1238 = vsel %vm1140, %v1226, %v1228
    %v1239 = vsel %vm1140, %v1228, %v1230
    %v1240 = vsel %vm1140, %v1230, %v1232
    %v1241 = vsel %vm1140, %v1232, %v1234
    %v1242 = vsel %vm1140, %v1234, %v1236
    %v1249 = vadd.f32 %v1056, %v1237
    %v1250 = vadd.f32 %v1057, %v1238
    %v1251 = vadd.f32 %v1058, %v1239
    %v1252 = vadd.f32 %v1059, %v1240
    %v1253 = vadd.f32 %v1060, %v1241
    %v1254 = vadd.f32 %v1061, %v1242
    %s1255 = sld [smem:[#allocation2 + $0x186]]
    %v1256 = vstv %s1255
    %v1257 = vmul.f32 %v1256, %v82
    %v1258 = vmul.f32 %v1256, %v83
    %v1259 = vmul.f32 %v1256, %v84
    %v1260 = vmul.f32 %v1256, %v85
    %v1261 = vmul.f32 %v1256, %v86
    %v1262 = vmul.f32 %v1256, %v87
    %v1263 = vmul.f32 %v1256, %v88
    %1271 = vrot.lane.b32.xlu0 %v1257, 72
    %v1272 = vpop.permute.xlu0 %1271
    %1273 = vrot.lane.b32.xlu0 %v1258, 72
    %v1274 = vpop.permute.xlu0 %1273
    %1275 = vrot.lane.b32.xlu0 %v1259, 72
    %v1276 = vpop.permute.xlu0 %1275
    %1277 = vrot.lane.b32.xlu0 %v1260, 72
    %v1278 = vpop.permute.xlu0 %1277
    %1279 = vrot.lane.b32.xlu0 %v1261, 72
    %v1280 = vpop.permute.xlu0 %1279
    %1281 = vrot.lane.b32.xlu0 %v1262, 72
    %v1282 = vpop.permute.xlu0 %1281
    %1283 = vrot.lane.b32.xlu0 %v1263, 72
    %v1284 = vpop.permute.xlu0 %1283
    %v1285 = vsel %vm1140, %v1272, %v1274
    %v1286 = vsel %vm1140, %v1274, %v1276
    %v1287 = vsel %vm1140, %v1276, %v1278
    %v1288 = vsel %vm1140, %v1278, %v1280
    %v1289 = vsel %vm1140, %v1280, %v1282
    %v1290 = vsel %vm1140, %v1282, %v1284
    %v1297 = vadd.f32 %v1104, %v1285
    %v1298 = vadd.f32 %v1105, %v1286
    %v1299 = vadd.f32 %v1106, %v1287
    %v1300 = vadd.f32 %v1107, %v1288
    %v1301 = vadd.f32 %v1108, %v1289
    %v1302 = vadd.f32 %v1109, %v1290
    %s1303 = sld [smem:[#allocation2 + $0x7]]
    %v1304 = vstv %s1303
    %v1305 = vmul.f32 %v1304, %v82
    %v1306 = vmul.f32 %v1304, %v83
    %v1307 = vmul.f32 %v1304, %v84
    %v1308 = vmul.f32 %v1304, %v85
    %v1309 = vmul.f32 %v1304, %v86
    %v1310 = vmul.f32 %v1304, %v87
    %v1311 = vmul.f32 %v1304, %v88
    %1319 = vrot.lane.b32.xlu0 %v1305, 71
    %v1320 = vpop.permute.xlu0 %1319
    %1321 = vrot.lane.b32.xlu0 %v1306, 71
    %v1322 = vpop.permute.xlu0 %1321
    %1323 = vrot.lane.b32.xlu0 %v1307, 71
    %v1324 = vpop.permute.xlu0 %1323
    %1325 = vrot.lane.b32.xlu0 %v1308, 71
    %v1326 = vpop.permute.xlu0 %1325
    %1327 = vrot.lane.b32.xlu0 %v1309, 71
    %v1328 = vpop.permute.xlu0 %1327
    %1329 = vrot.lane.b32.xlu0 %v1310, 71
    %v1330 = vpop.permute.xlu0 %1329
    %1331 = vrot.lane.b32.xlu0 %v1311, 71
    %v1332 = vpop.permute.xlu0 %1331
    %vm1333 = vcmask 580608
    %v1334 = vsel %vm1333, %v1320, %v1322
    %v1335 = vsel %vm1333, %v1322, %v1324
    %v1336 = vsel %vm1333, %v1324, %v1326
    %v1337 = vsel %vm1333, %v1326, %v1328
    %v1338 = vsel %vm1333, %v1328, %v1330
    %v1339 = vsel %vm1333, %v1330, %v1332
    %v1346 = vadd.f32 %v1153, %v1334
    %v1347 = vadd.f32 %v1154, %v1335
    %v1348 = vadd.f32 %v1155, %v1336
    %v1349 = vadd.f32 %v1156, %v1337
    %v1350 = vadd.f32 %v1157, %v1338
    %v1351 = vadd.f32 %v1158, %v1339
    %s1352 = sld [smem:[#allocation2 + $0x87]]
    %v1353 = vstv %s1352
    %v1354 = vmul.f32 %v1353, %v82
    %v1355 = vmul.f32 %v1353, %v83
    %v1356 = vmul.f32 %v1353, %v84
    %v1357 = vmul.f32 %v1353, %v85
    %v1358 = vmul.f32 %v1353, %v86
    %v1359 = vmul.f32 %v1353, %v87
    %v1360 = vmul.f32 %v1353, %v88
    %1368 = vrot.lane.b32.xlu0 %v1354, 71
    %v1369 = vpop.permute.xlu0 %1368
    %1370 = vrot.lane.b32.xlu0 %v1355, 71
    %v1371 = vpop.permute.xlu0 %1370
    %1372 = vrot.lane.b32.xlu0 %v1356, 71
    %v1373 = vpop.permute.xlu0 %1372
    %1374 = vrot.lane.b32.xlu0 %v1357, 71
    %v1375 = vpop.permute.xlu0 %1374
    %1376 = vrot.lane.b32.xlu0 %v1358, 71
    %v1377 = vpop.permute.xlu0 %1376
    %1378 = vrot.lane.b32.xlu0 %v1359, 71
    %v1379 = vpop.permute.xlu0 %1378
    %1380 = vrot.lane.b32.xlu0 %v1360, 71
    %v1381 = vpop.permute.xlu0 %1380
    %v1382 = vsel %vm1333, %v1369, %v1371
    %v1383 = vsel %vm1333, %v1371, %v1373
    %v1384 = vsel %vm1333, %v1373, %v1375
    %v1385 = vsel %vm1333, %v1375, %v1377
    %v1386 = vsel %vm1333, %v1377, %v1379
    %v1387 = vsel %vm1333, %v1379, %v1381
    %v1394 = vadd.f32 %v1201, %v1382
    %v1395 = vadd.f32 %v1202, %v1383
    %v1396 = vadd.f32 %v1203, %v1384
    %v1397 = vadd.f32 %v1204, %v1385
    %v1398 = vadd.f32 %v1205, %v1386
    %v1399 = vadd.f32 %v1206, %v1387
    %s1400 = sld [smem:[#allocation2 + $0x107]]
    %v1401 = vstv %s1400
    %v1402 = vmul.f32 %v1401, %v82
    %v1403 = vmul.f32 %v1401, %v83
    %v1404 = vmul.f32 %v1401, %v84
    %v1405 = vmul.f32 %v1401, %v85
    %v1406 = vmul.f32 %v1401, %v86
    %v1407 = vmul.f32 %v1401, %v87
    %v1408 = vmul.f32 %v1401, %v88
    %1416 = vrot.lane.b32.xlu0 %v1402, 71
    %v1417 = vpop.permute.xlu0 %1416
    %1418 = vrot.lane.b32.xlu0 %v1403, 71
    %v1419 = vpop.permute.xlu0 %1418
    %1420 = vrot.lane.b32.xlu0 %v1404, 71
    %v1421 = vpop.permute.xlu0 %1420
    %1422 = vrot.lane.b32.xlu0 %v1405, 71
    %v1423 = vpop.permute.xlu0 %1422
    %1424 = vrot.lane.b32.xlu0 %v1406, 71
    %v1425 = vpop.permute.xlu0 %1424
    %1426 = vrot.lane.b32.xlu0 %v1407, 71
    %v1427 = vpop.permute.xlu0 %1426
    %1428 = vrot.lane.b32.xlu0 %v1408, 71
    %v1429 = vpop.permute.xlu0 %1428
    %v1430 = vsel %vm1333, %v1417, %v1419
    %v1431 = vsel %vm1333, %v1419, %v1421
    %v1432 = vsel %vm1333, %v1421, %v1423
    %v1433 = vsel %vm1333, %v1423, %v1425
    %v1434 = vsel %vm1333, %v1425, %v1427
    %v1435 = vsel %vm1333, %v1427, %v1429
    %v1442 = vadd.f32 %v1249, %v1430
    %v1443 = vadd.f32 %v1250, %v1431
    %v1444 = vadd.f32 %v1251, %v1432
    %v1445 = vadd.f32 %v1252, %v1433
    %v1446 = vadd.f32 %v1253, %v1434
    %v1447 = vadd.f32 %v1254, %v1435
    %s1448 = sld [smem:[#allocation2 + $0x187]]
    %v1449 = vstv %s1448
    %v1450 = vmul.f32 %v1449, %v82
    %v1451 = vmul.f32 %v1449, %v83
    %v1452 = vmul.f32 %v1449, %v84
    %v1453 = vmul.f32 %v1449, %v85
    %v1454 = vmul.f32 %v1449, %v86
    %v1455 = vmul.f32 %v1449, %v87
    %v1456 = vmul.f32 %v1449, %v88
    %1464 = vrot.lane.b32.xlu0 %v1450, 71
    %v1465 = vpop.permute.xlu0 %1464
    %1466 = vrot.lane.b32.xlu0 %v1451, 71
    %v1467 = vpop.permute.xlu0 %1466
    %1468 = vrot.lane.b32.xlu0 %v1452, 71
    %v1469 = vpop.permute.xlu0 %1468
    %1470 = vrot.lane.b32.xlu0 %v1453, 71
    %v1471 = vpop.permute.xlu0 %1470
    %1472 = vrot.lane.b32.xlu0 %v1454, 71
    %v1473 = vpop.permute.xlu0 %1472
    %1474 = vrot.lane.b32.xlu0 %v1455, 71
    %v1475 = vpop.permute.xlu0 %1474
    %1476 = vrot.lane.b32.xlu0 %v1456, 71
    %v1477 = vpop.permute.xlu0 %1476
    %v1478 = vsel %vm1333, %v1465, %v1467
    %v1479 = vsel %vm1333, %v1467, %v1469
    %v1480 = vsel %vm1333, %v1469, %v1471
    %v1481 = vsel %vm1333, %v1471, %v1473
    %v1482 = vsel %vm1333, %v1473, %v1475
    %v1483 = vsel %vm1333, %v1475, %v1477
    %v1490 = vadd.f32 %v1297, %v1478
    %v1491 = vadd.f32 %v1298, %v1479
    %v1492 = vadd.f32 %v1299, %v1480
    %v1493 = vadd.f32 %v1300, %v1481
    %v1494 = vadd.f32 %v1301, %v1482
    %v1495 = vadd.f32 %v1302, %v1483
    %s1496 = sld [smem:[#allocation2 + $0x8]]
    %v1497 = vstv %s1496
    %v1498 = vmul.f32 %v1497, %v82
    %v1499 = vmul.f32 %v1497, %v83
    %v1500 = vmul.f32 %v1497, %v84
    %v1501 = vmul.f32 %v1497, %v85
    %v1502 = vmul.f32 %v1497, %v86
    %v1503 = vmul.f32 %v1497, %v87
    %v1504 = vmul.f32 %v1497, %v88
    %1512 = vrot.lane.b32.xlu0 %v1498, 70
    %v1513 = vpop.permute.xlu0 %1512
    %1514 = vrot.lane.b32.xlu0 %v1499, 70
    %v1515 = vpop.permute.xlu0 %1514
    %1516 = vrot.lane.b32.xlu0 %v1500, 70
    %v1517 = vpop.permute.xlu0 %1516
    %1518 = vrot.lane.b32.xlu0 %v1501, 70
    %v1519 = vpop.permute.xlu0 %1518
    %1520 = vrot.lane.b32.xlu0 %v1502, 70
    %v1521 = vpop.permute.xlu0 %1520
    %1522 = vrot.lane.b32.xlu0 %v1503, 70
    %v1523 = vpop.permute.xlu0 %1522
    %1524 = vrot.lane.b32.xlu0 %v1504, 70
    %v1525 = vpop.permute.xlu0 %1524
    %vm1526 = vcmask 572416
    %v1527 = vsel %vm1526, %v1513, %v1515
    %v1528 = vsel %vm1526, %v1515, %v1517
    %v1529 = vsel %vm1526, %v1517, %v1519
    %v1530 = vsel %vm1526, %v1519, %v1521
    %v1531 = vsel %vm1526, %v1521, %v1523
    %v1532 = vsel %vm1526, %v1523, %v1525
    %v1539 = vadd.f32 %v1346, %v1527
    %v1540 = vadd.f32 %v1347, %v1528
    %v1541 = vadd.f32 %v1348, %v1529
    %v1542 = vadd.f32 %v1349, %v1530
    %v1543 = vadd.f32 %v1350, %v1531
    %v1544 = vadd.f32 %v1351, %v1532
    %s1545 = sld [smem:[#allocation2 + $0x88]]
    %v1546 = vstv %s1545
    %v1547 = vmul.f32 %v1546, %v82
    %v1548 = vmul.f32 %v1546, %v83
    %v1549 = vmul.f32 %v1546, %v84
    %v1550 = vmul.f32 %v1546, %v85
    %v1551 = vmul.f32 %v1546, %v86
    %v1552 = vmul.f32 %v1546, %v87
    %v1553 = vmul.f32 %v1546, %v88
    %1561 = vrot.lane.b32.xlu0 %v1547, 70
    %v1562 = vpop.permute.xlu0 %1561
    %1563 = vrot.lane.b32.xlu0 %v1548, 70
    %v1564 = vpop.permute.xlu0 %1563
    %1565 = vrot.lane.b32.xlu0 %v1549, 70
    %v1566 = vpop.permute.xlu0 %1565
    %1567 = vrot.lane.b32.xlu0 %v1550, 70
    %v1568 = vpop.permute.xlu0 %1567
    %1569 = vrot.lane.b32.xlu0 %v1551, 70
    %v1570 = vpop.permute.xlu0 %1569
    %1571 = vrot.lane.b32.xlu0 %v1552, 70
    %v1572 = vpop.permute.xlu0 %1571
    %1573 = vrot.lane.b32.xlu0 %v1553, 70
    %v1574 = vpop.permute.xlu0 %1573
    %v1575 = vsel %vm1526, %v1562, %v1564
    %v1576 = vsel %vm1526, %v1564, %v1566
    %v1577 = vsel %vm1526, %v1566, %v1568
    %v1578 = vsel %vm1526, %v1568, %v1570
    %v1579 = vsel %vm1526, %v1570, %v1572
    %v1580 = vsel %vm1526, %v1572, %v1574
    %v1587 = vadd.f32 %v1394, %v1575
    %v1588 = vadd.f32 %v1395, %v1576
    %v1589 = vadd.f32 %v1396, %v1577
    %v1590 = vadd.f32 %v1397, %v1578
    %v1591 = vadd.f32 %v1398, %v1579
    %v1592 = vadd.f32 %v1399, %v1580
    %s1593 = sld [smem:[#allocation2 + $0x108]]
    %v1594 = vstv %s1593
    %v1595 = vmul.f32 %v1594, %v82
    %v1596 = vmul.f32 %v1594, %v83
    %v1597 = vmul.f32 %v1594, %v84
    %v1598 = vmul.f32 %v1594, %v85
    %v1599 = vmul.f32 %v1594, %v86
    %v1600 = vmul.f32 %v1594, %v87
    %v1601 = vmul.f32 %v1594, %v88
    %1609 = vrot.lane.b32.xlu0 %v1595, 70
    %v1610 = vpop.permute.xlu0 %1609
    %1611 = vrot.lane.b32.xlu0 %v1596, 70
    %v1612 = vpop.permute.xlu0 %1611
    %1613 = vrot.lane.b32.xlu0 %v1597, 70
    %v1614 = vpop.permute.xlu0 %1613
    %1615 = vrot.lane.b32.xlu0 %v1598, 70
    %v1616 = vpop.permute.xlu0 %1615
    %1617 = vrot.lane.b32.xlu0 %v1599, 70
    %v1618 = vpop.permute.xlu0 %1617
    %1619 = vrot.lane.b32.xlu0 %v1600, 70
    %v1620 = vpop.permute.xlu0 %1619
    %1621 = vrot.lane.b32.xlu0 %v1601, 70
    %v1622 = vpop.permute.xlu0 %1621
    %v1623 = vsel %vm1526, %v1610, %v1612
    %v1624 = vsel %vm1526, %v1612, %v1614
    %v1625 = vsel %vm1526, %v1614, %v1616
    %v1626 = vsel %vm1526, %v1616, %v1618
    %v1627 = vsel %vm1526, %v1618, %v1620
    %v1628 = vsel %vm1526, %v1620, %v1622
    %v1635 = vadd.f32 %v1442, %v1623
    %v1636 = vadd.f32 %v1443, %v1624
    %v1637 = vadd.f32 %v1444, %v1625
    %v1638 = vadd.f32 %v1445, %v1626
    %v1639 = vadd.f32 %v1446, %v1627
    %v1640 = vadd.f32 %v1447, %v1628
    %s1641 = sld [smem:[#allocation2 + $0x188]]
    %v1642 = vstv %s1641
    %v1643 = vmul.f32 %v1642, %v82
    %v1644 = vmul.f32 %v1642, %v83
    %v1645 = vmul.f32 %v1642, %v84
    %v1646 = vmul.f32 %v1642, %v85
    %v1647 = vmul.f32 %v1642, %v86
    %v1648 = vmul.f32 %v1642, %v87
    %v1649 = vmul.f32 %v1642, %v88
    %1657 = vrot.lane.b32.xlu0 %v1643, 70
    %v1658 = vpop.permute.xlu0 %1657
    %1659 = vrot.lane.b32.xlu0 %v1644, 70
    %v1660 = vpop.permute.xlu0 %1659
    %1661 = vrot.lane.b32.xlu0 %v1645, 70
    %v1662 = vpop.permute.xlu0 %1661
    %1663 = vrot.lane.b32.xlu0 %v1646, 70
    %v1664 = vpop.permute.xlu0 %1663
    %1665 = vrot.lane.b32.xlu0 %v1647, 70
    %v1666 = vpop.permute.xlu0 %1665
    %1667 = vrot.lane.b32.xlu0 %v1648, 70
    %v1668 = vpop.permute.xlu0 %1667
    %1669 = vrot.lane.b32.xlu0 %v1649, 70
    %v1670 = vpop.permute.xlu0 %1669
    %v1671 = vsel %vm1526, %v1658, %v1660
    %v1672 = vsel %vm1526, %v1660, %v1662
    %v1673 = vsel %vm1526, %v1662, %v1664
    %v1674 = vsel %vm1526, %v1664, %v1666
    %v1675 = vsel %vm1526, %v1666, %v1668
    %v1676 = vsel %vm1526, %v1668, %v1670
    %v1683 = vadd.f32 %v1490, %v1671
    %v1684 = vadd.f32 %v1491, %v1672
    %v1685 = vadd.f32 %v1492, %v1673
    %v1686 = vadd.f32 %v1493, %v1674
    %v1687 = vadd.f32 %v1494, %v1675
    %v1688 = vadd.f32 %v1495, %v1676
    %s1689 = sld [smem:[#allocation4]]
    %v1690 = vstv %s1689
    %v1691 = vadd.f32 %v1539, %v1690
    %v1692 = vadd.f32 %v1540, %v1690
    %v1693 = vadd.f32 %v1541, %v1690
    %v1694 = vadd.f32 %v1542, %v1690
    %v1695 = vadd.f32 %v1543, %v1690
    %v1696 = vadd.f32 %v1544, %v1690
    %v1697 = vmax.f32 %v1691, 0.0
    %v1698 = vmax.f32 %v1692, 0.0
    %v1699 = vmax.f32 %v1693, 0.0
    %v1700 = vmax.f32 %v1694, 0.0
    %v1701 = vmax.f32 %v1695, 0.0
    %v1702 = vmax.f32 %v1696, 0.0
    %s1703 = sld [smem:[#allocation4 + $0x1]]
    %v1704 = vstv %s1703
    %v1705 = vadd.f32 %v1587, %v1704
    %v1706 = vadd.f32 %v1588, %v1704
    %v1707 = vadd.f32 %v1589, %v1704
    %v1708 = vadd.f32 %v1590, %v1704
    %v1709 = vadd.f32 %v1591, %v1704
    %v1710 = vadd.f32 %v1592, %v1704
    %v1711 = vmax.f32 %v1705, 0.0
    %v1712 = vmax.f32 %v1706, 0.0
    %v1713 = vmax.f32 %v1707, 0.0
    %v1714 = vmax.f32 %v1708, 0.0
    %v1715 = vmax.f32 %v1709, 0.0
    %v1716 = vmax.f32 %v1710, 0.0
    %s1717 = sld [smem:[#allocation4 + $0x2]]
    %v1718 = vstv %s1717
    %v1719 = vadd.f32 %v1635, %v1718
    %v1720 = vadd.f32 %v1636, %v1718
    %v1721 = vadd.f32 %v1637, %v1718
    %v1722 = vadd.f32 %v1638, %v1718
    %v1723 = vadd.f32 %v1639, %v1718
    %v1724 = vadd.f32 %v1640, %v1718
    %v1725 = vmax.f32 %v1719, 0.0
    %v1726 = vmax.f32 %v1720, 0.0
    %v1727 = vmax.f32 %v1721, 0.0
    %v1728 = vmax.f32 %v1722, 0.0
    %v1729 = vmax.f32 %v1723, 0.0
    %v1730 = vmax.f32 %v1724, 0.0
    %s1731 = sld [smem:[#allocation4 + $0x3]]
    %v1732 = vstv %s1731
    %v1733 = vadd.f32 %v1683, %v1732
    %v1734 = vadd.f32 %v1684, %v1732
    %v1735 = vadd.f32 %v1685, %v1732
    %v1736 = vadd.f32 %v1686, %v1732
    %v1737 = vadd.f32 %v1687, %v1732
    %v1738 = vadd.f32 %v1688, %v1732
    %v1739 = vmax.f32 %v1733, 0.0
    %v1740 = vmax.f32 %v1734, 0.0
    %v1741 = vmax.f32 %v1735, 0.0
    %v1742 = vmax.f32 %v1736, 0.0
    %v1743 = vmax.f32 %v1737, 0.0
    %v1744 = vmax.f32 %v1738, 0.0
    %s1745 = sld [smem:[#allocation6]]
    %v1746 = vstv %s1745
    %v1747 = vmul.f32 %v1746, %v1697
    %v1748 = vmul.f32 %v1746, %v1698
    %v1749 = vmul.f32 %v1746, %v1699
    %v1750 = vmul.f32 %v1746, %v1700
    %v1751 = vmul.f32 %v1746, %v1701
    %v1752 = vmul.f32 %v1746, %v1702
    %v1753 = vadd.f32 %v1747, 0.0
    %v1754 = vadd.f32 %v1748, 0.0
    %v1755 = vadd.f32 %v1749, 0.0
    %v1756 = vadd.f32 %v1750, 0.0
    %v1757 = vadd.f32 %v1751, 0.0
    %v1758 = vadd.f32 %v1752, 0.0
    %s1759 = sld [smem:[#allocation6 + $0x200]]
    %v1760 = vstv %s1759
    %v1761 = vmul.f32 %v1760, %v1697
    %v1762 = vmul.f32 %v1760, %v1698
    %v1763 = vmul.f32 %v1760, %v1699
    %v1764 = vmul.f32 %v1760, %v1700
    %v1765 = vmul.f32 %v1760, %v1701
    %v1766 = vmul.f32 %v1760, %v1702
    %v1767 = vadd.f32 %v1761, 0.0
    %v1768 = vadd.f32 %v1762, 0.0
    %v1769 = vadd.f32 %v1763, 0.0
    %v1770 = vadd.f32 %v1764, 0.0
    %v1771 = vadd.f32 %v1765, 0.0
    %v1772 = vadd.f32 %v1766, 0.0
    %s1773 = sld [smem:[#allocation6 + $0x400]]
    %v1774 = vstv %s1773
    %v1775 = vmul.f32 %v1774, %v1697
    %v1776 = vmul.f32 %v1774, %v1698
    %v1777 = vmul.f32 %v1774, %v1699
    %v1778 = vmul.f32 %v1774, %v1700
    %v1779 = vmul.f32 %v1774, %v1701
    %v1780 = vmul.f32 %v1774, %v1702
    %v1781 = vadd.f32 %v1775, 0.0
    %v1782 = vadd.f32 %v1776, 0.0
    %v1783 = vadd.f32 %v1777, 0.0
    %v1784 = vadd.f32 %v1778, 0.0
    %v1785 = vadd.f32 %v1779, 0.0
    %v1786 = vadd.f32 %v1780, 0.0
    %s1787 = sld [smem:[#allocation6 + $0x600]]
    %v1788 = vstv %s1787
    %v1789 = vmul.f32 %v1788, %v1697
    %v1790 = vmul.f32 %v1788, %v1698
    %v1791 = vmul.f32 %v1788, %v1699
    %v1792 = vmul.f32 %v1788, %v1700
    %v1793 = vmul.f32 %v1788, %v1701
    %v1794 = vmul.f32 %v1788, %v1702
    %v1795 = vadd.f32 %v1789, 0.0
    %v1796 = vadd.f32 %v1790, 0.0
    %v1797 = vadd.f32 %v1791, 0.0
    %v1798 = vadd.f32 %v1792, 0.0
    %v1799 = vadd.f32 %v1793, 0.0
    %v1800 = vadd.f32 %v1794, 0.0
    %s1801 = sld [smem:[#allocation6 + $0x1]]
    %v1802 = vstv %s1801
    %v1803 = vmul.f32 %v1802, %v1697
    %v1804 = vmul.f32 %v1802, %v1698
    %v1805 = vmul.f32 %v1802, %v1699
    %v1806 = vmul.f32 %v1802, %v1700
    %v1807 = vmul.f32 %v1802, %v1701
    %v1808 = vmul.f32 %v1802, %v1702
    %1815 = vrot.lane.b32.xlu0 %v1803, 127
    %v1816 = vpop.permute.xlu0 %1815
    %1817 = vrot.lane.b32.xlu0 %v1804, 127
    %v1818 = vpop.permute.xlu0 %1817
    %1819 = vrot.lane.b32.xlu0 %v1805, 127
    %v1820 = vpop.permute.xlu0 %1819
    %1821 = vrot.lane.b32.xlu0 %v1806, 127
    %v1822 = vpop.permute.xlu0 %1821
    %1823 = vrot.lane.b32.xlu0 %v1807, 127
    %v1824 = vpop.permute.xlu0 %1823
    %1825 = vrot.lane.b32.xlu0 %v1808, 127
    %v1826 = vpop.permute.xlu0 %1825
    %v1827 = vsel %vm175, %v1816, %v1818
    %v1828 = vsel %vm175, %v1818, %v1820
    %v1829 = vsel %vm175, %v1820, %v1822
    %v1830 = vsel %vm175, %v1822, %v1824
    %v1831 = vsel %vm175, %v1824, %v1826
    %v1838 = vadd.f32 %v1753, %v1827
    %v1839 = vadd.f32 %v1754, %v1828
    %v1840 = vadd.f32 %v1755, %v1829
    %v1841 = vadd.f32 %v1756, %v1830
    %v1842 = vadd.f32 %v1757, %v1831
    %v1843 = vadd.f32 %v1758, %v1826
    %s1844 = sld [smem:[#allocation6 + $0x201]]
    %v1845 = vstv %s1844
    %v1846 = vmul.f32 %v1845, %v1697
    %v1847 = vmul.f32 %v1845, %v1698
    %v1848 = vmul.f32 %v1845, %v1699
    %v1849 = vmul.f32 %v1845, %v1700
    %v1850 = vmul.f32 %v1845, %v1701
    %v1851 = vmul.f32 %v1845, %v1702
    %1858 = vrot.lane.b32.xlu0 %v1846, 127
    %v1859 = vpop.permute.xlu0 %1858
    %1860 = vrot.lane.b32.xlu0 %v1847, 127
    %v1861 = vpop.permute.xlu0 %1860
    %1862 = vrot.lane.b32.xlu0 %v1848, 127
    %v1863 = vpop.permute.xlu0 %1862
    %1864 = vrot.lane.b32.xlu0 %v1849, 127
    %v1865 = vpop.permute.xlu0 %1864
    %1866 = vrot.lane.b32.xlu0 %v1850, 127
    %v1867 = vpop.permute.xlu0 %1866
    %1868 = vrot.lane.b32.xlu0 %v1851, 127
    %v1869 = vpop.permute.xlu0 %1868
    %v1870 = vsel %vm175, %v1859, %v1861
    %v1871 = vsel %vm175, %v1861, %v1863
    %v1872 = vsel %vm175, %v1863, %v1865
    %v1873 = vsel %vm175, %v1865, %v1867
    %v1874 = vsel %vm175, %v1867, %v1869
    %v1881 = vadd.f32 %v1767, %v1870
    %v1882 = vadd.f32 %v1768, %v1871
    %v1883 = vadd.f32 %v1769, %v1872
    %v1884 = vadd.f32 %v1770, %v1873
    %v1885 = vadd.f32 %v1771, %v1874
    %v1886 = vadd.f32 %v1772, %v1869
    %s1887 = sld [smem:[#allocation6 + $0x401]]
    %v1888 = vstv %s1887
    %v1889 = vmul.f32 %v1888, %v1697
    %v1890 = vmul.f32 %v1888, %v1698
    %v1891 = vmul.f32 %v1888, %v1699
    %v1892 = vmul.f32 %v1888, %v1700
    %v1893 = vmul.f32 %v1888, %v1701
    %v1894 = vmul.f32 %v1888, %v1702
    %1901 = vrot.lane.b32.xlu0 %v1889, 127
    %v1902 = vpop.permute.xlu0 %1901
    %1903 = vrot.lane.b32.xlu0 %v1890, 127
    %v1904 = vpop.permute.xlu0 %1903
    %1905 = vrot.lane.b32.xlu0 %v1891, 127
    %v1906 = vpop.permute.xlu0 %1905
    %1907 = vrot.lane.b32.xlu0 %v1892, 127
    %v1908 = vpop.permute.xlu0 %1907
    %1909 = vrot.lane.b32.xlu0 %v1893, 127
    %v1910 = vpop.permute.xlu0 %1909
    %1911 = vrot.lane.b32.xlu0 %v1894, 127
    %v1912 = vpop.permute.xlu0 %1911
    %v1913 = vsel %vm175, %v1902, %v1904
    %v1914 = vsel %vm175, %v1904, %v1906
    %v1915 = vsel %vm175, %v1906, %v1908
    %v1916 = vsel %vm175, %v1908, %v1910
    %v1917 = vsel %vm175, %v1910, %v1912
    %v1924 = vadd.f32 %v1781, %v1913
    %v1925 = vadd.f32 %v1782, %v1914
    %v1926 = vadd.f32 %v1783, %v1915
    %v1927 = vadd.f32 %v1784, %v1916
    %v1928 = vadd.f32 %v1785, %v1917
    %v1929 = vadd.f32 %v1786, %v1912
    %s1930 = sld [smem:[#allocation6 + $0x601]]
    %v1931 = vstv %s1930
    %v1932 = vmul.f32 %v1931, %v1697
    %v1933 = vmul.f32 %v1931, %v1698
    %v1934 = vmul.f32 %v1931, %v1699
    %v1935 = vmul.f32 %v1931, %v1700
    %v1936 = vmul.f32 %v1931, %v1701
    %v1937 = vmul.f32 %v1931, %v1702
    %1944 = vrot.lane.b32.xlu0 %v1932, 127
    %v1945 = vpop.permute.xlu0 %1944
    %1946 = vrot.lane.b32.xlu0 %v1933, 127
    %v1947 = vpop.permute.xlu0 %1946
    %1948 = vrot.lane.b32.xlu0 %v1934, 127
    %v1949 = vpop.permute.xlu0 %1948
    %1950 = vrot.lane.b32.xlu0 %v1935, 127
    %v1951 = vpop.permute.xlu0 %1950
    %1952 = vrot.lane.b32.xlu0 %v1936, 127
    %v1953 = vpop.permute.xlu0 %1952
    %1954 = vrot.lane.b32.xlu0 %v1937, 127
    %v1955 = vpop.permute.xlu0 %1954
    %v1956 = vsel %vm175, %v1945, %v1947
    %v1957 = vsel %vm175, %v1947, %v1949
    %v1958 = vsel %vm175, %v1949, %v1951
    %v1959 = vsel %vm175, %v1951, %v1953
    %v1960 = vsel %vm175, %v1953, %v1955
    %v1967 = vadd.f32 %v1795, %v1956
    %v1968 = vadd.f32 %v1796, %v1957
    %v1969 = vadd.f32 %v1797, %v1958
    %v1970 = vadd.f32 %v1798, %v1959
    %v1971 = vadd.f32 %v1799, %v1960
    %v1972 = vadd.f32 %v1800, %v1955
    %s1973 = sld [smem:[#allocation6 + $0x2]]
    %v1974 = vstv %s1973
    %v1975 = vmul.f32 %v1974, %v1697
    %v1976 = vmul.f32 %v1974, %v1698
    %v1977 = vmul.f32 %v1974, %v1699
    %v1978 = vmul.f32 %v1974, %v1700
    %v1979 = vmul.f32 %v1974, %v1701
    %v1980 = vmul.f32 %v1974, %v1702
    %1987 = vrot.lane.b32.xlu0 %v1975, 126
    %v1988 = vpop.permute.xlu0 %1987
    %1989 = vrot.lane.b32.xlu0 %v1976, 126
    %v1990 = vpop.permute.xlu0 %1989
    %1991 = vrot.lane.b32.xlu0 %v1977, 126
    %v1992 = vpop.permute.xlu0 %1991
    %1993 = vrot.lane.b32.xlu0 %v1978, 126
    %v1994 = vpop.permute.xlu0 %1993
    %1995 = vrot.lane.b32.xlu0 %v1979, 126
    %v1996 = vpop.permute.xlu0 %1995
    %1997 = vrot.lane.b32.xlu0 %v1980, 126
    %v1998 = vpop.permute.xlu0 %1997
    %v1999 = vsel %vm368, %v1988, %v1990
    %v2000 = vsel %vm368, %v1990, %v1992
    %v2001 = vsel %vm368, %v1992, %v1994
    %v2002 = vsel %vm368, %v1994, %v1996
    %v2003 = vsel %vm368, %v1996, %v1998
    %v2010 = vadd.f32 %v1838, %v1999
    %v2011 = vadd.f32 %v1839, %v2000
    %v2012 = vadd.f32 %v1840, %v2001
    %v2013 = vadd.f32 %v1841, %v2002
    %v2014 = vadd.f32 %v1842, %v2003
    %v2015 = vadd.f32 %v1843, %v1998
    %s2016 = sld [smem:[#allocation6 + $0x202]]
    %v2017 = vstv %s2016
    %v2018 = vmul.f32 %v2017, %v1697
    %v2019 = vmul.f32 %v2017, %v1698
    %v2020 = vmul.f32 %v2017, %v1699
    %v2021 = vmul.f32 %v2017, %v1700
    %v2022 = vmul.f32 %v2017, %v1701
    %v2023 = vmul.f32 %v2017, %v1702
    %2030 = vrot.lane.b32.xlu0 %v2018, 126
    %v2031 = vpop.permute.xlu0 %2030
    %2032 = vrot.lane.b32.xlu0 %v2019, 126
    %v2033 = vpop.permute.xlu0 %2032
    %2034 = vrot.lane.b32.xlu0 %v2020, 126
    %v2035 = vpop.permute.xlu0 %2034
    %2036 = vrot.lane.b32.xlu0 %v2021, 126
    %v2037 = vpop.permute.xlu0 %2036
    %2038 = vrot.lane.b32.xlu0 %v2022, 126
    %v2039 = vpop.permute.xlu0 %2038
    %2040 = vrot.lane.b32.xlu0 %v2023, 126
    %v2041 = vpop.permute.xlu0 %2040
    %v2042 = vsel %vm368, %v2031, %v2033
    %v2043 = vsel %vm368, %v2033, %v2035
    %v2044 = vsel %vm368, %v2035, %v2037
    %v2045 = vsel %vm368, %v2037, %v2039
    %v2046 = vsel %vm368, %v2039, %v2041
    %v2053 = vadd.f32 %v1881, %v2042
    %v2054 = vadd.f32 %v1882, %v2043
    %v2055 = vadd.f32 %v1883, %v2044
    %v2056 = vadd.f32 %v1884, %v2045
    %v2057 = vadd.f32 %v1885, %v2046
    %v2058 = vadd.f32 %v1886, %v2041
    %s2059 = sld [smem:[#allocation6 + $0x402]]
    %v2060 = vstv %s2059
    %v2061 = vmul.f32 %v2060, %v1697
    %v2062 = vmul.f32 %v2060, %v1698
    %v2063 = vmul.f32 %v2060, %v1699
    %v2064 = vmul.f32 %v2060, %v1700
    %v2065 = vmul.f32 %v2060, %v1701
    %v2066 = vmul.f32 %v2060, %v1702
    %2073 = vrot.lane.b32.xlu0 %v2061, 126
    %v2074 = vpop.permute.xlu0 %2073
    %2075 = vrot.lane.b32.xlu0 %v2062, 126
    %v2076 = vpop.permute.xlu0 %2075
    %2077 = vrot.lane.b32.xlu0 %v2063, 126
    %v2078 = vpop.permute.xlu0 %2077
    %2079 = vrot.lane.b32.xlu0 %v2064, 126
    %v2080 = vpop.permute.xlu0 %2079
    %2081 = vrot.lane.b32.xlu0 %v2065, 126
    %v2082 = vpop.permute.xlu0 %2081
    %2083 = vrot.lane.b32.xlu0 %v2066, 126
    %v2084 = vpop.permute.xlu0 %2083
    %v2085 = vsel %vm368, %v2074, %v2076
    %v2086 = vsel %vm368, %v2076, %v2078
    %v2087 = vsel %vm368, %v2078, %v2080
    %v2088 = vsel %vm368, %v2080, %v2082
    %v2089 = vsel %vm368, %v2082, %v2084
    %v2096 = vadd.f32 %v1924, %v2085
    %v2097 = vadd.f32 %v1925, %v2086
    %v2098 = vadd.f32 %v1926, %v2087
    %v2099 = vadd.f32 %v1927, %v2088
    %v2100 = vadd.f32 %v1928, %v2089
    %v2101 = vadd.f32 %v1929, %v2084
    %s2102 = sld [smem:[#allocation6 + $0x602]]
    %v2103 = vstv %s2102
    %v2104 = vmul.f32 %v2103, %v1697
    %v2105 = vmul.f32 %v2103, %v1698
    %v2106 = vmul.f32 %v2103, %v1699
    %v2107 = vmul.f32 %v2103, %v1700
    %v2108 = vmul.f32 %v2103, %v1701
    %v2109 = vmul.f32 %v2103, %v1702
    %2116 = vrot.lane.b32.xlu0 %v2104, 126
    %v2117 = vpop.permute.xlu0 %2116
    %2118 = vrot.lane.b32.xlu0 %v2105, 126
    %v2119 = vpop.permute.xlu0 %2118
    %2120 = vrot.lane.b32.xlu0 %v2106, 126
    %v2121 = vpop.permute.xlu0 %2120
    %2122 = vrot.lane.b32.xlu0 %v2107, 126
    %v2123 = vpop.permute.xlu0 %2122
    %2124 = vrot.lane.b32.xlu0 %v2108, 126
    %v2125 = vpop.permute.xlu0 %2124
    %2126 = vrot.lane.b32.xlu0 %v2109, 126
    %v2127 = vpop.permute.xlu0 %2126
    %v2128 = vsel %vm368, %v2117, %v2119
    %v2129 = vsel %vm368, %v2119, %v2121
    %v2130 = vsel %vm368, %v2121, %v2123
    %v2131 = vsel %vm368, %v2123, %v2125
    %v2132 = vsel %vm368, %v2125, %v2127
    %v2139 = vadd.f32 %v1967, %v2128
    %v2140 = vadd.f32 %v1968, %v2129
    %v2141 = vadd.f32 %v1969, %v2130
    %v2142 = vadd.f32 %v1970, %v2131
    %v2143 = vadd.f32 %v1971, %v2132
    %v2144 = vadd.f32 %v1972, %v2127
    %s2145 = sld [smem:[#allocation6 + $0x3]]
    %v2146 = vstv %s2145
    %v2147 = vmul.f32 %v2146, %v1697
    %v2148 = vmul.f32 %v2146, %v1698
    %v2149 = vmul.f32 %v2146, %v1699
    %v2150 = vmul.f32 %v2146, %v1700
    %v2151 = vmul.f32 %v2146, %v1701
    %v2152 = vmul.f32 %v2146, %v1702
    %2159 = vrot.lane.b32.xlu0 %v2147, 100
    %v2160 = vpop.permute.xlu0 %2159
    %2161 = vrot.lane.b32.xlu0 %v2148, 100
    %v2162 = vpop.permute.xlu0 %2161
    %2163 = vrot.lane.b32.xlu0 %v2149, 100
    %v2164 = vpop.permute.xlu0 %2163
    %2165 = vrot.lane.b32.xlu0 %v2150, 100
    %v2166 = vpop.permute.xlu0 %2165
    %2167 = vrot.lane.b32.xlu0 %v2151, 100
    %v2168 = vpop.permute.xlu0 %2167
    %2169 = vrot.lane.b32.xlu0 %v2152, 100
    %v2170 = vpop.permute.xlu0 %2169
    %v2171 = vsel %vm561, %v2160, %v2162
    %v2172 = vsel %vm561, %v2162, %v2164
    %v2173 = vsel %vm561, %v2164, %v2166
    %v2174 = vsel %vm561, %v2166, %v2168
    %v2175 = vsel %vm561, %v2168, %v2170
    %v2182 = vadd.f32 %v2010, %v2171
    %v2183 = vadd.f32 %v2011, %v2172
    %v2184 = vadd.f32 %v2012, %v2173
    %v2185 = vadd.f32 %v2013, %v2174
    %v2186 = vadd.f32 %v2014, %v2175
    %v2187 = vadd.f32 %v2015, %v2170
    %s2188 = sld [smem:[#allocation6 + $0x203]]
    %v2189 = vstv %s2188
    %v2190 = vmul.f32 %v2189, %v1697
    %v2191 = vmul.f32 %v2189, %v1698
    %v2192 = vmul.f32 %v2189, %v1699
    %v2193 = vmul.f32 %v2189, %v1700
    %v2194 = vmul.f32 %v2189, %v1701
    %v2195 = vmul.f32 %v2189, %v1702
    %2202 = vrot.lane.b32.xlu0 %v2190, 100
    %v2203 = vpop.permute.xlu0 %2202
    %2204 = vrot.lane.b32.xlu0 %v2191, 100
    %v2205 = vpop.permute.xlu0 %2204
    %2206 = vrot.lane.b32.xlu0 %v2192, 100
    %v2207 = vpop.permute.xlu0 %2206
    %2208 = vrot.lane.b32.xlu0 %v2193, 100
    %v2209 = vpop.permute.xlu0 %2208
    %2210 = vrot.lane.b32.xlu0 %v2194, 100
    %v2211 = vpop.permute.xlu0 %2210
    %2212 = vrot.lane.b32.xlu0 %v2195, 100
    %v2213 = vpop.permute.xlu0 %2212
    %v2214 = vsel %vm561, %v2203, %v2205
    %v2215 = vsel %vm561, %v2205, %v2207
    %v2216 = vsel %vm561, %v2207, %v2209
    %v2217 = vsel %vm561, %v2209, %v2211
    %v2218 = vsel %vm561, %v2211, %v2213
    %v2225 = vadd.f32 %v2053, %v2214
    %v2226 = vadd.f32 %v2054, %v2215
    %v2227 = vadd.f32 %v2055, %v2216
    %v2228 = vadd.f32 %v2056, %v2217
    %v2229 = vadd.f32 %v2057, %v2218
    %v2230 = vadd.f32 %v2058, %v2213
    %s2231 = sld [smem:[#allocation6 + $0x403]]
    %v2232 = vstv %s2231
    %v2233 = vmul.f32 %v2232, %v1697
    %v2234 = vmul.f32 %v2232, %v1698
    %v2235 = vmul.f32 %v2232, %v1699
    %v2236 = vmul.f32 %v2232, %v1700
    %v2237 = vmul.f32 %v2232, %v1701
    %v2238 = vmul.f32 %v2232, %v1702
    %2245 = vrot.lane.b32.xlu0 %v2233, 100
    %v2246 = vpop.permute.xlu0 %2245
    %2247 = vrot.lane.b32.xlu0 %v2234, 100
    %v2248 = vpop.permute.xlu0 %2247
    %2249 = vrot.lane.b32.xlu0 %v2235, 100
    %v2250 = vpop.permute.xlu0 %2249
    %2251 = vrot.lane.b32.xlu0 %v2236, 100
    %v2252 = vpop.permute.xlu0 %2251
    %2253 = vrot.lane.b32.xlu0 %v2237, 100
    %v2254 = vpop.permute.xlu0 %2253
    %2255 = vrot.lane.b32.xlu0 %v2238, 100
    %v2256 = vpop.permute.xlu0 %2255
    %v2257 = vsel %vm561, %v2246, %v2248
    %v2258 = vsel %vm561, %v2248, %v2250
    %v2259 = vsel %vm561, %v2250, %v2252
    %v2260 = vsel %vm561, %v2252, %v2254
    %v2261 = vsel %vm561, %v2254, %v2256
    %v2268 = vadd.f32 %v2096, %v2257
    %v2269 = vadd.f32 %v2097, %v2258
    %v2270 = vadd.f32 %v2098, %v2259
    %v2271 = vadd.f32 %v2099, %v2260
    %v2272 = vadd.f32 %v2100, %v2261
    %v2273 = vadd.f32 %v2101, %v2256
    %s2274 = sld [smem:[#allocation6 + $0x603]]
    %v2275 = vstv %s2274
    %v2276 = vmul.f32 %v2275, %v1697
    %v2277 = vmul.f32 %v2275, %v1698
    %v2278 = vmul.f32 %v2275, %v1699
    %v2279 = vmul.f32 %v2275, %v1700
    %v2280 = vmul.f32 %v2275, %v1701
    %v2281 = vmul.f32 %v2275, %v1702
    %2288 = vrot.lane.b32.xlu0 %v2276, 100
    %v2289 = vpop.permute.xlu0 %2288
    %2290 = vrot.lane.b32.xlu0 %v2277, 100
    %v2291 = vpop.permute.xlu0 %2290
    %2292 = vrot.lane.b32.xlu0 %v2278, 100
    %v2293 = vpop.permute.xlu0 %2292
    %2294 = vrot.lane.b32.xlu0 %v2279, 100
    %v2295 = vpop.permute.xlu0 %2294
    %2296 = vrot.lane.b32.xlu0 %v2280, 100
    %v2297 = vpop.permute.xlu0 %2296
    %2298 = vrot.lane.b32.xlu0 %v2281, 100
    %v2299 = vpop.permute.xlu0 %2298
    %v2300 = vsel %vm561, %v2289, %v2291
    %v2301 = vsel %vm561, %v2291, %v2293
    %v2302 = vsel %vm561, %v2293, %v2295
    %v2303 = vsel %vm561, %v2295, %v2297
    %v2304 = vsel %vm561, %v2297, %v2299
    %v2311 = vadd.f32 %v2139, %v2300
    %v2312 = vadd.f32 %v2140, %v2301
    %v2313 = vadd.f32 %v2141, %v2302
    %v2314 = vadd.f32 %v2142, %v2303
    %v2315 = vadd.f32 %v2143, %v2304
    %v2316 = vadd.f32 %v2144, %v2299
    %s2317 = sld [smem:[#allocation6 + $0x4]]
    %v2318 = vstv %s2317
    %v2319 = vmul.f32 %v2318, %v1697
    %v2320 = vmul.f32 %v2318, %v1698
    %v2321 = vmul.f32 %v2318, %v1699
    %v2322 = vmul.f32 %v2318, %v1700
    %v2323 = vmul.f32 %v2318, %v1701
    %v2324 = vmul.f32 %v2318, %v1702
    %2331 = vrot.lane.b32.xlu0 %v2319, 99
    %v2332 = vpop.permute.xlu0 %2331
    %2333 = vrot.lane.b32.xlu0 %v2320, 99
    %v2334 = vpop.permute.xlu0 %2333
    %2335 = vrot.lane.b32.xlu0 %v2321, 99
    %v2336 = vpop.permute.xlu0 %2335
    %2337 = vrot.lane.b32.xlu0 %v2322, 99
    %v2338 = vpop.permute.xlu0 %2337
    %2339 = vrot.lane.b32.xlu0 %v2323, 99
    %v2340 = vpop.permute.xlu0 %2339
    %2341 = vrot.lane.b32.xlu0 %v2324, 99
    %v2342 = vpop.permute.xlu0 %2341
    %v2343 = vsel %vm754, %v2332, %v2334
    %v2344 = vsel %vm754, %v2334, %v2336
    %v2345 = vsel %vm754, %v2336, %v2338
    %v2346 = vsel %vm754, %v2338, %v2340
    %v2347 = vsel %vm754, %v2340, %v2342
    %v2354 = vadd.f32 %v2182, %v2343
    %v2355 = vadd.f32 %v2183, %v2344
    %v2356 = vadd.f32 %v2184, %v2345
    %v2357 = vadd.f32 %v2185, %v2346
    %v2358 = vadd.f32 %v2186, %v2347
    %v2359 = vadd.f32 %v2187, %v2342
    %s2360 = sld [smem:[#allocation6 + $0x204]]
    %v2361 = vstv %s2360
    %v2362 = vmul.f32 %v2361, %v1697
    %v2363 = vmul.f32 %v2361, %v1698
    %v2364 = vmul.f32 %v2361, %v1699
    %v2365 = vmul.f32 %v2361, %v1700
    %v2366 = vmul.f32 %v2361, %v1701
    %v2367 = vmul.f32 %v2361, %v1702
    %2374 = vrot.lane.b32.xlu0 %v2362, 99
    %v2375 = vpop.permute.xlu0 %2374
    %2376 = vrot.lane.b32.xlu0 %v2363, 99
    %v2377 = vpop.permute.xlu0 %2376
    %2378 = vrot.lane.b32.xlu0 %v2364, 99
    %v2379 = vpop.permute.xlu0 %2378
    %2380 = vrot.lane.b32.xlu0 %v2365, 99
    %v2381 = vpop.permute.xlu0 %2380
    %2382 = vrot.lane.b32.xlu0 %v2366, 99
    %v2383 = vpop.permute.xlu0 %2382
    %2384 = vrot.lane.b32.xlu0 %v2367, 99
    %v2385 = vpop.permute.xlu0 %2384
    %v2386 = vsel %vm754, %v2375, %v2377
    %v2387 = vsel %vm754, %v2377, %v2379
    %v2388 = vsel %vm754, %v2379, %v2381
    %v2389 = vsel %vm754, %v2381, %v2383
    %v2390 = vsel %vm754, %v2383, %v2385
    %v2397 = vadd.f32 %v2225, %v2386
    %v2398 = vadd.f32 %v2226, %v2387
    %v2399 = vadd.f32 %v2227, %v2388
    %v2400 = vadd.f32 %v2228, %v2389
    %v2401 = vadd.f32 %v2229, %v2390
    %v2402 = vadd.f32 %v2230, %v2385
    %s2403 = sld [smem:[#allocation6 + $0x404]]
    %v2404 = vstv %s2403
    %v2405 = vmul.f32 %v2404, %v1697
    %v2406 = vmul.f32 %v2404, %v1698
    %v2407 = vmul.f32 %v2404, %v1699
    %v2408 = vmul.f32 %v2404, %v1700
    %v2409 = vmul.f32 %v2404, %v1701
    %v2410 = vmul.f32 %v2404, %v1702
    %2417 = vrot.lane.b32.xlu0 %v2405, 99
    %v2418 = vpop.permute.xlu0 %2417
    %2419 = vrot.lane.b32.xlu0 %v2406, 99
    %v2420 = vpop.permute.xlu0 %2419
    %2421 = vrot.lane.b32.xlu0 %v2407, 99
    %v2422 = vpop.permute.xlu0 %2421
    %2423 = vrot.lane.b32.xlu0 %v2408, 99
    %v2424 = vpop.permute.xlu0 %2423
    %2425 = vrot.lane.b32.xlu0 %v2409, 99
    %v2426 = vpop.permute.xlu0 %2425
    %2427 = vrot.lane.b32.xlu0 %v2410, 99
    %v2428 = vpop.permute.xlu0 %2427
    %v2429 = vsel %vm754, %v2418, %v2420
    %v2430 = vsel %vm754, %v2420, %v2422
    %v2431 = vsel %vm754, %v2422, %v2424
    %v2432 = vsel %vm754, %v2424, %v2426
    %v2433 = vsel %vm754, %v2426, %v2428
    %v2440 = vadd.f32 %v2268, %v2429
    %v2441 = vadd.f32 %v2269, %v2430
    %v2442 = vadd.f32 %v2270, %v2431
    %v2443 = vadd.f32 %v2271, %v2432
    %v2444 = vadd.f32 %v2272, %v2433
    %v2445 = vadd.f32 %v2273, %v2428
    %s2446 = sld [smem:[#allocation6 + $0x604]]
    %v2447 = vstv %s2446
    %v2448 = vmul.f32 %v2447, %v1697
    %v2449 = vmul.f32 %v2447, %v1698
    %v2450 = vmul.f32 %v2447, %v1699
    %v2451 = vmul.f32 %v2447, %v1700
    %v2452 = vmul.f32 %v2447, %v1701
    %v2453 = vmul.f32 %v2447, %v1702
    %2460 = vrot.lane.b32.xlu0 %v2448, 99
    %v2461 = vpop.permute.xlu0 %2460
    %2462 = vrot.lane.b32.xlu0 %v2449, 99
    %v2463 = vpop.permute.xlu0 %2462
    %2464 = vrot.lane.b32.xlu0 %v2450, 99
    %v2465 = vpop.permute.xlu0 %2464
    %2466 = vrot.lane.b32.xlu0 %v2451, 99
    %v2467 = vpop.permute.xlu0 %2466
    %2468 = vrot.lane.b32.xlu0 %v2452, 99
    %v2469 = vpop.permute.xlu0 %2468
    %2470 = vrot.lane.b32.xlu0 %v2453, 99
    %v2471 = vpop.permute.xlu0 %2470
    %v2472 = vsel %vm754, %v2461, %v2463
    %v2473 = vsel %vm754, %v2463, %v2465
    %v2474 = vsel %vm754, %v2465, %v2467
    %v2475 = vsel %vm754, %v2467, %v2469
    %v2476 = vsel %vm754, %v2469, %v2471
    %v2483 = vadd.f32 %v2311, %v2472
    %v2484 = vadd.f32 %v2312, %v2473
    %v2485 = vadd.f32 %v2313, %v2474
    %v2486 = vadd.f32 %v2314, %v2475
    %v2487 = vadd.f32 %v2315, %v2476
    %v2488 = vadd.f32 %v2316, %v2471
    %s2489 = sld [smem:[#allocation6 + $0x5]]
    %v2490 = vstv %s2489
    %v2491 = vmul.f32 %v2490, %v1697
    %v2492 = vmul.f32 %v2490, %v1698
    %v2493 = vmul.f32 %v2490, %v1699
    %v2494 = vmul.f32 %v2490, %v1700
    %v2495 = vmul.f32 %v2490, %v1701
    %v2496 = vmul.f32 %v2490, %v1702
    %2503 = vrot.lane.b32.xlu0 %v2491, 98
    %v2504 = vpop.permute.xlu0 %2503
    %2505 = vrot.lane.b32.xlu0 %v2492, 98
    %v2506 = vpop.permute.xlu0 %2505
    %2507 = vrot.lane.b32.xlu0 %v2493, 98
    %v2508 = vpop.permute.xlu0 %2507
    %2509 = vrot.lane.b32.xlu0 %v2494, 98
    %v2510 = vpop.permute.xlu0 %2509
    %2511 = vrot.lane.b32.xlu0 %v2495, 98
    %v2512 = vpop.permute.xlu0 %2511
    %2513 = vrot.lane.b32.xlu0 %v2496, 98
    %v2514 = vpop.permute.xlu0 %2513
    %v2515 = vsel %vm947, %v2504, %v2506
    %v2516 = vsel %vm947, %v2506, %v2508
    %v2517 = vsel %vm947, %v2508, %v2510
    %v2518 = vsel %vm947, %v2510, %v2512
    %v2519 = vsel %vm947, %v2512, %v2514
    %v2526 = vadd.f32 %v2354, %v2515
    %v2527 = vadd.f32 %v2355, %v2516
    %v2528 = vadd.f32 %v2356, %v2517
    %v2529 = vadd.f32 %v2357, %v2518
    %v2530 = vadd.f32 %v2358, %v2519
    %v2531 = vadd.f32 %v2359, %v2514
    %s2532 = sld [smem:[#allocation6 + $0x205]]
    %v2533 = vstv %s2532
    %v2534 = vmul.f32 %v2533, %v1697
    %v2535 = vmul.f32 %v2533, %v1698
    %v2536 = vmul.f32 %v2533, %v1699
    %v2537 = vmul.f32 %v2533, %v1700
    %v2538 = vmul.f32 %v2533, %v1701
    %v2539 = vmul.f32 %v2533, %v1702
    %2546 = vrot.lane.b32.xlu0 %v2534, 98
    %v2547 = vpop.permute.xlu0 %2546
    %2548 = vrot.lane.b32.xlu0 %v2535, 98
    %v2549 = vpop.permute.xlu0 %2548
    %2550 = vrot.lane.b32.xlu0 %v2536, 98
    %v2551 = vpop.permute.xlu0 %2550
    %2552 = vrot.lane.b32.xlu0 %v2537, 98
    %v2553 = vpop.permute.xlu0 %2552
    %2554 = vrot.lane.b32.xlu0 %v2538, 98
    %v2555 = vpop.permute.xlu0 %2554
    %2556 = vrot.lane.b32.xlu0 %v2539, 98
    %v2557 = vpop.permute.xlu0 %2556
    %v2558 = vsel %vm947, %v2547, %v2549
    %v2559 = vsel %vm947, %v2549, %v2551
    %v2560 = vsel %vm947, %v2551, %v2553
    %v2561 = vsel %vm947, %v2553, %v2555
    %v2562 = vsel %vm947, %v2555, %v2557
    %v2569 = vadd.f32 %v2397, %v2558
    %v2570 = vadd.f32 %v2398, %v2559
    %v2571 = vadd.f32 %v2399, %v2560
    %v2572 = vadd.f32 %v2400, %v2561
    %v2573 = vadd.f32 %v2401, %v2562
    %v2574 = vadd.f32 %v2402, %v2557
    %s2575 = sld [smem:[#allocation6 + $0x405]]
    %v2576 = vstv %s2575
    %v2577 = vmul.f32 %v2576, %v1697
    %v2578 = vmul.f32 %v2576, %v1698
    %v2579 = vmul.f32 %v2576, %v1699
    %v2580 = vmul.f32 %v2576, %v1700
    %v2581 = vmul.f32 %v2576, %v1701
    %v2582 = vmul.f32 %v2576, %v1702
    %2589 = vrot.lane.b32.xlu0 %v2577, 98
    %v2590 = vpop.permute.xlu0 %2589
    %2591 = vrot.lane.b32.xlu0 %v2578, 98
    %v2592 = vpop.permute.xlu0 %2591
    %2593 = vrot.lane.b32.xlu0 %v2579, 98
    %v2594 = vpop.permute.xlu0 %2593
    %2595 = vrot.lane.b32.xlu0 %v2580, 98
    %v2596 = vpop.permute.xlu0 %2595
    %2597 = vrot.lane.b32.xlu0 %v2581, 98
    %v2598 = vpop.permute.xlu0 %2597
    %2599 = vrot.lane.b32.xlu0 %v2582, 98
    %v2600 = vpop.permute.xlu0 %2599
    %v2601 = vsel %vm947, %v2590, %v2592
    %v2602 = vsel %vm947, %v2592, %v2594
    %v2603 = vsel %vm947, %v2594, %v2596
    %v2604 = vsel %vm947, %v2596, %v2598
    %v2605 = vsel %vm947, %v2598, %v2600
    %v2612 = vadd.f32 %v2440, %v2601
    %v2613 = vadd.f32 %v2441, %v2602
    %v2614 = vadd.f32 %v2442, %v2603
    %v2615 = vadd.f32 %v2443, %v2604
    %v2616 = vadd.f32 %v2444, %v2605
    %v2617 = vadd.f32 %v2445, %v2600
    %s2618 = sld [smem:[#allocation6 + $0x605]]
    %v2619 = vstv %s2618
    %v2620 = vmul.f32 %v2619, %v1697
    %v2621 = vmul.f32 %v2619, %v1698
    %v2622 = vmul.f32 %v2619, %v1699
    %v2623 = vmul.f32 %v2619, %v1700
    %v2624 = vmul.f32 %v2619, %v1701
    %v2625 = vmul.f32 %v2619, %v1702
    %2632 = vrot.lane.b32.xlu0 %v2620, 98
    %v2633 = vpop.permute.xlu0 %2632
    %2634 = vrot.lane.b32.xlu0 %v2621, 98
    %v2635 = vpop.permute.xlu0 %2634
    %2636 = vrot.lane.b32.xlu0 %v2622, 98
    %v2637 = vpop.permute.xlu0 %2636
    %2638 = vrot.lane.b32.xlu0 %v2623, 98
    %v2639 = vpop.permute.xlu0 %2638
    %2640 = vrot.lane.b32.xlu0 %v2624, 98
    %v2641 = vpop.permute.xlu0 %2640
    %2642 = vrot.lane.b32.xlu0 %v2625, 98
    %v2643 = vpop.permute.xlu0 %2642
    %v2644 = vsel %vm947, %v2633, %v2635
    %v2645 = vsel %vm947, %v2635, %v2637
    %v2646 = vsel %vm947, %v2637, %v2639
    %v2647 = vsel %vm947, %v2639, %v2641
    %v2648 = vsel %vm947, %v2641, %v2643
    %v2655 = vadd.f32 %v2483, %v2644
    %v2656 = vadd.f32 %v2484, %v2645
    %v2657 = vadd.f32 %v2485, %v2646
    %v2658 = vadd.f32 %v2486, %v2647
    %v2659 = vadd.f32 %v2487, %v2648
    %v2660 = vadd.f32 %v2488, %v2643
    %s2661 = sld [smem:[#allocation6 + $0x6]]
    %v2662 = vstv %s2661
    %v2663 = vmul.f32 %v2662, %v1697
    %v2664 = vmul.f32 %v2662, %v1698
    %v2665 = vmul.f32 %v2662, %v1699
    %v2666 = vmul.f32 %v2662, %v1700
    %v2667 = vmul.f32 %v2662, %v1701
    %v2668 = vmul.f32 %v2662, %v1702
    %2675 = vrot.lane.b32.xlu0 %v2663, 72
    %v2676 = vpop.permute.xlu0 %2675
    %2677 = vrot.lane.b32.xlu0 %v2664, 72
    %v2678 = vpop.permute.xlu0 %2677
    %2679 = vrot.lane.b32.xlu0 %v2665, 72
    %v2680 = vpop.permute.xlu0 %2679
    %2681 = vrot.lane.b32.xlu0 %v2666, 72
    %v2682 = vpop.permute.xlu0 %2681
    %2683 = vrot.lane.b32.xlu0 %v2667, 72
    %v2684 = vpop.permute.xlu0 %2683
    %2685 = vrot.lane.b32.xlu0 %v2668, 72
    %v2686 = vpop.permute.xlu0 %2685
    %v2687 = vsel %vm1140, %v2676, %v2678
    %v2688 = vsel %vm1140, %v2678, %v2680
    %v2689 = vsel %vm1140, %v2680, %v2682
    %v2690 = vsel %vm1140, %v2682, %v2684
    %v2691 = vsel %vm1140, %v2684, %v2686
    %v2698 = vadd.f32 %v2526, %v2687
    %v2699 = vadd.f32 %v2527, %v2688
    %v2700 = vadd.f32 %v2528, %v2689
    %v2701 = vadd.f32 %v2529, %v2690
    %v2702 = vadd.f32 %v2530, %v2691
    %v2703 = vadd.f32 %v2531, %v2686
    %s2704 = sld [smem:[#allocation6 + $0x206]]
    %v2705 = vstv %s2704
    %v2706 = vmul.f32 %v2705, %v1697
    %v2707 = vmul.f32 %v2705, %v1698
    %v2708 = vmul.f32 %v2705, %v1699
    %v2709 = vmul.f32 %v2705, %v1700
    %v2710 = vmul.f32 %v2705, %v1701
    %v2711 = vmul.f32 %v2705, %v1702
    %2718 = vrot.lane.b32.xlu0 %v2706, 72
    %v2719 = vpop.permute.xlu0 %2718
    %2720 = vrot.lane.b32.xlu0 %v2707, 72
    %v2721 = vpop.permute.xlu0 %2720
    %2722 = vrot.lane.b32.xlu0 %v2708, 72
    %v2723 = vpop.permute.xlu0 %2722
    %2724 = vrot.lane.b32.xlu0 %v2709, 72
    %v2725 = vpop.permute.xlu0 %2724
    %2726 = vrot.lane.b32.xlu0 %v2710, 72
    %v2727 = vpop.permute.xlu0 %2726
    %2728 = vrot.lane.b32.xlu0 %v2711, 72
    %v2729 = vpop.permute.xlu0 %2728
    %v2730 = vsel %vm1140, %v2719, %v2721
    %v2731 = vsel %vm1140, %v2721, %v2723
    %v2732 = vsel %vm1140, %v2723, %v2725
    %v2733 = vsel %vm1140, %v2725, %v2727
    %v2734 = vsel %vm1140, %v2727, %v2729
    %v2741 = vadd.f32 %v2569, %v2730
    %v2742 = vadd.f32 %v2570, %v2731
    %v2743 = vadd.f32 %v2571, %v2732
    %v2744 = vadd.f32 %v2572, %v2733
    %v2745 = vadd.f32 %v2573, %v2734
    %v2746 = vadd.f32 %v2574, %v2729
    %s2747 = sld [smem:[#allocation6 + $0x406]]
    %v2748 = vstv %s2747
    %v2749 = vmul.f32 %v2748, %v1697
    %v2750 = vmul.f32 %v2748, %v1698
    %v2751 = vmul.f32 %v2748, %v1699
    %v2752 = vmul.f32 %v2748, %v1700
    %v2753 = vmul.f32 %v2748, %v1701
    %v2754 = vmul.f32 %v2748, %v1702
    %2761 = vrot.lane.b32.xlu0 %v2749, 72
    %v2762 = vpop.permute.xlu0 %2761
    %2763 = vrot.lane.b32.xlu0 %v2750, 72
    %v2764 = vpop.permute.xlu0 %2763
    %2765 = vrot.lane.b32.xlu0 %v2751, 72
    %v2766 = vpop.permute.xlu0 %2765
    %2767 = vrot.lane.b32.xlu0 %v2752, 72
    %v2768 = vpop.permute.xlu0 %2767
    %2769 = vrot.lane.b32.xlu0 %v2753, 72
    %v2770 = vpop.permute.xlu0 %2769
    %2771 = vrot.lane.b32.xlu0 %v2754, 72
    %v2772 = vpop.permute.xlu0 %2771
    %v2773 = vsel %vm1140, %v2762, %v2764
    %v2774 = vsel %vm1140, %v2764, %v2766
    %v2775 = vsel %vm1140, %v2766, %v2768
    %v2776 = vsel %vm1140, %v2768, %v2770
    %v2777 = vsel %vm1140, %v2770, %v2772
    %v2784 = vadd.f32 %v2612, %v2773
    %v2785 = vadd.f32 %v2613, %v2774
    %v2786 = vadd.f32 %v2614, %v2775
    %v2787 = vadd.f32 %v2615, %v2776
    %v2788 = vadd.f32 %v2616, %v2777
    %v2789 = vadd.f32 %v2617, %v2772
    %s2790 = sld [smem:[#allocation6 + $0x606]]
    %v2791 = vstv %s2790
    %v2792 = vmul.f32 %v2791, %v1697
    %v2793 = vmul.f32 %v2791, %v1698
    %v2794 = vmul.f32 %v2791, %v1699
    %v2795 = vmul.f32 %v2791, %v1700
    %v2796 = vmul.f32 %v2791, %v1701
    %v2797 = vmul.f32 %v2791, %v1702
    %2804 = vrot.lane.b32.xlu0 %v2792, 72
    %v2805 = vpop.permute.xlu0 %2804
    %2806 = vrot.lane.b32.xlu0 %v2793, 72
    %v2807 = vpop.permute.xlu0 %2806
    %2808 = vrot.lane.b32.xlu0 %v2794, 72
    %v2809 = vpop.permute.xlu0 %2808
    %2810 = vrot.lane.b32.xlu0 %v2795, 72
    %v2811 = vpop.permute.xlu0 %2810
    %2812 = vrot.lane.b32.xlu0 %v2796, 72
    %v2813 = vpop.permute.xlu0 %2812
    %2814 = vrot.lane.b32.xlu0 %v2797, 72
    %v2815 = vpop.permute.xlu0 %2814
    %v2816 = vsel %vm1140, %v2805, %v2807
    %v2817 = vsel %vm1140, %v2807, %v2809
    %v2818 = vsel %vm1140, %v2809, %v2811
    %v2819 = vsel %vm1140, %v2811, %v2813
    %v2820 = vsel %vm1140, %v2813, %v2815
    %v2827 = vadd.f32 %v2655, %v2816
    %v2828 = vadd.f32 %v2656, %v2817
    %v2829 = vadd.f32 %v2657, %v2818
    %v2830 = vadd.f32 %v2658, %v2819
    %v2831 = vadd.f32 %v2659, %v2820
    %v2832 = vadd.f32 %v2660, %v2815
    %s2833 = sld [smem:[#allocation6 + $0x7]]
    %v2834 = vstv %s2833
    %v2835 = vmul.f32 %v2834, %v1697
    %v2836 = vmul.f32 %v2834, %v1698
    %v2837 = vmul.f32 %v2834, %v1699
    %v2838 = vmul.f32 %v2834, %v1700
    %v2839 = vmul.f32 %v2834, %v1701
    %v2840 = vmul.f32 %v2834, %v1702
    %2847 = vrot.lane.b32.xlu0 %v2835, 71
    %v2848 = vpop.permute.xlu0 %2847
    %2849 = vrot.lane.b32.xlu0 %v2836, 71
    %v2850 = vpop.permute.xlu0 %2849
    %2851 = vrot.lane.b32.xlu0 %v2837, 71
    %v2852 = vpop.permute.xlu0 %2851
    %2853 = vrot.lane.b32.xlu0 %v2838, 71
    %v2854 = vpop.permute.xlu0 %2853
    %2855 = vrot.lane.b32.xlu0 %v2839, 71
    %v2856 = vpop.permute.xlu0 %2855
    %2857 = vrot.lane.b32.xlu0 %v2840, 71
    %v2858 = vpop.permute.xlu0 %2857
    %v2859 = vsel %vm1333, %v2848, %v2850
    %v2860 = vsel %vm1333, %v2850, %v2852
    %v2861 = vsel %vm1333, %v2852, %v2854
    %v2862 = vsel %vm1333, %v2854, %v2856
    %v2863 = vsel %vm1333, %v2856, %v2858
    %v2870 = vadd.f32 %v2698, %v2859
    %v2871 = vadd.f32 %v2699, %v2860
    %v2872 = vadd.f32 %v2700, %v2861
    %v2873 = vadd.f32 %v2701, %v2862
    %v2874 = vadd.f32 %v2702, %v2863
    %v2875 = vadd.f32 %v2703, %v2858
    %s2876 = sld [smem:[#allocation6 + $0x207]]
    %v2877 = vstv %s2876
    %v2878 = vmul.f32 %v2877, %v1697
    %v2879 = vmul.f32 %v2877, %v1698
    %v2880 = vmul.f32 %v2877, %v1699
    %v2881 = vmul.f32 %v2877, %v1700
    %v2882 = vmul.f32 %v2877, %v1701
    %v2883 = vmul.f32 %v2877, %v1702
    %2890 = vrot.lane.b32.xlu0 %v2878, 71
    %v2891 = vpop.permute.xlu0 %2890
    %2892 = vrot.lane.b32.xlu0 %v2879, 71
    %v2893 = vpop.permute.xlu0 %2892
    %2894 = vrot.lane.b32.xlu0 %v2880, 71
    %v2895 = vpop.permute.xlu0 %2894
    %2896 = vrot.lane.b32.xlu0 %v2881, 71
    %v2897 = vpop.permute.xlu0 %2896
    %2898 = vrot.lane.b32.xlu0 %v2882, 71
    %v2899 = vpop.permute.xlu0 %2898
    %2900 = vrot.lane.b32.xlu0 %v2883, 71
    %v2901 = vpop.permute.xlu0 %2900
    %v2902 = vsel %vm1333, %v2891, %v2893
    %v2903 = vsel %vm1333, %v2893, %v2895
    %v2904 = vsel %vm1333, %v2895, %v2897
    %v2905 = vsel %vm1333, %v2897, %v2899
    %v2906 = vsel %vm1333, %v2899, %v2901
    %v2913 = vadd.f32 %v2741, %v2902
    %v2914 = vadd.f32 %v2742, %v2903
    %v2915 = vadd.f32 %v2743, %v2904
    %v2916 = vadd.f32 %v2744, %v2905
    %v2917 = vadd.f32 %v2745, %v2906
    %v2918 = vadd.f32 %v2746, %v2901
    %s2919 = sld [smem:[#allocation6 + $0x407]]
    %v2920 = vstv %s2919
    %v2921 = vmul.f32 %v2920, %v1697
    %v2922 = vmul.f32 %v2920, %v1698
    %v2923 = vmul.f32 %v2920, %v1699
    %v2924 = vmul.f32 %v2920, %v1700
    %v2925 = vmul.f32 %v2920, %v1701
    %v2926 = vmul.f32 %v2920, %v1702
    %2933 = vrot.lane.b32.xlu0 %v2921, 71
    %v2934 = vpop.permute.xlu0 %2933
    %2935 = vrot.lane.b32.xlu0 %v2922, 71
    %v2936 = vpop.permute.xlu0 %2935
    %2937 = vrot.lane.b32.xlu0 %v2923, 71
    %v2938 = vpop.permute.xlu0 %2937
    %2939 = vrot.lane.b32.xlu0 %v2924, 71
    %v2940 = vpop.permute.xlu0 %2939
    %2941 = vrot.lane.b32.xlu0 %v2925, 71
    %v2942 = vpop.permute.xlu0 %2941
    %2943 = vrot.lane.b32.xlu0 %v2926, 71
    %v2944 = vpop.permute.xlu0 %2943
    %v2945 = vsel %vm1333, %v2934, %v2936
    %v2946 = vsel %vm1333, %v2936, %v2938
    %v2947 = vsel %vm1333, %v2938, %v2940
    %v2948 = vsel %vm1333, %v2940, %v2942
    %v2949 = vsel %vm1333, %v2942, %v2944
    %v2956 = vadd.f32 %v2784, %v2945
    %v2957 = vadd.f32 %v2785, %v2946
    %v2958 = vadd.f32 %v2786, %v2947
    %v2959 = vadd.f32 %v2787, %v2948
    %v2960 = vadd.f32 %v2788, %v2949
    %v2961 = vadd.f32 %v2789, %v2944
    %s2962 = sld [smem:[#allocation6 + $0x607]]
    %v2963 = vstv %s2962
    %v2964 = vmul.f32 %v2963, %v1697
    %v2965 = vmul.f32 %v2963, %v1698
    %v2966 = vmul.f32 %v2963, %v1699
    %v2967 = vmul.f32 %v2963, %v1700
    %v2968 = vmul.f32 %v2963, %v1701
    %v2969 = vmul.f32 %v2963, %v1702
    %2976 = vrot.lane.b32.xlu0 %v2964, 71
    %v2977 = vpop.permute.xlu0 %2976
    %2978 = vrot.lane.b32.xlu0 %v2965, 71
    %v2979 = vpop.permute.xlu0 %2978
    %2980 = vrot.lane.b32.xlu0 %v2966, 71
    %v2981 = vpop.permute.xlu0 %2980
    %2982 = vrot.lane.b32.xlu0 %v2967, 71
    %v2983 = vpop.permute.xlu0 %2982
    %2984 = vrot.lane.b32.xlu0 %v2968, 71
    %v2985 = vpop.permute.xlu0 %2984
    %2986 = vrot.lane.b32.xlu0 %v2969, 71
    %v2987 = vpop.permute.xlu0 %2986
    %v2988 = vsel %vm1333, %v2977, %v2979
    %v2989 = vsel %vm1333, %v2979, %v2981
    %v2990 = vsel %vm1333, %v2981, %v2983
    %v2991 = vsel %vm1333, %v2983, %v2985
    %v2992 = vsel %vm1333, %v2985, %v2987
    %v2999 = vadd.f32 %v2827, %v2988
    %v3000 = vadd.f32 %v2828, %v2989
    %v3001 = vadd.f32 %v2829, %v2990
    %v3002 = vadd.f32 %v2830, %v2991
    %v3003 = vadd.f32 %v2831, %v2992
    %v3004 = vadd.f32 %v2832, %v2987
    %s3005 = sld [smem:[#allocation6 + $0x8]]
    %v3006 = vstv %s3005
    %v3007 = vmul.f32 %v3006, %v1697
    %v3008 = vmul.f32 %v3006, %v1698
    %v3009 = vmul.f32 %v3006, %v1699
    %v3010 = vmul.f32 %v3006, %v1700
    %v3011 = vmul.f32 %v3006, %v1701
    %v3012 = vmul.f32 %v3006, %v1702
    %3019 = vrot.lane.b32.xlu0 %v3007, 70
    %v3020 = vpop.permute.xlu0 %3019
    %3021 = vrot.lane.b32.xlu0 %v3008, 70
    %v3022 = vpop.permute.xlu0 %3021
    %3023 = vrot.lane.b32.xlu0 %v3009, 70
    %v3024 = vpop.permute.xlu0 %3023
    %3025 = vrot.lane.b32.xlu0 %v3010, 70
    %v3026 = vpop.permute.xlu0 %3025
    %3027 = vrot.lane.b32.xlu0 %v3011, 70
    %v3028 = vpop.permute.xlu0 %3027
    %3029 = vrot.lane.b32.xlu0 %v3012, 70
    %v3030 = vpop.permute.xlu0 %3029
    %v3031 = vsel %vm1526, %v3020, %v3022
    %v3032 = vsel %vm1526, %v3022, %v3024
    %v3033 = vsel %vm1526, %v3024, %v3026
    %v3034 = vsel %vm1526, %v3026, %v3028
    %v3035 = vsel %vm1526, %v3028, %v3030
    %v3042 = vadd.f32 %v2870, %v3031
    %v3043 = vadd.f32 %v2871, %v3032
    %v3044 = vadd.f32 %v2872, %v3033
    %v3045 = vadd.f32 %v2873, %v3034
    %v3046 = vadd.f32 %v2874, %v3035
    %v3047 = vadd.f32 %v2875, %v3030
    %s3048 = sld [smem:[#allocation6 + $0x208]]
    %v3049 = vstv %s3048
    %v3050 = vmul.f32 %v3049, %v1697
    %v3051 = vmul.f32 %v3049, %v1698
    %v3052 = vmul.f32 %v3049, %v1699
    %v3053 = vmul.f32 %v3049, %v1700
    %v3054 = vmul.f32 %v3049, %v1701
    %v3055 = vmul.f32 %v3049, %v1702
    %3062 = vrot.lane.b32.xlu0 %v3050, 70
    %v3063 = vpop.permute.xlu0 %3062
    %3064 = vrot.lane.b32.xlu0 %v3051, 70
    %v3065 = vpop.permute.xlu0 %3064
    %3066 = vrot.lane.b32.xlu0 %v3052, 70
    %v3067 = vpop.permute.xlu0 %3066
    %3068 = vrot.lane.b32.xlu0 %v3053, 70
    %v3069 = vpop.permute.xlu0 %3068
    %3070 = vrot.lane.b32.xlu0 %v3054, 70
    %v3071 = vpop.permute.xlu0 %3070
    %3072 = vrot.lane.b32.xlu0 %v3055, 70
    %v3073 = vpop.permute.xlu0 %3072
    %v3074 = vsel %vm1526, %v3063, %v3065
    %v3075 = vsel %vm1526, %v3065, %v3067
    %v3076 = vsel %vm1526, %v3067, %v3069
    %v3077 = vsel %vm1526, %v3069, %v3071
    %v3078 = vsel %vm1526, %v3071, %v3073
    %v3085 = vadd.f32 %v2913, %v3074
    %v3086 = vadd.f32 %v2914, %v3075
    %v3087 = vadd.f32 %v2915, %v3076
    %v3088 = vadd.f32 %v2916, %v3077
    %v3089 = vadd.f32 %v2917, %v3078
    %v3090 = vadd.f32 %v2918, %v3073
    %s3091 = sld [smem:[#allocation6 + $0x408]]
    %v3092 = vstv %s3091
    %v3093 = vmul.f32 %v3092, %v1697
    %v3094 = vmul.f32 %v3092, %v1698
    %v3095 = vmul.f32 %v3092, %v1699
    %v3096 = vmul.f32 %v3092, %v1700
    %v3097 = vmul.f32 %v3092, %v1701
    %v3098 = vmul.f32 %v3092, %v1702
    %3105 = vrot.lane.b32.xlu0 %v3093, 70
    %v3106 = vpop.permute.xlu0 %3105
    %3107 = vrot.lane.b32.xlu0 %v3094, 70
    %v3108 = vpop.permute.xlu0 %3107
    %3109 = vrot.lane.b32.xlu0 %v3095, 70
    %v3110 = vpop.permute.xlu0 %3109
    %3111 = vrot.lane.b32.xlu0 %v3096, 70
    %v3112 = vpop.permute.xlu0 %3111
    %3113 = vrot.lane.b32.xlu0 %v3097, 70
    %v3114 = vpop.permute.xlu0 %3113
    %3115 = vrot.lane.b32.xlu0 %v3098, 70
    %v3116 = vpop.permute.xlu0 %3115
    %v3117 = vsel %vm1526, %v3106, %v3108
    %v3118 = vsel %vm1526, %v3108, %v3110
    %v3119 = vsel %vm1526, %v3110, %v3112
    %v3120 = vsel %vm1526, %v3112, %v3114
    %v3121 = vsel %vm1526, %v3114, %v3116
    %v3128 = vadd.f32 %v2956, %v3117
    %v3129 = vadd.f32 %v2957, %v3118
    %v3130 = vadd.f32 %v2958, %v3119
    %v3131 = vadd.f32 %v2959, %v3120
    %v3132 = vadd.f32 %v2960, %v3121
    %v3133 = vadd.f32 %v2961, %v3116
    %s3134 = sld [smem:[#allocation6 + $0x608]]
    %v3135 = vstv %s3134
    %v3136 = vmul.f32 %v3135, %v1697
    %v3137 = vmul.f32 %v3135, %v1698
    %v3138 = vmul.f32 %v3135, %v1699
    %v3139 = vmul.f32 %v3135, %v1700
    %v3140 = vmul.f32 %v3135, %v1701
    %v3141 = vmul.f32 %v3135, %v1702
    %3148 = vrot.lane.b32.xlu0 %v3136, 70
    %v3149 = vpop.permute.xlu0 %3148
    %3150 = vrot.lane.b32.xlu0 %v3137, 70
    %v3151 = vpop.permute.xlu0 %3150
    %3152 = vrot.lane.b32.xlu0 %v3138, 70
    %v3153 = vpop.permute.xlu0 %3152
    %3154 = vrot.lane.b32.xlu0 %v3139, 70
    %v3155 = vpop.permute.xlu0 %3154
    %3156 = vrot.lane.b32.xlu0 %v3140, 70
    %v3157 = vpop.permute.xlu0 %3156
    %3158 = vrot.lane.b32.xlu0 %v3141, 70
    %v3159 = vpop.permute.xlu0 %3158
    %v3160 = vsel %vm1526, %v3149, %v3151
    %v3161 = vsel %vm1526, %v3151, %v3153
    %v3162 = vsel %vm1526, %v3153, %v3155
    %v3163 = vsel %vm1526, %v3155, %v3157
    %v3164 = vsel %vm1526, %v3157, %v3159
    %v3171 = vadd.f32 %v2999, %v3160
    %v3172 = vadd.f32 %v3000, %v3161
    %v3173 = vadd.f32 %v3001, %v3162
    %v3174 = vadd.f32 %v3002, %v3163
    %v3175 = vadd.f32 %v3003, %v3164
    %v3176 = vadd.f32 %v3004, %v3159
    %s3177 = sld [smem:[#allocation6 + $0x80]]
    %v3178 = vstv %s3177
    %v3179 = vmul.f32 %v3178, %v1711
    %v3180 = vmul.f32 %v3178, %v1712
    %v3181 = vmul.f32 %v3178, %v1713
    %v3182 = vmul.f32 %v3178, %v1714
    %v3183 = vmul.f32 %v3178, %v1715
    %v3184 = vmul.f32 %v3178, %v1716
    %v3185 = vadd.f32 %v3042, %v3179
    %v3186 = vadd.f32 %v3043, %v3180
    %v3187 = vadd.f32 %v3044, %v3181
    %v3188 = vadd.f32 %v3045, %v3182
    %v3189 = vadd.f32 %v3046, %v3183
    %v3190 = vadd.f32 %v3047, %v3184
    %s3191 = sld [smem:[#allocation6 + $0x280]]
    %v3192 = vstv %s3191
    %v3193 = vmul.f32 %v3192, %v1711
    %v3194 = vmul.f32 %v3192, %v1712
    %v3195 = vmul.f32 %v3192, %v1713
    %v3196 = vmul.f32 %v3192, %v1714
    %v3197 = vmul.f32 %v3192, %v1715
    %v3198 = vmul.f32 %v3192, %v1716
    %v3199 = vadd.f32 %v3085, %v3193
    %v3200 = vadd.f32 %v3086, %v3194
    %v3201 = vadd.f32 %v3087, %v3195
    %v3202 = vadd.f32 %v3088, %v3196
    %v3203 = vadd.f32 %v3089, %v3197
    %v3204 = vadd.f32 %v3090, %v3198
    %s3205 = sld [smem:[#allocation6 + $0x480]]
    %v3206 = vstv %s3205
    %v3207 = vmul.f32 %v3206, %v1711
    %v3208 = vmul.f32 %v3206, %v1712
    %v3209 = vmul.f32 %v3206, %v1713
    %v3210 = vmul.f32 %v3206, %v1714
    %v3211 = vmul.f32 %v3206, %v1715
    %v3212 = vmul.f32 %v3206, %v1716
    %v3213 = vadd.f32 %v3128, %v3207
    %v3214 = vadd.f32 %v3129, %v3208
    %v3215 = vadd.f32 %v3130, %v3209
    %v3216 = vadd.f32 %v3131, %v3210
    %v3217 = vadd.f32 %v3132, %v3211
    %v3218 = vadd.f32 %v3133, %v3212
    %s3219 = sld [smem:[#allocation6 + $0x680]]
    %v3220 = vstv %s3219
    %v3221 = vmul.f32 %v3220, %v1711
    %v3222 = vmul.f32 %v3220, %v1712
    %v3223 = vmul.f32 %v3220, %v1713
    %v3224 = vmul.f32 %v3220, %v1714
    %v3225 = vmul.f32 %v3220, %v1715
    %v3226 = vmul.f32 %v3220, %v1716
    %v3227 = vadd.f32 %v3171, %v3221
    %v3228 = vadd.f32 %v3172, %v3222
    %v3229 = vadd.f32 %v3173, %v3223
    %v3230 = vadd.f32 %v3174, %v3224
    %v3231 = vadd.f32 %v3175, %v3225
    %v3232 = vadd.f32 %v3176, %v3226
    %s3233 = sld [smem:[#allocation6 + $0x81]]
    %v3234 = vstv %s3233
    %v3235 = vmul.f32 %v3234, %v1711
    %v3236 = vmul.f32 %v3234, %v1712
    %v3237 = vmul.f32 %v3234, %v1713
    %v3238 = vmul.f32 %v3234, %v1714
    %v3239 = vmul.f32 %v3234, %v1715
    %v3240 = vmul.f32 %v3234, %v1716
    %3247 = vrot.lane.b32.xlu0 %v3235, 127
    %v3248 = vpop.permute.xlu0 %3247
    %3249 = vrot.lane.b32.xlu0 %v3236, 127
    %v3250 = vpop.permute.xlu0 %3249
    %3251 = vrot.lane.b32.xlu0 %v3237, 127
    %v3252 = vpop.permute.xlu0 %3251
    %3253 = vrot.lane.b32.xlu0 %v3238, 127
    %v3254 = vpop.permute.xlu0 %3253
    %3255 = vrot.lane.b32.xlu0 %v3239, 127
    %v3256 = vpop.permute.xlu0 %3255
    %3257 = vrot.lane.b32.xlu0 %v3240, 127
    %v3258 = vpop.permute.xlu0 %3257
    %v3259 = vsel %vm175, %v3248, %v3250
    %v3260 = vsel %vm175, %v3250, %v3252
    %v3261 = vsel %vm175, %v3252, %v3254
    %v3262 = vsel %vm175, %v3254, %v3256
    %v3263 = vsel %vm175, %v3256, %v3258
    %v3270 = vadd.f32 %v3185, %v3259
    %v3271 = vadd.f32 %v3186, %v3260
    %v3272 = vadd.f32 %v3187, %v3261
    %v3273 = vadd.f32 %v3188, %v3262
    %v3274 = vadd.f32 %v3189, %v3263
    %v3275 = vadd.f32 %v3190, %v3258
    %s3276 = sld [smem:[#allocation6 + $0x281]]
    %v3277 = vstv %s3276
    %v3278 = vmul.f32 %v3277, %v1711
    %v3279 = vmul.f32 %v3277, %v1712
    %v3280 = vmul.f32 %v3277, %v1713
    %v3281 = vmul.f32 %v3277, %v1714
    %v3282 = vmul.f32 %v3277, %v1715
    %v3283 = vmul.f32 %v3277, %v1716
    %3290 = vrot.lane.b32.xlu0 %v3278, 127
    %v3291 = vpop.permute.xlu0 %3290
    %3292 = vrot.lane.b32.xlu0 %v3279, 127
    %v3293 = vpop.permute.xlu0 %3292
    %3294 = vrot.lane.b32.xlu0 %v3280, 127
    %v3295 = vpop.permute.xlu0 %3294
    %3296 = vrot.lane.b32.xlu0 %v3281, 127
    %v3297 = vpop.permute.xlu0 %3296
    %3298 = vrot.lane.b32.xlu0 %v3282, 127
    %v3299 = vpop.permute.xlu0 %3298
    %3300 = vrot.lane.b32.xlu0 %v3283, 127
    %v3301 = vpop.permute.xlu0 %3300
    %v3302 = vsel %vm175, %v3291, %v3293
    %v3303 = vsel %vm175, %v3293, %v3295
    %v3304 = vsel %vm175, %v3295, %v3297
    %v3305 = vsel %vm175, %v3297, %v3299
    %v3306 = vsel %vm175, %v3299, %v3301
    %v3313 = vadd.f32 %v3199, %v3302
    %v3314 = vadd.f32 %v3200, %v3303
    %v3315 = vadd.f32 %v3201, %v3304
    %v3316 = vadd.f32 %v3202, %v3305
    %v3317 = vadd.f32 %v3203, %v3306
    %v3318 = vadd.f32 %v3204, %v3301
    %s3319 = sld [smem:[#allocation6 + $0x481]]
    %v3320 = vstv %s3319
    %v3321 = vmul.f32 %v3320, %v1711
    %v3322 = vmul.f32 %v3320, %v1712
    %v3323 = vmul.f32 %v3320, %v1713
    %v3324 = vmul.f32 %v3320, %v1714
    %v3325 = vmul.f32 %v3320, %v1715
    %v3326 = vmul.f32 %v3320, %v1716
    %3333 = vrot.lane.b32.xlu0 %v3321, 127
    %v3334 = vpop.permute.xlu0 %3333
    %3335 = vrot.lane.b32.xlu0 %v3322, 127
    %v3336 = vpop.permute.xlu0 %3335
    %3337 = vrot.lane.b32.xlu0 %v3323, 127
    %v3338 = vpop.permute.xlu0 %3337
    %3339 = vrot.lane.b32.xlu0 %v3324, 127
    %v3340 = vpop.permute.xlu0 %3339
    %3341 = vrot.lane.b32.xlu0 %v3325, 127
    %v3342 = vpop.permute.xlu0 %3341
    %3343 = vrot.lane.b32.xlu0 %v3326, 127
    %v3344 = vpop.permute.xlu0 %3343
    %v3345 = vsel %vm175, %v3334, %v3336
    %v3346 = vsel %vm175, %v3336, %v3338
    %v3347 = vsel %vm175, %v3338, %v3340
    %v3348 = vsel %vm175, %v3340, %v3342
    %v3349 = vsel %vm175, %v3342, %v3344
    %v3356 = vadd.f32 %v3213, %v3345
    %v3357 = vadd.f32 %v3214, %v3346
    %v3358 = vadd.f32 %v3215, %v3347
    %v3359 = vadd.f32 %v3216, %v3348
    %v3360 = vadd.f32 %v3217, %v3349
    %v3361 = vadd.f32 %v3218, %v3344
    %s3362 = sld [smem:[#allocation6 + $0x681]]
    %v3363 = vstv %s3362
    %v3364 = vmul.f32 %v3363, %v1711
    %v3365 = vmul.f32 %v3363, %v1712
    %v3366 = vmul.f32 %v3363, %v1713
    %v3367 = vmul.f32 %v3363, %v1714
    %v3368 = vmul.f32 %v3363, %v1715
    %v3369 = vmul.f32 %v3363, %v1716
    %3376 = vrot.lane.b32.xlu0 %v3364, 127
    %v3377 = vpop.permute.xlu0 %3376
    %3378 = vrot.lane.b32.xlu0 %v3365, 127
    %v3379 = vpop.permute.xlu0 %3378
    %3380 = vrot.lane.b32.xlu0 %v3366, 127
    %v3381 = vpop.permute.xlu0 %3380
    %3382 = vrot.lane.b32.xlu0 %v3367, 127
    %v3383 = vpop.permute.xlu0 %3382
    %3384 = vrot.lane.b32.xlu0 %v3368, 127
    %v3385 = vpop.permute.xlu0 %3384
    %3386 = vrot.lane.b32.xlu0 %v3369, 127
    %v3387 = vpop.permute.xlu0 %3386
    %v3388 = vsel %vm175, %v3377, %v3379
    %v3389 = vsel %vm175, %v3379, %v3381
    %v3390 = vsel %vm175, %v3381, %v3383
    %v3391 = vsel %vm175, %v3383, %v3385
    %v3392 = vsel %vm175, %v3385, %v3387
    %v3399 = vadd.f32 %v3227, %v3388
    %v3400 = vadd.f32 %v3228, %v3389
    %v3401 = vadd.f32 %v3229, %v3390
    %v3402 = vadd.f32 %v3230, %v3391
    %v3403 = vadd.f32 %v3231, %v3392
    %v3404 = vadd.f32 %v3232, %v3387
    %s3405 = sld [smem:[#allocation6 + $0x82]]
    %v3406 = vstv %s3405
    %v3407 = vmul.f32 %v3406, %v1711
    %v3408 = vmul.f32 %v3406, %v1712
    %v3409 = vmul.f32 %v3406, %v1713
    %v3410 = vmul.f32 %v3406, %v1714
    %v3411 = vmul.f32 %v3406, %v1715
    %v3412 = vmul.f32 %v3406, %v1716
    %3419 = vrot.lane.b32.xlu0 %v3407, 126
    %v3420 = vpop.permute.xlu0 %3419
    %3421 = vrot.lane.b32.xlu0 %v3408, 126
    %v3422 = vpop.permute.xlu0 %3421
    %3423 = vrot.lane.b32.xlu0 %v3409, 126
    %v3424 = vpop.permute.xlu0 %3423
    %3425 = vrot.lane.b32.xlu0 %v3410, 126
    %v3426 = vpop.permute.xlu0 %3425
    %3427 = vrot.lane.b32.xlu0 %v3411, 126
    %v3428 = vpop.permute.xlu0 %3427
    %3429 = vrot.lane.b32.xlu0 %v3412, 126
    %v3430 = vpop.permute.xlu0 %3429
    %v3431 = vsel %vm368, %v3420, %v3422
    %v3432 = vsel %vm368, %v3422, %v3424
    %v3433 = vsel %vm368, %v3424, %v3426
    %v3434 = vsel %vm368, %v3426, %v3428
    %v3435 = vsel %vm368, %v3428, %v3430
    %v3442 = vadd.f32 %v3270, %v3431
    %v3443 = vadd.f32 %v3271, %v3432
    %v3444 = vadd.f32 %v3272, %v3433
    %v3445 = vadd.f32 %v3273, %v3434
    %v3446 = vadd.f32 %v3274, %v3435
    %v3447 = vadd.f32 %v3275, %v3430
    %s3448 = sld [smem:[#allocation6 + $0x282]]
    %v3449 = vstv %s3448
    %v3450 = vmul.f32 %v3449, %v1711
    %v3451 = vmul.f32 %v3449, %v1712
    %v3452 = vmul.f32 %v3449, %v1713
    %v3453 = vmul.f32 %v3449, %v1714
    %v3454 = vmul.f32 %v3449, %v1715
    %v3455 = vmul.f32 %v3449, %v1716
    %3462 = vrot.lane.b32.xlu0 %v3450, 126
    %v3463 = vpop.permute.xlu0 %3462
    %3464 = vrot.lane.b32.xlu0 %v3451, 126
    %v3465 = vpop.permute.xlu0 %3464
    %3466 = vrot.lane.b32.xlu0 %v3452, 126
    %v3467 = vpop.permute.xlu0 %3466
    %3468 = vrot.lane.b32.xlu0 %v3453, 126
    %v3469 = vpop.permute.xlu0 %3468
    %3470 = vrot.lane.b32.xlu0 %v3454, 126
    %v3471 = vpop.permute.xlu0 %3470
    %3472 = vrot.lane.b32.xlu0 %v3455, 126
    %v3473 = vpop.permute.xlu0 %3472
    %v3474 = vsel %vm368, %v3463, %v3465
    %v3475 = vsel %vm368, %v3465, %v3467
    %v3476 = vsel %vm368, %v3467, %v3469
    %v3477 = vsel %vm368, %v3469, %v3471
    %v3478 = vsel %vm368, %v3471, %v3473
    %v3485 = vadd.f32 %v3313, %v3474
    %v3486 = vadd.f32 %v3314, %v3475
    %v3487 = vadd.f32 %v3315, %v3476
    %v3488 = vadd.f32 %v3316, %v3477
    %v3489 = vadd.f32 %v3317, %v3478
    %v3490 = vadd.f32 %v3318, %v3473
    %s3491 = sld [smem:[#allocation6 + $0x482]]
    %v3492 = vstv %s3491
    %v3493 = vmul.f32 %v3492, %v1711
    %v3494 = vmul.f32 %v3492, %v1712
    %v3495 = vmul.f32 %v3492, %v1713
    %v3496 = vmul.f32 %v3492, %v1714
    %v3497 = vmul.f32 %v3492, %v1715
    %v3498 = vmul.f32 %v3492, %v1716
    %3505 = vrot.lane.b32.xlu0 %v3493, 126
    %v3506 = vpop.permute.xlu0 %3505
    %3507 = vrot.lane.b32.xlu0 %v3494, 126
    %v3508 = vpop.permute.xlu0 %3507
    %3509 = vrot.lane.b32.xlu0 %v3495, 126
    %v3510 = vpop.permute.xlu0 %3509
    %3511 = vrot.lane.b32.xlu0 %v3496, 126
    %v3512 = vpop.permute.xlu0 %3511
    %3513 = vrot.lane.b32.xlu0 %v3497, 126
    %v3514 = vpop.permute.xlu0 %3513
    %3515 = vrot.lane.b32.xlu0 %v3498, 126
    %v3516 = vpop.permute.xlu0 %3515
    %v3517 = vsel %vm368, %v3506, %v3508
    %v3518 = vsel %vm368, %v3508, %v3510
    %v3519 = vsel %vm368, %v3510, %v3512
    %v3520 = vsel %vm368, %v3512, %v3514
    %v3521 = vsel %vm368, %v3514, %v3516
    %v3528 = vadd.f32 %v3356, %v3517
    %v3529 = vadd.f32 %v3357, %v3518
    %v3530 = vadd.f32 %v3358, %v3519
    %v3531 = vadd.f32 %v3359, %v3520
    %v3532 = vadd.f32 %v3360, %v3521
    %v3533 = vadd.f32 %v3361, %v3516
    %s3534 = sld [smem:[#allocation6 + $0x682]]
    %v3535 = vstv %s3534
    %v3536 = vmul.f32 %v3535, %v1711
    %v3537 = vmul.f32 %v3535, %v1712
    %v3538 = vmul.f32 %v3535, %v1713
    %v3539 = vmul.f32 %v3535, %v1714
    %v3540 = vmul.f32 %v3535, %v1715
    %v3541 = vmul.f32 %v3535, %v1716
    %3548 = vrot.lane.b32.xlu0 %v3536, 126
    %v3549 = vpop.permute.xlu0 %3548
    %3550 = vrot.lane.b32.xlu0 %v3537, 126
    %v3551 = vpop.permute.xlu0 %3550
    %3552 = vrot.lane.b32.xlu0 %v3538, 126
    %v3553 = vpop.permute.xlu0 %3552
    %3554 = vrot.lane.b32.xlu0 %v3539, 126
    %v3555 = vpop.permute.xlu0 %3554
    %3556 = vrot.lane.b32.xlu0 %v3540, 126
    %v3557 = vpop.permute.xlu0 %3556
    %3558 = vrot.lane.b32.xlu0 %v3541, 126
    %v3559 = vpop.permute.xlu0 %3558
    %v3560 = vsel %vm368, %v3549, %v3551
    %v3561 = vsel %vm368, %v3551, %v3553
    %v3562 = vsel %vm368, %v3553, %v3555
    %v3563 = vsel %vm368, %v3555, %v3557
    %v3564 = vsel %vm368, %v3557, %v3559
    %v3571 = vadd.f32 %v3399, %v3560
    %v3572 = vadd.f32 %v3400, %v3561
    %v3573 = vadd.f32 %v3401, %v3562
    %v3574 = vadd.f32 %v3402, %v3563
    %v3575 = vadd.f32 %v3403, %v3564
    %v3576 = vadd.f32 %v3404, %v3559
    %s3577 = sld [smem:[#allocation6 + $0x83]]
    %v3578 = vstv %s3577
    %v3579 = vmul.f32 %v3578, %v1711
    %v3580 = vmul.f32 %v3578, %v1712
    %v3581 = vmul.f32 %v3578, %v1713
    %v3582 = vmul.f32 %v3578, %v1714
    %v3583 = vmul.f32 %v3578, %v1715
    %v3584 = vmul.f32 %v3578, %v1716
    %3591 = vrot.lane.b32.xlu0 %v3579, 100
    %v3592 = vpop.permute.xlu0 %3591
    %3593 = vrot.lane.b32.xlu0 %v3580, 100
    %v3594 = vpop.permute.xlu0 %3593
    %3595 = vrot.lane.b32.xlu0 %v3581, 100
    %v3596 = vpop.permute.xlu0 %3595
    %3597 = vrot.lane.b32.xlu0 %v3582, 100
    %v3598 = vpop.permute.xlu0 %3597
    %3599 = vrot.lane.b32.xlu0 %v3583, 100
    %v3600 = vpop.permute.xlu0 %3599
    %3601 = vrot.lane.b32.xlu0 %v3584, 100
    %v3602 = vpop.permute.xlu0 %3601
    %v3603 = vsel %vm561, %v3592, %v3594
    %v3604 = vsel %vm561, %v3594, %v3596
    %v3605 = vsel %vm561, %v3596, %v3598
    %v3606 = vsel %vm561, %v3598, %v3600
    %v3607 = vsel %vm561, %v3600, %v3602
    %v3614 = vadd.f32 %v3442, %v3603
    %v3615 = vadd.f32 %v3443, %v3604
    %v3616 = vadd.f32 %v3444, %v3605
    %v3617 = vadd.f32 %v3445, %v3606
    %v3618 = vadd.f32 %v3446, %v3607
    %v3619 = vadd.f32 %v3447, %v3602
    %s3620 = sld [smem:[#allocation6 + $0x283]]
    %v3621 = vstv %s3620
    %v3622 = vmul.f32 %v3621, %v1711
    %v3623 = vmul.f32 %v3621, %v1712
    %v3624 = vmul.f32 %v3621, %v1713
    %v3625 = vmul.f32 %v3621, %v1714
    %v3626 = vmul.f32 %v3621, %v1715
    %v3627 = vmul.f32 %v3621, %v1716
    %3634 = vrot.lane.b32.xlu0 %v3622, 100
    %v3635 = vpop.permute.xlu0 %3634
    %3636 = vrot.lane.b32.xlu0 %v3623, 100
    %v3637 = vpop.permute.xlu0 %3636
    %3638 = vrot.lane.b32.xlu0 %v3624, 100
    %v3639 = vpop.permute.xlu0 %3638
    %3640 = vrot.lane.b32.xlu0 %v3625, 100
    %v3641 = vpop.permute.xlu0 %3640
    %3642 = vrot.lane.b32.xlu0 %v3626, 100
    %v3643 = vpop.permute.xlu0 %3642
    %3644 = vrot.lane.b32.xlu0 %v3627, 100
    %v3645 = vpop.permute.xlu0 %3644
    %v3646 = vsel %vm561, %v3635, %v3637
    %v3647 = vsel %vm561, %v3637, %v3639
    %v3648 = vsel %vm561, %v3639, %v3641
    %v3649 = vsel %vm561, %v3641, %v3643
    %v3650 = vsel %vm561, %v3643, %v3645
    %v3657 = vadd.f32 %v3485, %v3646
    %v3658 = vadd.f32 %v3486, %v3647
    %v3659 = vadd.f32 %v3487, %v3648
    %v3660 = vadd.f32 %v3488, %v3649
    %v3661 = vadd.f32 %v3489, %v3650
    %v3662 = vadd.f32 %v3490, %v3645
    %s3663 = sld [smem:[#allocation6 + $0x483]]
    %v3664 = vstv %s3663
    %v3665 = vmul.f32 %v3664, %v1711
    %v3666 = vmul.f32 %v3664, %v1712
    %v3667 = vmul.f32 %v3664, %v1713
    %v3668 = vmul.f32 %v3664, %v1714
    %v3669 = vmul.f32 %v3664, %v1715
    %v3670 = vmul.f32 %v3664, %v1716
    %3677 = vrot.lane.b32.xlu0 %v3665, 100
    %v3678 = vpop.permute.xlu0 %3677
    %3679 = vrot.lane.b32.xlu0 %v3666, 100
    %v3680 = vpop.permute.xlu0 %3679
    %3681 = vrot.lane.b32.xlu0 %v3667, 100
    %v3682 = vpop.permute.xlu0 %3681
    %3683 = vrot.lane.b32.xlu0 %v3668, 100
    %v3684 = vpop.permute.xlu0 %3683
    %3685 = vrot.lane.b32.xlu0 %v3669, 100
    %v3686 = vpop.permute.xlu0 %3685
    %3687 = vrot.lane.b32.xlu0 %v3670, 100
    %v3688 = vpop.permute.xlu0 %3687
    %v3689 = vsel %vm561, %v3678, %v3680
    %v3690 = vsel %vm561, %v3680, %v3682
    %v3691 = vsel %vm561, %v3682, %v3684
    %v3692 = vsel %vm561, %v3684, %v3686
    %v3693 = vsel %vm561, %v3686, %v3688
    %v3700 = vadd.f32 %v3528, %v3689
    %v3701 = vadd.f32 %v3529, %v3690
    %v3702 = vadd.f32 %v3530, %v3691
    %v3703 = vadd.f32 %v3531, %v3692
    %v3704 = vadd.f32 %v3532, %v3693
    %v3705 = vadd.f32 %v3533, %v3688
    %s3706 = sld [smem:[#allocation6 + $0x683]]
    %v3707 = vstv %s3706
    %v3708 = vmul.f32 %v3707, %v1711
    %v3709 = vmul.f32 %v3707, %v1712
    %v3710 = vmul.f32 %v3707, %v1713
    %v3711 = vmul.f32 %v3707, %v1714
    %v3712 = vmul.f32 %v3707, %v1715
    %v3713 = vmul.f32 %v3707, %v1716
    %3720 = vrot.lane.b32.xlu0 %v3708, 100
    %v3721 = vpop.permute.xlu0 %3720
    %3722 = vrot.lane.b32.xlu0 %v3709, 100
    %v3723 = vpop.permute.xlu0 %3722
    %3724 = vrot.lane.b32.xlu0 %v3710, 100
    %v3725 = vpop.permute.xlu0 %3724
    %3726 = vrot.lane.b32.xlu0 %v3711, 100
    %v3727 = vpop.permute.xlu0 %3726
    %3728 = vrot.lane.b32.xlu0 %v3712, 100
    %v3729 = vpop.permute.xlu0 %3728
    %3730 = vrot.lane.b32.xlu0 %v3713, 100
    %v3731 = vpop.permute.xlu0 %3730
    %v3732 = vsel %vm561, %v3721, %v3723
    %v3733 = vsel %vm561, %v3723, %v3725
    %v3734 = vsel %vm561, %v3725, %v3727
    %v3735 = vsel %vm561, %v3727, %v3729
    %v3736 = vsel %vm561, %v3729, %v3731
    %v3743 = vadd.f32 %v3571, %v3732
    %v3744 = vadd.f32 %v3572, %v3733
    %v3745 = vadd.f32 %v3573, %v3734
    %v3746 = vadd.f32 %v3574, %v3735
    %v3747 = vadd.f32 %v3575, %v3736
    %v3748 = vadd.f32 %v3576, %v3731
    %s3749 = sld [smem:[#allocation6 + $0x84]]
    %v3750 = vstv %s3749
    %v3751 = vmul.f32 %v3750, %v1711
    %v3752 = vmul.f32 %v3750, %v1712
    %v3753 = vmul.f32 %v3750, %v1713
    %v3754 = vmul.f32 %v3750, %v1714
    %v3755 = vmul.f32 %v3750, %v1715
    %v3756 = vmul.f32 %v3750, %v1716
    %3763 = vrot.lane.b32.xlu0 %v3751, 99
    %v3764 = vpop.permute.xlu0 %3763
    %3765 = vrot.lane.b32.xlu0 %v3752, 99
    %v3766 = vpop.permute.xlu0 %3765
    %3767 = vrot.lane.b32.xlu0 %v3753, 99
    %v3768 = vpop.permute.xlu0 %3767
    %3769 = vrot.lane.b32.xlu0 %v3754, 99
    %v3770 = vpop.permute.xlu0 %3769
    %3771 = vrot.lane.b32.xlu0 %v3755, 99
    %v3772 = vpop.permute.xlu0 %3771
    %3773 = vrot.lane.b32.xlu0 %v3756, 99
    %v3774 = vpop.permute.xlu0 %3773
    %v3775 = vsel %vm754, %v3764, %v3766
    %v3776 = vsel %vm754, %v3766, %v3768
    %v3777 = vsel %vm754, %v3768, %v3770
    %v3778 = vsel %vm754, %v3770, %v3772
    %v3779 = vsel %vm754, %v3772, %v3774
    %v3786 = vadd.f32 %v3614, %v3775
    %v3787 = vadd.f32 %v3615, %v3776
    %v3788 = vadd.f32 %v3616, %v3777
    %v3789 = vadd.f32 %v3617, %v3778
    %v3790 = vadd.f32 %v3618, %v3779
    %v3791 = vadd.f32 %v3619, %v3774
    %s3792 = sld [smem:[#allocation6 + $0x284]]
    %v3793 = vstv %s3792
    %v3794 = vmul.f32 %v3793, %v1711
    %v3795 = vmul.f32 %v3793, %v1712
    %v3796 = vmul.f32 %v3793, %v1713
    %v3797 = vmul.f32 %v3793, %v1714
    %v3798 = vmul.f32 %v3793, %v1715
    %v3799 = vmul.f32 %v3793, %v1716
    %3806 = vrot.lane.b32.xlu0 %v3794, 99
    %v3807 = vpop.permute.xlu0 %3806
    %3808 = vrot.lane.b32.xlu0 %v3795, 99
    %v3809 = vpop.permute.xlu0 %3808
    %3810 = vrot.lane.b32.xlu0 %v3796, 99
    %v3811 = vpop.permute.xlu0 %3810
    %3812 = vrot.lane.b32.xlu0 %v3797, 99
    %v3813 = vpop.permute.xlu0 %3812
    %3814 = vrot.lane.b32.xlu0 %v3798, 99
    %v3815 = vpop.permute.xlu0 %3814
    %3816 = vrot.lane.b32.xlu0 %v3799, 99
    %v3817 = vpop.permute.xlu0 %3816
    %v3818 = vsel %vm754, %v3807, %v3809
    %v3819 = vsel %vm754, %v3809, %v3811
    %v3820 = vsel %vm754, %v3811, %v3813
    %v3821 = vsel %vm754, %v3813, %v3815
    %v3822 = vsel %vm754, %v3815, %v3817
    %v3829 = vadd.f32 %v3657, %v3818
    %v3830 = vadd.f32 %v3658, %v3819
    %v3831 = vadd.f32 %v3659, %v3820
    %v3832 = vadd.f32 %v3660, %v3821
    %v3833 = vadd.f32 %v3661, %v3822
    %v3834 = vadd.f32 %v3662, %v3817
    %s3835 = sld [smem:[#allocation6 + $0x484]]
    %v3836 = vstv %s3835
    %v3837 = vmul.f32 %v3836, %v1711
    %v3838 = vmul.f32 %v3836, %v1712
    %v3839 = vmul.f32 %v3836, %v1713
    %v3840 = vmul.f32 %v3836, %v1714
    %v3841 = vmul.f32 %v3836, %v1715
    %v3842 = vmul.f32 %v3836, %v1716
    %3849 = vrot.lane.b32.xlu0 %v3837, 99
    %v3850 = vpop.permute.xlu0 %3849
    %3851 = vrot.lane.b32.xlu0 %v3838, 99
    %v3852 = vpop.permute.xlu0 %3851
    %3853 = vrot.lane.b32.xlu0 %v3839, 99
    %v3854 = vpop.permute.xlu0 %3853
    %3855 = vrot.lane.b32.xlu0 %v3840, 99
    %v3856 = vpop.permute.xlu0 %3855
    %3857 = vrot.lane.b32.xlu0 %v3841, 99
    %v3858 = vpop.permute.xlu0 %3857
    %3859 = vrot.lane.b32.xlu0 %v3842, 99
    %v3860 = vpop.permute.xlu0 %3859
    %v3861 = vsel %vm754, %v3850, %v3852
    %v3862 = vsel %vm754, %v3852, %v3854
    %v3863 = vsel %vm754, %v3854, %v3856
    %v3864 = vsel %vm754, %v3856, %v3858
    %v3865 = vsel %vm754, %v3858, %v3860
    %v3872 = vadd.f32 %v3700, %v3861
    %v3873 = vadd.f32 %v3701, %v3862
    %v3874 = vadd.f32 %v3702, %v3863
    %v3875 = vadd.f32 %v3703, %v3864
    %v3876 = vadd.f32 %v3704, %v3865
    %v3877 = vadd.f32 %v3705, %v3860
    %s3878 = sld [smem:[#allocation6 + $0x684]]
    %v3879 = vstv %s3878
    %v3880 = vmul.f32 %v3879, %v1711
    %v3881 = vmul.f32 %v3879, %v1712
    %v3882 = vmul.f32 %v3879, %v1713
    %v3883 = vmul.f32 %v3879, %v1714
    %v3884 = vmul.f32 %v3879, %v1715
    %v3885 = vmul.f32 %v3879, %v1716
    %3892 = vrot.lane.b32.xlu0 %v3880, 99
    %v3893 = vpop.permute.xlu0 %3892
    %3894 = vrot.lane.b32.xlu0 %v3881, 99
    %v3895 = vpop.permute.xlu0 %3894
    %3896 = vrot.lane.b32.xlu0 %v3882, 99
    %v3897 = vpop.permute.xlu0 %3896
    %3898 = vrot.lane.b32.xlu0 %v3883, 99
    %v3899 = vpop.permute.xlu0 %3898
    %3900 = vrot.lane.b32.xlu0 %v3884, 99
    %v3901 = vpop.permute.xlu0 %3900
    %3902 = vrot.lane.b32.xlu0 %v3885, 99
    %v3903 = vpop.permute.xlu0 %3902
    %v3904 = vsel %vm754, %v3893, %v3895
    %v3905 = vsel %vm754, %v3895, %v3897
    %v3906 = vsel %vm754, %v3897, %v3899
    %v3907 = vsel %vm754, %v3899, %v3901
    %v3908 = vsel %vm754, %v3901, %v3903
    %v3915 = vadd.f32 %v3743, %v3904
    %v3916 = vadd.f32 %v3744, %v3905
    %v3917 = vadd.f32 %v3745, %v3906
    %v3918 = vadd.f32 %v3746, %v3907
    %v3919 = vadd.f32 %v3747, %v3908
    %v3920 = vadd.f32 %v3748, %v3903
    %s3921 = sld [smem:[#allocation6 + $0x85]]
    %v3922 = vstv %s3921
    %v3923 = vmul.f32 %v3922, %v1711
    %v3924 = vmul.f32 %v3922, %v1712
    %v3925 = vmul.f32 %v3922, %v1713
    %v3926 = vmul.f32 %v3922, %v1714
    %v3927 = vmul.f32 %v3922, %v1715
    %v3928 = vmul.f32 %v3922, %v1716
    %3935 = vrot.lane.b32.xlu0 %v3923, 98
    %v3936 = vpop.permute.xlu0 %3935
    %3937 = vrot.lane.b32.xlu0 %v3924, 98
    %v3938 = vpop.permute.xlu0 %3937
    %3939 = vrot.lane.b32.xlu0 %v3925, 98
    %v3940 = vpop.permute.xlu0 %3939
    %3941 = vrot.lane.b32.xlu0 %v3926, 98
    %v3942 = vpop.permute.xlu0 %3941
    %3943 = vrot.lane.b32.xlu0 %v3927, 98
    %v3944 = vpop.permute.xlu0 %3943
    %3945 = vrot.lane.b32.xlu0 %v3928, 98
    %v3946 = vpop.permute.xlu0 %3945
    %v3947 = vsel %vm947, %v3936, %v3938
    %v3948 = vsel %vm947, %v3938, %v3940
    %v3949 = vsel %vm947, %v3940, %v3942
    %v3950 = vsel %vm947, %v3942, %v3944
    %v3951 = vsel %vm947, %v3944, %v3946
    %v3958 = vadd.f32 %v3786, %v3947
    %v3959 = vadd.f32 %v3787, %v3948
    %v3960 = vadd.f32 %v3788, %v3949
    %v3961 = vadd.f32 %v3789, %v3950
    %v3962 = vadd.f32 %v3790, %v3951
    %v3963 = vadd.f32 %v3791, %v3946
    %s3964 = sld [smem:[#allocation6 + $0x285]]
    %v3965 = vstv %s3964
    %v3966 = vmul.f32 %v3965, %v1711
    %v3967 = vmul.f32 %v3965, %v1712
    %v3968 = vmul.f32 %v3965, %v1713
    %v3969 = vmul.f32 %v3965, %v1714
    %v3970 = vmul.f32 %v3965, %v1715
    %v3971 = vmul.f32 %v3965, %v1716
    %3978 = vrot.lane.b32.xlu0 %v3966, 98
    %v3979 = vpop.permute.xlu0 %3978
    %3980 = vrot.lane.b32.xlu0 %v3967, 98
    %v3981 = vpop.permute.xlu0 %3980
    %3982 = vrot.lane.b32.xlu0 %v3968, 98
    %v3983 = vpop.permute.xlu0 %3982
    %3984 = vrot.lane.b32.xlu0 %v3969, 98
    %v3985 = vpop.permute.xlu0 %3984
    %3986 = vrot.lane.b32.xlu0 %v3970, 98
    %v3987 = vpop.permute.xlu0 %3986
    %3988 = vrot.lane.b32.xlu0 %v3971, 98
    %v3989 = vpop.permute.xlu0 %3988
    %v3990 = vsel %vm947, %v3979, %v3981
    %v3991 = vsel %vm947, %v3981, %v3983
    %v3992 = vsel %vm947, %v3983, %v3985
    %v3993 = vsel %vm947, %v3985, %v3987
    %v3994 = vsel %vm947, %v3987, %v3989
    %v4001 = vadd.f32 %v3829, %v3990
    %v4002 = vadd.f32 %v3830, %v3991
    %v4003 = vadd.f32 %v3831, %v3992
    %v4004 = vadd.f32 %v3832, %v3993
    %v4005 = vadd.f32 %v3833, %v3994
    %v4006 = vadd.f32 %v3834, %v3989
    %s4007 = sld [smem:[#allocation6 + $0x485]]
    %v4008 = vstv %s4007
    %v4009 = vmul.f32 %v4008, %v1711
    %v4010 = vmul.f32 %v4008, %v1712
    %v4011 = vmul.f32 %v4008, %v1713
    %v4012 = vmul.f32 %v4008, %v1714
    %v4013 = vmul.f32 %v4008, %v1715
    %v4014 = vmul.f32 %v4008, %v1716
    %4021 = vrot.lane.b32.xlu0 %v4009, 98
    %v4022 = vpop.permute.xlu0 %4021
    %4023 = vrot.lane.b32.xlu0 %v4010, 98
    %v4024 = vpop.permute.xlu0 %4023
    %4025 = vrot.lane.b32.xlu0 %v4011, 98
    %v4026 = vpop.permute.xlu0 %4025
    %4027 = vrot.lane.b32.xlu0 %v4012, 98
    %v4028 = vpop.permute.xlu0 %4027
    %4029 = vrot.lane.b32.xlu0 %v4013, 98
    %v4030 = vpop.permute.xlu0 %4029
    %4031 = vrot.lane.b32.xlu0 %v4014, 98
    %v4032 = vpop.permute.xlu0 %4031
    %v4033 = vsel %vm947, %v4022, %v4024
    %v4034 = vsel %vm947, %v4024, %v4026
    %v4035 = vsel %vm947, %v4026, %v4028
    %v4036 = vsel %vm947, %v4028, %v4030
    %v4037 = vsel %vm947, %v4030, %v4032
    %v4044 = vadd.f32 %v3872, %v4033
    %v4045 = vadd.f32 %v3873, %v4034
    %v4046 = vadd.f32 %v3874, %v4035
    %v4047 = vadd.f32 %v3875, %v4036
    %v4048 = vadd.f32 %v3876, %v4037
    %v4049 = vadd.f32 %v3877, %v4032
    %s4050 = sld [smem:[#allocation6 + $0x685]]
    %v4051 = vstv %s4050
    %v4052 = vmul.f32 %v4051, %v1711
    %v4053 = vmul.f32 %v4051, %v1712
    %v4054 = vmul.f32 %v4051, %v1713
    %v4055 = vmul.f32 %v4051, %v1714
    %v4056 = vmul.f32 %v4051, %v1715
    %v4057 = vmul.f32 %v4051, %v1716
    %4064 = vrot.lane.b32.xlu0 %v4052, 98
    %v4065 = vpop.permute.xlu0 %4064
    %4066 = vrot.lane.b32.xlu0 %v4053, 98
    %v4067 = vpop.permute.xlu0 %4066
    %4068 = vrot.lane.b32.xlu0 %v4054, 98
    %v4069 = vpop.permute.xlu0 %4068
    %4070 = vrot.lane.b32.xlu0 %v4055, 98
    %v4071 = vpop.permute.xlu0 %4070
    %4072 = vrot.lane.b32.xlu0 %v4056, 98
    %v4073 = vpop.permute.xlu0 %4072
    %4074 = vrot.lane.b32.xlu0 %v4057, 98
    %v4075 = vpop.permute.xlu0 %4074
    %v4076 = vsel %vm947, %v4065, %v4067
    %v4077 = vsel %vm947, %v4067, %v4069
    %v4078 = vsel %vm947, %v4069, %v4071
    %v4079 = vsel %vm947, %v4071, %v4073
    %v4080 = vsel %vm947, %v4073, %v4075
    %v4087 = vadd.f32 %v3915, %v4076
    %v4088 = vadd.f32 %v3916, %v4077
    %v4089 = vadd.f32 %v3917, %v4078
    %v4090 = vadd.f32 %v3918, %v4079
    %v4091 = vadd.f32 %v3919, %v4080
    %v4092 = vadd.f32 %v3920, %v4075
    %s4093 = sld [smem:[#allocation6 + $0x86]]
    %v4094 = vstv %s4093
    %v4095 = vmul.f32 %v4094, %v1711
    %v4096 = vmul.f32 %v4094, %v1712
    %v4097 = vmul.f32 %v4094, %v1713
    %v4098 = vmul.f32 %v4094, %v1714
    %v4099 = vmul.f32 %v4094, %v1715
    %v4100 = vmul.f32 %v4094, %v1716
    %4107 = vrot.lane.b32.xlu0 %v4095, 72
    %v4108 = vpop.permute.xlu0 %4107
    %4109 = vrot.lane.b32.xlu0 %v4096, 72
    %v4110 = vpop.permute.xlu0 %4109
    %4111 = vrot.lane.b32.xlu0 %v4097, 72
    %v4112 = vpop.permute.xlu0 %4111
    %4113 = vrot.lane.b32.xlu0 %v4098, 72
    %v4114 = vpop.permute.xlu0 %4113
    %4115 = vrot.lane.b32.xlu0 %v4099, 72
    %v4116 = vpop.permute.xlu0 %4115
    %4117 = vrot.lane.b32.xlu0 %v4100, 72
    %v4118 = vpop.permute.xlu0 %4117
    %v4119 = vsel %vm1140, %v4108, %v4110
    %v4120 = vsel %vm1140, %v4110, %v4112
    %v4121 = vsel %vm1140, %v4112, %v4114
    %v4122 = vsel %vm1140, %v4114, %v4116
    %v4123 = vsel %vm1140, %v4116, %v4118
    %v4130 = vadd.f32 %v3958, %v4119
    %v4131 = vadd.f32 %v3959, %v4120
    %v4132 = vadd.f32 %v3960, %v4121
    %v4133 = vadd.f32 %v3961, %v4122
    %v4134 = vadd.f32 %v3962, %v4123
    %v4135 = vadd.f32 %v3963, %v4118
    %s4136 = sld [smem:[#allocation6 + $0x286]]
    %v4137 = vstv %s4136
    %v4138 = vmul.f32 %v4137, %v1711
    %v4139 = vmul.f32 %v4137, %v1712
    %v4140 = vmul.f32 %v4137, %v1713
    %v4141 = vmul.f32 %v4137, %v1714
    %v4142 = vmul.f32 %v4137, %v1715
    %v4143 = vmul.f32 %v4137, %v1716
    %4150 = vrot.lane.b32.xlu0 %v4138, 72
    %v4151 = vpop.permute.xlu0 %4150
    %4152 = vrot.lane.b32.xlu0 %v4139, 72
    %v4153 = vpop.permute.xlu0 %4152
    %4154 = vrot.lane.b32.xlu0 %v4140, 72
    %v4155 = vpop.permute.xlu0 %4154
    %4156 = vrot.lane.b32.xlu0 %v4141, 72
    %v4157 = vpop.permute.xlu0 %4156
    %4158 = vrot.lane.b32.xlu0 %v4142, 72
    %v4159 = vpop.permute.xlu0 %4158
    %4160 = vrot.lane.b32.xlu0 %v4143, 72
    %v4161 = vpop.permute.xlu0 %4160
    %v4162 = vsel %vm1140, %v4151, %v4153
    %v4163 = vsel %vm1140, %v4153, %v4155
    %v4164 = vsel %vm1140, %v4155, %v4157
    %v4165 = vsel %vm1140, %v4157, %v4159
    %v4166 = vsel %vm1140, %v4159, %v4161
    %v4173 = vadd.f32 %v4001, %v4162
    %v4174 = vadd.f32 %v4002, %v4163
    %v4175 = vadd.f32 %v4003, %v4164
    %v4176 = vadd.f32 %v4004, %v4165
    %v4177 = vadd.f32 %v4005, %v4166
    %v4178 = vadd.f32 %v4006, %v4161
    %s4179 = sld [smem:[#allocation6 + $0x486]]
    %v4180 = vstv %s4179
    %v4181 = vmul.f32 %v4180, %v1711
    %v4182 = vmul.f32 %v4180, %v1712
    %v4183 = vmul.f32 %v4180, %v1713
    %v4184 = vmul.f32 %v4180, %v1714
    %v4185 = vmul.f32 %v4180, %v1715
    %v4186 = vmul.f32 %v4180, %v1716
    %4193 = vrot.lane.b32.xlu0 %v4181, 72
    %v4194 = vpop.permute.xlu0 %4193
    %4195 = vrot.lane.b32.xlu0 %v4182, 72
    %v4196 = vpop.permute.xlu0 %4195
    %4197 = vrot.lane.b32.xlu0 %v4183, 72
    %v4198 = vpop.permute.xlu0 %4197
    %4199 = vrot.lane.b32.xlu0 %v4184, 72
    %v4200 = vpop.permute.xlu0 %4199
    %4201 = vrot.lane.b32.xlu0 %v4185, 72
    %v4202 = vpop.permute.xlu0 %4201
    %4203 = vrot.lane.b32.xlu0 %v4186, 72
    %v4204 = vpop.permute.xlu0 %4203
    %v4205 = vsel %vm1140, %v4194, %v4196
    %v4206 = vsel %vm1140, %v4196, %v4198
    %v4207 = vsel %vm1140, %v4198, %v4200
    %v4208 = vsel %vm1140, %v4200, %v4202
    %v4209 = vsel %vm1140, %v4202, %v4204
    %v4216 = vadd.f32 %v4044, %v4205
    %v4217 = vadd.f32 %v4045, %v4206
    %v4218 = vadd.f32 %v4046, %v4207
    %v4219 = vadd.f32 %v4047, %v4208
    %v4220 = vadd.f32 %v4048, %v4209
    %v4221 = vadd.f32 %v4049, %v4204
    %s4222 = sld [smem:[#allocation6 + $0x686]]
    %v4223 = vstv %s4222
    %v4224 = vmul.f32 %v4223, %v1711
    %v4225 = vmul.f32 %v4223, %v1712
    %v4226 = vmul.f32 %v4223, %v1713
    %v4227 = vmul.f32 %v4223, %v1714
    %v4228 = vmul.f32 %v4223, %v1715
    %v4229 = vmul.f32 %v4223, %v1716
    %4236 = vrot.lane.b32.xlu0 %v4224, 72
    %v4237 = vpop.permute.xlu0 %4236
    %4238 = vrot.lane.b32.xlu0 %v4225, 72
    %v4239 = vpop.permute.xlu0 %4238
    %4240 = vrot.lane.b32.xlu0 %v4226, 72
    %v4241 = vpop.permute.xlu0 %4240
    %4242 = vrot.lane.b32.xlu0 %v4227, 72
    %v4243 = vpop.permute.xlu0 %4242
    %4244 = vrot.lane.b32.xlu0 %v4228, 72
    %v4245 = vpop.permute.xlu0 %4244
    %4246 = vrot.lane.b32.xlu0 %v4229, 72
    %v4247 = vpop.permute.xlu0 %4246
    %v4248 = vsel %vm1140, %v4237, %v4239
    %v4249 = vsel %vm1140, %v4239, %v4241
    %v4250 = vsel %vm1140, %v4241, %v4243
    %v4251 = vsel %vm1140, %v4243, %v4245
    %v4252 = vsel %vm1140, %v4245, %v4247
    %v4259 = vadd.f32 %v4087, %v4248
    %v4260 = vadd.f32 %v4088, %v4249
    %v4261 = vadd.f32 %v4089, %v4250
    %v4262 = vadd.f32 %v4090, %v4251
    %v4263 = vadd.f32 %v4091, %v4252
    %v4264 = vadd.f32 %v4092, %v4247
    %s4265 = sld [smem:[#allocation6 + $0x87]]
    %v4266 = vstv %s4265
    %v4267 = vmul.f32 %v4266, %v1711
    %v4268 = vmul.f32 %v4266, %v1712
    %v4269 = vmul.f32 %v4266, %v1713
    %v4270 = vmul.f32 %v4266, %v1714
    %v4271 = vmul.f32 %v4266, %v1715
    %v4272 = vmul.f32 %v4266, %v1716
    %4279 = vrot.lane.b32.xlu0 %v4267, 71
    %v4280 = vpop.permute.xlu0 %4279
    %4281 = vrot.lane.b32.xlu0 %v4268, 71
    %v4282 = vpop.permute.xlu0 %4281
    %4283 = vrot.lane.b32.xlu0 %v4269, 71
    %v4284 = vpop.permute.xlu0 %4283
    %4285 = vrot.lane.b32.xlu0 %v4270, 71
    %v4286 = vpop.permute.xlu0 %4285
    %4287 = vrot.lane.b32.xlu0 %v4271, 71
    %v4288 = vpop.permute.xlu0 %4287
    %4289 = vrot.lane.b32.xlu0 %v4272, 71
    %v4290 = vpop.permute.xlu0 %4289
    %v4291 = vsel %vm1333, %v4280, %v4282
    %v4292 = vsel %vm1333, %v4282, %v4284
    %v4293 = vsel %vm1333, %v4284, %v4286
    %v4294 = vsel %vm1333, %v4286, %v4288
    %v4295 = vsel %vm1333, %v4288, %v4290
    %v4302 = vadd.f32 %v4130, %v4291
    %v4303 = vadd.f32 %v4131, %v4292
    %v4304 = vadd.f32 %v4132, %v4293
    %v4305 = vadd.f32 %v4133, %v4294
    %v4306 = vadd.f32 %v4134, %v4295
    %v4307 = vadd.f32 %v4135, %v4290
    %s4308 = sld [smem:[#allocation6 + $0x287]]
    %v4309 = vstv %s4308
    %v4310 = vmul.f32 %v4309, %v1711
    %v4311 = vmul.f32 %v4309, %v1712
    %v4312 = vmul.f32 %v4309, %v1713
    %v4313 = vmul.f32 %v4309, %v1714
    %v4314 = vmul.f32 %v4309, %v1715
    %v4315 = vmul.f32 %v4309, %v1716
    %4322 = vrot.lane.b32.xlu0 %v4310, 71
    %v4323 = vpop.permute.xlu0 %4322
    %4324 = vrot.lane.b32.xlu0 %v4311, 71
    %v4325 = vpop.permute.xlu0 %4324
    %4326 = vrot.lane.b32.xlu0 %v4312, 71
    %v4327 = vpop.permute.xlu0 %4326
    %4328 = vrot.lane.b32.xlu0 %v4313, 71
    %v4329 = vpop.permute.xlu0 %4328
    %4330 = vrot.lane.b32.xlu0 %v4314, 71
    %v4331 = vpop.permute.xlu0 %4330
    %4332 = vrot.lane.b32.xlu0 %v4315, 71
    %v4333 = vpop.permute.xlu0 %4332
    %v4334 = vsel %vm1333, %v4323, %v4325
    %v4335 = vsel %vm1333, %v4325, %v4327
    %v4336 = vsel %vm1333, %v4327, %v4329
    %v4337 = vsel %vm1333, %v4329, %v4331
    %v4338 = vsel %vm1333, %v4331, %v4333
    %v4345 = vadd.f32 %v4173, %v4334
    %v4346 = vadd.f32 %v4174, %v4335
    %v4347 = vadd.f32 %v4175, %v4336
    %v4348 = vadd.f32 %v4176, %v4337
    %v4349 = vadd.f32 %v4177, %v4338
    %v4350 = vadd.f32 %v4178, %v4333
    %s4351 = sld [smem:[#allocation6 + $0x487]]
    %v4352 = vstv %s4351
    %v4353 = vmul.f32 %v4352, %v1711
    %v4354 = vmul.f32 %v4352, %v1712
    %v4355 = vmul.f32 %v4352, %v1713
    %v4356 = vmul.f32 %v4352, %v1714
    %v4357 = vmul.f32 %v4352, %v1715
    %v4358 = vmul.f32 %v4352, %v1716
    %4365 = vrot.lane.b32.xlu0 %v4353, 71
    %v4366 = vpop.permute.xlu0 %4365
    %4367 = vrot.lane.b32.xlu0 %v4354, 71
    %v4368 = vpop.permute.xlu0 %4367
    %4369 = vrot.lane.b32.xlu0 %v4355, 71
    %v4370 = vpop.permute.xlu0 %4369
    %4371 = vrot.lane.b32.xlu0 %v4356, 71
    %v4372 = vpop.permute.xlu0 %4371
    %4373 = vrot.lane.b32.xlu0 %v4357, 71
    %v4374 = vpop.permute.xlu0 %4373
    %4375 = vrot.lane.b32.xlu0 %v4358, 71
    %v4376 = vpop.permute.xlu0 %4375
    %v4377 = vsel %vm1333, %v4366, %v4368
    %v4378 = vsel %vm1333, %v4368, %v4370
    %v4379 = vsel %vm1333, %v4370, %v4372
    %v4380 = vsel %vm1333, %v4372, %v4374
    %v4381 = vsel %vm1333, %v4374, %v4376
    %v4388 = vadd.f32 %v4216, %v4377
    %v4389 = vadd.f32 %v4217, %v4378
    %v4390 = vadd.f32 %v4218, %v4379
    %v4391 = vadd.f32 %v4219, %v4380
    %v4392 = vadd.f32 %v4220, %v4381
    %v4393 = vadd.f32 %v4221, %v4376
    %s4394 = sld [smem:[#allocation6 + $0x687]]
    %v4395 = vstv %s4394
    %v4396 = vmul.f32 %v4395, %v1711
    %v4397 = vmul.f32 %v4395, %v1712
    %v4398 = vmul.f32 %v4395, %v1713
    %v4399 = vmul.f32 %v4395, %v1714
    %v4400 = vmul.f32 %v4395, %v1715
    %v4401 = vmul.f32 %v4395, %v1716
    %4408 = vrot.lane.b32.xlu0 %v4396, 71
    %v4409 = vpop.permute.xlu0 %4408
    %4410 = vrot.lane.b32.xlu0 %v4397, 71
    %v4411 = vpop.permute.xlu0 %4410
    %4412 = vrot.lane.b32.xlu0 %v4398, 71
    %v4413 = vpop.permute.xlu0 %4412
    %4414 = vrot.lane.b32.xlu0 %v4399, 71
    %v4415 = vpop.permute.xlu0 %4414
    %4416 = vrot.lane.b32.xlu0 %v4400, 71
    %v4417 = vpop.permute.xlu0 %4416
    %4418 = vrot.lane.b32.xlu0 %v4401, 71
    %v4419 = vpop.permute.xlu0 %4418
    %v4420 = vsel %vm1333, %v4409, %v4411
    %v4421 = vsel %vm1333, %v4411, %v4413
    %v4422 = vsel %vm1333, %v4413, %v4415
    %v4423 = vsel %vm1333, %v4415, %v4417
    %v4424 = vsel %vm1333, %v4417, %v4419
    %v4431 = vadd.f32 %v4259, %v4420
    %v4432 = vadd.f32 %v4260, %v4421
    %v4433 = vadd.f32 %v4261, %v4422
    %v4434 = vadd.f32 %v4262, %v4423
    %v4435 = vadd.f32 %v4263, %v4424
    %v4436 = vadd.f32 %v4264, %v4419
    %s4437 = sld [smem:[#allocation6 + $0x88]]
    %v4438 = vstv %s4437
    %v4439 = vmul.f32 %v4438, %v1711
    %v4440 = vmul.f32 %v4438, %v1712
    %v4441 = vmul.f32 %v4438, %v1713
    %v4442 = vmul.f32 %v4438, %v1714
    %v4443 = vmul.f32 %v4438, %v1715
    %v4444 = vmul.f32 %v4438, %v1716
    %4451 = vrot.lane.b32.xlu0 %v4439, 70
    %v4452 = vpop.permute.xlu0 %4451
    %4453 = vrot.lane.b32.xlu0 %v4440, 70
    %v4454 = vpop.permute.xlu0 %4453
    %4455 = vrot.lane.b32.xlu0 %v4441, 70
    %v4456 = vpop.permute.xlu0 %4455
    %4457 = vrot.lane.b32.xlu0 %v4442, 70
    %v4458 = vpop.permute.xlu0 %4457
    %4459 = vrot.lane.b32.xlu0 %v4443, 70
    %v4460 = vpop.permute.xlu0 %4459
    %4461 = vrot.lane.b32.xlu0 %v4444, 70
    %v4462 = vpop.permute.xlu0 %4461
    %v4463 = vsel %vm1526, %v4452, %v4454
    %v4464 = vsel %vm1526, %v4454, %v4456
    %v4465 = vsel %vm1526, %v4456, %v4458
    %v4466 = vsel %vm1526, %v4458, %v4460
    %v4467 = vsel %vm1526, %v4460, %v4462
    %v4474 = vadd.f32 %v4302, %v4463
    %v4475 = vadd.f32 %v4303, %v4464
    %v4476 = vadd.f32 %v4304, %v4465
    %v4477 = vadd.f32 %v4305, %v4466
    %v4478 = vadd.f32 %v4306, %v4467
    %v4479 = vadd.f32 %v4307, %v4462
    %s4480 = sld [smem:[#allocation6 + $0x288]]
    %v4481 = vstv %s4480
    %v4482 = vmul.f32 %v4481, %v1711
    %v4483 = vmul.f32 %v4481, %v1712
    %v4484 = vmul.f32 %v4481, %v1713
    %v4485 = vmul.f32 %v4481, %v1714
    %v4486 = vmul.f32 %v4481, %v1715
    %v4487 = vmul.f32 %v4481, %v1716
    %4494 = vrot.lane.b32.xlu0 %v4482, 70
    %v4495 = vpop.permute.xlu0 %4494
    %4496 = vrot.lane.b32.xlu0 %v4483, 70
    %v4497 = vpop.permute.xlu0 %4496
    %4498 = vrot.lane.b32.xlu0 %v4484, 70
    %v4499 = vpop.permute.xlu0 %4498
    %4500 = vrot.lane.b32.xlu0 %v4485, 70
    %v4501 = vpop.permute.xlu0 %4500
    %4502 = vrot.lane.b32.xlu0 %v4486, 70
    %v4503 = vpop.permute.xlu0 %4502
    %4504 = vrot.lane.b32.xlu0 %v4487, 70
    %v4505 = vpop.permute.xlu0 %4504
    %v4506 = vsel %vm1526, %v4495, %v4497
    %v4507 = vsel %vm1526, %v4497, %v4499
    %v4508 = vsel %vm1526, %v4499, %v4501
    %v4509 = vsel %vm1526, %v4501, %v4503
    %v4510 = vsel %vm1526, %v4503, %v4505
    %v4517 = vadd.f32 %v4345, %v4506
    %v4518 = vadd.f32 %v4346, %v4507
    %v4519 = vadd.f32 %v4347, %v4508
    %v4520 = vadd.f32 %v4348, %v4509
    %v4521 = vadd.f32 %v4349, %v4510
    %v4522 = vadd.f32 %v4350, %v4505
    %s4523 = sld [smem:[#allocation6 + $0x488]]
    %v4524 = vstv %s4523
    %v4525 = vmul.f32 %v4524, %v1711
    %v4526 = vmul.f32 %v4524, %v1712
    %v4527 = vmul.f32 %v4524, %v1713
    %v4528 = vmul.f32 %v4524, %v1714
    %v4529 = vmul.f32 %v4524, %v1715
    %v4530 = vmul.f32 %v4524, %v1716
    %4537 = vrot.lane.b32.xlu0 %v4525, 70
    %v4538 = vpop.permute.xlu0 %4537
    %4539 = vrot.lane.b32.xlu0 %v4526, 70
    %v4540 = vpop.permute.xlu0 %4539
    %4541 = vrot.lane.b32.xlu0 %v4527, 70
    %v4542 = vpop.permute.xlu0 %4541
    %4543 = vrot.lane.b32.xlu0 %v4528, 70
    %v4544 = vpop.permute.xlu0 %4543
    %4545 = vrot.lane.b32.xlu0 %v4529, 70
    %v4546 = vpop.permute.xlu0 %4545
    %4547 = vrot.lane.b32.xlu0 %v4530, 70
    %v4548 = vpop.permute.xlu0 %4547
    %v4549 = vsel %vm1526, %v4538, %v4540
    %v4550 = vsel %vm1526, %v4540, %v4542
    %v4551 = vsel %vm1526, %v4542, %v4544
    %v4552 = vsel %vm1526, %v4544, %v4546
    %v4553 = vsel %vm1526, %v4546, %v4548
    %v4560 = vadd.f32 %v4388, %v4549
    %v4561 = vadd.f32 %v4389, %v4550
    %v4562 = vadd.f32 %v4390, %v4551
    %v4563 = vadd.f32 %v4391, %v4552
    %v4564 = vadd.f32 %v4392, %v4553
    %v4565 = vadd.f32 %v4393, %v4548
    %s4566 = sld [smem:[#allocation6 + $0x688]]
    %v4567 = vstv %s4566
    %v4568 = vmul.f32 %v4567, %v1711
    %v4569 = vmul.f32 %v4567, %v1712
    %v4570 = vmul.f32 %v4567, %v1713
    %v4571 = vmul.f32 %v4567, %v1714
    %v4572 = vmul.f32 %v4567, %v1715
    %v4573 = vmul.f32 %v4567, %v1716
    %4580 = vrot.lane.b32.xlu0 %v4568, 70
    %v4581 = vpop.permute.xlu0 %4580
    %4582 = vrot.lane.b32.xlu0 %v4569, 70
    %v4583 = vpop.permute.xlu0 %4582
    %4584 = vrot.lane.b32.xlu0 %v4570, 70
    %v4585 = vpop.permute.xlu0 %4584
    %4586 = vrot.lane.b32.xlu0 %v4571, 70
    %v4587 = vpop.permute.xlu0 %4586
    %4588 = vrot.lane.b32.xlu0 %v4572, 70
    %v4589 = vpop.permute.xlu0 %4588
    %4590 = vrot.lane.b32.xlu0 %v4573, 70
    %v4591 = vpop.permute.xlu0 %4590
    %v4592 = vsel %vm1526, %v4581, %v4583
    %v4593 = vsel %vm1526, %v4583, %v4585
    %v4594 = vsel %vm1526, %v4585, %v4587
    %v4595 = vsel %vm1526, %v4587, %v4589
    %v4596 = vsel %vm1526, %v4589, %v4591
    %v4603 = vadd.f32 %v4431, %v4592
    %v4604 = vadd.f32 %v4432, %v4593
    %v4605 = vadd.f32 %v4433, %v4594
    %v4606 = vadd.f32 %v4434, %v4595
    %v4607 = vadd.f32 %v4435, %v4596
    %v4608 = vadd.f32 %v4436, %v4591
    %s4609 = sld [smem:[#allocation6 + $0x100]]
    %v4610 = vstv %s4609
    %v4611 = vmul.f32 %v4610, %v1725
    %v4612 = vmul.f32 %v4610, %v1726
    %v4613 = vmul.f32 %v4610, %v1727
    %v4614 = vmul.f32 %v4610, %v1728
    %v4615 = vmul.f32 %v4610, %v1729
    %v4616 = vmul.f32 %v4610, %v1730
    %v4617 = vadd.f32 %v4474, %v4611
    %v4618 = vadd.f32 %v4475, %v4612
    %v4619 = vadd.f32 %v4476, %v4613
    %v4620 = vadd.f32 %v4477, %v4614
    %v4621 = vadd.f32 %v4478, %v4615
    %v4622 = vadd.f32 %v4479, %v4616
    %s4623 = sld [smem:[#allocation6 + $0x300]]
    %v4624 = vstv %s4623
    %v4625 = vmul.f32 %v4624, %v1725
    %v4626 = vmul.f32 %v4624, %v1726
    %v4627 = vmul.f32 %v4624, %v1727
    %v4628 = vmul.f32 %v4624, %v1728
    %v4629 = vmul.f32 %v4624, %v1729
    %v4630 = vmul.f32 %v4624, %v1730
    %v4631 = vadd.f32 %v4517, %v4625
    %v4632 = vadd.f32 %v4518, %v4626
    %v4633 = vadd.f32 %v4519, %v4627
    %v4634 = vadd.f32 %v4520, %v4628
    %v4635 = vadd.f32 %v4521, %v4629
    %v4636 = vadd.f32 %v4522, %v4630
    %s4637 = sld [smem:[#allocation6 + $0x500]]
    %v4638 = vstv %s4637
    %v4639 = vmul.f32 %v4638, %v1725
    %v4640 = vmul.f32 %v4638, %v1726
    %v4641 = vmul.f32 %v4638, %v1727
    %v4642 = vmul.f32 %v4638, %v1728
    %v4643 = vmul.f32 %v4638, %v1729
    %v4644 = vmul.f32 %v4638, %v1730
    %v4645 = vadd.f32 %v4560, %v4639
    %v4646 = vadd.f32 %v4561, %v4640
    %v4647 = vadd.f32 %v4562, %v4641
    %v4648 = vadd.f32 %v4563, %v4642
    %v4649 = vadd.f32 %v4564, %v4643
    %v4650 = vadd.f32 %v4565, %v4644
    %s4651 = sld [smem:[#allocation6 + $0x700]]
    %v4652 = vstv %s4651
    %v4653 = vmul.f32 %v4652, %v1725
    %v4654 = vmul.f32 %v4652, %v1726
    %v4655 = vmul.f32 %v4652, %v1727
    %v4656 = vmul.f32 %v4652, %v1728
    %v4657 = vmul.f32 %v4652, %v1729
    %v4658 = vmul.f32 %v4652, %v1730
    %v4659 = vadd.f32 %v4603, %v4653
    %v4660 = vadd.f32 %v4604, %v4654
    %v4661 = vadd.f32 %v4605, %v4655
    %v4662 = vadd.f32 %v4606, %v4656
    %v4663 = vadd.f32 %v4607, %v4657
    %v4664 = vadd.f32 %v4608, %v4658
    %s4665 = sld [smem:[#allocation6 + $0x101]]
    %v4666 = vstv %s4665
    %v4667 = vmul.f32 %v4666, %v1725
    %v4668 = vmul.f32 %v4666, %v1726
    %v4669 = vmul.f32 %v4666, %v1727
    %v4670 = vmul.f32 %v4666, %v1728
    %v4671 = vmul.f32 %v4666, %v1729
    %v4672 = vmul.f32 %v4666, %v1730
    %4679 = vrot.lane.b32.xlu0 %v4667, 127
    %v4680 = vpop.permute.xlu0 %4679
    %4681 = vrot.lane.b32.xlu0 %v4668, 127
    %v4682 = vpop.permute.xlu0 %4681
    %4683 = vrot.lane.b32.xlu0 %v4669, 127
    %v4684 = vpop.permute.xlu0 %4683
    %4685 = vrot.lane.b32.xlu0 %v4670, 127
    %v4686 = vpop.permute.xlu0 %4685
    %4687 = vrot.lane.b32.xlu0 %v4671, 127
    %v4688 = vpop.permute.xlu0 %4687
    %4689 = vrot.lane.b32.xlu0 %v4672, 127
    %v4690 = vpop.permute.xlu0 %4689
    %v4691 = vsel %vm175, %v4680, %v4682
    %v4692 = vsel %vm175, %v4682, %v4684
    %v4693 = vsel %vm175, %v4684, %v4686
    %v4694 = vsel %vm175, %v4686, %v4688
    %v4695 = vsel %vm175, %v4688, %v4690
    %v4702 = vadd.f32 %v4617, %v4691
    %v4703 = vadd.f32 %v4618, %v4692
    %v4704 = vadd.f32 %v4619, %v4693
    %v4705 = vadd.f32 %v4620, %v4694
    %v4706 = vadd.f32 %v4621, %v4695
    %v4707 = vadd.f32 %v4622, %v4690
    %s4708 = sld [smem:[#allocation6 + $0x301]]
    %v4709 = vstv %s4708
    %v4710 = vmul.f32 %v4709, %v1725
    %v4711 = vmul.f32 %v4709, %v1726
    %v4712 = vmul.f32 %v4709, %v1727
    %v4713 = vmul.f32 %v4709, %v1728
    %v4714 = vmul.f32 %v4709, %v1729
    %v4715 = vmul.f32 %v4709, %v1730
    %4722 = vrot.lane.b32.xlu0 %v4710, 127
    %v4723 = vpop.permute.xlu0 %4722
    %4724 = vrot.lane.b32.xlu0 %v4711, 127
    %v4725 = vpop.permute.xlu0 %4724
    %4726 = vrot.lane.b32.xlu0 %v4712, 127
    %v4727 = vpop.permute.xlu0 %4726
    %4728 = vrot.lane.b32.xlu0 %v4713, 127
    %v4729 = vpop.permute.xlu0 %4728
    %4730 = vrot.lane.b32.xlu0 %v4714, 127
    %v4731 = vpop.permute.xlu0 %4730
    %4732 = vrot.lane.b32.xlu0 %v4715, 127
    %v4733 = vpop.permute.xlu0 %4732
    %v4734 = vsel %vm175, %v4723, %v4725
    %v4735 = vsel %vm175, %v4725, %v4727
    %v4736 = vsel %vm175, %v4727, %v4729
    %v4737 = vsel %vm175, %v4729, %v4731
    %v4738 = vsel %vm175, %v4731, %v4733
    %v4745 = vadd.f32 %v4631, %v4734
    %v4746 = vadd.f32 %v4632, %v4735
    %v4747 = vadd.f32 %v4633, %v4736
    %v4748 = vadd.f32 %v4634, %v4737
    %v4749 = vadd.f32 %v4635, %v4738
    %v4750 = vadd.f32 %v4636, %v4733
    %s4751 = sld [smem:[#allocation6 + $0x501]]
    %v4752 = vstv %s4751
    %v4753 = vmul.f32 %v4752, %v1725
    %v4754 = vmul.f32 %v4752, %v1726
    %v4755 = vmul.f32 %v4752, %v1727
    %v4756 = vmul.f32 %v4752, %v1728
    %v4757 = vmul.f32 %v4752, %v1729
    %v4758 = vmul.f32 %v4752, %v1730
    %4765 = vrot.lane.b32.xlu0 %v4753, 127
    %v4766 = vpop.permute.xlu0 %4765
    %4767 = vrot.lane.b32.xlu0 %v4754, 127
    %v4768 = vpop.permute.xlu0 %4767
    %4769 = vrot.lane.b32.xlu0 %v4755, 127
    %v4770 = vpop.permute.xlu0 %4769
    %4771 = vrot.lane.b32.xlu0 %v4756, 127
    %v4772 = vpop.permute.xlu0 %4771
    %4773 = vrot.lane.b32.xlu0 %v4757, 127
    %v4774 = vpop.permute.xlu0 %4773
    %4775 = vrot.lane.b32.xlu0 %v4758, 127
    %v4776 = vpop.permute.xlu0 %4775
    %v4777 = vsel %vm175, %v4766, %v4768
    %v4778 = vsel %vm175, %v4768, %v4770
    %v4779 = vsel %vm175, %v4770, %v4772
    %v4780 = vsel %vm175, %v4772, %v4774
    %v4781 = vsel %vm175, %v4774, %v4776
    %v4788 = vadd.f32 %v4645, %v4777
    %v4789 = vadd.f32 %v4646, %v4778
    %v4790 = vadd.f32 %v4647, %v4779
    %v4791 = vadd.f32 %v4648, %v4780
    %v4792 = vadd.f32 %v4649, %v4781
    %v4793 = vadd.f32 %v4650, %v4776
    %s4794 = sld [smem:[#allocation6 + $0x701]]
    %v4795 = vstv %s4794
    %v4796 = vmul.f32 %v4795, %v1725
    %v4797 = vmul.f32 %v4795, %v1726
    %v4798 = vmul.f32 %v4795, %v1727
    %v4799 = vmul.f32 %v4795, %v1728
    %v4800 = vmul.f32 %v4795, %v1729
    %v4801 = vmul.f32 %v4795, %v1730
    %4808 = vrot.lane.b32.xlu0 %v4796, 127
    %v4809 = vpop.permute.xlu0 %4808
    %4810 = vrot.lane.b32.xlu0 %v4797, 127
    %v4811 = vpop.permute.xlu0 %4810
    %4812 = vrot.lane.b32.xlu0 %v4798, 127
    %v4813 = vpop.permute.xlu0 %4812
    %4814 = vrot.lane.b32.xlu0 %v4799, 127
    %v4815 = vpop.permute.xlu0 %4814
    %4816 = vrot.lane.b32.xlu0 %v4800, 127
    %v4817 = vpop.permute.xlu0 %4816
    %4818 = vrot.lane.b32.xlu0 %v4801, 127
    %v4819 = vpop.permute.xlu0 %4818
    %v4820 = vsel %vm175, %v4809, %v4811
    %v4821 = vsel %vm175, %v4811, %v4813
    %v4822 = vsel %vm175, %v4813, %v4815
    %v4823 = vsel %vm175, %v4815, %v4817
    %v4824 = vsel %vm175, %v4817, %v4819
    %v4831 = vadd.f32 %v4659, %v4820
    %v4832 = vadd.f32 %v4660, %v4821
    %v4833 = vadd.f32 %v4661, %v4822
    %v4834 = vadd.f32 %v4662, %v4823
    %v4835 = vadd.f32 %v4663, %v4824
    %v4836 = vadd.f32 %v4664, %v4819
    %s4837 = sld [smem:[#allocation6 + $0x102]]
    %v4838 = vstv %s4837
    %v4839 = vmul.f32 %v4838, %v1725
    %v4840 = vmul.f32 %v4838, %v1726
    %v4841 = vmul.f32 %v4838, %v1727
    %v4842 = vmul.f32 %v4838, %v1728
    %v4843 = vmul.f32 %v4838, %v1729
    %v4844 = vmul.f32 %v4838, %v1730
    %4851 = vrot.lane.b32.xlu0 %v4839, 126
    %v4852 = vpop.permute.xlu0 %4851
    %4853 = vrot.lane.b32.xlu0 %v4840, 126
    %v4854 = vpop.permute.xlu0 %4853
    %4855 = vrot.lane.b32.xlu0 %v4841, 126
    %v4856 = vpop.permute.xlu0 %4855
    %4857 = vrot.lane.b32.xlu0 %v4842, 126
    %v4858 = vpop.permute.xlu0 %4857
    %4859 = vrot.lane.b32.xlu0 %v4843, 126
    %v4860 = vpop.permute.xlu0 %4859
    %4861 = vrot.lane.b32.xlu0 %v4844, 126
    %v4862 = vpop.permute.xlu0 %4861
    %v4863 = vsel %vm368, %v4852, %v4854
    %v4864 = vsel %vm368, %v4854, %v4856
    %v4865 = vsel %vm368, %v4856, %v4858
    %v4866 = vsel %vm368, %v4858, %v4860
    %v4867 = vsel %vm368, %v4860, %v4862
    %v4874 = vadd.f32 %v4702, %v4863
    %v4875 = vadd.f32 %v4703, %v4864
    %v4876 = vadd.f32 %v4704, %v4865
    %v4877 = vadd.f32 %v4705, %v4866
    %v4878 = vadd.f32 %v4706, %v4867
    %v4879 = vadd.f32 %v4707, %v4862
    %s4880 = sld [smem:[#allocation6 + $0x302]]
    %v4881 = vstv %s4880
    %v4882 = vmul.f32 %v4881, %v1725
    %v4883 = vmul.f32 %v4881, %v1726
    %v4884 = vmul.f32 %v4881, %v1727
    %v4885 = vmul.f32 %v4881, %v1728
    %v4886 = vmul.f32 %v4881, %v1729
    %v4887 = vmul.f32 %v4881, %v1730
    %4894 = vrot.lane.b32.xlu0 %v4882, 126
    %v4895 = vpop.permute.xlu0 %4894
    %4896 = vrot.lane.b32.xlu0 %v4883, 126
    %v4897 = vpop.permute.xlu0 %4896
    %4898 = vrot.lane.b32.xlu0 %v4884, 126
    %v4899 = vpop.permute.xlu0 %4898
    %4900 = vrot.lane.b32.xlu0 %v4885, 126
    %v4901 = vpop.permute.xlu0 %4900
    %4902 = vrot.lane.b32.xlu0 %v4886, 126
    %v4903 = vpop.permute.xlu0 %4902
    %4904 = vrot.lane.b32.xlu0 %v4887, 126
    %v4905 = vpop.permute.xlu0 %4904
    %v4906 = vsel %vm368, %v4895, %v4897
    %v4907 = vsel %vm368, %v4897, %v4899
    %v4908 = vsel %vm368, %v4899, %v4901
    %v4909 = vsel %vm368, %v4901, %v4903
    %v4910 = vsel %vm368, %v4903, %v4905
    %v4917 = vadd.f32 %v4745, %v4906
    %v4918 = vadd.f32 %v4746, %v4907
    %v4919 = vadd.f32 %v4747, %v4908
    %v4920 = vadd.f32 %v4748, %v4909
    %v4921 = vadd.f32 %v4749, %v4910
    %v4922 = vadd.f32 %v4750, %v4905
    %s4923 = sld [smem:[#allocation6 + $0x502]]
    %v4924 = vstv %s4923
    %v4925 = vmul.f32 %v4924, %v1725
    %v4926 = vmul.f32 %v4924, %v1726
    %v4927 = vmul.f32 %v4924, %v1727
    %v4928 = vmul.f32 %v4924, %v1728
    %v4929 = vmul.f32 %v4924, %v1729
    %v4930 = vmul.f32 %v4924, %v1730
    %4937 = vrot.lane.b32.xlu0 %v4925, 126
    %v4938 = vpop.permute.xlu0 %4937
    %4939 = vrot.lane.b32.xlu0 %v4926, 126
    %v4940 = vpop.permute.xlu0 %4939
    %4941 = vrot.lane.b32.xlu0 %v4927, 126
    %v4942 = vpop.permute.xlu0 %4941
    %4943 = vrot.lane.b32.xlu0 %v4928, 126
    %v4944 = vpop.permute.xlu0 %4943
    %4945 = vrot.lane.b32.xlu0 %v4929, 126
    %v4946 = vpop.permute.xlu0 %4945
    %4947 = vrot.lane.b32.xlu0 %v4930, 126
    %v4948 = vpop.permute.xlu0 %4947
    %v4949 = vsel %vm368, %v4938, %v4940
    %v4950 = vsel %vm368, %v4940, %v4942
    %v4951 = vsel %vm368, %v4942, %v4944
    %v4952 = vsel %vm368, %v4944, %v4946
    %v4953 = vsel %vm368, %v4946, %v4948
    %v4960 = vadd.f32 %v4788, %v4949
    %v4961 = vadd.f32 %v4789, %v4950
    %v4962 = vadd.f32 %v4790, %v4951
    %v4963 = vadd.f32 %v4791, %v4952
    %v4964 = vadd.f32 %v4792, %v4953
    %v4965 = vadd.f32 %v4793, %v4948
    %s4966 = sld [smem:[#allocation6 + $0x702]]
    %v4967 = vstv %s4966
    %v4968 = vmul.f32 %v4967, %v1725
    %v4969 = vmul.f32 %v4967, %v1726
    %v4970 = vmul.f32 %v4967, %v1727
    %v4971 = vmul.f32 %v4967, %v1728
    %v4972 = vmul.f32 %v4967, %v1729
    %v4973 = vmul.f32 %v4967, %v1730
    %4980 = vrot.lane.b32.xlu0 %v4968, 126
    %v4981 = vpop.permute.xlu0 %4980
    %4982 = vrot.lane.b32.xlu0 %v4969, 126
    %v4983 = vpop.permute.xlu0 %4982
    %4984 = vrot.lane.b32.xlu0 %v4970, 126
    %v4985 = vpop.permute.xlu0 %4984
    %4986 = vrot.lane.b32.xlu0 %v4971, 126
    %v4987 = vpop.permute.xlu0 %4986
    %4988 = vrot.lane.b32.xlu0 %v4972, 126
    %v4989 = vpop.permute.xlu0 %4988
    %4990 = vrot.lane.b32.xlu0 %v4973, 126
    %v4991 = vpop.permute.xlu0 %4990
    %v4992 = vsel %vm368, %v4981, %v4983
    %v4993 = vsel %vm368, %v4983, %v4985
    %v4994 = vsel %vm368, %v4985, %v4987
    %v4995 = vsel %vm368, %v4987, %v4989
    %v4996 = vsel %vm368, %v4989, %v4991
    %v5003 = vadd.f32 %v4831, %v4992
    %v5004 = vadd.f32 %v4832, %v4993
    %v5005 = vadd.f32 %v4833, %v4994
    %v5006 = vadd.f32 %v4834, %v4995
    %v5007 = vadd.f32 %v4835, %v4996
    %v5008 = vadd.f32 %v4836, %v4991
    %s5009 = sld [smem:[#allocation6 + $0x103]]
    %v5010 = vstv %s5009
    %v5011 = vmul.f32 %v5010, %v1725
    %v5012 = vmul.f32 %v5010, %v1726
    %v5013 = vmul.f32 %v5010, %v1727
    %v5014 = vmul.f32 %v5010, %v1728
    %v5015 = vmul.f32 %v5010, %v1729
    %v5016 = vmul.f32 %v5010, %v1730
    %5023 = vrot.lane.b32.xlu0 %v5011, 100
    %v5024 = vpop.permute.xlu0 %5023
    %5025 = vrot.lane.b32.xlu0 %v5012, 100
    %v5026 = vpop.permute.xlu0 %5025
    %5027 = vrot.lane.b32.xlu0 %v5013, 100
    %v5028 = vpop.permute.xlu0 %5027
    %5029 = vrot.lane.b32.xlu0 %v5014, 100
    %v5030 = vpop.permute.xlu0 %5029
    %5031 = vrot.lane.b32.xlu0 %v5015, 100
    %v5032 = vpop.permute.xlu0 %5031
    %5033 = vrot.lane.b32.xlu0 %v5016, 100
    %v5034 = vpop.permute.xlu0 %5033
    %v5035 = vsel %vm561, %v5024, %v5026
    %v5036 = vsel %vm561, %v5026, %v5028
    %v5037 = vsel %vm561, %v5028, %v5030
    %v5038 = vsel %vm561, %v5030, %v5032
    %v5039 = vsel %vm561, %v5032, %v5034
    %v5046 = vadd.f32 %v4874, %v5035
    %v5047 = vadd.f32 %v4875, %v5036
    %v5048 = vadd.f32 %v4876, %v5037
    %v5049 = vadd.f32 %v4877, %v5038
    %v5050 = vadd.f32 %v4878, %v5039
    %v5051 = vadd.f32 %v4879, %v5034
    %s5052 = sld [smem:[#allocation6 + $0x303]]
    %v5053 = vstv %s5052
    %v5054 = vmul.f32 %v5053, %v1725
    %v5055 = vmul.f32 %v5053, %v1726
    %v5056 = vmul.f32 %v5053, %v1727
    %v5057 = vmul.f32 %v5053, %v1728
    %v5058 = vmul.f32 %v5053, %v1729
    %v5059 = vmul.f32 %v5053, %v1730
    %5066 = vrot.lane.b32.xlu0 %v5054, 100
    %v5067 = vpop.permute.xlu0 %5066
    %5068 = vrot.lane.b32.xlu0 %v5055, 100
    %v5069 = vpop.permute.xlu0 %5068
    %5070 = vrot.lane.b32.xlu0 %v5056, 100
    %v5071 = vpop.permute.xlu0 %5070
    %5072 = vrot.lane.b32.xlu0 %v5057, 100
    %v5073 = vpop.permute.xlu0 %5072
    %5074 = vrot.lane.b32.xlu0 %v5058, 100
    %v5075 = vpop.permute.xlu0 %5074
    %5076 = vrot.lane.b32.xlu0 %v5059, 100
    %v5077 = vpop.permute.xlu0 %5076
    %v5078 = vsel %vm561, %v5067, %v5069
    %v5079 = vsel %vm561, %v5069, %v5071
    %v5080 = vsel %vm561, %v5071, %v5073
    %v5081 = vsel %vm561, %v5073, %v5075
    %v5082 = vsel %vm561, %v5075, %v5077
    %v5089 = vadd.f32 %v4917, %v5078
    %v5090 = vadd.f32 %v4918, %v5079
    %v5091 = vadd.f32 %v4919, %v5080
    %v5092 = vadd.f32 %v4920, %v5081
    %v5093 = vadd.f32 %v4921, %v5082
    %v5094 = vadd.f32 %v4922, %v5077
    %s5095 = sld [smem:[#allocation6 + $0x503]]
    %v5096 = vstv %s5095
    %v5097 = vmul.f32 %v5096, %v1725
    %v5098 = vmul.f32 %v5096, %v1726
    %v5099 = vmul.f32 %v5096, %v1727
    %v5100 = vmul.f32 %v5096, %v1728
    %v5101 = vmul.f32 %v5096, %v1729
    %v5102 = vmul.f32 %v5096, %v1730
    %5109 = vrot.lane.b32.xlu0 %v5097, 100
    %v5110 = vpop.permute.xlu0 %5109
    %5111 = vrot.lane.b32.xlu0 %v5098, 100
    %v5112 = vpop.permute.xlu0 %5111
    %5113 = vrot.lane.b32.xlu0 %v5099, 100
    %v5114 = vpop.permute.xlu0 %5113
    %5115 = vrot.lane.b32.xlu0 %v5100, 100
    %v5116 = vpop.permute.xlu0 %5115
    %5117 = vrot.lane.b32.xlu0 %v5101, 100
    %v5118 = vpop.permute.xlu0 %5117
    %5119 = vrot.lane.b32.xlu0 %v5102, 100
    %v5120 = vpop.permute.xlu0 %5119
    %v5121 = vsel %vm561, %v5110, %v5112
    %v5122 = vsel %vm561, %v5112, %v5114
    %v5123 = vsel %vm561, %v5114, %v5116
    %v5124 = vsel %vm561, %v5116, %v5118
    %v5125 = vsel %vm561, %v5118, %v5120
    %v5132 = vadd.f32 %v4960, %v5121
    %v5133 = vadd.f32 %v4961, %v5122
    %v5134 = vadd.f32 %v4962, %v5123
    %v5135 = vadd.f32 %v4963, %v5124
    %v5136 = vadd.f32 %v4964, %v5125
    %v5137 = vadd.f32 %v4965, %v5120
    %s5138 = sld [smem:[#allocation6 + $0x703]]
    %v5139 = vstv %s5138
    %v5140 = vmul.f32 %v5139, %v1725
    %v5141 = vmul.f32 %v5139, %v1726
    %v5142 = vmul.f32 %v5139, %v1727
    %v5143 = vmul.f32 %v5139, %v1728
    %v5144 = vmul.f32 %v5139, %v1729
    %v5145 = vmul.f32 %v5139, %v1730
    %5152 = vrot.lane.b32.xlu0 %v5140, 100
    %v5153 = vpop.permute.xlu0 %5152
    %5154 = vrot.lane.b32.xlu0 %v5141, 100
    %v5155 = vpop.permute.xlu0 %5154
    %5156 = vrot.lane.b32.xlu0 %v5142, 100
    %v5157 = vpop.permute.xlu0 %5156
    %5158 = vrot.lane.b32.xlu0 %v5143, 100
    %v5159 = vpop.permute.xlu0 %5158
    %5160 = vrot.lane.b32.xlu0 %v5144, 100
    %v5161 = vpop.permute.xlu0 %5160
    %5162 = vrot.lane.b32.xlu0 %v5145, 100
    %v5163 = vpop.permute.xlu0 %5162
    %v5164 = vsel %vm561, %v5153, %v5155
    %v5165 = vsel %vm561, %v5155, %v5157
    %v5166 = vsel %vm561, %v5157, %v5159
    %v5167 = vsel %vm561, %v5159, %v5161
    %v5168 = vsel %vm561, %v5161, %v5163
    %v5175 = vadd.f32 %v5003, %v5164
    %v5176 = vadd.f32 %v5004, %v5165
    %v5177 = vadd.f32 %v5005, %v5166
    %v5178 = vadd.f32 %v5006, %v5167
    %v5179 = vadd.f32 %v5007, %v5168
    %v5180 = vadd.f32 %v5008, %v5163
    %s5181 = sld [smem:[#allocation6 + $0x104]]
    %v5182 = vstv %s5181
    %v5183 = vmul.f32 %v5182, %v1725
    %v5184 = vmul.f32 %v5182, %v1726
    %v5185 = vmul.f32 %v5182, %v1727
    %v5186 = vmul.f32 %v5182, %v1728
    %v5187 = vmul.f32 %v5182, %v1729
    %v5188 = vmul.f32 %v5182, %v1730
    %5195 = vrot.lane.b32.xlu0 %v5183, 99
    %v5196 = vpop.permute.xlu0 %5195
    %5197 = vrot.lane.b32.xlu0 %v5184, 99
    %v5198 = vpop.permute.xlu0 %5197
    %5199 = vrot.lane.b32.xlu0 %v5185, 99
    %v5200 = vpop.permute.xlu0 %5199
    %5201 = vrot.lane.b32.xlu0 %v5186, 99
    %v5202 = vpop.permute.xlu0 %5201
    %5203 = vrot.lane.b32.xlu0 %v5187, 99
    %v5204 = vpop.permute.xlu0 %5203
    %5205 = vrot.lane.b32.xlu0 %v5188, 99
    %v5206 = vpop.permute.xlu0 %5205
    %v5207 = vsel %vm754, %v5196, %v5198
    %v5208 = vsel %vm754, %v5198, %v5200
    %v5209 = vsel %vm754, %v5200, %v5202
    %v5210 = vsel %vm754, %v5202, %v5204
    %v5211 = vsel %vm754, %v5204, %v5206
    %v5218 = vadd.f32 %v5046, %v5207
    %v5219 = vadd.f32 %v5047, %v5208
    %v5220 = vadd.f32 %v5048, %v5209
    %v5221 = vadd.f32 %v5049, %v5210
    %v5222 = vadd.f32 %v5050, %v5211
    %v5223 = vadd.f32 %v5051, %v5206
    %s5224 = sld [smem:[#allocation6 + $0x304]]
    %v5225 = vstv %s5224
    %v5226 = vmul.f32 %v5225, %v1725
    %v5227 = vmul.f32 %v5225, %v1726
    %v5228 = vmul.f32 %v5225, %v1727
    %v5229 = vmul.f32 %v5225, %v1728
    %v5230 = vmul.f32 %v5225, %v1729
    %v5231 = vmul.f32 %v5225, %v1730
    %5238 = vrot.lane.b32.xlu0 %v5226, 99
    %v5239 = vpop.permute.xlu0 %5238
    %5240 = vrot.lane.b32.xlu0 %v5227, 99
    %v5241 = vpop.permute.xlu0 %5240
    %5242 = vrot.lane.b32.xlu0 %v5228, 99
    %v5243 = vpop.permute.xlu0 %5242
    %5244 = vrot.lane.b32.xlu0 %v5229, 99
    %v5245 = vpop.permute.xlu0 %5244
    %5246 = vrot.lane.b32.xlu0 %v5230, 99
    %v5247 = vpop.permute.xlu0 %5246
    %5248 = vrot.lane.b32.xlu0 %v5231, 99
    %v5249 = vpop.permute.xlu0 %5248
    %v5250 = vsel %vm754, %v5239, %v5241
    %v5251 = vsel %vm754, %v5241, %v5243
    %v5252 = vsel %vm754, %v5243, %v5245
    %v5253 = vsel %vm754, %v5245, %v5247
    %v5254 = vsel %vm754, %v5247, %v5249
    %v5261 = vadd.f32 %v5089, %v5250
    %v5262 = vadd.f32 %v5090, %v5251
    %v5263 = vadd.f32 %v5091, %v5252
    %v5264 = vadd.f32 %v5092, %v5253
    %v5265 = vadd.f32 %v5093, %v5254
    %v5266 = vadd.f32 %v5094, %v5249
    %s5267 = sld [smem:[#allocation6 + $0x504]]
    %v5268 = vstv %s5267
    %v5269 = vmul.f32 %v5268, %v1725
    %v5270 = vmul.f32 %v5268, %v1726
    %v5271 = vmul.f32 %v5268, %v1727
    %v5272 = vmul.f32 %v5268, %v1728
    %v5273 = vmul.f32 %v5268, %v1729
    %v5274 = vmul.f32 %v5268, %v1730
    %5281 = vrot.lane.b32.xlu0 %v5269, 99
    %v5282 = vpop.permute.xlu0 %5281
    %5283 = vrot.lane.b32.xlu0 %v5270, 99
    %v5284 = vpop.permute.xlu0 %5283
    %5285 = vrot.lane.b32.xlu0 %v5271, 99
    %v5286 = vpop.permute.xlu0 %5285
    %5287 = vrot.lane.b32.xlu0 %v5272, 99
    %v5288 = vpop.permute.xlu0 %5287
    %5289 = vrot.lane.b32.xlu0 %v5273, 99
    %v5290 = vpop.permute.xlu0 %5289
    %5291 = vrot.lane.b32.xlu0 %v5274, 99
    %v5292 = vpop.permute.xlu0 %5291
    %v5293 = vsel %vm754, %v5282, %v5284
    %v5294 = vsel %vm754, %v5284, %v5286
    %v5295 = vsel %vm754, %v5286, %v5288
    %v5296 = vsel %vm754, %v5288, %v5290
    %v5297 = vsel %vm754, %v5290, %v5292
    %v5304 = vadd.f32 %v5132, %v5293
    %v5305 = vadd.f32 %v5133, %v5294
    %v5306 = vadd.f32 %v5134, %v5295
    %v5307 = vadd.f32 %v5135, %v5296
    %v5308 = vadd.f32 %v5136, %v5297
    %v5309 = vadd.f32 %v5137, %v5292
    %s5310 = sld [smem:[#allocation6 + $0x704]]
    %v5311 = vstv %s5310
    %v5312 = vmul.f32 %v5311, %v1725
    %v5313 = vmul.f32 %v5311, %v1726
    %v5314 = vmul.f32 %v5311, %v1727
    %v5315 = vmul.f32 %v5311, %v1728
    %v5316 = vmul.f32 %v5311, %v1729
    %v5317 = vmul.f32 %v5311, %v1730
    %5324 = vrot.lane.b32.xlu0 %v5312, 99
    %v5325 = vpop.permute.xlu0 %5324
    %5326 = vrot.lane.b32.xlu0 %v5313, 99
    %v5327 = vpop.permute.xlu0 %5326
    %5328 = vrot.lane.b32.xlu0 %v5314, 99
    %v5329 = vpop.permute.xlu0 %5328
    %5330 = vrot.lane.b32.xlu0 %v5315, 99
    %v5331 = vpop.permute.xlu0 %5330
    %5332 = vrot.lane.b32.xlu0 %v5316, 99
    %v5333 = vpop.permute.xlu0 %5332
    %5334 = vrot.lane.b32.xlu0 %v5317, 99
    %v5335 = vpop.permute.xlu0 %5334
    %v5336 = vsel %vm754, %v5325, %v5327
    %v5337 = vsel %vm754, %v5327, %v5329
    %v5338 = vsel %vm754, %v5329, %v5331
    %v5339 = vsel %vm754, %v5331, %v5333
    %v5340 = vsel %vm754, %v5333, %v5335
    %v5347 = vadd.f32 %v5175, %v5336
    %v5348 = vadd.f32 %v5176, %v5337
    %v5349 = vadd.f32 %v5177, %v5338
    %v5350 = vadd.f32 %v5178, %v5339
    %v5351 = vadd.f32 %v5179, %v5340
    %v5352 = vadd.f32 %v5180, %v5335
    %s5353 = sld [smem:[#allocation6 + $0x105]]
    %v5354 = vstv %s5353
    %v5355 = vmul.f32 %v5354, %v1725
    %v5356 = vmul.f32 %v5354, %v1726
    %v5357 = vmul.f32 %v5354, %v1727
    %v5358 = vmul.f32 %v5354, %v1728
    %v5359 = vmul.f32 %v5354, %v1729
    %v5360 = vmul.f32 %v5354, %v1730
    %5367 = vrot.lane.b32.xlu0 %v5355, 98
    %v5368 = vpop.permute.xlu0 %5367
    %5369 = vrot.lane.b32.xlu0 %v5356, 98
    %v5370 = vpop.permute.xlu0 %5369
    %5371 = vrot.lane.b32.xlu0 %v5357, 98
    %v5372 = vpop.permute.xlu0 %5371
    %5373 = vrot.lane.b32.xlu0 %v5358, 98
    %v5374 = vpop.permute.xlu0 %5373
    %5375 = vrot.lane.b32.xlu0 %v5359, 98
    %v5376 = vpop.permute.xlu0 %5375
    %5377 = vrot.lane.b32.xlu0 %v5360, 98
    %v5378 = vpop.permute.xlu0 %5377
    %v5379 = vsel %vm947, %v5368, %v5370
    %v5380 = vsel %vm947, %v5370, %v5372
    %v5381 = vsel %vm947, %v5372, %v5374
    %v5382 = vsel %vm947, %v5374, %v5376
    %v5383 = vsel %vm947, %v5376, %v5378
    %v5390 = vadd.f32 %v5218, %v5379
    %v5391 = vadd.f32 %v5219, %v5380
    %v5392 = vadd.f32 %v5220, %v5381
    %v5393 = vadd.f32 %v5221, %v5382
    %v5394 = vadd.f32 %v5222, %v5383
    %v5395 = vadd.f32 %v5223, %v5378
    %s5396 = sld [smem:[#allocation6 + $0x305]]
    %v5397 = vstv %s5396
    %v5398 = vmul.f32 %v5397, %v1725
    %v5399 = vmul.f32 %v5397, %v1726
    %v5400 = vmul.f32 %v5397, %v1727
    %v5401 = vmul.f32 %v5397, %v1728
    %v5402 = vmul.f32 %v5397, %v1729
    %v5403 = vmul.f32 %v5397, %v1730
    %5410 = vrot.lane.b32.xlu0 %v5398, 98
    %v5411 = vpop.permute.xlu0 %5410
    %5412 = vrot.lane.b32.xlu0 %v5399, 98
    %v5413 = vpop.permute.xlu0 %5412
    %5414 = vrot.lane.b32.xlu0 %v5400, 98
    %v5415 = vpop.permute.xlu0 %5414
    %5416 = vrot.lane.b32.xlu0 %v5401, 98
    %v5417 = vpop.permute.xlu0 %5416
    %5418 = vrot.lane.b32.xlu0 %v5402, 98
    %v5419 = vpop.permute.xlu0 %5418
    %5420 = vrot.lane.b32.xlu0 %v5403, 98
    %v5421 = vpop.permute.xlu0 %5420
    %v5422 = vsel %vm947, %v5411, %v5413
    %v5423 = vsel %vm947, %v5413, %v5415
    %v5424 = vsel %vm947, %v5415, %v5417
    %v5425 = vsel %vm947, %v5417, %v5419
    %v5426 = vsel %vm947, %v5419, %v5421
    %v5433 = vadd.f32 %v5261, %v5422
    %v5434 = vadd.f32 %v5262, %v5423
    %v5435 = vadd.f32 %v5263, %v5424
    %v5436 = vadd.f32 %v5264, %v5425
    %v5437 = vadd.f32 %v5265, %v5426
    %v5438 = vadd.f32 %v5266, %v5421
    %s5439 = sld [smem:[#allocation6 + $0x505]]
    %v5440 = vstv %s5439
    %v5441 = vmul.f32 %v5440, %v1725
    %v5442 = vmul.f32 %v5440, %v1726
    %v5443 = vmul.f32 %v5440, %v1727
    %v5444 = vmul.f32 %v5440, %v1728
    %v5445 = vmul.f32 %v5440, %v1729
    %v5446 = vmul.f32 %v5440, %v1730
    %5453 = vrot.lane.b32.xlu0 %v5441, 98
    %v5454 = vpop.permute.xlu0 %5453
    %5455 = vrot.lane.b32.xlu0 %v5442, 98
    %v5456 = vpop.permute.xlu0 %5455
    %5457 = vrot.lane.b32.xlu0 %v5443, 98
    %v5458 = vpop.permute.xlu0 %5457
    %5459 = vrot.lane.b32.xlu0 %v5444, 98
    %v5460 = vpop.permute.xlu0 %5459
    %5461 = vrot.lane.b32.xlu0 %v5445, 98
    %v5462 = vpop.permute.xlu0 %5461
    %5463 = vrot.lane.b32.xlu0 %v5446, 98
    %v5464 = vpop.permute.xlu0 %5463
    %v5465 = vsel %vm947, %v5454, %v5456
    %v5466 = vsel %vm947, %v5456, %v5458
    %v5467 = vsel %vm947, %v5458, %v5460
    %v5468 = vsel %vm947, %v5460, %v5462
    %v5469 = vsel %vm947, %v5462, %v5464
    %v5476 = vadd.f32 %v5304, %v5465
    %v5477 = vadd.f32 %v5305, %v5466
    %v5478 = vadd.f32 %v5306, %v5467
    %v5479 = vadd.f32 %v5307, %v5468
    %v5480 = vadd.f32 %v5308, %v5469
    %v5481 = vadd.f32 %v5309, %v5464
    %s5482 = sld [smem:[#allocation6 + $0x705]]
    %v5483 = vstv %s5482
    %v5484 = vmul.f32 %v5483, %v1725
    %v5485 = vmul.f32 %v5483, %v1726
    %v5486 = vmul.f32 %v5483, %v1727
    %v5487 = vmul.f32 %v5483, %v1728
    %v5488 = vmul.f32 %v5483, %v1729
    %v5489 = vmul.f32 %v5483, %v1730
    %5496 = vrot.lane.b32.xlu0 %v5484, 98
    %v5497 = vpop.permute.xlu0 %5496
    %5498 = vrot.lane.b32.xlu0 %v5485, 98
    %v5499 = vpop.permute.xlu0 %5498
    %5500 = vrot.lane.b32.xlu0 %v5486, 98
    %v5501 = vpop.permute.xlu0 %5500
    %5502 = vrot.lane.b32.xlu0 %v5487, 98
    %v5503 = vpop.permute.xlu0 %5502
    %5504 = vrot.lane.b32.xlu0 %v5488, 98
    %v5505 = vpop.permute.xlu0 %5504
    %5506 = vrot.lane.b32.xlu0 %v5489, 98
    %v5507 = vpop.permute.xlu0 %5506
    %v5508 = vsel %vm947, %v5497, %v5499
    %v5509 = vsel %vm947, %v5499, %v5501
    %v5510 = vsel %vm947, %v5501, %v5503
    %v5511 = vsel %vm947, %v5503, %v5505
    %v5512 = vsel %vm947, %v5505, %v5507
    %v5519 = vadd.f32 %v5347, %v5508
    %v5520 = vadd.f32 %v5348, %v5509
    %v5521 = vadd.f32 %v5349, %v5510
    %v5522 = vadd.f32 %v5350, %v5511
    %v5523 = vadd.f32 %v5351, %v5512
    %v5524 = vadd.f32 %v5352, %v5507
    %s5525 = sld [smem:[#allocation6 + $0x106]]
    %v5526 = vstv %s5525
    %v5527 = vmul.f32 %v5526, %v1725
    %v5528 = vmul.f32 %v5526, %v1726
    %v5529 = vmul.f32 %v5526, %v1727
    %v5530 = vmul.f32 %v5526, %v1728
    %v5531 = vmul.f32 %v5526, %v1729
    %v5532 = vmul.f32 %v5526, %v1730
    %5539 = vrot.lane.b32.xlu0 %v5527, 72
    %v5540 = vpop.permute.xlu0 %5539
    %5541 = vrot.lane.b32.xlu0 %v5528, 72
    %v5542 = vpop.permute.xlu0 %5541
    %5543 = vrot.lane.b32.xlu0 %v5529, 72
    %v5544 = vpop.permute.xlu0 %5543
    %5545 = vrot.lane.b32.xlu0 %v5530, 72
    %v5546 = vpop.permute.xlu0 %5545
    %5547 = vrot.lane.b32.xlu0 %v5531, 72
    %v5548 = vpop.permute.xlu0 %5547
    %5549 = vrot.lane.b32.xlu0 %v5532, 72
    %v5550 = vpop.permute.xlu0 %5549
    %v5551 = vsel %vm1140, %v5540, %v5542
    %v5552 = vsel %vm1140, %v5542, %v5544
    %v5553 = vsel %vm1140, %v5544, %v5546
    %v5554 = vsel %vm1140, %v5546, %v5548
    %v5555 = vsel %vm1140, %v5548, %v5550
    %v5562 = vadd.f32 %v5390, %v5551
    %v5563 = vadd.f32 %v5391, %v5552
    %v5564 = vadd.f32 %v5392, %v5553
    %v5565 = vadd.f32 %v5393, %v5554
    %v5566 = vadd.f32 %v5394, %v5555
    %v5567 = vadd.f32 %v5395, %v5550
    %s5568 = sld [smem:[#allocation6 + $0x306]]
    %v5569 = vstv %s5568
    %v5570 = vmul.f32 %v5569, %v1725
    %v5571 = vmul.f32 %v5569, %v1726
    %v5572 = vmul.f32 %v5569, %v1727
    %v5573 = vmul.f32 %v5569, %v1728
    %v5574 = vmul.f32 %v5569, %v1729
    %v5575 = vmul.f32 %v5569, %v1730
    %5582 = vrot.lane.b32.xlu0 %v5570, 72
    %v5583 = vpop.permute.xlu0 %5582
    %5584 = vrot.lane.b32.xlu0 %v5571, 72
    %v5585 = vpop.permute.xlu0 %5584
    %5586 = vrot.lane.b32.xlu0 %v5572, 72
    %v5587 = vpop.permute.xlu0 %5586
    %5588 = vrot.lane.b32.xlu0 %v5573, 72
    %v5589 = vpop.permute.xlu0 %5588
    %5590 = vrot.lane.b32.xlu0 %v5574, 72
    %v5591 = vpop.permute.xlu0 %5590
    %5592 = vrot.lane.b32.xlu0 %v5575, 72
    %v5593 = vpop.permute.xlu0 %5592
    %v5594 = vsel %vm1140, %v5583, %v5585
    %v5595 = vsel %vm1140, %v5585, %v5587
    %v5596 = vsel %vm1140, %v5587, %v5589
    %v5597 = vsel %vm1140, %v5589, %v5591
    %v5598 = vsel %vm1140, %v5591, %v5593
    %v5605 = vadd.f32 %v5433, %v5594
    %v5606 = vadd.f32 %v5434, %v5595
    %v5607 = vadd.f32 %v5435, %v5596
    %v5608 = vadd.f32 %v5436, %v5597
    %v5609 = vadd.f32 %v5437, %v5598
    %v5610 = vadd.f32 %v5438, %v5593
    %s5611 = sld [smem:[#allocation6 + $0x506]]
    %v5612 = vstv %s5611
    %v5613 = vmul.f32 %v5612, %v1725
    %v5614 = vmul.f32 %v5612, %v1726
    %v5615 = vmul.f32 %v5612, %v1727
    %v5616 = vmul.f32 %v5612, %v1728
    %v5617 = vmul.f32 %v5612, %v1729
    %v5618 = vmul.f32 %v5612, %v1730
    %5625 = vrot.lane.b32.xlu0 %v5613, 72
    %v5626 = vpop.permute.xlu0 %5625
    %5627 = vrot.lane.b32.xlu0 %v5614, 72
    %v5628 = vpop.permute.xlu0 %5627
    %5629 = vrot.lane.b32.xlu0 %v5615, 72
    %v5630 = vpop.permute.xlu0 %5629
    %5631 = vrot.lane.b32.xlu0 %v5616, 72
    %v5632 = vpop.permute.xlu0 %5631
    %5633 = vrot.lane.b32.xlu0 %v5617, 72
    %v5634 = vpop.permute.xlu0 %5633
    %5635 = vrot.lane.b32.xlu0 %v5618, 72
    %v5636 = vpop.permute.xlu0 %5635
    %v5637 = vsel %vm1140, %v5626, %v5628
    %v5638 = vsel %vm1140, %v5628, %v5630
    %v5639 = vsel %vm1140, %v5630, %v5632
    %v5640 = vsel %vm1140, %v5632, %v5634
    %v5641 = vsel %vm1140, %v5634, %v5636
    %v5648 = vadd.f32 %v5476, %v5637
    %v5649 = vadd.f32 %v5477, %v5638
    %v5650 = vadd.f32 %v5478, %v5639
    %v5651 = vadd.f32 %v5479, %v5640
    %v5652 = vadd.f32 %v5480, %v5641
    %v5653 = vadd.f32 %v5481, %v5636
    %s5654 = sld [smem:[#allocation6 + $0x706]]
    %v5655 = vstv %s5654
    %v5656 = vmul.f32 %v5655, %v1725
    %v5657 = vmul.f32 %v5655, %v1726
    %v5658 = vmul.f32 %v5655, %v1727
    %v5659 = vmul.f32 %v5655, %v1728
    %v5660 = vmul.f32 %v5655, %v1729
    %v5661 = vmul.f32 %v5655, %v1730
    %5668 = vrot.lane.b32.xlu0 %v5656, 72
    %v5669 = vpop.permute.xlu0 %5668
    %5670 = vrot.lane.b32.xlu0 %v5657, 72
    %v5671 = vpop.permute.xlu0 %5670
    %5672 = vrot.lane.b32.xlu0 %v5658, 72
    %v5673 = vpop.permute.xlu0 %5672
    %5674 = vrot.lane.b32.xlu0 %v5659, 72
    %v5675 = vpop.permute.xlu0 %5674
    %5676 = vrot.lane.b32.xlu0 %v5660, 72
    %v5677 = vpop.permute.xlu0 %5676
    %5678 = vrot.lane.b32.xlu0 %v5661, 72
    %v5679 = vpop.permute.xlu0 %5678
    %v5680 = vsel %vm1140, %v5669, %v5671
    %v5681 = vsel %vm1140, %v5671, %v5673
    %v5682 = vsel %vm1140, %v5673, %v5675
    %v5683 = vsel %vm1140, %v5675, %v5677
    %v5684 = vsel %vm1140, %v5677, %v5679
    %v5691 = vadd.f32 %v5519, %v5680
    %v5692 = vadd.f32 %v5520, %v5681
    %v5693 = vadd.f32 %v5521, %v5682
    %v5694 = vadd.f32 %v5522, %v5683
    %v5695 = vadd.f32 %v5523, %v5684
    %v5696 = vadd.f32 %v5524, %v5679
    %s5697 = sld [smem:[#allocation6 + $0x107]]
    %v5698 = vstv %s5697
    %v5699 = vmul.f32 %v5698, %v1725
    %v5700 = vmul.f32 %v5698, %v1726
    %v5701 = vmul.f32 %v5698, %v1727
    %v5702 = vmul.f32 %v5698, %v1728
    %v5703 = vmul.f32 %v5698, %v1729
    %v5704 = vmul.f32 %v5698, %v1730
    %5711 = vrot.lane.b32.xlu0 %v5699, 71
    %v5712 = vpop.permute.xlu0 %5711
    %5713 = vrot.lane.b32.xlu0 %v5700, 71
    %v5714 = vpop.permute.xlu0 %5713
    %5715 = vrot.lane.b32.xlu0 %v5701, 71
    %v5716 = vpop.permute.xlu0 %5715
    %5717 = vrot.lane.b32.xlu0 %v5702, 71
    %v5718 = vpop.permute.xlu0 %5717
    %5719 = vrot.lane.b32.xlu0 %v5703, 71
    %v5720 = vpop.permute.xlu0 %5719
    %5721 = vrot.lane.b32.xlu0 %v5704, 71
    %v5722 = vpop.permute.xlu0 %5721
    %v5723 = vsel %vm1333, %v5712, %v5714
    %v5724 = vsel %vm1333, %v5714, %v5716
    %v5725 = vsel %vm1333, %v5716, %v5718
    %v5726 = vsel %vm1333, %v5718, %v5720
    %v5727 = vsel %vm1333, %v5720, %v5722
    %v5734 = vadd.f32 %v5562, %v5723
    %v5735 = vadd.f32 %v5563, %v5724
    %v5736 = vadd.f32 %v5564, %v5725
    %v5737 = vadd.f32 %v5565, %v5726
    %v5738 = vadd.f32 %v5566, %v5727
    %v5739 = vadd.f32 %v5567, %v5722
    %s5740 = sld [smem:[#allocation6 + $0x307]]
    %v5741 = vstv %s5740
    %v5742 = vmul.f32 %v5741, %v1725
    %v5743 = vmul.f32 %v5741, %v1726
    %v5744 = vmul.f32 %v5741, %v1727
    %v5745 = vmul.f32 %v5741, %v1728
    %v5746 = vmul.f32 %v5741, %v1729
    %v5747 = vmul.f32 %v5741, %v1730
    %5754 = vrot.lane.b32.xlu0 %v5742, 71
    %v5755 = vpop.permute.xlu0 %5754
    %5756 = vrot.lane.b32.xlu0 %v5743, 71
    %v5757 = vpop.permute.xlu0 %5756
    %5758 = vrot.lane.b32.xlu0 %v5744, 71
    %v5759 = vpop.permute.xlu0 %5758
    %5760 = vrot.lane.b32.xlu0 %v5745, 71
    %v5761 = vpop.permute.xlu0 %5760
    %5762 = vrot.lane.b32.xlu0 %v5746, 71
    %v5763 = vpop.permute.xlu0 %5762
    %5764 = vrot.lane.b32.xlu0 %v5747, 71
    %v5765 = vpop.permute.xlu0 %5764
    %v5766 = vsel %vm1333, %v5755, %v5757
    %v5767 = vsel %vm1333, %v5757, %v5759
    %v5768 = vsel %vm1333, %v5759, %v5761
    %v5769 = vsel %vm1333, %v5761, %v5763
    %v5770 = vsel %vm1333, %v5763, %v5765
    %v5777 = vadd.f32 %v5605, %v5766
    %v5778 = vadd.f32 %v5606, %v5767
    %v5779 = vadd.f32 %v5607, %v5768
    %v5780 = vadd.f32 %v5608, %v5769
    %v5781 = vadd.f32 %v5609, %v5770
    %v5782 = vadd.f32 %v5610, %v5765
    %s5783 = sld [smem:[#allocation6 + $0x507]]
    %v5784 = vstv %s5783
    %v5785 = vmul.f32 %v5784, %v1725
    %v5786 = vmul.f32 %v5784, %v1726
    %v5787 = vmul.f32 %v5784, %v1727
    %v5788 = vmul.f32 %v5784, %v1728
    %v5789 = vmul.f32 %v5784, %v1729
    %v5790 = vmul.f32 %v5784, %v1730
    %5797 = vrot.lane.b32.xlu0 %v5785, 71
    %v5798 = vpop.permute.xlu0 %5797
    %5799 = vrot.lane.b32.xlu0 %v5786, 71
    %v5800 = vpop.permute.xlu0 %5799
    %5801 = vrot.lane.b32.xlu0 %v5787, 71
    %v5802 = vpop.permute.xlu0 %5801
    %5803 = vrot.lane.b32.xlu0 %v5788, 71
    %v5804 = vpop.permute.xlu0 %5803
    %5805 = vrot.lane.b32.xlu0 %v5789, 71
    %v5806 = vpop.permute.xlu0 %5805
    %5807 = vrot.lane.b32.xlu0 %v5790, 71
    %v5808 = vpop.permute.xlu0 %5807
    %v5809 = vsel %vm1333, %v5798, %v5800
    %v5810 = vsel %vm1333, %v5800, %v5802
    %v5811 = vsel %vm1333, %v5802, %v5804
    %v5812 = vsel %vm1333, %v5804, %v5806
    %v5813 = vsel %vm1333, %v5806, %v5808
    %v5820 = vadd.f32 %v5648, %v5809
    %v5821 = vadd.f32 %v5649, %v5810
    %v5822 = vadd.f32 %v5650, %v5811
    %v5823 = vadd.f32 %v5651, %v5812
    %v5824 = vadd.f32 %v5652, %v5813
    %v5825 = vadd.f32 %v5653, %v5808
    %s5826 = sld [smem:[#allocation6 + $0x707]]
    %v5827 = vstv %s5826
    %v5828 = vmul.f32 %v5827, %v1725
    %v5829 = vmul.f32 %v5827, %v1726
    %v5830 = vmul.f32 %v5827, %v1727
    %v5831 = vmul.f32 %v5827, %v1728
    %v5832 = vmul.f32 %v5827, %v1729
    %v5833 = vmul.f32 %v5827, %v1730
    %5840 = vrot.lane.b32.xlu0 %v5828, 71
    %v5841 = vpop.permute.xlu0 %5840
    %5842 = vrot.lane.b32.xlu0 %v5829, 71
    %v5843 = vpop.permute.xlu0 %5842
    %5844 = vrot.lane.b32.xlu0 %v5830, 71
    %v5845 = vpop.permute.xlu0 %5844
    %5846 = vrot.lane.b32.xlu0 %v5831, 71
    %v5847 = vpop.permute.xlu0 %5846
    %5848 = vrot.lane.b32.xlu0 %v5832, 71
    %v5849 = vpop.permute.xlu0 %5848
    %5850 = vrot.lane.b32.xlu0 %v5833, 71
    %v5851 = vpop.permute.xlu0 %5850
    %v5852 = vsel %vm1333, %v5841, %v5843
    %v5853 = vsel %vm1333, %v5843, %v5845
    %v5854 = vsel %vm1333, %v5845, %v5847
    %v5855 = vsel %vm1333, %v5847, %v5849
    %v5856 = vsel %vm1333, %v5849, %v5851
    %v5863 = vadd.f32 %v5691, %v5852
    %v5864 = vadd.f32 %v5692, %v5853
    %v5865 = vadd.f32 %v5693, %v5854
    %v5866 = vadd.f32 %v5694, %v5855
    %v5867 = vadd.f32 %v5695, %v5856
    %v5868 = vadd.f32 %v5696, %v5851
    %s5869 = sld [smem:[#allocation6 + $0x108]]
    %v5870 = vstv %s5869
    %v5871 = vmul.f32 %v5870, %v1725
    %v5872 = vmul.f32 %v5870, %v1726
    %v5873 = vmul.f32 %v5870, %v1727
    %v5874 = vmul.f32 %v5870, %v1728
    %v5875 = vmul.f32 %v5870, %v1729
    %v5876 = vmul.f32 %v5870, %v1730
    %5883 = vrot.lane.b32.xlu0 %v5871, 70
    %v5884 = vpop.permute.xlu0 %5883
    %5885 = vrot.lane.b32.xlu0 %v5872, 70
    %v5886 = vpop.permute.xlu0 %5885
    %5887 = vrot.lane.b32.xlu0 %v5873, 70
    %v5888 = vpop.permute.xlu0 %5887
    %5889 = vrot.lane.b32.xlu0 %v5874, 70
    %v5890 = vpop.permute.xlu0 %5889
    %5891 = vrot.lane.b32.xlu0 %v5875, 70
    %v5892 = vpop.permute.xlu0 %5891
    %5893 = vrot.lane.b32.xlu0 %v5876, 70
    %v5894 = vpop.permute.xlu0 %5893
    %v5895 = vsel %vm1526, %v5884, %v5886
    %v5896 = vsel %vm1526, %v5886, %v5888
    %v5897 = vsel %vm1526, %v5888, %v5890
    %v5898 = vsel %vm1526, %v5890, %v5892
    %v5899 = vsel %vm1526, %v5892, %v5894
    %v5906 = vadd.f32 %v5734, %v5895
    %v5907 = vadd.f32 %v5735, %v5896
    %v5908 = vadd.f32 %v5736, %v5897
    %v5909 = vadd.f32 %v5737, %v5898
    %v5910 = vadd.f32 %v5738, %v5899
    %v5911 = vadd.f32 %v5739, %v5894
    %s5912 = sld [smem:[#allocation6 + $0x308]]
    %v5913 = vstv %s5912
    %v5914 = vmul.f32 %v5913, %v1725
    %v5915 = vmul.f32 %v5913, %v1726
    %v5916 = vmul.f32 %v5913, %v1727
    %v5917 = vmul.f32 %v5913, %v1728
    %v5918 = vmul.f32 %v5913, %v1729
    %v5919 = vmul.f32 %v5913, %v1730
    %5926 = vrot.lane.b32.xlu0 %v5914, 70
    %v5927 = vpop.permute.xlu0 %5926
    %5928 = vrot.lane.b32.xlu0 %v5915, 70
    %v5929 = vpop.permute.xlu0 %5928
    %5930 = vrot.lane.b32.xlu0 %v5916, 70
    %v5931 = vpop.permute.xlu0 %5930
    %5932 = vrot.lane.b32.xlu0 %v5917, 70
    %v5933 = vpop.permute.xlu0 %5932
    %5934 = vrot.lane.b32.xlu0 %v5918, 70
    %v5935 = vpop.permute.xlu0 %5934
    %5936 = vrot.lane.b32.xlu0 %v5919, 70
    %v5937 = vpop.permute.xlu0 %5936
    %v5938 = vsel %vm1526, %v5927, %v5929
    %v5939 = vsel %vm1526, %v5929, %v5931
    %v5940 = vsel %vm1526, %v5931, %v5933
    %v5941 = vsel %vm1526, %v5933, %v5935
    %v5942 = vsel %vm1526, %v5935, %v5937
    %v5949 = vadd.f32 %v5777, %v5938
    %v5950 = vadd.f32 %v5778, %v5939
    %v5951 = vadd.f32 %v5779, %v5940
    %v5952 = vadd.f32 %v5780, %v5941
    %v5953 = vadd.f32 %v5781, %v5942
    %v5954 = vadd.f32 %v5782, %v5937
    %s5955 = sld [smem:[#allocation6 + $0x508]]
    %v5956 = vstv %s5955
    %v5957 = vmul.f32 %v5956, %v1725
    %v5958 = vmul.f32 %v5956, %v1726
    %v5959 = vmul.f32 %v5956, %v1727
    %v5960 = vmul.f32 %v5956, %v1728
    %v5961 = vmul.f32 %v5956, %v1729
    %v5962 = vmul.f32 %v5956, %v1730
    %5969 = vrot.lane.b32.xlu0 %v5957, 70
    %v5970 = vpop.permute.xlu0 %5969
    %5971 = vrot.lane.b32.xlu0 %v5958, 70
    %v5972 = vpop.permute.xlu0 %5971
    %5973 = vrot.lane.b32.xlu0 %v5959, 70
    %v5974 = vpop.permute.xlu0 %5973
    %5975 = vrot.lane.b32.xlu0 %v5960, 70
    %v5976 = vpop.permute.xlu0 %5975
    %5977 = vrot.lane.b32.xlu0 %v5961, 70
    %v5978 = vpop.permute.xlu0 %5977
    %5979 = vrot.lane.b32.xlu0 %v5962, 70
    %v5980 = vpop.permute.xlu0 %5979
    %v5981 = vsel %vm1526, %v5970, %v5972
    %v5982 = vsel %vm1526, %v5972, %v5974
    %v5983 = vsel %vm1526, %v5974, %v5976
    %v5984 = vsel %vm1526, %v5976, %v5978
    %v5985 = vsel %vm1526, %v5978, %v5980
    %v5992 = vadd.f32 %v5820, %v5981
    %v5993 = vadd.f32 %v5821, %v5982
    %v5994 = vadd.f32 %v5822, %v5983
    %v5995 = vadd.f32 %v5823, %v5984
    %v5996 = vadd.f32 %v5824, %v5985
    %v5997 = vadd.f32 %v5825, %v5980
    %s5998 = sld [smem:[#allocation6 + $0x708]]
    %v5999 = vstv %s5998
    %v6000 = vmul.f32 %v5999, %v1725
    %v6001 = vmul.f32 %v5999, %v1726
    %v6002 = vmul.f32 %v5999, %v1727
    %v6003 = vmul.f32 %v5999, %v1728
    %v6004 = vmul.f32 %v5999, %v1729
    %v6005 = vmul.f32 %v5999, %v1730
    %6012 = vrot.lane.b32.xlu0 %v6000, 70
    %v6013 = vpop.permute.xlu0 %6012
    %6014 = vrot.lane.b32.xlu0 %v6001, 70
    %v6015 = vpop.permute.xlu0 %6014
    %6016 = vrot.lane.b32.xlu0 %v6002, 70
    %v6017 = vpop.permute.xlu0 %6016
    %6018 = vrot.lane.b32.xlu0 %v6003, 70
    %v6019 = vpop.permute.xlu0 %6018
    %6020 = vrot.lane.b32.xlu0 %v6004, 70
    %v6021 = vpop.permute.xlu0 %6020
    %6022 = vrot.lane.b32.xlu0 %v6005, 70
    %v6023 = vpop.permute.xlu0 %6022
    %v6024 = vsel %vm1526, %v6013, %v6015
    %v6025 = vsel %vm1526, %v6015, %v6017
    %v6026 = vsel %vm1526, %v6017, %v6019
    %v6027 = vsel %vm1526, %v6019, %v6021
    %v6028 = vsel %vm1526, %v6021, %v6023
    %v6035 = vadd.f32 %v5863, %v6024
    %v6036 = vadd.f32 %v5864, %v6025
    %v6037 = vadd.f32 %v5865, %v6026
    %v6038 = vadd.f32 %v5866, %v6027
    %v6039 = vadd.f32 %v5867, %v6028
    %v6040 = vadd.f32 %v5868, %v6023
    %s6041 = sld [smem:[#allocation6 + $0x180]]
    %v6042 = vstv %s6041
    %v6043 = vmul.f32 %v6042, %v1739
    %v6044 = vmul.f32 %v6042, %v1740
    %v6045 = vmul.f32 %v6042, %v1741
    %v6046 = vmul.f32 %v6042, %v1742
    %v6047 = vmul.f32 %v6042, %v1743
    %v6048 = vmul.f32 %v6042, %v1744
    %v6049 = vadd.f32 %v5906, %v6043
    %v6050 = vadd.f32 %v5907, %v6044
    %v6051 = vadd.f32 %v5908, %v6045
    %v6052 = vadd.f32 %v5909, %v6046
    %v6053 = vadd.f32 %v5910, %v6047
    %v6054 = vadd.f32 %v5911, %v6048
    %s6055 = sld [smem:[#allocation6 + $0x380]]
    %v6056 = vstv %s6055
    %v6057 = vmul.f32 %v6056, %v1739
    %v6058 = vmul.f32 %v6056, %v1740
    %v6059 = vmul.f32 %v6056, %v1741
    %v6060 = vmul.f32 %v6056, %v1742
    %v6061 = vmul.f32 %v6056, %v1743
    %v6062 = vmul.f32 %v6056, %v1744
    %v6063 = vadd.f32 %v5949, %v6057
    %v6064 = vadd.f32 %v5950, %v6058
    %v6065 = vadd.f32 %v5951, %v6059
    %v6066 = vadd.f32 %v5952, %v6060
    %v6067 = vadd.f32 %v5953, %v6061
    %v6068 = vadd.f32 %v5954, %v6062
    %s6069 = sld [smem:[#allocation6 + $0x580]]
    %v6070 = vstv %s6069
    %v6071 = vmul.f32 %v6070, %v1739
    %v6072 = vmul.f32 %v6070, %v1740
    %v6073 = vmul.f32 %v6070, %v1741
    %v6074 = vmul.f32 %v6070, %v1742
    %v6075 = vmul.f32 %v6070, %v1743
    %v6076 = vmul.f32 %v6070, %v1744
    %v6077 = vadd.f32 %v5992, %v6071
    %v6078 = vadd.f32 %v5993, %v6072
    %v6079 = vadd.f32 %v5994, %v6073
    %v6080 = vadd.f32 %v5995, %v6074
    %v6081 = vadd.f32 %v5996, %v6075
    %v6082 = vadd.f32 %v5997, %v6076
    %s6083 = sld [smem:[#allocation6 + $0x780]]
    %v6084 = vstv %s6083
    %v6085 = vmul.f32 %v6084, %v1739
    %v6086 = vmul.f32 %v6084, %v1740
    %v6087 = vmul.f32 %v6084, %v1741
    %v6088 = vmul.f32 %v6084, %v1742
    %v6089 = vmul.f32 %v6084, %v1743
    %v6090 = vmul.f32 %v6084, %v1744
    %v6091 = vadd.f32 %v6035, %v6085
    %v6092 = vadd.f32 %v6036, %v6086
    %v6093 = vadd.f32 %v6037, %v6087
    %v6094 = vadd.f32 %v6038, %v6088
    %v6095 = vadd.f32 %v6039, %v6089
    %v6096 = vadd.f32 %v6040, %v6090
    %s6097 = sld [smem:[#allocation6 + $0x181]]
    %v6098 = vstv %s6097
    %v6099 = vmul.f32 %v6098, %v1739
    %v6100 = vmul.f32 %v6098, %v1740
    %v6101 = vmul.f32 %v6098, %v1741
    %v6102 = vmul.f32 %v6098, %v1742
    %v6103 = vmul.f32 %v6098, %v1743
    %v6104 = vmul.f32 %v6098, %v1744
    %6111 = vrot.lane.b32.xlu0 %v6099, 127
    %v6112 = vpop.permute.xlu0 %6111
    %6113 = vrot.lane.b32.xlu0 %v6100, 127
    %v6114 = vpop.permute.xlu0 %6113
    %6115 = vrot.lane.b32.xlu0 %v6101, 127
    %v6116 = vpop.permute.xlu0 %6115
    %6117 = vrot.lane.b32.xlu0 %v6102, 127
    %v6118 = vpop.permute.xlu0 %6117
    %6119 = vrot.lane.b32.xlu0 %v6103, 127
    %v6120 = vpop.permute.xlu0 %6119
    %6121 = vrot.lane.b32.xlu0 %v6104, 127
    %v6122 = vpop.permute.xlu0 %6121
    %v6123 = vsel %vm175, %v6112, %v6114
    %v6124 = vsel %vm175, %v6114, %v6116
    %v6125 = vsel %vm175, %v6116, %v6118
    %v6126 = vsel %vm175, %v6118, %v6120
    %v6127 = vsel %vm175, %v6120, %v6122
    %v6134 = vadd.f32 %v6049, %v6123
    %v6135 = vadd.f32 %v6050, %v6124
    %v6136 = vadd.f32 %v6051, %v6125
    %v6137 = vadd.f32 %v6052, %v6126
    %v6138 = vadd.f32 %v6053, %v6127
    %v6139 = vadd.f32 %v6054, %v6122
    %s6140 = sld [smem:[#allocation6 + $0x381]]
    %v6141 = vstv %s6140
    %v6142 = vmul.f32 %v6141, %v1739
    %v6143 = vmul.f32 %v6141, %v1740
    %v6144 = vmul.f32 %v6141, %v1741
    %v6145 = vmul.f32 %v6141, %v1742
    %v6146 = vmul.f32 %v6141, %v1743
    %v6147 = vmul.f32 %v6141, %v1744
    %6154 = vrot.lane.b32.xlu0 %v6142, 127
    %v6155 = vpop.permute.xlu0 %6154
    %6156 = vrot.lane.b32.xlu0 %v6143, 127
    %v6157 = vpop.permute.xlu0 %6156
    %6158 = vrot.lane.b32.xlu0 %v6144, 127
    %v6159 = vpop.permute.xlu0 %6158
    %6160 = vrot.lane.b32.xlu0 %v6145, 127
    %v6161 = vpop.permute.xlu0 %6160
    %6162 = vrot.lane.b32.xlu0 %v6146, 127
    %v6163 = vpop.permute.xlu0 %6162
    %6164 = vrot.lane.b32.xlu0 %v6147, 127
    %v6165 = vpop.permute.xlu0 %6164
    %v6166 = vsel %vm175, %v6155, %v6157
    %v6167 = vsel %vm175, %v6157, %v6159
    %v6168 = vsel %vm175, %v6159, %v6161
    %v6169 = vsel %vm175, %v6161, %v6163
    %v6170 = vsel %vm175, %v6163, %v6165
    %v6177 = vadd.f32 %v6063, %v6166
    %v6178 = vadd.f32 %v6064, %v6167
    %v6179 = vadd.f32 %v6065, %v6168
    %v6180 = vadd.f32 %v6066, %v6169
    %v6181 = vadd.f32 %v6067, %v6170
    %v6182 = vadd.f32 %v6068, %v6165
    %s6183 = sld [smem:[#allocation6 + $0x581]]
    %v6184 = vstv %s6183
    %v6185 = vmul.f32 %v6184, %v1739
    %v6186 = vmul.f32 %v6184, %v1740
    %v6187 = vmul.f32 %v6184, %v1741
    %v6188 = vmul.f32 %v6184, %v1742
    %v6189 = vmul.f32 %v6184, %v1743
    %v6190 = vmul.f32 %v6184, %v1744
    %6197 = vrot.lane.b32.xlu0 %v6185, 127
    %v6198 = vpop.permute.xlu0 %6197
    %6199 = vrot.lane.b32.xlu0 %v6186, 127
    %v6200 = vpop.permute.xlu0 %6199
    %6201 = vrot.lane.b32.xlu0 %v6187, 127
    %v6202 = vpop.permute.xlu0 %6201
    %6203 = vrot.lane.b32.xlu0 %v6188, 127
    %v6204 = vpop.permute.xlu0 %6203
    %6205 = vrot.lane.b32.xlu0 %v6189, 127
    %v6206 = vpop.permute.xlu0 %6205
    %6207 = vrot.lane.b32.xlu0 %v6190, 127
    %v6208 = vpop.permute.xlu0 %6207
    %v6209 = vsel %vm175, %v6198, %v6200
    %v6210 = vsel %vm175, %v6200, %v6202
    %v6211 = vsel %vm175, %v6202, %v6204
    %v6212 = vsel %vm175, %v6204, %v6206
    %v6213 = vsel %vm175, %v6206, %v6208
    %v6220 = vadd.f32 %v6077, %v6209
    %v6221 = vadd.f32 %v6078, %v6210
    %v6222 = vadd.f32 %v6079, %v6211
    %v6223 = vadd.f32 %v6080, %v6212
    %v6224 = vadd.f32 %v6081, %v6213
    %v6225 = vadd.f32 %v6082, %v6208
    %s6226 = sld [smem:[#allocation6 + $0x781]]
    %v6227 = vstv %s6226
    %v6228 = vmul.f32 %v6227, %v1739
    %v6229 = vmul.f32 %v6227, %v1740
    %v6230 = vmul.f32 %v6227, %v1741
    %v6231 = vmul.f32 %v6227, %v1742
    %v6232 = vmul.f32 %v6227, %v1743
    %v6233 = vmul.f32 %v6227, %v1744
    %6240 = vrot.lane.b32.xlu0 %v6228, 127
    %v6241 = vpop.permute.xlu0 %6240
    %6242 = vrot.lane.b32.xlu0 %v6229, 127
    %v6243 = vpop.permute.xlu0 %6242
    %6244 = vrot.lane.b32.xlu0 %v6230, 127
    %v6245 = vpop.permute.xlu0 %6244
    %6246 = vrot.lane.b32.xlu0 %v6231, 127
    %v6247 = vpop.permute.xlu0 %6246
    %6248 = vrot.lane.b32.xlu0 %v6232, 127
    %v6249 = vpop.permute.xlu0 %6248
    %6250 = vrot.lane.b32.xlu0 %v6233, 127
    %v6251 = vpop.permute.xlu0 %6250
    %v6252 = vsel %vm175, %v6241, %v6243
    %v6253 = vsel %vm175, %v6243, %v6245
    %v6254 = vsel %vm175, %v6245, %v6247
    %v6255 = vsel %vm175, %v6247, %v6249
    %v6256 = vsel %vm175, %v6249, %v6251
    %v6263 = vadd.f32 %v6091, %v6252
    %v6264 = vadd.f32 %v6092, %v6253
    %v6265 = vadd.f32 %v6093, %v6254
    %v6266 = vadd.f32 %v6094, %v6255
    %v6267 = vadd.f32 %v6095, %v6256
    %v6268 = vadd.f32 %v6096, %v6251
    %s6269 = sld [smem:[#allocation6 + $0x182]]
    %v6270 = vstv %s6269
    %v6271 = vmul.f32 %v6270, %v1739
    %v6272 = vmul.f32 %v6270, %v1740
    %v6273 = vmul.f32 %v6270, %v1741
    %v6274 = vmul.f32 %v6270, %v1742
    %v6275 = vmul.f32 %v6270, %v1743
    %v6276 = vmul.f32 %v6270, %v1744
    %6283 = vrot.lane.b32.xlu0 %v6271, 126
    %v6284 = vpop.permute.xlu0 %6283
    %6285 = vrot.lane.b32.xlu0 %v6272, 126
    %v6286 = vpop.permute.xlu0 %6285
    %6287 = vrot.lane.b32.xlu0 %v6273, 126
    %v6288 = vpop.permute.xlu0 %6287
    %6289 = vrot.lane.b32.xlu0 %v6274, 126
    %v6290 = vpop.permute.xlu0 %6289
    %6291 = vrot.lane.b32.xlu0 %v6275, 126
    %v6292 = vpop.permute.xlu0 %6291
    %6293 = vrot.lane.b32.xlu0 %v6276, 126
    %v6294 = vpop.permute.xlu0 %6293
    %v6295 = vsel %vm368, %v6284, %v6286
    %v6296 = vsel %vm368, %v6286, %v6288
    %v6297 = vsel %vm368, %v6288, %v6290
    %v6298 = vsel %vm368, %v6290, %v6292
    %v6299 = vsel %vm368, %v6292, %v6294
    %v6306 = vadd.f32 %v6134, %v6295
    %v6307 = vadd.f32 %v6135, %v6296
    %v6308 = vadd.f32 %v6136, %v6297
    %v6309 = vadd.f32 %v6137, %v6298
    %v6310 = vadd.f32 %v6138, %v6299
    %v6311 = vadd.f32 %v6139, %v6294
    %s6312 = sld [smem:[#allocation6 + $0x382]]
    %v6313 = vstv %s6312
    %v6314 = vmul.f32 %v6313, %v1739
    %v6315 = vmul.f32 %v6313, %v1740
    %v6316 = vmul.f32 %v6313, %v1741
    %v6317 = vmul.f32 %v6313, %v1742
    %v6318 = vmul.f32 %v6313, %v1743
    %v6319 = vmul.f32 %v6313, %v1744
    %6326 = vrot.lane.b32.xlu0 %v6314, 126
    %v6327 = vpop.permute.xlu0 %6326
    %6328 = vrot.lane.b32.xlu0 %v6315, 126
    %v6329 = vpop.permute.xlu0 %6328
    %6330 = vrot.lane.b32.xlu0 %v6316, 126
    %v6331 = vpop.permute.xlu0 %6330
    %6332 = vrot.lane.b32.xlu0 %v6317, 126
    %v6333 = vpop.permute.xlu0 %6332
    %6334 = vrot.lane.b32.xlu0 %v6318, 126
    %v6335 = vpop.permute.xlu0 %6334
    %6336 = vrot.lane.b32.xlu0 %v6319, 126
    %v6337 = vpop.permute.xlu0 %6336
    %v6338 = vsel %vm368, %v6327, %v6329
    %v6339 = vsel %vm368, %v6329, %v6331
    %v6340 = vsel %vm368, %v6331, %v6333
    %v6341 = vsel %vm368, %v6333, %v6335
    %v6342 = vsel %vm368, %v6335, %v6337
    %v6349 = vadd.f32 %v6177, %v6338
    %v6350 = vadd.f32 %v6178, %v6339
    %v6351 = vadd.f32 %v6179, %v6340
    %v6352 = vadd.f32 %v6180, %v6341
    %v6353 = vadd.f32 %v6181, %v6342
    %v6354 = vadd.f32 %v6182, %v6337
    %s6355 = sld [smem:[#allocation6 + $0x582]]
    %v6356 = vstv %s6355
    %v6357 = vmul.f32 %v6356, %v1739
    %v6358 = vmul.f32 %v6356, %v1740
    %v6359 = vmul.f32 %v6356, %v1741
    %v6360 = vmul.f32 %v6356, %v1742
    %v6361 = vmul.f32 %v6356, %v1743
    %v6362 = vmul.f32 %v6356, %v1744
    %6369 = vrot.lane.b32.xlu0 %v6357, 126
    %v6370 = vpop.permute.xlu0 %6369
    %6371 = vrot.lane.b32.xlu0 %v6358, 126
    %v6372 = vpop.permute.xlu0 %6371
    %6373 = vrot.lane.b32.xlu0 %v6359, 126
    %v6374 = vpop.permute.xlu0 %6373
    %6375 = vrot.lane.b32.xlu0 %v6360, 126
    %v6376 = vpop.permute.xlu0 %6375
    %6377 = vrot.lane.b32.xlu0 %v6361, 126
    %v6378 = vpop.permute.xlu0 %6377
    %6379 = vrot.lane.b32.xlu0 %v6362, 126
    %v6380 = vpop.permute.xlu0 %6379
    %v6381 = vsel %vm368, %v6370, %v6372
    %v6382 = vsel %vm368, %v6372, %v6374
    %v6383 = vsel %vm368, %v6374, %v6376
    %v6384 = vsel %vm368, %v6376, %v6378
    %v6385 = vsel %vm368, %v6378, %v6380
    %v6392 = vadd.f32 %v6220, %v6381
    %v6393 = vadd.f32 %v6221, %v6382
    %v6394 = vadd.f32 %v6222, %v6383
    %v6395 = vadd.f32 %v6223, %v6384
    %v6396 = vadd.f32 %v6224, %v6385
    %v6397 = vadd.f32 %v6225, %v6380
    %s6398 = sld [smem:[#allocation6 + $0x782]]
    %v6399 = vstv %s6398
    %v6400 = vmul.f32 %v6399, %v1739
    %v6401 = vmul.f32 %v6399, %v1740
    %v6402 = vmul.f32 %v6399, %v1741
    %v6403 = vmul.f32 %v6399, %v1742
    %v6404 = vmul.f32 %v6399, %v1743
    %v6405 = vmul.f32 %v6399, %v1744
    %6412 = vrot.lane.b32.xlu0 %v6400, 126
    %v6413 = vpop.permute.xlu0 %6412
    %6414 = vrot.lane.b32.xlu0 %v6401, 126
    %v6415 = vpop.permute.xlu0 %6414
    %6416 = vrot.lane.b32.xlu0 %v6402, 126
    %v6417 = vpop.permute.xlu0 %6416
    %6418 = vrot.lane.b32.xlu0 %v6403, 126
    %v6419 = vpop.permute.xlu0 %6418
    %6420 = vrot.lane.b32.xlu0 %v6404, 126
    %v6421 = vpop.permute.xlu0 %6420
    %6422 = vrot.lane.b32.xlu0 %v6405, 126
    %v6423 = vpop.permute.xlu0 %6422
    %v6424 = vsel %vm368, %v6413, %v6415
    %v6425 = vsel %vm368, %v6415, %v6417
    %v6426 = vsel %vm368, %v6417, %v6419
    %v6427 = vsel %vm368, %v6419, %v6421
    %v6428 = vsel %vm368, %v6421, %v6423
    %v6435 = vadd.f32 %v6263, %v6424
    %v6436 = vadd.f32 %v6264, %v6425
    %v6437 = vadd.f32 %v6265, %v6426
    %v6438 = vadd.f32 %v6266, %v6427
    %v6439 = vadd.f32 %v6267, %v6428
    %v6440 = vadd.f32 %v6268, %v6423
    %s6441 = sld [smem:[#allocation6 + $0x183]]
    %v6442 = vstv %s6441
    %v6443 = vmul.f32 %v6442, %v1739
    %v6444 = vmul.f32 %v6442, %v1740
    %v6445 = vmul.f32 %v6442, %v1741
    %v6446 = vmul.f32 %v6442, %v1742
    %v6447 = vmul.f32 %v6442, %v1743
    %v6448 = vmul.f32 %v6442, %v1744
    %6455 = vrot.lane.b32.xlu0 %v6443, 100
    %v6456 = vpop.permute.xlu0 %6455
    %6457 = vrot.lane.b32.xlu0 %v6444, 100
    %v6458 = vpop.permute.xlu0 %6457
    %6459 = vrot.lane.b32.xlu0 %v6445, 100
    %v6460 = vpop.permute.xlu0 %6459
    %6461 = vrot.lane.b32.xlu0 %v6446, 100
    %v6462 = vpop.permute.xlu0 %6461
    %6463 = vrot.lane.b32.xlu0 %v6447, 100
    %v6464 = vpop.permute.xlu0 %6463
    %6465 = vrot.lane.b32.xlu0 %v6448, 100
    %v6466 = vpop.permute.xlu0 %6465
    %v6467 = vsel %vm561, %v6456, %v6458
    %v6468 = vsel %vm561, %v6458, %v6460
    %v6469 = vsel %vm561, %v6460, %v6462
    %v6470 = vsel %vm561, %v6462, %v6464
    %v6471 = vsel %vm561, %v6464, %v6466
    %v6478 = vadd.f32 %v6306, %v6467
    %v6479 = vadd.f32 %v6307, %v6468
    %v6480 = vadd.f32 %v6308, %v6469
    %v6481 = vadd.f32 %v6309, %v6470
    %v6482 = vadd.f32 %v6310, %v6471
    %v6483 = vadd.f32 %v6311, %v6466
    %s6484 = sld [smem:[#allocation6 + $0x383]]
    %v6485 = vstv %s6484
    %v6486 = vmul.f32 %v6485, %v1739
    %v6487 = vmul.f32 %v6485, %v1740
    %v6488 = vmul.f32 %v6485, %v1741
    %v6489 = vmul.f32 %v6485, %v1742
    %v6490 = vmul.f32 %v6485, %v1743
    %v6491 = vmul.f32 %v6485, %v1744
    %6498 = vrot.lane.b32.xlu0 %v6486, 100
    %v6499 = vpop.permute.xlu0 %6498
    %6500 = vrot.lane.b32.xlu0 %v6487, 100
    %v6501 = vpop.permute.xlu0 %6500
    %6502 = vrot.lane.b32.xlu0 %v6488, 100
    %v6503 = vpop.permute.xlu0 %6502
    %6504 = vrot.lane.b32.xlu0 %v6489, 100
    %v6505 = vpop.permute.xlu0 %6504
    %6506 = vrot.lane.b32.xlu0 %v6490, 100
    %v6507 = vpop.permute.xlu0 %6506
    %6508 = vrot.lane.b32.xlu0 %v6491, 100
    %v6509 = vpop.permute.xlu0 %6508
    %v6510 = vsel %vm561, %v6499, %v6501
    %v6511 = vsel %vm561, %v6501, %v6503
    %v6512 = vsel %vm561, %v6503, %v6505
    %v6513 = vsel %vm561, %v6505, %v6507
    %v6514 = vsel %vm561, %v6507, %v6509
    %v6521 = vadd.f32 %v6349, %v6510
    %v6522 = vadd.f32 %v6350, %v6511
    %v6523 = vadd.f32 %v6351, %v6512
    %v6524 = vadd.f32 %v6352, %v6513
    %v6525 = vadd.f32 %v6353, %v6514
    %v6526 = vadd.f32 %v6354, %v6509
    %s6527 = sld [smem:[#allocation6 + $0x583]]
    %v6528 = vstv %s6527
    %v6529 = vmul.f32 %v6528, %v1739
    %v6530 = vmul.f32 %v6528, %v1740
    %v6531 = vmul.f32 %v6528, %v1741
    %v6532 = vmul.f32 %v6528, %v1742
    %v6533 = vmul.f32 %v6528, %v1743
    %v6534 = vmul.f32 %v6528, %v1744
    %6541 = vrot.lane.b32.xlu0 %v6529, 100
    %v6542 = vpop.permute.xlu0 %6541
    %6543 = vrot.lane.b32.xlu0 %v6530, 100
    %v6544 = vpop.permute.xlu0 %6543
    %6545 = vrot.lane.b32.xlu0 %v6531, 100
    %v6546 = vpop.permute.xlu0 %6545
    %6547 = vrot.lane.b32.xlu0 %v6532, 100
    %v6548 = vpop.permute.xlu0 %6547
    %6549 = vrot.lane.b32.xlu0 %v6533, 100
    %v6550 = vpop.permute.xlu0 %6549
    %6551 = vrot.lane.b32.xlu0 %v6534, 100
    %v6552 = vpop.permute.xlu0 %6551
    %v6553 = vsel %vm561, %v6542, %v6544
    %v6554 = vsel %vm561, %v6544, %v6546
    %v6555 = vsel %vm561, %v6546, %v6548
    %v6556 = vsel %vm561, %v6548, %v6550
    %v6557 = vsel %vm561, %v6550, %v6552
    %v6564 = vadd.f32 %v6392, %v6553
    %v6565 = vadd.f32 %v6393, %v6554
    %v6566 = vadd.f32 %v6394, %v6555
    %v6567 = vadd.f32 %v6395, %v6556
    %v6568 = vadd.f32 %v6396, %v6557
    %v6569 = vadd.f32 %v6397, %v6552
    %s6570 = sld [smem:[#allocation6 + $0x783]]
    %v6571 = vstv %s6570
    %v6572 = vmul.f32 %v6571, %v1739
    %v6573 = vmul.f32 %v6571, %v1740
    %v6574 = vmul.f32 %v6571, %v1741
    %v6575 = vmul.f32 %v6571, %v1742
    %v6576 = vmul.f32 %v6571, %v1743
    %v6577 = vmul.f32 %v6571, %v1744
    %6584 = vrot.lane.b32.xlu0 %v6572, 100
    %v6585 = vpop.permute.xlu0 %6584
    %6586 = vrot.lane.b32.xlu0 %v6573, 100
    %v6587 = vpop.permute.xlu0 %6586
    %6588 = vrot.lane.b32.xlu0 %v6574, 100
    %v6589 = vpop.permute.xlu0 %6588
    %6590 = vrot.lane.b32.xlu0 %v6575, 100
    %v6591 = vpop.permute.xlu0 %6590
    %6592 = vrot.lane.b32.xlu0 %v6576, 100
    %v6593 = vpop.permute.xlu0 %6592
    %6594 = vrot.lane.b32.xlu0 %v6577, 100
    %v6595 = vpop.permute.xlu0 %6594
    %v6596 = vsel %vm561, %v6585, %v6587
    %v6597 = vsel %vm561, %v6587, %v6589
    %v6598 = vsel %vm561, %v6589, %v6591
    %v6599 = vsel %vm561, %v6591, %v6593
    %v6600 = vsel %vm561, %v6593, %v6595
    %v6607 = vadd.f32 %v6435, %v6596
    %v6608 = vadd.f32 %v6436, %v6597
    %v6609 = vadd.f32 %v6437, %v6598
    %v6610 = vadd.f32 %v6438, %v6599
    %v6611 = vadd.f32 %v6439, %v6600
    %v6612 = vadd.f32 %v6440, %v6595
    %s6613 = sld [smem:[#allocation6 + $0x184]]
    %v6614 = vstv %s6613
    %v6615 = vmul.f32 %v6614, %v1739
    %v6616 = vmul.f32 %v6614, %v1740
    %v6617 = vmul.f32 %v6614, %v1741
    %v6618 = vmul.f32 %v6614, %v1742
    %v6619 = vmul.f32 %v6614, %v1743
    %v6620 = vmul.f32 %v6614, %v1744
    %6627 = vrot.lane.b32.xlu0 %v6615, 99
    %v6628 = vpop.permute.xlu0 %6627
    %6629 = vrot.lane.b32.xlu0 %v6616, 99
    %v6630 = vpop.permute.xlu0 %6629
    %6631 = vrot.lane.b32.xlu0 %v6617, 99
    %v6632 = vpop.permute.xlu0 %6631
    %6633 = vrot.lane.b32.xlu0 %v6618, 99
    %v6634 = vpop.permute.xlu0 %6633
    %6635 = vrot.lane.b32.xlu0 %v6619, 99
    %v6636 = vpop.permute.xlu0 %6635
    %6637 = vrot.lane.b32.xlu0 %v6620, 99
    %v6638 = vpop.permute.xlu0 %6637
    %v6639 = vsel %vm754, %v6628, %v6630
    %v6640 = vsel %vm754, %v6630, %v6632
    %v6641 = vsel %vm754, %v6632, %v6634
    %v6642 = vsel %vm754, %v6634, %v6636
    %v6643 = vsel %vm754, %v6636, %v6638
    %v6650 = vadd.f32 %v6478, %v6639
    %v6651 = vadd.f32 %v6479, %v6640
    %v6652 = vadd.f32 %v6480, %v6641
    %v6653 = vadd.f32 %v6481, %v6642
    %v6654 = vadd.f32 %v6482, %v6643
    %v6655 = vadd.f32 %v6483, %v6638
    %s6656 = sld [smem:[#allocation6 + $0x384]]
    %v6657 = vstv %s6656
    %v6658 = vmul.f32 %v6657, %v1739
    %v6659 = vmul.f32 %v6657, %v1740
    %v6660 = vmul.f32 %v6657, %v1741
    %v6661 = vmul.f32 %v6657, %v1742
    %v6662 = vmul.f32 %v6657, %v1743
    %v6663 = vmul.f32 %v6657, %v1744
    %6670 = vrot.lane.b32.xlu0 %v6658, 99
    %v6671 = vpop.permute.xlu0 %6670
    %6672 = vrot.lane.b32.xlu0 %v6659, 99
    %v6673 = vpop.permute.xlu0 %6672
    %6674 = vrot.lane.b32.xlu0 %v6660, 99
    %v6675 = vpop.permute.xlu0 %6674
    %6676 = vrot.lane.b32.xlu0 %v6661, 99
    %v6677 = vpop.permute.xlu0 %6676
    %6678 = vrot.lane.b32.xlu0 %v6662, 99
    %v6679 = vpop.permute.xlu0 %6678
    %6680 = vrot.lane.b32.xlu0 %v6663, 99
    %v6681 = vpop.permute.xlu0 %6680
    %v6682 = vsel %vm754, %v6671, %v6673
    %v6683 = vsel %vm754, %v6673, %v6675
    %v6684 = vsel %vm754, %v6675, %v6677
    %v6685 = vsel %vm754, %v6677, %v6679
    %v6686 = vsel %vm754, %v6679, %v6681
    %v6693 = vadd.f32 %v6521, %v6682
    %v6694 = vadd.f32 %v6522, %v6683
    %v6695 = vadd.f32 %v6523, %v6684
    %v6696 = vadd.f32 %v6524, %v6685
    %v6697 = vadd.f32 %v6525, %v6686
    %v6698 = vadd.f32 %v6526, %v6681
    %s6699 = sld [smem:[#allocation6 + $0x584]]
    %v6700 = vstv %s6699
    %v6701 = vmul.f32 %v6700, %v1739
    %v6702 = vmul.f32 %v6700, %v1740
    %v6703 = vmul.f32 %v6700, %v1741
    %v6704 = vmul.f32 %v6700, %v1742
    %v6705 = vmul.f32 %v6700, %v1743
    %v6706 = vmul.f32 %v6700, %v1744
    %6713 = vrot.lane.b32.xlu0 %v6701, 99
    %v6714 = vpop.permute.xlu0 %6713
    %6715 = vrot.lane.b32.xlu0 %v6702, 99
    %v6716 = vpop.permute.xlu0 %6715
    %6717 = vrot.lane.b32.xlu0 %v6703, 99
    %v6718 = vpop.permute.xlu0 %6717
    %6719 = vrot.lane.b32.xlu0 %v6704, 99
    %v6720 = vpop.permute.xlu0 %6719
    %6721 = vrot.lane.b32.xlu0 %v6705, 99
    %v6722 = vpop.permute.xlu0 %6721
    %6723 = vrot.lane.b32.xlu0 %v6706, 99
    %v6724 = vpop.permute.xlu0 %6723
    %v6725 = vsel %vm754, %v6714, %v6716
    %v6726 = vsel %vm754, %v6716, %v6718
    %v6727 = vsel %vm754, %v6718, %v6720
    %v6728 = vsel %vm754, %v6720, %v6722
    %v6729 = vsel %vm754, %v6722, %v6724
    %v6736 = vadd.f32 %v6564, %v6725
    %v6737 = vadd.f32 %v6565, %v6726
    %v6738 = vadd.f32 %v6566, %v6727
    %v6739 = vadd.f32 %v6567, %v6728
    %v6740 = vadd.f32 %v6568, %v6729
    %v6741 = vadd.f32 %v6569, %v6724
    %s6742 = sld [smem:[#allocation6 + $0x784]]
    %v6743 = vstv %s6742
    %v6744 = vmul.f32 %v6743, %v1739
    %v6745 = vmul.f32 %v6743, %v1740
    %v6746 = vmul.f32 %v6743, %v1741
    %v6747 = vmul.f32 %v6743, %v1742
    %v6748 = vmul.f32 %v6743, %v1743
    %v6749 = vmul.f32 %v6743, %v1744
    %6756 = vrot.lane.b32.xlu0 %v6744, 99
    %v6757 = vpop.permute.xlu0 %6756
    %6758 = vrot.lane.b32.xlu0 %v6745, 99
    %v6759 = vpop.permute.xlu0 %6758
    %6760 = vrot.lane.b32.xlu0 %v6746, 99
    %v6761 = vpop.permute.xlu0 %6760
    %6762 = vrot.lane.b32.xlu0 %v6747, 99
    %v6763 = vpop.permute.xlu0 %6762
    %6764 = vrot.lane.b32.xlu0 %v6748, 99
    %v6765 = vpop.permute.xlu0 %6764
    %6766 = vrot.lane.b32.xlu0 %v6749, 99
    %v6767 = vpop.permute.xlu0 %6766
    %v6768 = vsel %vm754, %v6757, %v6759
    %v6769 = vsel %vm754, %v6759, %v6761
    %v6770 = vsel %vm754, %v6761, %v6763
    %v6771 = vsel %vm754, %v6763, %v6765
    %v6772 = vsel %vm754, %v6765, %v6767
    %v6779 = vadd.f32 %v6607, %v6768
    %v6780 = vadd.f32 %v6608, %v6769
    %v6781 = vadd.f32 %v6609, %v6770
    %v6782 = vadd.f32 %v6610, %v6771
    %v6783 = vadd.f32 %v6611, %v6772
    %v6784 = vadd.f32 %v6612, %v6767
    %s6785 = sld [smem:[#allocation6 + $0x185]]
    %v6786 = vstv %s6785
    %v6787 = vmul.f32 %v6786, %v1739
    %v6788 = vmul.f32 %v6786, %v1740
    %v6789 = vmul.f32 %v6786, %v1741
    %v6790 = vmul.f32 %v6786, %v1742
    %v6791 = vmul.f32 %v6786, %v1743
    %v6792 = vmul.f32 %v6786, %v1744
    %6799 = vrot.lane.b32.xlu0 %v6787, 98
    %v6800 = vpop.permute.xlu0 %6799
    %6801 = vrot.lane.b32.xlu0 %v6788, 98
    %v6802 = vpop.permute.xlu0 %6801
    %6803 = vrot.lane.b32.xlu0 %v6789, 98
    %v6804 = vpop.permute.xlu0 %6803
    %6805 = vrot.lane.b32.xlu0 %v6790, 98
    %v6806 = vpop.permute.xlu0 %6805
    %6807 = vrot.lane.b32.xlu0 %v6791, 98
    %v6808 = vpop.permute.xlu0 %6807
    %6809 = vrot.lane.b32.xlu0 %v6792, 98
    %v6810 = vpop.permute.xlu0 %6809
    %v6811 = vsel %vm947, %v6800, %v6802
    %v6812 = vsel %vm947, %v6802, %v6804
    %v6813 = vsel %vm947, %v6804, %v6806
    %v6814 = vsel %vm947, %v6806, %v6808
    %v6815 = vsel %vm947, %v6808, %v6810
    %v6822 = vadd.f32 %v6650, %v6811
    %v6823 = vadd.f32 %v6651, %v6812
    %v6824 = vadd.f32 %v6652, %v6813
    %v6825 = vadd.f32 %v6653, %v6814
    %v6826 = vadd.f32 %v6654, %v6815
    %v6827 = vadd.f32 %v6655, %v6810
    %s6828 = sld [smem:[#allocation6 + $0x385]]
    %v6829 = vstv %s6828
    %v6830 = vmul.f32 %v6829, %v1739
    %v6831 = vmul.f32 %v6829, %v1740
    %v6832 = vmul.f32 %v6829, %v1741
    %v6833 = vmul.f32 %v6829, %v1742
    %v6834 = vmul.f32 %v6829, %v1743
    %v6835 = vmul.f32 %v6829, %v1744
    %6842 = vrot.lane.b32.xlu0 %v6830, 98
    %v6843 = vpop.permute.xlu0 %6842
    %6844 = vrot.lane.b32.xlu0 %v6831, 98
    %v6845 = vpop.permute.xlu0 %6844
    %6846 = vrot.lane.b32.xlu0 %v6832, 98
    %v6847 = vpop.permute.xlu0 %6846
    %6848 = vrot.lane.b32.xlu0 %v6833, 98
    %v6849 = vpop.permute.xlu0 %6848
    %6850 = vrot.lane.b32.xlu0 %v6834, 98
    %v6851 = vpop.permute.xlu0 %6850
    %6852 = vrot.lane.b32.xlu0 %v6835, 98
    %v6853 = vpop.permute.xlu0 %6852
    %v6854 = vsel %vm947, %v6843, %v6845
    %v6855 = vsel %vm947, %v6845, %v6847
    %v6856 = vsel %vm947, %v6847, %v6849
    %v6857 = vsel %vm947, %v6849, %v6851
    %v6858 = vsel %vm947, %v6851, %v6853
    %v6865 = vadd.f32 %v6693, %v6854
    %v6866 = vadd.f32 %v6694, %v6855
    %v6867 = vadd.f32 %v6695, %v6856
    %v6868 = vadd.f32 %v6696, %v6857
    %v6869 = vadd.f32 %v6697, %v6858
    %v6870 = vadd.f32 %v6698, %v6853
    %s6871 = sld [smem:[#allocation6 + $0x585]]
    %v6872 = vstv %s6871
    %v6873 = vmul.f32 %v6872, %v1739
    %v6874 = vmul.f32 %v6872, %v1740
    %v6875 = vmul.f32 %v6872, %v1741
    %v6876 = vmul.f32 %v6872, %v1742
    %v6877 = vmul.f32 %v6872, %v1743
    %v6878 = vmul.f32 %v6872, %v1744
    %6885 = vrot.lane.b32.xlu0 %v6873, 98
    %v6886 = vpop.permute.xlu0 %6885
    %6887 = vrot.lane.b32.xlu0 %v6874, 98
    %v6888 = vpop.permute.xlu0 %6887
    %6889 = vrot.lane.b32.xlu0 %v6875, 98
    %v6890 = vpop.permute.xlu0 %6889
    %6891 = vrot.lane.b32.xlu0 %v6876, 98
    %v6892 = vpop.permute.xlu0 %6891
    %6893 = vrot.lane.b32.xlu0 %v6877, 98
    %v6894 = vpop.permute.xlu0 %6893
    %6895 = vrot.lane.b32.xlu0 %v6878, 98
    %v6896 = vpop.permute.xlu0 %6895
    %v6897 = vsel %vm947, %v6886, %v6888
    %v6898 = vsel %vm947, %v6888, %v6890
    %v6899 = vsel %vm947, %v6890, %v6892
    %v6900 = vsel %vm947, %v6892, %v6894
    %v6901 = vsel %vm947, %v6894, %v6896
    %v6908 = vadd.f32 %v6736, %v6897
    %v6909 = vadd.f32 %v6737, %v6898
    %v6910 = vadd.f32 %v6738, %v6899
    %v6911 = vadd.f32 %v6739, %v6900
    %v6912 = vadd.f32 %v6740, %v6901
    %v6913 = vadd.f32 %v6741, %v6896
    %s6914 = sld [smem:[#allocation6 + $0x785]]
    %v6915 = vstv %s6914
    %v6916 = vmul.f32 %v6915, %v1739
    %v6917 = vmul.f32 %v6915, %v1740
    %v6918 = vmul.f32 %v6915, %v1741
    %v6919 = vmul.f32 %v6915, %v1742
    %v6920 = vmul.f32 %v6915, %v1743
    %v6921 = vmul.f32 %v6915, %v1744
    %6928 = vrot.lane.b32.xlu0 %v6916, 98
    %v6929 = vpop.permute.xlu0 %6928
    %6930 = vrot.lane.b32.xlu0 %v6917, 98
    %v6931 = vpop.permute.xlu0 %6930
    %6932 = vrot.lane.b32.xlu0 %v6918, 98
    %v6933 = vpop.permute.xlu0 %6932
    %6934 = vrot.lane.b32.xlu0 %v6919, 98
    %v6935 = vpop.permute.xlu0 %6934
    %6936 = vrot.lane.b32.xlu0 %v6920, 98
    %v6937 = vpop.permute.xlu0 %6936
    %6938 = vrot.lane.b32.xlu0 %v6921, 98
    %v6939 = vpop.permute.xlu0 %6938
    %v6940 = vsel %vm947, %v6929, %v6931
    %v6941 = vsel %vm947, %v6931, %v6933
    %v6942 = vsel %vm947, %v6933, %v6935
    %v6943 = vsel %vm947, %v6935, %v6937
    %v6944 = vsel %vm947, %v6937, %v6939
    %v6951 = vadd.f32 %v6779, %v6940
    %v6952 = vadd.f32 %v6780, %v6941
    %v6953 = vadd.f32 %v6781, %v6942
    %v6954 = vadd.f32 %v6782, %v6943
    %v6955 = vadd.f32 %v6783, %v6944
    %v6956 = vadd.f32 %v6784, %v6939
    %s6957 = sld [smem:[#allocation6 + $0x186]]
    %v6958 = vstv %s6957
    %v6959 = vmul.f32 %v6958, %v1739
    %v6960 = vmul.f32 %v6958, %v1740
    %v6961 = vmul.f32 %v6958, %v1741
    %v6962 = vmul.f32 %v6958, %v1742
    %v6963 = vmul.f32 %v6958, %v1743
    %v6964 = vmul.f32 %v6958, %v1744
    %6971 = vrot.lane.b32.xlu0 %v6959, 72
    %v6972 = vpop.permute.xlu0 %6971
    %6973 = vrot.lane.b32.xlu0 %v6960, 72
    %v6974 = vpop.permute.xlu0 %6973
    %6975 = vrot.lane.b32.xlu0 %v6961, 72
    %v6976 = vpop.permute.xlu0 %6975
    %6977 = vrot.lane.b32.xlu0 %v6962, 72
    %v6978 = vpop.permute.xlu0 %6977
    %6979 = vrot.lane.b32.xlu0 %v6963, 72
    %v6980 = vpop.permute.xlu0 %6979
    %6981 = vrot.lane.b32.xlu0 %v6964, 72
    %v6982 = vpop.permute.xlu0 %6981
    %v6983 = vsel %vm1140, %v6972, %v6974
    %v6984 = vsel %vm1140, %v6974, %v6976
    %v6985 = vsel %vm1140, %v6976, %v6978
    %v6986 = vsel %vm1140, %v6978, %v6980
    %v6987 = vsel %vm1140, %v6980, %v6982
    %v6994 = vadd.f32 %v6822, %v6983
    %v6995 = vadd.f32 %v6823, %v6984
    %v6996 = vadd.f32 %v6824, %v6985
    %v6997 = vadd.f32 %v6825, %v6986
    %v6998 = vadd.f32 %v6826, %v6987
    %v6999 = vadd.f32 %v6827, %v6982
    %s7000 = sld [smem:[#allocation6 + $0x386]]
    %v7001 = vstv %s7000
    %v7002 = vmul.f32 %v7001, %v1739
    %v7003 = vmul.f32 %v7001, %v1740
    %v7004 = vmul.f32 %v7001, %v1741
    %v7005 = vmul.f32 %v7001, %v1742
    %v7006 = vmul.f32 %v7001, %v1743
    %v7007 = vmul.f32 %v7001, %v1744
    %7014 = vrot.lane.b32.xlu0 %v7002, 72
    %v7015 = vpop.permute.xlu0 %7014
    %7016 = vrot.lane.b32.xlu0 %v7003, 72
    %v7017 = vpop.permute.xlu0 %7016
    %7018 = vrot.lane.b32.xlu0 %v7004, 72
    %v7019 = vpop.permute.xlu0 %7018
    %7020 = vrot.lane.b32.xlu0 %v7005, 72
    %v7021 = vpop.permute.xlu0 %7020
    %7022 = vrot.lane.b32.xlu0 %v7006, 72
    %v7023 = vpop.permute.xlu0 %7022
    %7024 = vrot.lane.b32.xlu0 %v7007, 72
    %v7025 = vpop.permute.xlu0 %7024
    %v7026 = vsel %vm1140, %v7015, %v7017
    %v7027 = vsel %vm1140, %v7017, %v7019
    %v7028 = vsel %vm1140, %v7019, %v7021
    %v7029 = vsel %vm1140, %v7021, %v7023
    %v7030 = vsel %vm1140, %v7023, %v7025
    %v7037 = vadd.f32 %v6865, %v7026
    %v7038 = vadd.f32 %v6866, %v7027
    %v7039 = vadd.f32 %v6867, %v7028
    %v7040 = vadd.f32 %v6868, %v7029
    %v7041 = vadd.f32 %v6869, %v7030
    %v7042 = vadd.f32 %v6870, %v7025
    %s7043 = sld [smem:[#allocation6 + $0x586]]
    %v7044 = vstv %s7043
    %v7045 = vmul.f32 %v7044, %v1739
    %v7046 = vmul.f32 %v7044, %v1740
    %v7047 = vmul.f32 %v7044, %v1741
    %v7048 = vmul.f32 %v7044, %v1742
    %v7049 = vmul.f32 %v7044, %v1743
    %v7050 = vmul.f32 %v7044, %v1744
    %7057 = vrot.lane.b32.xlu0 %v7045, 72
    %v7058 = vpop.permute.xlu0 %7057
    %7059 = vrot.lane.b32.xlu0 %v7046, 72
    %v7060 = vpop.permute.xlu0 %7059
    %7061 = vrot.lane.b32.xlu0 %v7047, 72
    %v7062 = vpop.permute.xlu0 %7061
    %7063 = vrot.lane.b32.xlu0 %v7048, 72
    %v7064 = vpop.permute.xlu0 %7063
    %7065 = vrot.lane.b32.xlu0 %v7049, 72
    %v7066 = vpop.permute.xlu0 %7065
    %7067 = vrot.lane.b32.xlu0 %v7050, 72
    %v7068 = vpop.permute.xlu0 %7067
    %v7069 = vsel %vm1140, %v7058, %v7060
    %v7070 = vsel %vm1140, %v7060, %v7062
    %v7071 = vsel %vm1140, %v7062, %v7064
    %v7072 = vsel %vm1140, %v7064, %v7066
    %v7073 = vsel %vm1140, %v7066, %v7068
    %v7080 = vadd.f32 %v6908, %v7069
    %v7081 = vadd.f32 %v6909, %v7070
    %v7082 = vadd.f32 %v6910, %v7071
    %v7083 = vadd.f32 %v6911, %v7072
    %v7084 = vadd.f32 %v6912, %v7073
    %v7085 = vadd.f32 %v6913, %v7068
    %s7086 = sld [smem:[#allocation6 + $0x786]]
    %v7087 = vstv %s7086
    %v7088 = vmul.f32 %v7087, %v1739
    %v7089 = vmul.f32 %v7087, %v1740
    %v7090 = vmul.f32 %v7087, %v1741
    %v7091 = vmul.f32 %v7087, %v1742
    %v7092 = vmul.f32 %v7087, %v1743
    %v7093 = vmul.f32 %v7087, %v1744
    %7100 = vrot.lane.b32.xlu0 %v7088, 72
    %v7101 = vpop.permute.xlu0 %7100
    %7102 = vrot.lane.b32.xlu0 %v7089, 72
    %v7103 = vpop.permute.xlu0 %7102
    %7104 = vrot.lane.b32.xlu0 %v7090, 72
    %v7105 = vpop.permute.xlu0 %7104
    %7106 = vrot.lane.b32.xlu0 %v7091, 72
    %v7107 = vpop.permute.xlu0 %7106
    %7108 = vrot.lane.b32.xlu0 %v7092, 72
    %v7109 = vpop.permute.xlu0 %7108
    %7110 = vrot.lane.b32.xlu0 %v7093, 72
    %v7111 = vpop.permute.xlu0 %7110
    %v7112 = vsel %vm1140, %v7101, %v7103
    %v7113 = vsel %vm1140, %v7103, %v7105
    %v7114 = vsel %vm1140, %v7105, %v7107
    %v7115 = vsel %vm1140, %v7107, %v7109
    %v7116 = vsel %vm1140, %v7109, %v7111
    %v7123 = vadd.f32 %v6951, %v7112
    %v7124 = vadd.f32 %v6952, %v7113
    %v7125 = vadd.f32 %v6953, %v7114
    %v7126 = vadd.f32 %v6954, %v7115
    %v7127 = vadd.f32 %v6955, %v7116
    %v7128 = vadd.f32 %v6956, %v7111
    %s7129 = sld [smem:[#allocation6 + $0x187]]
    %v7130 = vstv %s7129
    %v7131 = vmul.f32 %v7130, %v1739
    %v7132 = vmul.f32 %v7130, %v1740
    %v7133 = vmul.f32 %v7130, %v1741
    %v7134 = vmul.f32 %v7130, %v1742
    %v7135 = vmul.f32 %v7130, %v1743
    %v7136 = vmul.f32 %v7130, %v1744
    %7143 = vrot.lane.b32.xlu0 %v7131, 71
    %v7144 = vpop.permute.xlu0 %7143
    %7145 = vrot.lane.b32.xlu0 %v7132, 71
    %v7146 = vpop.permute.xlu0 %7145
    %7147 = vrot.lane.b32.xlu0 %v7133, 71
    %v7148 = vpop.permute.xlu0 %7147
    %7149 = vrot.lane.b32.xlu0 %v7134, 71
    %v7150 = vpop.permute.xlu0 %7149
    %7151 = vrot.lane.b32.xlu0 %v7135, 71
    %v7152 = vpop.permute.xlu0 %7151
    %7153 = vrot.lane.b32.xlu0 %v7136, 71
    %v7154 = vpop.permute.xlu0 %7153
    %v7155 = vsel %vm1333, %v7144, %v7146
    %v7156 = vsel %vm1333, %v7146, %v7148
    %v7157 = vsel %vm1333, %v7148, %v7150
    %v7158 = vsel %vm1333, %v7150, %v7152
    %v7159 = vsel %vm1333, %v7152, %v7154
    %v7166 = vadd.f32 %v6994, %v7155
    %v7167 = vadd.f32 %v6995, %v7156
    %v7168 = vadd.f32 %v6996, %v7157
    %v7169 = vadd.f32 %v6997, %v7158
    %v7170 = vadd.f32 %v6998, %v7159
    %v7171 = vadd.f32 %v6999, %v7154
    %s7172 = sld [smem:[#allocation6 + $0x387]]
    %v7173 = vstv %s7172
    %v7174 = vmul.f32 %v7173, %v1739
    %v7175 = vmul.f32 %v7173, %v1740
    %v7176 = vmul.f32 %v7173, %v1741
    %v7177 = vmul.f32 %v7173, %v1742
    %v7178 = vmul.f32 %v7173, %v1743
    %v7179 = vmul.f32 %v7173, %v1744
    %7186 = vrot.lane.b32.xlu0 %v7174, 71
    %v7187 = vpop.permute.xlu0 %7186
    %7188 = vrot.lane.b32.xlu0 %v7175, 71
    %v7189 = vpop.permute.xlu0 %7188
    %7190 = vrot.lane.b32.xlu0 %v7176, 71
    %v7191 = vpop.permute.xlu0 %7190
    %7192 = vrot.lane.b32.xlu0 %v7177, 71
    %v7193 = vpop.permute.xlu0 %7192
    %7194 = vrot.lane.b32.xlu0 %v7178, 71
    %v7195 = vpop.permute.xlu0 %7194
    %7196 = vrot.lane.b32.xlu0 %v7179, 71
    %v7197 = vpop.permute.xlu0 %7196
    %v7198 = vsel %vm1333, %v7187, %v7189
    %v7199 = vsel %vm1333, %v7189, %v7191
    %v7200 = vsel %vm1333, %v7191, %v7193
    %v7201 = vsel %vm1333, %v7193, %v7195
    %v7202 = vsel %vm1333, %v7195, %v7197
    %v7209 = vadd.f32 %v7037, %v7198
    %v7210 = vadd.f32 %v7038, %v7199
    %v7211 = vadd.f32 %v7039, %v7200
    %v7212 = vadd.f32 %v7040, %v7201
    %v7213 = vadd.f32 %v7041, %v7202
    %v7214 = vadd.f32 %v7042, %v7197
    %s7215 = sld [smem:[#allocation6 + $0x587]]
    %v7216 = vstv %s7215
    %v7217 = vmul.f32 %v7216, %v1739
    %v7218 = vmul.f32 %v7216, %v1740
    %v7219 = vmul.f32 %v7216, %v1741
    %v7220 = vmul.f32 %v7216, %v1742
    %v7221 = vmul.f32 %v7216, %v1743
    %v7222 = vmul.f32 %v7216, %v1744
    %7229 = vrot.lane.b32.xlu0 %v7217, 71
    %v7230 = vpop.permute.xlu0 %7229
    %7231 = vrot.lane.b32.xlu0 %v7218, 71
    %v7232 = vpop.permute.xlu0 %7231
    %7233 = vrot.lane.b32.xlu0 %v7219, 71
    %v7234 = vpop.permute.xlu0 %7233
    %7235 = vrot.lane.b32.xlu0 %v7220, 71
    %v7236 = vpop.permute.xlu0 %7235
    %7237 = vrot.lane.b32.xlu0 %v7221, 71
    %v7238 = vpop.permute.xlu0 %7237
    %7239 = vrot.lane.b32.xlu0 %v7222, 71
    %v7240 = vpop.permute.xlu0 %7239
    %v7241 = vsel %vm1333, %v7230, %v7232
    %v7242 = vsel %vm1333, %v7232, %v7234
    %v7243 = vsel %vm1333, %v7234, %v7236
    %v7244 = vsel %vm1333, %v7236, %v7238
    %v7245 = vsel %vm1333, %v7238, %v7240
    %v7252 = vadd.f32 %v7080, %v7241
    %v7253 = vadd.f32 %v7081, %v7242
    %v7254 = vadd.f32 %v7082, %v7243
    %v7255 = vadd.f32 %v7083, %v7244
    %v7256 = vadd.f32 %v7084, %v7245
    %v7257 = vadd.f32 %v7085, %v7240
    %s7258 = sld [smem:[#allocation6 + $0x787]]
    %v7259 = vstv %s7258
    %v7260 = vmul.f32 %v7259, %v1739
    %v7261 = vmul.f32 %v7259, %v1740
    %v7262 = vmul.f32 %v7259, %v1741
    %v7263 = vmul.f32 %v7259, %v1742
    %v7264 = vmul.f32 %v7259, %v1743
    %v7265 = vmul.f32 %v7259, %v1744
    %7272 = vrot.lane.b32.xlu0 %v7260, 71
    %v7273 = vpop.permute.xlu0 %7272
    %7274 = vrot.lane.b32.xlu0 %v7261, 71
    %v7275 = vpop.permute.xlu0 %7274
    %7276 = vrot.lane.b32.xlu0 %v7262, 71
    %v7277 = vpop.permute.xlu0 %7276
    %7278 = vrot.lane.b32.xlu0 %v7263, 71
    %v7279 = vpop.permute.xlu0 %7278
    %7280 = vrot.lane.b32.xlu0 %v7264, 71
    %v7281 = vpop.permute.xlu0 %7280
    %7282 = vrot.lane.b32.xlu0 %v7265, 71
    %v7283 = vpop.permute.xlu0 %7282
    %v7284 = vsel %vm1333, %v7273, %v7275
    %v7285 = vsel %vm1333, %v7275, %v7277
    %v7286 = vsel %vm1333, %v7277, %v7279
    %v7287 = vsel %vm1333, %v7279, %v7281
    %v7288 = vsel %vm1333, %v7281, %v7283
    %v7295 = vadd.f32 %v7123, %v7284
    %v7296 = vadd.f32 %v7124, %v7285
    %v7297 = vadd.f32 %v7125, %v7286
    %v7298 = vadd.f32 %v7126, %v7287
    %v7299 = vadd.f32 %v7127, %v7288
    %v7300 = vadd.f32 %v7128, %v7283
    %s7301 = sld [smem:[#allocation6 + $0x188]]
    %v7302 = vstv %s7301
    %v7303 = vmul.f32 %v7302, %v1739
    %v7304 = vmul.f32 %v7302, %v1740
    %v7305 = vmul.f32 %v7302, %v1741
    %v7306 = vmul.f32 %v7302, %v1742
    %v7307 = vmul.f32 %v7302, %v1743
    %v7308 = vmul.f32 %v7302, %v1744
    %7315 = vrot.lane.b32.xlu0 %v7303, 70
    %v7316 = vpop.permute.xlu0 %7315
    %7317 = vrot.lane.b32.xlu0 %v7304, 70
    %v7318 = vpop.permute.xlu0 %7317
    %7319 = vrot.lane.b32.xlu0 %v7305, 70
    %v7320 = vpop.permute.xlu0 %7319
    %7321 = vrot.lane.b32.xlu0 %v7306, 70
    %v7322 = vpop.permute.xlu0 %7321
    %7323 = vrot.lane.b32.xlu0 %v7307, 70
    %v7324 = vpop.permute.xlu0 %7323
    %7325 = vrot.lane.b32.xlu0 %v7308, 70
    %v7326 = vpop.permute.xlu0 %7325
    %v7327 = vsel %vm1526, %v7316, %v7318
    %v7328 = vsel %vm1526, %v7318, %v7320
    %v7329 = vsel %vm1526, %v7320, %v7322
    %v7330 = vsel %vm1526, %v7322, %v7324
    %v7331 = vsel %vm1526, %v7324, %v7326
    %v7338 = vadd.f32 %v7166, %v7327
    %v7339 = vadd.f32 %v7167, %v7328
    %v7340 = vadd.f32 %v7168, %v7329
    %v7341 = vadd.f32 %v7169, %v7330
    %v7342 = vadd.f32 %v7170, %v7331
    %v7343 = vadd.f32 %v7171, %v7326
    %s7344 = sld [smem:[#allocation6 + $0x388]]
    %v7345 = vstv %s7344
    %v7346 = vmul.f32 %v7345, %v1739
    %v7347 = vmul.f32 %v7345, %v1740
    %v7348 = vmul.f32 %v7345, %v1741
    %v7349 = vmul.f32 %v7345, %v1742
    %v7350 = vmul.f32 %v7345, %v1743
    %v7351 = vmul.f32 %v7345, %v1744
    %7358 = vrot.lane.b32.xlu0 %v7346, 70
    %v7359 = vpop.permute.xlu0 %7358
    %7360 = vrot.lane.b32.xlu0 %v7347, 70
    %v7361 = vpop.permute.xlu0 %7360
    %7362 = vrot.lane.b32.xlu0 %v7348, 70
    %v7363 = vpop.permute.xlu0 %7362
    %7364 = vrot.lane.b32.xlu0 %v7349, 70
    %v7365 = vpop.permute.xlu0 %7364
    %7366 = vrot.lane.b32.xlu0 %v7350, 70
    %v7367 = vpop.permute.xlu0 %7366
    %7368 = vrot.lane.b32.xlu0 %v7351, 70
    %v7369 = vpop.permute.xlu0 %7368
    %v7370 = vsel %vm1526, %v7359, %v7361
    %v7371 = vsel %vm1526, %v7361, %v7363
    %v7372 = vsel %vm1526, %v7363, %v7365
    %v7373 = vsel %vm1526, %v7365, %v7367
    %v7374 = vsel %vm1526, %v7367, %v7369
    %v7381 = vadd.f32 %v7209, %v7370
    %v7382 = vadd.f32 %v7210, %v7371
    %v7383 = vadd.f32 %v7211, %v7372
    %v7384 = vadd.f32 %v7212, %v7373
    %v7385 = vadd.f32 %v7213, %v7374
    %v7386 = vadd.f32 %v7214, %v7369
    %s7387 = sld [smem:[#allocation6 + $0x588]]
    %v7388 = vstv %s7387
    %v7389 = vmul.f32 %v7388, %v1739
    %v7390 = vmul.f32 %v7388, %v1740
    %v7391 = vmul.f32 %v7388, %v1741
    %v7392 = vmul.f32 %v7388, %v1742
    %v7393 = vmul.f32 %v7388, %v1743
    %v7394 = vmul.f32 %v7388, %v1744
    %7401 = vrot.lane.b32.xlu0 %v7389, 70
    %v7402 = vpop.permute.xlu0 %7401
    %7403 = vrot.lane.b32.xlu0 %v7390, 70
    %v7404 = vpop.permute.xlu0 %7403
    %7405 = vrot.lane.b32.xlu0 %v7391, 70
    %v7406 = vpop.permute.xlu0 %7405
    %7407 = vrot.lane.b32.xlu0 %v7392, 70
    %v7408 = vpop.permute.xlu0 %7407
    %7409 = vrot.lane.b32.xlu0 %v7393, 70
    %v7410 = vpop.permute.xlu0 %7409
    %7411 = vrot.lane.b32.xlu0 %v7394, 70
    %v7412 = vpop.permute.xlu0 %7411
    %v7413 = vsel %vm1526, %v7402, %v7404
    %v7414 = vsel %vm1526, %v7404, %v7406
    %v7415 = vsel %vm1526, %v7406, %v7408
    %v7416 = vsel %vm1526, %v7408, %v7410
    %v7417 = vsel %vm1526, %v7410, %v7412
    %v7424 = vadd.f32 %v7252, %v7413
    %v7425 = vadd.f32 %v7253, %v7414
    %v7426 = vadd.f32 %v7254, %v7415
    %v7427 = vadd.f32 %v7255, %v7416
    %v7428 = vadd.f32 %v7256, %v7417
    %v7429 = vadd.f32 %v7257, %v7412
    %s7430 = sld [smem:[#allocation6 + $0x788]]
    %v7431 = vstv %s7430
    %v7432 = vmul.f32 %v7431, %v1739
    %v7433 = vmul.f32 %v7431, %v1740
    %v7434 = vmul.f32 %v7431, %v1741
    %v7435 = vmul.f32 %v7431, %v1742
    %v7436 = vmul.f32 %v7431, %v1743
    %v7437 = vmul.f32 %v7431, %v1744
    %7444 = vrot.lane.b32.xlu0 %v7432, 70
    %v7445 = vpop.permute.xlu0 %7444
    %7446 = vrot.lane.b32.xlu0 %v7433, 70
    %v7447 = vpop.permute.xlu0 %7446
    %7448 = vrot.lane.b32.xlu0 %v7434, 70
    %v7449 = vpop.permute.xlu0 %7448
    %7450 = vrot.lane.b32.xlu0 %v7435, 70
    %v7451 = vpop.permute.xlu0 %7450
    %7452 = vrot.lane.b32.xlu0 %v7436, 70
    %v7453 = vpop.permute.xlu0 %7452
    %7454 = vrot.lane.b32.xlu0 %v7437, 70
    %v7455 = vpop.permute.xlu0 %7454
    %v7456 = vsel %vm1526, %v7445, %v7447
    %v7457 = vsel %vm1526, %v7447, %v7449
    %v7458 = vsel %vm1526, %v7449, %v7451
    %v7459 = vsel %vm1526, %v7451, %v7453
    %v7460 = vsel %vm1526, %v7453, %v7455
    %v7467 = vadd.f32 %v7295, %v7456
    %v7468 = vadd.f32 %v7296, %v7457
    %v7469 = vadd.f32 %v7297, %v7458
    %v7470 = vadd.f32 %v7298, %v7459
    %v7471 = vadd.f32 %v7299, %v7460
    %v7472 = vadd.f32 %v7300, %v7455
    %s7473 = sld [smem:[#allocation7]]
    %v7474 = vstv %s7473
    %v7475 = vadd.f32 %v7338, %v7474
    %v7476 = vadd.f32 %v7339, %v7474
    %v7477 = vadd.f32 %v7340, %v7474
    %v7478 = vadd.f32 %v7341, %v7474
    %v7479 = vadd.f32 %v7342, %v7474
    %v7480 = vadd.f32 %v7343, %v7474
    %v7481 = vmax.f32 %v7475, 0.0
    %v7482 = vmax.f32 %v7476, 0.0
    %v7483 = vmax.f32 %v7477, 0.0
    %v7484 = vmax.f32 %v7478, 0.0
    %v7485 = vmax.f32 %v7479, 0.0
    %v7486 = vmax.f32 %v7480, 0.0
    %s7487 = sld [smem:[#allocation7 + $0x1]]
    %v7488 = vstv %s7487
    %v7489 = vadd.f32 %v7381, %v7488
    %v7490 = vadd.f32 %v7382, %v7488
    %v7491 = vadd.f32 %v7383, %v7488
    %v7492 = vadd.f32 %v7384, %v7488
    %v7493 = vadd.f32 %v7385, %v7488
    %v7494 = vadd.f32 %v7386, %v7488
    %v7495 = vmax.f32 %v7489, 0.0
    %v7496 = vmax.f32 %v7490, 0.0
    %v7497 = vmax.f32 %v7491, 0.0
    %v7498 = vmax.f32 %v7492, 0.0
    %v7499 = vmax.f32 %v7493, 0.0
    %v7500 = vmax.f32 %v7494, 0.0
    %s7501 = sld [smem:[#allocation7 + $0x2]]
    %v7502 = vstv %s7501
    %v7503 = vadd.f32 %v7424, %v7502
    %v7504 = vadd.f32 %v7425, %v7502
    %v7505 = vadd.f32 %v7426, %v7502
    %v7506 = vadd.f32 %v7427, %v7502
    %v7507 = vadd.f32 %v7428, %v7502
    %v7508 = vadd.f32 %v7429, %v7502
    %v7509 = vmax.f32 %v7503, 0.0
    %v7510 = vmax.f32 %v7504, 0.0
    %v7511 = vmax.f32 %v7505, 0.0
    %v7512 = vmax.f32 %v7506, 0.0
    %v7513 = vmax.f32 %v7507, 0.0
    %v7514 = vmax.f32 %v7508, 0.0
    %s7515 = sld [smem:[#allocation7 + $0x3]]
    %v7516 = vstv %s7515
    %v7517 = vadd.f32 %v7467, %v7516
    %v7518 = vadd.f32 %v7468, %v7516
    %v7519 = vadd.f32 %v7469, %v7516
    %v7520 = vadd.f32 %v7470, %v7516
    %v7521 = vadd.f32 %v7471, %v7516
    %v7522 = vadd.f32 %v7472, %v7516
    %v7523 = vmax.f32 %v7517, 0.0
    %v7524 = vmax.f32 %v7518, 0.0
    %v7525 = vmax.f32 %v7519, 0.0
    %v7526 = vmax.f32 %v7520, 0.0
    %v7527 = vmax.f32 %v7521, 0.0
    %v7528 = vmax.f32 %v7522, 0.0
    %7535 = vrot.lane.b32.xlu0 %v7481, 100
    %v7536 = vpop.permute.xlu0 %7535
    %7537 = vrot.lane.b32.xlu0 %v7482, 100
    %v7538 = vpop.permute.xlu0 %7537
    %7539 = vrot.lane.b32.xlu0 %v7483, 100
    %v7540 = vpop.permute.xlu0 %7539
    %7541 = vrot.lane.b32.xlu0 %v7484, 100
    %v7542 = vpop.permute.xlu0 %7541
    %7543 = vrot.lane.b32.xlu0 %v7485, 100
    %v7544 = vpop.permute.xlu0 %7543
    %7545 = vrot.lane.b32.xlu0 %v7486, 100
    %v7546 = vpop.permute.xlu0 %7545
    %v7547 = vsel %vm561, %v7536, %v7538
    %v7548 = vsel %vm561, %v7538, %v7540
    %v7549 = vsel %vm561, %v7540, %v7542
    %v7550 = vsel %vm561, %v7542, %v7544
    %v7551 = vsel %vm561, %v7544, %v7546
    %v7558 = vmax.f32 %v7481, %v7547
    %v7559 = vmax.f32 %v7482, %v7548
    %v7560 = vmax.f32 %v7483, %v7549
    %v7561 = vmax.f32 %v7484, %v7550
    %v7562 = vmax.f32 %v7485, %v7551
    %v7563 = vmax.f32 %v7486, %v7546
    %7570 = vrot.lane.b32.xlu0 %v7558, 127
    %v7571 = vpop.permute.xlu0 %7570
    %7572 = vrot.lane.b32.xlu0 %v7559, 127
    %v7573 = vpop.permute.xlu0 %7572
    %7574 = vrot.lane.b32.xlu0 %v7560, 127
    %v7575 = vpop.permute.xlu0 %7574
    %7576 = vrot.lane.b32.xlu0 %v7561, 127
    %v7577 = vpop.permute.xlu0 %7576
    %7578 = vrot.lane.b32.xlu0 %v7562, 127
    %v7579 = vpop.permute.xlu0 %7578
    %7580 = vrot.lane.b32.xlu0 %v7563, 127
    %v7581 = vpop.permute.xlu0 %7580
    %v7582 = vsel %vm175, %v7571, %v7573
    %v7583 = vsel %vm175, %v7573, %v7575
    %v7584 = vsel %vm175, %v7575, %v7577
    %v7585 = vsel %vm175, %v7577, %v7579
    %v7586 = vsel %vm175, %v7579, %v7581
    %v7592 = vmax.f32 %v7558, %v7582
    %v7593 = vmax.f32 %v7559, %v7583
    %v7594 = vmax.f32 %v7560, %v7584
    %v7595 = vmax.f32 %v7561, %v7585
    %v7596 = vmax.f32 %v7562, %v7586
    %v7597 = vld [vmem:[%s5] sm:$0xff]
    %v7598 = vld [vmem:[%s5 + $0x8] sm:$0xff]
    %v7599 = vld [vmem:[%s5 + $0x10] sm:$0xff]
    %v7600 = vld [vmem:[%s5 + $0x18] sm:$0xff]
    %v7601 = vld [vmem:[%s5 + $0x20] sm:$0xff]
    %v7602 = vld [vmem:[%s5 + $0x28] sm:$0xff]
    %v7603 = vld [vmem:[%s5 + $0x30] sm:$0xff]
    %v7604 = vld [vmem:[%s5 + $0x38] sm:$0xff]
    %v7605 = vld [vmem:[%s5 + $0x40] sm:$0xff]
    %v7606 = vld [vmem:[%s5 + $0x48] sm:$0xff]
    %v7607 = vld [vmem:[%s5 + $0x50] sm:$0xff]
    %v7608 = vld [vmem:[%s5 + $0x58] sm:$0xff]
    %v7609 = vld [vmem:[%s5 + $0x60] sm:$0xff]
    %v7610 = vld [vmem:[%s5 + $0x68] sm:$0xff]
    %v7611 = vld [vmem:[%s5 + $0x70] sm:$0xff]
    %v7612 = vld [vmem:[%s5 + $0x78] sm:$0xff]
    %v7613 = vld [vmem:[%s5 + $0x80] sm:$0xff]
    %v7614 = vld [vmem:[%s5 + $0x88] sm:$0xff]
    %v7615 = vld [vmem:[%s5 + $0x90] sm:$0xff]
    %v7616 = vld [vmem:[%s5 + $0x98] sm:$0xff]
    %v7617 = vld [vmem:[%s5 + $0xa0] sm:$0xff]
    %v7618 = vld [vmem:[%s5 + $0xa8] sm:$0xff]
    %v7619 = vld [vmem:[%s5 + $0xb0] sm:$0xff]
    %v7620 = vld [vmem:[%s5 + $0xb8] sm:$0xff]
    %v7621 = vld [vmem:[%s5 + $0xc0] sm:$0xff]
    %v7622 = vld [vmem:[%s5 + $0xc8] sm:$0xff]
    %v7623 = vld [vmem:[%s5 + $0xd0] sm:$0xff]
    %v7624 = vld [vmem:[%s5 + $0xd8] sm:$0xff]
    %v7625 = vld [vmem:[%s5 + $0xe0] sm:$0xff]
    %v7626 = vld [vmem:[%s5 + $0xe8] sm:$0xff]
    %v7627 = vld [vmem:[%s5 + $0xf0] sm:$0xff]
    %v7628 = vld [vmem:[%s5 + $0xf8] sm:$0xff]
    %v7629 = vld [vmem:[%s5 + $0x100] sm:$0xff]
    %v7630 = vld [vmem:[%s5 + $0x108] sm:$0xff]
    %v7631 = vld [vmem:[%s5 + $0x110] sm:$0xff]
    %v7632 = vld [vmem:[%s5 + $0x118] sm:$0xff]
    %v7633 = vld [vmem:[%s5 + $0x120] sm:$0xff]
    %v7634 = vld [vmem:[%s5 + $0x128] sm:$0xff]
    %v7635 = vld [vmem:[%s5 + $0x130] sm:$0xff]
    %v7636 = vld [vmem:[%s5 + $0x138] sm:$0xff]
    %v7637 = vld [vmem:[%s5 + $0x140] sm:$0xff]
    %v7638 = vld [vmem:[%s5 + $0x148] sm:$0xff]
    %v7639 = vld [vmem:[%s5 + $0x150] sm:$0xff]
    %v7640 = vld [vmem:[%s5 + $0x158] sm:$0xff]
    %v7641 = vld [vmem:[%s5 + $0x160] sm:$0xff]
    %v7642 = vld [vmem:[%s5 + $0x168] sm:$0xff]
    %v7643 = vld [vmem:[%s5 + $0x170] sm:$0xff]
    %v7644 = vld [vmem:[%s5 + $0x178] sm:$0xff]
    %v7645 = vld [vmem:[%s5 + $0x180] sm:$0xff]
    %v7646 = vld [vmem:[%s5 + $0x188] sm:$0xff]
    %v7647 = vld [vmem:[%s5 + $0x190] sm:$0xff]
    %v7648 = vld [vmem:[%s5 + $0x198] sm:$0xff]
    %v7649 = vld [vmem:[%s5 + $0x1a0] sm:$0xff]
    %v7650 = vld [vmem:[%s5 + $0x1a8] sm:$0xff]
    %v7651 = vld [vmem:[%s5 + $0x1b0] sm:$0xff]
    %v7652 = vld [vmem:[%s5 + $0x1b8] sm:$0xff]
    %v7653 = vld [vmem:[%s5 + $0x1c0] sm:$0xff]
    %v7654 = vld [vmem:[%s5 + $0x1c8] sm:$0xff]
    %v7655 = vld [vmem:[%s5 + $0x1d0] sm:$0xff]
    %v7656 = vld [vmem:[%s5 + $0x1d8] sm:$0xff]
    %v7657 = vld [vmem:[%s5 + $0x1e0] sm:$0xff]
    %v7658 = vld [vmem:[%s5 + $0x1e8] sm:$0xff]
    %v7659 = vld [vmem:[%s5 + $0x1f0] sm:$0xff]
    %v7660 = vld [vmem:[%s5 + $0x1f8] sm:$0xff]
    %v7661 = vld [vmem:[%s5 + $0x200] sm:$0xff]
    %v7662 = vld [vmem:[%s5 + $0x208] sm:$0xff]
    %v7663 = vld [vmem:[%s5 + $0x210] sm:$0xff]
    %v7664 = vld [vmem:[%s5 + $0x218] sm:$0xff]
    %v7665 = vld [vmem:[%s5 + $0x220] sm:$0xff]
    %v7666 = vld [vmem:[%s5 + $0x228] sm:$0xff]
    %v7667 = vld [vmem:[%s5 + $0x230] sm:$0xff]
    %v7668 = vld [vmem:[%s5 + $0x238] sm:$0xff]
    %v7669 = vld [vmem:[%s5 + $0x240] sm:$0xff]
    %v7670 = vld [vmem:[%s5 + $0x248] sm:$0xff]
    %v7671 = vld [vmem:[%s5 + $0x250] sm:$0xff]
    %v7672 = vld [vmem:[%s5 + $0x258] sm:$0xff]
    %v7673 = vld [vmem:[%s5 + $0x260] sm:$0xff]
    %v7674 = vld [vmem:[%s5 + $0x268] sm:$0xff]
    %v7675 = vld [vmem:[%s5 + $0x270] sm:$0xff]
    %v7676 = vld [vmem:[%s5 + $0x278] sm:$0xff]
    %7683 = vrot.lane.b32.xlu0 %v7495, 100
    %v7684 = vpop.permute.xlu0 %7683
    %7685 = vrot.lane.b32.xlu0 %v7496, 100
    %v7686 = vpop.permute.xlu0 %7685
    %7687 = vrot.lane.b32.xlu0 %v7497, 100
    %v7688 = vpop.permute.xlu0 %7687
    %7689 = vrot.lane.b32.xlu0 %v7498, 100
    %v7690 = vpop.permute.xlu0 %7689
    %7691 = vrot.lane.b32.xlu0 %v7499, 100
    %v7692 = vpop.permute.xlu0 %7691
    %7693 = vrot.lane.b32.xlu0 %v7500, 100
    %v7694 = vpop.permute.xlu0 %7693
    %v7695 = vsel %vm561, %v7684, %v7686
    %v7696 = vsel %vm561, %v7686, %v7688
    %v7697 = vsel %vm561, %v7688, %v7690
    %v7698 = vsel %vm561, %v7690, %v7692
    %v7699 = vsel %vm561, %v7692, %v7694
    %v7706 = vmax.f32 %v7495, %v7695
    %v7707 = vmax.f32 %v7496, %v7696
    %v7708 = vmax.f32 %v7497, %v7697
    %v7709 = vmax.f32 %v7498, %v7698
    %v7710 = vmax.f32 %v7499, %v7699
    %v7711 = vmax.f32 %v7500, %v7694
    %7718 = vrot.lane.b32.xlu0 %v7706, 127
    %v7719 = vpop.permute.xlu0 %7718
    %7720 = vrot.lane.b32.xlu0 %v7707, 127
    %v7721 = vpop.permute.xlu0 %7720
    %7722 = vrot.lane.b32.xlu0 %v7708, 127
    %v7723 = vpop.permute.xlu0 %7722
    %7724 = vrot.lane.b32.xlu0 %v7709, 127
    %v7725 = vpop.permute.xlu0 %7724
    %7726 = vrot.lane.b32.xlu0 %v7710, 127
    %v7727 = vpop.permute.xlu0 %7726
    %7728 = vrot.lane.b32.xlu0 %v7711, 127
    %v7729 = vpop.permute.xlu0 %7728
    %v7730 = vsel %vm175, %v7719, %v7721
    %v7731 = vsel %vm175, %v7721, %v7723
    %v7732 = vsel %vm175, %v7723, %v7725
    %v7733 = vsel %vm175, %v7725, %v7727
    %v7734 = vsel %vm175, %v7727, %v7729
    %v7740 = vmax.f32 %v7706, %v7730
    %v7741 = vmax.f32 %v7707, %v7731
    %v7742 = vmax.f32 %v7708, %v7732
    %v7743 = vmax.f32 %v7709, %v7733
    %v7744 = vmax.f32 %v7710, %v7734
    %s7745 = scalar_lea.vmem %s5, 640
    %v7746 = vld [vmem:[%s7745] sm:$0xff]
    %v7747 = vld [vmem:[%s7745 + $0x8] sm:$0xff]
    %v7748 = vld [vmem:[%s7745 + $0x10] sm:$0xff]
    %v7749 = vld [vmem:[%s7745 + $0x18] sm:$0xff]
    %v7750 = vld [vmem:[%s7745 + $0x20] sm:$0xff]
    %v7751 = vld [vmem:[%s7745 + $0x28] sm:$0xff]
    %v7752 = vld [vmem:[%s7745 + $0x30] sm:$0xff]
    %v7753 = vld [vmem:[%s7745 + $0x38] sm:$0xff]
    %v7754 = vld [vmem:[%s7745 + $0x40] sm:$0xff]
    %v7755 = vld [vmem:[%s7745 + $0x48] sm:$0xff]
    %v7756 = vld [vmem:[%s7745 + $0x50] sm:$0xff]
    %v7757 = vld [vmem:[%s7745 + $0x58] sm:$0xff]
    %v7758 = vld [vmem:[%s7745 + $0x60] sm:$0xff]
    %v7759 = vld [vmem:[%s7745 + $0x68] sm:$0xff]
    %v7760 = vld [vmem:[%s7745 + $0x70] sm:$0xff]
    %v7761 = vld [vmem:[%s7745 + $0x78] sm:$0xff]
    %v7762 = vld [vmem:[%s7745 + $0x80] sm:$0xff]
    %v7763 = vld [vmem:[%s7745 + $0x88] sm:$0xff]
    %v7764 = vld [vmem:[%s7745 + $0x90] sm:$0xff]
    %v7765 = vld [vmem:[%s7745 + $0x98] sm:$0xff]
    %v7766 = vld [vmem:[%s7745 + $0xa0] sm:$0xff]
    %v7767 = vld [vmem:[%s7745 + $0xa8] sm:$0xff]
    %v7768 = vld [vmem:[%s7745 + $0xb0] sm:$0xff]
    %v7769 = vld [vmem:[%s7745 + $0xb8] sm:$0xff]
    %v7770 = vld [vmem:[%s7745 + $0xc0] sm:$0xff]
    %v7771 = vld [vmem:[%s7745 + $0xc8] sm:$0xff]
    %v7772 = vld [vmem:[%s7745 + $0xd0] sm:$0xff]
    %v7773 = vld [vmem:[%s7745 + $0xd8] sm:$0xff]
    %v7774 = vld [vmem:[%s7745 + $0xe0] sm:$0xff]
    %v7775 = vld [vmem:[%s7745 + $0xe8] sm:$0xff]
    %v7776 = vld [vmem:[%s7745 + $0xf0] sm:$0xff]
    %v7777 = vld [vmem:[%s7745 + $0xf8] sm:$0xff]
    %v7778 = vld [vmem:[%s7745 + $0x100] sm:$0xff]
    %v7779 = vld [vmem:[%s7745 + $0x108] sm:$0xff]
    %v7780 = vld [vmem:[%s7745 + $0x110] sm:$0xff]
    %v7781 = vld [vmem:[%s7745 + $0x118] sm:$0xff]
    %v7782 = vld [vmem:[%s7745 + $0x120] sm:$0xff]
    %v7783 = vld [vmem:[%s7745 + $0x128] sm:$0xff]
    %v7784 = vld [vmem:[%s7745 + $0x130] sm:$0xff]
    %v7785 = vld [vmem:[%s7745 + $0x138] sm:$0xff]
    %v7786 = vld [vmem:[%s7745 + $0x140] sm:$0xff]
    %v7787 = vld [vmem:[%s7745 + $0x148] sm:$0xff]
    %v7788 = vld [vmem:[%s7745 + $0x150] sm:$0xff]
    %v7789 = vld [vmem:[%s7745 + $0x158] sm:$0xff]
    %v7790 = vld [vmem:[%s7745 + $0x160] sm:$0xff]
    %v7791 = vld [vmem:[%s7745 + $0x168] sm:$0xff]
    %v7792 = vld [vmem:[%s7745 + $0x170] sm:$0xff]
    %v7793 = vld [vmem:[%s7745 + $0x178] sm:$0xff]
    %v7794 = vld [vmem:[%s7745 + $0x180] sm:$0xff]
    %v7795 = vld [vmem:[%s7745 + $0x188] sm:$0xff]
    %v7796 = vld [vmem:[%s7745 + $0x190] sm:$0xff]
    %v7797 = vld [vmem:[%s7745 + $0x198] sm:$0xff]
    %v7798 = vld [vmem:[%s7745 + $0x1a0] sm:$0xff]
    %v7799 = vld [vmem:[%s7745 + $0x1a8] sm:$0xff]
    %v7800 = vld [vmem:[%s7745 + $0x1b0] sm:$0xff]
    %v7801 = vld [vmem:[%s7745 + $0x1b8] sm:$0xff]
    %v7802 = vld [vmem:[%s7745 + $0x1c0] sm:$0xff]
    %v7803 = vld [vmem:[%s7745 + $0x1c8] sm:$0xff]
    %v7804 = vld [vmem:[%s7745 + $0x1d0] sm:$0xff]
    %v7805 = vld [vmem:[%s7745 + $0x1d8] sm:$0xff]
    %v7806 = vld [vmem:[%s7745 + $0x1e0] sm:$0xff]
    %v7807 = vld [vmem:[%s7745 + $0x1e8] sm:$0xff]
    %v7808 = vld [vmem:[%s7745 + $0x1f0] sm:$0xff]
    %v7809 = vld [vmem:[%s7745 + $0x1f8] sm:$0xff]
    %v7810 = vld [vmem:[%s7745 + $0x200] sm:$0xff]
    %v7811 = vld [vmem:[%s7745 + $0x208] sm:$0xff]
    %v7812 = vld [vmem:[%s7745 + $0x210] sm:$0xff]
    %v7813 = vld [vmem:[%s7745 + $0x218] sm:$0xff]
    %v7814 = vld [vmem:[%s7745 + $0x220] sm:$0xff]
    %v7815 = vld [vmem:[%s7745 + $0x228] sm:$0xff]
    %v7816 = vld [vmem:[%s7745 + $0x230] sm:$0xff]
    %v7817 = vld [vmem:[%s7745 + $0x238] sm:$0xff]
    %v7818 = vld [vmem:[%s7745 + $0x240] sm:$0xff]
    %v7819 = vld [vmem:[%s7745 + $0x248] sm:$0xff]
    %v7820 = vld [vmem:[%s7745 + $0x250] sm:$0xff]
    %v7821 = vld [vmem:[%s7745 + $0x258] sm:$0xff]
    %v7822 = vld [vmem:[%s7745 + $0x260] sm:$0xff]
    %v7823 = vld [vmem:[%s7745 + $0x268] sm:$0xff]
    %v7824 = vld [vmem:[%s7745 + $0x270] sm:$0xff]
    %v7825 = vld [vmem:[%s7745 + $0x278] sm:$0xff]
    %7826 = vmatprep.subr.mxu0 0.0
    %7827 = vmatpush1.msra.mxu0 %v7761
    %7828 = vmatprep.subr.mxu0 0.0
    %7829 = vmatpush1.msra.mxu0 %v7760
    %7830 = vmatprep.subr.mxu0 0.0
    %7831 = vmatpush1.msra.mxu0 %v7759
    %7832 = vmatprep.subr.mxu0 0.0
    %7833 = vmatpush1.msra.mxu0 %v7758
    %7834 = vmatprep.subr.mxu0 0.0
    %7835 = vmatpush1.msra.mxu0 %v7757
    %7836 = vmatprep.subr.mxu0 0.0
    %7837 = vmatpush1.msra.mxu0 %v7756
    %7838 = vmatprep.subr.mxu0 0.0
    %7839 = vmatpush1.msra.mxu0 %v7755
    %7840 = vmatprep.subr.mxu0 0.0
    %7841 = vmatpush1.msra.mxu0 %v7754
    %7842 = vmatprep.subr.mxu0 0.0
    %7843 = vmatpush1.msra.mxu0 %v7753
    %7844 = vmatprep.subr.mxu0 0.0
    %7845 = vmatpush1.msra.mxu0 %v7752
    %7846 = vmatprep.subr.mxu0 0.0
    %7847 = vmatpush1.msra.mxu0 %v7751
    %7848 = vmatprep.subr.mxu0 0.0
    %7849 = vmatpush1.msra.mxu0 %v7750
    %7850 = vmatprep.subr.mxu0 0.0
    %7851 = vmatpush1.msra.mxu0 %v7749
    %7852 = vmatprep.subr.mxu0 0.0
    %7853 = vmatpush1.msra.mxu0 %v7748
    %7854 = vmatprep.subr.mxu0 0.0
    %7855 = vmatpush1.msra.mxu0 %v7747
    %7856 = vmatprep.subr.mxu0 0.0
    %7857 = vmatpush1.msra.mxu0 %v7746
    %7858 = vmatprep.subr.mxu0 0.0
    %7859 = vmatpush2.msra.mxu0 %v7777
    %7860 = vmatprep.subr.mxu0 0.0
    %7861 = vmatpush2.msra.mxu0 %v7776
    %7862 = vmatprep.subr.mxu0 0.0
    %7863 = vmatpush2.msra.mxu0 %v7775
    %7864 = vmatprep.subr.mxu0 0.0
    %7865 = vmatpush2.msra.mxu0 %v7774
    %7866 = vmatprep.subr.mxu0 0.0
    %7867 = vmatpush2.msra.mxu0 %v7773
    %7868 = vmatprep.subr.mxu0 0.0
    %7869 = vmatpush2.msra.mxu0 %v7772
    %7870 = vmatprep.subr.mxu0 0.0
    %7871 = vmatpush2.msra.mxu0 %v7771
    %7872 = vmatprep.subr.mxu0 0.0
    %7873 = vmatpush2.msra.mxu0 %v7770
    %7874 = vmatprep.subr.mxu0 0.0
    %7875 = vmatpush2.msra.mxu0 %v7769
    %7876 = vmatprep.subr.mxu0 0.0
    %7877 = vmatpush2.msra.mxu0 %v7768
    %7878 = vmatprep.subr.mxu0 0.0
    %7879 = vmatpush2.msra.mxu0 %v7767
    %7880 = vmatprep.subr.mxu0 0.0
    %7881 = vmatpush2.msra.mxu0 %v7766
    %7882 = vmatprep.subr.mxu0 0.0
    %7883 = vmatpush2.msra.mxu0 %v7765
    %7884 = vmatprep.subr.mxu0 0.0
    %7885 = vmatpush2.msra.mxu0 %v7764
    %7886 = vmatprep.subr.mxu0 0.0
    %7887 = vmatpush2.msra.mxu0 %v7763
    %7888 = vmatprep.subr.mxu0 0.0
    %7889 = vmatpush2.msra.mxu0 %v7762
    %7890 = vmatprep.mubr.f32.mxu0 %v7741
    %7891 = vmatmul.mubr.f32.gmra.mxu0 %v7740
    %v7892 = vpop.f32.mrf.mxu0
    %v7893 = vadd.f32 0.0, %v7892
    %v7894 = vpop.f32.mrf.mxu0
    %7895 = vdwg.mxu0
    %7896 = vmatprep.subr.mxu0 0.0
    %7897 = vmatpush1.msra.mxu0 %v7793
    %7898 = vmatprep.subr.mxu0 0.0
    %7899 = vmatpush1.msra.mxu0 %v7792
    %7900 = vmatprep.subr.mxu0 0.0
    %7901 = vmatpush1.msra.mxu0 %v7791
    %7902 = vmatprep.subr.mxu0 0.0
    %7903 = vmatpush1.msra.mxu0 %v7790
    %7904 = vmatprep.subr.mxu0 0.0
    %7905 = vmatpush1.msra.mxu0 %v7789
    %7906 = vmatprep.subr.mxu0 0.0
    %7907 = vmatpush1.msra.mxu0 %v7788
    %7908 = vmatprep.subr.mxu0 0.0
    %7909 = vmatpush1.msra.mxu0 %v7787
    %7910 = vmatprep.subr.mxu0 0.0
    %7911 = vmatpush1.msra.mxu0 %v7786
    %7912 = vmatprep.subr.mxu0 0.0
    %7913 = vmatpush1.msra.mxu0 %v7785
    %7914 = vmatprep.subr.mxu0 0.0
    %7915 = vmatpush1.msra.mxu0 %v7784
    %7916 = vmatprep.subr.mxu0 0.0
    %7917 = vmatpush1.msra.mxu0 %v7783
    %7918 = vmatprep.subr.mxu0 0.0
    %7919 = vmatpush1.msra.mxu0 %v7782
    %7920 = vmatprep.subr.mxu0 0.0
    %7921 = vmatpush1.msra.mxu0 %v7781
    %7922 = vmatprep.subr.mxu0 0.0
    %7923 = vmatpush1.msra.mxu0 %v7780
    %7924 = vmatprep.subr.mxu0 0.0
    %7925 = vmatpush1.msra.mxu0 %v7779
    %7926 = vmatprep.subr.mxu0 0.0
    %7927 = vmatpush1.msra.mxu0 %v7778
    %7928 = vmatprep.subr.mxu0 0.0
    %7929 = vmatpush2.msra.mxu0 %v7809
    %7930 = vmatprep.subr.mxu0 0.0
    %7931 = vmatpush2.msra.mxu0 %v7808
    %7932 = vmatprep.subr.mxu0 0.0
    %7933 = vmatpush2.msra.mxu0 %v7807
    %7934 = vmatprep.subr.mxu0 0.0
    %7935 = vmatpush2.msra.mxu0 %v7806
    %7936 = vmatprep.subr.mxu0 0.0
    %7937 = vmatpush2.msra.mxu0 %v7805
    %7938 = vmatprep.subr.mxu0 0.0
    %7939 = vmatpush2.msra.mxu0 %v7804
    %7940 = vmatprep.subr.mxu0 0.0
    %7941 = vmatpush2.msra.mxu0 %v7803
    %7942 = vmatprep.subr.mxu0 0.0
    %7943 = vmatpush2.msra.mxu0 %v7802
    %7944 = vmatprep.subr.mxu0 0.0
    %7945 = vmatpush2.msra.mxu0 %v7801
    %7946 = vmatprep.subr.mxu0 0.0
    %7947 = vmatpush2.msra.mxu0 %v7800
    %7948 = vmatprep.subr.mxu0 0.0
    %7949 = vmatpush2.msra.mxu0 %v7799
    %7950 = vmatprep.subr.mxu0 0.0
    %7951 = vmatpush2.msra.mxu0 %v7798
    %7952 = vmatprep.subr.mxu0 0.0
    %7953 = vmatpush2.msra.mxu0 %v7797
    %7954 = vmatprep.subr.mxu0 0.0
    %7955 = vmatpush2.msra.mxu0 %v7796
    %7956 = vmatprep.subr.mxu0 0.0
    %7957 = vmatpush2.msra.mxu0 %v7795
    %7958 = vmatprep.subr.mxu0 0.0
    %7959 = vmatpush2.msra.mxu0 %v7794
    %7960 = vmatprep.mubr.f32.mxu0 %v7743
    %7961 = vmatmul.mubr.f32.gmra.mxu0 %v7742
    %v7962 = vpop.f32.mrf.mxu0
    %v7963 = vadd.f32 %v7893, %v7962
    %v7964 = vpop.f32.mrf.mxu0
    %7965 = vdwg.mxu0
    %7966 = vmatprep.subr.mxu0 0.0
    %7967 = vmatpush1.msra.mxu0 %v7825
    %7968 = vmatprep.subr.mxu0 0.0
    %7969 = vmatpush1.msra.mxu0 %v7824
    %7970 = vmatprep.subr.mxu0 0.0
    %7971 = vmatpush1.msra.mxu0 %v7823
    %7972 = vmatprep.subr.mxu0 0.0
    %7973 = vmatpush1.msra.mxu0 %v7822
    %7974 = vmatprep.subr.mxu0 0.0
    %7975 = vmatpush1.msra.mxu0 %v7821
    %7976 = vmatprep.subr.mxu0 0.0
    %7977 = vmatpush1.msra.mxu0 %v7820
    %7978 = vmatprep.subr.mxu0 0.0
    %7979 = vmatpush1.msra.mxu0 %v7819
    %7980 = vmatprep.subr.mxu0 0.0
    %7981 = vmatpush1.msra.mxu0 %v7818
    %7982 = vmatprep.subr.mxu0 0.0
    %7983 = vmatpush1.msra.mxu0 %v7817
    %7984 = vmatprep.subr.mxu0 0.0
    %7985 = vmatpush1.msra.mxu0 %v7816
    %7986 = vmatprep.subr.mxu0 0.0
    %7987 = vmatpush1.msra.mxu0 %v7815
    %7988 = vmatprep.subr.mxu0 0.0
    %7989 = vmatpush1.msra.mxu0 %v7814
    %7990 = vmatprep.subr.mxu0 0.0
    %7991 = vmatpush1.msra.mxu0 %v7813
    %7992 = vmatprep.subr.mxu0 0.0
    %7993 = vmatpush1.msra.mxu0 %v7812
    %7994 = vmatprep.subr.mxu0 0.0
    %7995 = vmatpush1.msra.mxu0 %v7811
    %7996 = vmatprep.subr.mxu0 0.0
    %7997 = vmatpush1.msra.mxu0 %v7810
    %7998 = vmatprep.subr.mxu0 0.0
    %7999 = vmatpush2.msra.mxu0 0.0
    %8000 = vmatprep.subr.mxu0 0.0
    %8001 = vmatpush2.msra.mxu0 0.0
    %8002 = vmatprep.subr.mxu0 0.0
    %8003 = vmatpush2.msra.mxu0 0.0
    %8004 = vmatprep.subr.mxu0 0.0
    %8005 = vmatpush2.msra.mxu0 0.0
    %8006 = vmatprep.subr.mxu0 0.0
    %8007 = vmatpush2.msra.mxu0 0.0
    %8008 = vmatprep.subr.mxu0 0.0
    %8009 = vmatpush2.msra.mxu0 0.0
    %8010 = vmatprep.subr.mxu0 0.0
    %8011 = vmatpush2.msra.mxu0 0.0
    %8012 = vmatprep.subr.mxu0 0.0
    %8013 = vmatpush2.msra.mxu0 0.0
    %8014 = vmatprep.subr.mxu0 0.0
    %8015 = vmatpush2.msra.mxu0 0.0
    %8016 = vmatprep.subr.mxu0 0.0
    %8017 = vmatpush2.msra.mxu0 0.0
    %8018 = vmatprep.subr.mxu0 0.0
    %8019 = vmatpush2.msra.mxu0 0.0
    %8020 = vmatprep.subr.mxu0 0.0
    %8021 = vmatpush2.msra.mxu0 0.0
    %8022 = vmatprep.subr.mxu0 0.0
    %8023 = vmatpush2.msra.mxu0 0.0
    %8024 = vmatprep.subr.mxu0 0.0
    %8025 = vmatpush2.msra.mxu0 0.0
    %8026 = vmatprep.subr.mxu0 0.0
    %8027 = vmatpush2.msra.mxu0 0.0
    %8028 = vmatprep.subr.mxu0 0.0
    %8029 = vmatpush2.msra.mxu0 0.0
    %8030 = vmatprep.mubr.f32.mxu0 0.0
    %8031 = vmatmul.mubr.f32.gmra.mxu0 %v7744
    %v8032 = vpop.f32.mrf.mxu0
    %v8033 = vadd.f32 %v7963, %v8032
    %v8034 = vpop.f32.mrf.mxu0
    %8035 = vdwg.mxu0
    %8036 = vmatprep.subr.mxu0 0.0
    %8037 = vmatpush1.msra.mxu0 %v7612
    %8038 = vmatprep.subr.mxu0 0.0
    %8039 = vmatpush1.msra.mxu0 %v7611
    %8040 = vmatprep.subr.mxu0 0.0
    %8041 = vmatpush1.msra.mxu0 %v7610
    %8042 = vmatprep.subr.mxu0 0.0
    %8043 = vmatpush1.msra.mxu0 %v7609
    %8044 = vmatprep.subr.mxu0 0.0
    %8045 = vmatpush1.msra.mxu0 %v7608
    %8046 = vmatprep.subr.mxu0 0.0
    %8047 = vmatpush1.msra.mxu0 %v7607
    %8048 = vmatprep.subr.mxu0 0.0
    %8049 = vmatpush1.msra.mxu0 %v7606
    %8050 = vmatprep.subr.mxu0 0.0
    %8051 = vmatpush1.msra.mxu0 %v7605
    %8052 = vmatprep.subr.mxu0 0.0
    %8053 = vmatpush1.msra.mxu0 %v7604
    %8054 = vmatprep.subr.mxu0 0.0
    %8055 = vmatpush1.msra.mxu0 %v7603
    %8056 = vmatprep.subr.mxu0 0.0
    %8057 = vmatpush1.msra.mxu0 %v7602
    %8058 = vmatprep.subr.mxu0 0.0
    %8059 = vmatpush1.msra.mxu0 %v7601
    %8060 = vmatprep.subr.mxu0 0.0
    %8061 = vmatpush1.msra.mxu0 %v7600
    %8062 = vmatprep.subr.mxu0 0.0
    %8063 = vmatpush1.msra.mxu0 %v7599
    %8064 = vmatprep.subr.mxu0 0.0
    %8065 = vmatpush1.msra.mxu0 %v7598
    %8066 = vmatprep.subr.mxu0 0.0
    %8067 = vmatpush1.msra.mxu0 %v7597
    %8068 = vmatprep.subr.mxu0 0.0
    %8069 = vmatpush2.msra.mxu0 %v7628
    %8070 = vmatprep.subr.mxu0 0.0
    %8071 = vmatpush2.msra.mxu0 %v7627
    %8072 = vmatprep.subr.mxu0 0.0
    %8073 = vmatpush2.msra.mxu0 %v7626
    %8074 = vmatprep.subr.mxu0 0.0
    %8075 = vmatpush2.msra.mxu0 %v7625
    %8076 = vmatprep.subr.mxu0 0.0
    %8077 = vmatpush2.msra.mxu0 %v7624
    %8078 = vmatprep.subr.mxu0 0.0
    %8079 = vmatpush2.msra.mxu0 %v7623
    %8080 = vmatprep.subr.mxu0 0.0
    %8081 = vmatpush2.msra.mxu0 %v7622
    %8082 = vmatprep.subr.mxu0 0.0
    %8083 = vmatpush2.msra.mxu0 %v7621
    %8084 = vmatprep.subr.mxu0 0.0
    %8085 = vmatpush2.msra.mxu0 %v7620
    %8086 = vmatprep.subr.mxu0 0.0
    %8087 = vmatpush2.msra.mxu0 %v7619
    %8088 = vmatprep.subr.mxu0 0.0
    %8089 = vmatpush2.msra.mxu0 %v7618
    %8090 = vmatprep.subr.mxu0 0.0
    %8091 = vmatpush2.msra.mxu0 %v7617
    %8092 = vmatprep.subr.mxu0 0.0
    %8093 = vmatpush2.msra.mxu0 %v7616
    %8094 = vmatprep.subr.mxu0 0.0
    %8095 = vmatpush2.msra.mxu0 %v7615
    %8096 = vmatprep.subr.mxu0 0.0
    %8097 = vmatpush2.msra.mxu0 %v7614
    %8098 = vmatprep.subr.mxu0 0.0
    %8099 = vmatpush2.msra.mxu0 %v7613
    %8100 = vmatprep.mubr.f32.mxu0 %v7593
    %8101 = vmatmul.mubr.f32.gmra.mxu0 %v7592
    %v8102 = vpop.f32.mrf.mxu0
    %v8103 = vadd.f32 %v8033, %v8102
    %v8104 = vpop.f32.mrf.mxu0
    %8105 = vdwg.mxu0
    %8106 = vmatprep.subr.mxu0 0.0
    %8107 = vmatpush1.msra.mxu0 %v7644
    %8108 = vmatprep.subr.mxu0 0.0
    %8109 = vmatpush1.msra.mxu0 %v7643
    %8110 = vmatprep.subr.mxu0 0.0
    %8111 = vmatpush1.msra.mxu0 %v7642
    %8112 = vmatprep.subr.mxu0 0.0
    %8113 = vmatpush1.msra.mxu0 %v7641
    %8114 = vmatprep.subr.mxu0 0.0
    %8115 = vmatpush1.msra.mxu0 %v7640
    %8116 = vmatprep.subr.mxu0 0.0
    %8117 = vmatpush1.msra.mxu0 %v7639
    %8118 = vmatprep.subr.mxu0 0.0
    %8119 = vmatpush1.msra.mxu0 %v7638
    %8120 = vmatprep.subr.mxu0 0.0
    %8121 = vmatpush1.msra.mxu0 %v7637
    %8122 = vmatprep.subr.mxu0 0.0
    %8123 = vmatpush1.msra.mxu0 %v7636
    %8124 = vmatprep.subr.mxu0 0.0
    %8125 = vmatpush1.msra.mxu0 %v7635
    %8126 = vmatprep.subr.mxu0 0.0
    %8127 = vmatpush1.msra.mxu0 %v7634
    %8128 = vmatprep.subr.mxu0 0.0
    %8129 = vmatpush1.msra.mxu0 %v7633
    %8130 = vmatprep.subr.mxu0 0.0
    %8131 = vmatpush1.msra.mxu0 %v7632
    %8132 = vmatprep.subr.mxu0 0.0
    %8133 = vmatpush1.msra.mxu0 %v7631
    %8134 = vmatprep.subr.mxu0 0.0
    %8135 = vmatpush1.msra.mxu0 %v7630
    %8136 = vmatprep.subr.mxu0 0.0
    %8137 = vmatpush1.msra.mxu0 %v7629
    %8138 = vmatprep.subr.mxu0 0.0
    %8139 = vmatpush2.msra.mxu0 %v7660
    %8140 = vmatprep.subr.mxu0 0.0
    %8141 = vmatpush2.msra.mxu0 %v7659
    %8142 = vmatprep.subr.mxu0 0.0
    %8143 = vmatpush2.msra.mxu0 %v7658
    %8144 = vmatprep.subr.mxu0 0.0
    %8145 = vmatpush2.msra.mxu0 %v7657
    %8146 = vmatprep.subr.mxu0 0.0
    %8147 = vmatpush2.msra.mxu0 %v7656
    %8148 = vmatprep.subr.mxu0 0.0
    %8149 = vmatpush2.msra.mxu0 %v7655
    %8150 = vmatprep.subr.mxu0 0.0
    %8151 = vmatpush2.msra.mxu0 %v7654
    %8152 = vmatprep.subr.mxu0 0.0
    %8153 = vmatpush2.msra.mxu0 %v7653
    %8154 = vmatprep.subr.mxu0 0.0
    %8155 = vmatpush2.msra.mxu0 %v7652
    %8156 = vmatprep.subr.mxu0 0.0
    %8157 = vmatpush2.msra.mxu0 %v7651
    %8158 = vmatprep.subr.mxu0 0.0
    %8159 = vmatpush2.msra.mxu0 %v7650
    %8160 = vmatprep.subr.mxu0 0.0
    %8161 = vmatpush2.msra.mxu0 %v7649
    %8162 = vmatprep.subr.mxu0 0.0
    %8163 = vmatpush2.msra.mxu0 %v7648
    %8164 = vmatprep.subr.mxu0 0.0
    %8165 = vmatpush2.msra.mxu0 %v7647
    %8166 = vmatprep.subr.mxu0 0.0
    %8167 = vmatpush2.msra.mxu0 %v7646
    %8168 = vmatprep.subr.mxu0 0.0
    %8169 = vmatpush2.msra.mxu0 %v7645
    %8170 = vmatprep.mubr.f32.mxu0 %v7595
    %8171 = vmatmul.mubr.f32.gmra.mxu0 %v7594
    %v8172 = vpop.f32.mrf.mxu0
    %v8173 = vadd.f32 %v8103, %v8172
    %v8174 = vpop.f32.mrf.mxu0
    %8175 = vdwg.mxu0
    %8176 = vmatprep.subr.mxu0 0.0
    %8177 = vmatpush1.msra.mxu0 %v7676
    %8178 = vmatprep.subr.mxu0 0.0
    %8179 = vmatpush1.msra.mxu0 %v7675
    %8180 = vmatprep.subr.mxu0 0.0
    %8181 = vmatpush1.msra.mxu0 %v7674
    %8182 = vmatprep.subr.mxu0 0.0
    %8183 = vmatpush1.msra.mxu0 %v7673
    %8184 = vmatprep.subr.mxu0 0.0
    %8185 = vmatpush1.msra.mxu0 %v7672
    %8186 = vmatprep.subr.mxu0 0.0
    %8187 = vmatpush1.msra.mxu0 %v7671
    %8188 = vmatprep.subr.mxu0 0.0
    %8189 = vmatpush1.msra.mxu0 %v7670
    %8190 = vmatprep.subr.mxu0 0.0
    %8191 = vmatpush1.msra.mxu0 %v7669
    %8192 = vmatprep.subr.mxu0 0.0
    %8193 = vmatpush1.msra.mxu0 %v7668
    %8194 = vmatprep.subr.mxu0 0.0
    %8195 = vmatpush1.msra.mxu0 %v7667
    %8196 = vmatprep.subr.mxu0 0.0
    %8197 = vmatpush1.msra.mxu0 %v7666
    %8198 = vmatprep.subr.mxu0 0.0
    %8199 = vmatpush1.msra.mxu0 %v7665
    %8200 = vmatprep.subr.mxu0 0.0
    %8201 = vmatpush1.msra.mxu0 %v7664
    %8202 = vmatprep.subr.mxu0 0.0
    %8203 = vmatpush1.msra.mxu0 %v7663
    %8204 = vmatprep.subr.mxu0 0.0
    %8205 = vmatpush1.msra.mxu0 %v7662
    %8206 = vmatprep.subr.mxu0 0.0
    %8207 = vmatpush1.msra.mxu0 %v7661
    %8208 = vmatprep.subr.mxu0 0.0
    %8209 = vmatpush2.msra.mxu0 0.0
    %8210 = vmatprep.subr.mxu0 0.0
    %8211 = vmatpush2.msra.mxu0 0.0
    %8212 = vmatprep.subr.mxu0 0.0
    %8213 = vmatpush2.msra.mxu0 0.0
    %8214 = vmatprep.subr.mxu0 0.0
    %8215 = vmatpush2.msra.mxu0 0.0
    %8216 = vmatprep.subr.mxu0 0.0
    %8217 = vmatpush2.msra.mxu0 0.0
    %8218 = vmatprep.subr.mxu0 0.0
    %8219 = vmatpush2.msra.mxu0 0.0
    %8220 = vmatprep.subr.mxu0 0.0
    %8221 = vmatpush2.msra.mxu0 0.0
    %8222 = vmatprep.subr.mxu0 0.0
    %8223 = vmatpush2.msra.mxu0 0.0
    %8224 = vmatprep.subr.mxu0 0.0
    %8225 = vmatpush2.msra.mxu0 0.0
    %8226 = vmatprep.subr.mxu0 0.0
    %8227 = vmatpush2.msra.mxu0 0.0
    %8228 = vmatprep.subr.mxu0 0.0
    %8229 = vmatpush2.msra.mxu0 0.0
    %8230 = vmatprep.subr.mxu0 0.0
    %8231 = vmatpush2.msra.mxu0 0.0
    %8232 = vmatprep.subr.mxu0 0.0
    %8233 = vmatpush2.msra.mxu0 0.0
    %8234 = vmatprep.subr.mxu0 0.0
    %8235 = vmatpush2.msra.mxu0 0.0
    %8236 = vmatprep.subr.mxu0 0.0
    %8237 = vmatpush2.msra.mxu0 0.0
    %8238 = vmatprep.subr.mxu0 0.0
    %8239 = vmatpush2.msra.mxu0 0.0
    %8240 = vmatprep.mubr.f32.mxu0 0.0
    %8241 = vmatmul.mubr.f32.gmra.mxu0 %v7596
    %v8242 = vpop.f32.mrf.mxu0
    %v8243 = vadd.f32 %v8173, %v8242
    %v8244 = vpop.f32.mrf.mxu0
    %8245 = vdwg.mxu0
    %8252 = vrot.lane.b32.xlu0 %v7509, 100
    %v8253 = vpop.permute.xlu0 %8252
    %8254 = vrot.lane.b32.xlu0 %v7510, 100
    %v8255 = vpop.permute.xlu0 %8254
    %8256 = vrot.lane.b32.xlu0 %v7511, 100
    %v8257 = vpop.permute.xlu0 %8256
    %8258 = vrot.lane.b32.xlu0 %v7512, 100
    %v8259 = vpop.permute.xlu0 %8258
    %8260 = vrot.lane.b32.xlu0 %v7513, 100
    %v8261 = vpop.permute.xlu0 %8260
    %8262 = vrot.lane.b32.xlu0 %v7514, 100
    %v8263 = vpop.permute.xlu0 %8262
    %v8264 = vsel %vm561, %v8253, %v8255
    %v8265 = vsel %vm561, %v8255, %v8257
    %v8266 = vsel %vm561, %v8257, %v8259
    %v8267 = vsel %vm561, %v8259, %v8261
    %v8268 = vsel %vm561, %v8261, %v8263
    %v8275 = vmax.f32 %v7509, %v8264
    %v8276 = vmax.f32 %v7510, %v8265
    %v8277 = vmax.f32 %v7511, %v8266
    %v8278 = vmax.f32 %v7512, %v8267
    %v8279 = vmax.f32 %v7513, %v8268
    %v8280 = vmax.f32 %v7514, %v8263
    %8287 = vrot.lane.b32.xlu0 %v8275, 127
    %v8288 = vpop.permute.xlu0 %8287
    %8289 = vrot.lane.b32.xlu0 %v8276, 127
    %v8290 = vpop.permute.xlu0 %8289
    %8291 = vrot.lane.b32.xlu0 %v8277, 127
    %v8292 = vpop.permute.xlu0 %8291
    %8293 = vrot.lane.b32.xlu0 %v8278, 127
    %v8294 = vpop.permute.xlu0 %8293
    %8295 = vrot.lane.b32.xlu0 %v8279, 127
    %v8296 = vpop.permute.xlu0 %8295
    %8297 = vrot.lane.b32.xlu0 %v8280, 127
    %v8298 = vpop.permute.xlu0 %8297
    %v8299 = vsel %vm175, %v8288, %v8290
    %v8300 = vsel %vm175, %v8290, %v8292
    %v8301 = vsel %vm175, %v8292, %v8294
    %v8302 = vsel %vm175, %v8294, %v8296
    %v8303 = vsel %vm175, %v8296, %v8298
    %v8309 = vmax.f32 %v8275, %v8299
    %v8310 = vmax.f32 %v8276, %v8300
    %v8311 = vmax.f32 %v8277, %v8301
    %v8312 = vmax.f32 %v8278, %v8302
    %v8313 = vmax.f32 %v8279, %v8303
    %s8314 = scalar_lea.vmem %s5, 1280
    %v8315 = vld [vmem:[%s8314] sm:$0xff]
    %v8316 = vld [vmem:[%s8314 + $0x8] sm:$0xff]
    %v8317 = vld [vmem:[%s8314 + $0x10] sm:$0xff]
    %v8318 = vld [vmem:[%s8314 + $0x18] sm:$0xff]
    %v8319 = vld [vmem:[%s8314 + $0x20] sm:$0xff]
    %v8320 = vld [vmem:[%s8314 + $0x28] sm:$0xff]
    %v8321 = vld [vmem:[%s8314 + $0x30] sm:$0xff]
    %v8322 = vld [vmem:[%s8314 + $0x38] sm:$0xff]
    %v8323 = vld [vmem:[%s8314 + $0x40] sm:$0xff]
    %v8324 = vld [vmem:[%s8314 + $0x48] sm:$0xff]
    %v8325 = vld [vmem:[%s8314 + $0x50] sm:$0xff]
    %v8326 = vld [vmem:[%s8314 + $0x58] sm:$0xff]
    %v8327 = vld [vmem:[%s8314 + $0x60] sm:$0xff]
    %v8328 = vld [vmem:[%s8314 + $0x68] sm:$0xff]
    %v8329 = vld [vmem:[%s8314 + $0x70] sm:$0xff]
    %v8330 = vld [vmem:[%s8314 + $0x78] sm:$0xff]
    %v8331 = vld [vmem:[%s8314 + $0x80] sm:$0xff]
    %v8332 = vld [vmem:[%s8314 + $0x88] sm:$0xff]
    %v8333 = vld [vmem:[%s8314 + $0x90] sm:$0xff]
    %v8334 = vld [vmem:[%s8314 + $0x98] sm:$0xff]
    %v8335 = vld [vmem:[%s8314 + $0xa0] sm:$0xff]
    %v8336 = vld [vmem:[%s8314 + $0xa8] sm:$0xff]
    %v8337 = vld [vmem:[%s8314 + $0xb0] sm:$0xff]
    %v8338 = vld [vmem:[%s8314 + $0xb8] sm:$0xff]
    %v8339 = vld [vmem:[%s8314 + $0xc0] sm:$0xff]
    %v8340 = vld [vmem:[%s8314 + $0xc8] sm:$0xff]
    %v8341 = vld [vmem:[%s8314 + $0xd0] sm:$0xff]
    %v8342 = vld [vmem:[%s8314 + $0xd8] sm:$0xff]
    %v8343 = vld [vmem:[%s8314 + $0xe0] sm:$0xff]
    %v8344 = vld [vmem:[%s8314 + $0xe8] sm:$0xff]
    %v8345 = vld [vmem:[%s8314 + $0xf0] sm:$0xff]
    %v8346 = vld [vmem:[%s8314 + $0xf8] sm:$0xff]
    %v8347 = vld [vmem:[%s8314 + $0x100] sm:$0xff]
    %v8348 = vld [vmem:[%s8314 + $0x108] sm:$0xff]
    %v8349 = vld [vmem:[%s8314 + $0x110] sm:$0xff]
    %v8350 = vld [vmem:[%s8314 + $0x118] sm:$0xff]
    %v8351 = vld [vmem:[%s8314 + $0x120] sm:$0xff]
    %v8352 = vld [vmem:[%s8314 + $0x128] sm:$0xff]
    %v8353 = vld [vmem:[%s8314 + $0x130] sm:$0xff]
    %v8354 = vld [vmem:[%s8314 + $0x138] sm:$0xff]
    %v8355 = vld [vmem:[%s8314 + $0x140] sm:$0xff]
    %v8356 = vld [vmem:[%s8314 + $0x148] sm:$0xff]
    %v8357 = vld [vmem:[%s8314 + $0x150] sm:$0xff]
    %v8358 = vld [vmem:[%s8314 + $0x158] sm:$0xff]
    %v8359 = vld [vmem:[%s8314 + $0x160] sm:$0xff]
    %v8360 = vld [vmem:[%s8314 + $0x168] sm:$0xff]
    %v8361 = vld [vmem:[%s8314 + $0x170] sm:$0xff]
    %v8362 = vld [vmem:[%s8314 + $0x178] sm:$0xff]
    %v8363 = vld [vmem:[%s8314 + $0x180] sm:$0xff]
    %v8364 = vld [vmem:[%s8314 + $0x188] sm:$0xff]
    %v8365 = vld [vmem:[%s8314 + $0x190] sm:$0xff]
    %v8366 = vld [vmem:[%s8314 + $0x198] sm:$0xff]
    %v8367 = vld [vmem:[%s8314 + $0x1a0] sm:$0xff]
    %v8368 = vld [vmem:[%s8314 + $0x1a8] sm:$0xff]
    %v8369 = vld [vmem:[%s8314 + $0x1b0] sm:$0xff]
    %v8370 = vld [vmem:[%s8314 + $0x1b8] sm:$0xff]
    %v8371 = vld [vmem:[%s8314 + $0x1c0] sm:$0xff]
    %v8372 = vld [vmem:[%s8314 + $0x1c8] sm:$0xff]
    %v8373 = vld [vmem:[%s8314 + $0x1d0] sm:$0xff]
    %v8374 = vld [vmem:[%s8314 + $0x1d8] sm:$0xff]
    %v8375 = vld [vmem:[%s8314 + $0x1e0] sm:$0xff]
    %v8376 = vld [vmem:[%s8314 + $0x1e8] sm:$0xff]
    %v8377 = vld [vmem:[%s8314 + $0x1f0] sm:$0xff]
    %v8378 = vld [vmem:[%s8314 + $0x1f8] sm:$0xff]
    %v8379 = vld [vmem:[%s8314 + $0x200] sm:$0xff]
    %v8380 = vld [vmem:[%s8314 + $0x208] sm:$0xff]
    %v8381 = vld [vmem:[%s8314 + $0x210] sm:$0xff]
    %v8382 = vld [vmem:[%s8314 + $0x218] sm:$0xff]
    %v8383 = vld [vmem:[%s8314 + $0x220] sm:$0xff]
    %v8384 = vld [vmem:[%s8314 + $0x228] sm:$0xff]
    %v8385 = vld [vmem:[%s8314 + $0x230] sm:$0xff]
    %v8386 = vld [vmem:[%s8314 + $0x238] sm:$0xff]
    %v8387 = vld [vmem:[%s8314 + $0x240] sm:$0xff]
    %v8388 = vld [vmem:[%s8314 + $0x248] sm:$0xff]
    %v8389 = vld [vmem:[%s8314 + $0x250] sm:$0xff]
    %v8390 = vld [vmem:[%s8314 + $0x258] sm:$0xff]
    %v8391 = vld [vmem:[%s8314 + $0x260] sm:$0xff]
    %v8392 = vld [vmem:[%s8314 + $0x268] sm:$0xff]
    %v8393 = vld [vmem:[%s8314 + $0x270] sm:$0xff]
    %v8394 = vld [vmem:[%s8314 + $0x278] sm:$0xff]
    %8395 = vmatprep.subr.mxu0 0.0
    %8396 = vmatpush1.msra.mxu0 %v8330
    %8397 = vmatprep.subr.mxu0 0.0
    %8398 = vmatpush1.msra.mxu0 %v8329
    %8399 = vmatprep.subr.mxu0 0.0
    %8400 = vmatpush1.msra.mxu0 %v8328
    %8401 = vmatprep.subr.mxu0 0.0
    %8402 = vmatpush1.msra.mxu0 %v8327
    %8403 = vmatprep.subr.mxu0 0.0
    %8404 = vmatpush1.msra.mxu0 %v8326
    %8405 = vmatprep.subr.mxu0 0.0
    %8406 = vmatpush1.msra.mxu0 %v8325
    %8407 = vmatprep.subr.mxu0 0.0
    %8408 = vmatpush1.msra.mxu0 %v8324
    %8409 = vmatprep.subr.mxu0 0.0
    %8410 = vmatpush1.msra.mxu0 %v8323
    %8411 = vmatprep.subr.mxu0 0.0
    %8412 = vmatpush1.msra.mxu0 %v8322
    %8413 = vmatprep.subr.mxu0 0.0
    %8414 = vmatpush1.msra.mxu0 %v8321
    %8415 = vmatprep.subr.mxu0 0.0
    %8416 = vmatpush1.msra.mxu0 %v8320
    %8417 = vmatprep.subr.mxu0 0.0
    %8418 = vmatpush1.msra.mxu0 %v8319
    %8419 = vmatprep.subr.mxu0 0.0
    %8420 = vmatpush1.msra.mxu0 %v8318
    %8421 = vmatprep.subr.mxu0 0.0
    %8422 = vmatpush1.msra.mxu0 %v8317
    %8423 = vmatprep.subr.mxu0 0.0
    %8424 = vmatpush1.msra.mxu0 %v8316
    %8425 = vmatprep.subr.mxu0 0.0
    %8426 = vmatpush1.msra.mxu0 %v8315
    %8427 = vmatprep.subr.mxu0 0.0
    %8428 = vmatpush2.msra.mxu0 %v8346
    %8429 = vmatprep.subr.mxu0 0.0
    %8430 = vmatpush2.msra.mxu0 %v8345
    %8431 = vmatprep.subr.mxu0 0.0
    %8432 = vmatpush2.msra.mxu0 %v8344
    %8433 = vmatprep.subr.mxu0 0.0
    %8434 = vmatpush2.msra.mxu0 %v8343
    %8435 = vmatprep.subr.mxu0 0.0
    %8436 = vmatpush2.msra.mxu0 %v8342
    %8437 = vmatprep.subr.mxu0 0.0
    %8438 = vmatpush2.msra.mxu0 %v8341
    %8439 = vmatprep.subr.mxu0 0.0
    %8440 = vmatpush2.msra.mxu0 %v8340
    %8441 = vmatprep.subr.mxu0 0.0
    %8442 = vmatpush2.msra.mxu0 %v8339
    %8443 = vmatprep.subr.mxu0 0.0
    %8444 = vmatpush2.msra.mxu0 %v8338
    %8445 = vmatprep.subr.mxu0 0.0
    %8446 = vmatpush2.msra.mxu0 %v8337
    %8447 = vmatprep.subr.mxu0 0.0
    %8448 = vmatpush2.msra.mxu0 %v8336
    %8449 = vmatprep.subr.mxu0 0.0
    %8450 = vmatpush2.msra.mxu0 %v8335
    %8451 = vmatprep.subr.mxu0 0.0
    %8452 = vmatpush2.msra.mxu0 %v8334
    %8453 = vmatprep.subr.mxu0 0.0
    %8454 = vmatpush2.msra.mxu0 %v8333
    %8455 = vmatprep.subr.mxu0 0.0
    %8456 = vmatpush2.msra.mxu0 %v8332
    %8457 = vmatprep.subr.mxu0 0.0
    %8458 = vmatpush2.msra.mxu0 %v8331
    %8459 = vmatprep.mubr.f32.mxu0 %v8310
    %8460 = vmatmul.mubr.f32.gmra.mxu0 %v8309
    %v8461 = vpop.f32.mrf.mxu0
    %v8462 = vadd.f32 0.0, %v8461
    %v8463 = vpop.f32.mrf.mxu0
    %8464 = vdwg.mxu0
    %8465 = vmatprep.subr.mxu0 0.0
    %8466 = vmatpush1.msra.mxu0 %v8362
    %8467 = vmatprep.subr.mxu0 0.0
    %8468 = vmatpush1.msra.mxu0 %v8361
    %8469 = vmatprep.subr.mxu0 0.0
    %8470 = vmatpush1.msra.mxu0 %v8360
    %8471 = vmatprep.subr.mxu0 0.0
    %8472 = vmatpush1.msra.mxu0 %v8359
    %8473 = vmatprep.subr.mxu0 0.0
    %8474 = vmatpush1.msra.mxu0 %v8358
    %8475 = vmatprep.subr.mxu0 0.0
    %8476 = vmatpush1.msra.mxu0 %v8357
    %8477 = vmatprep.subr.mxu0 0.0
    %8478 = vmatpush1.msra.mxu0 %v8356
    %8479 = vmatprep.subr.mxu0 0.0
    %8480 = vmatpush1.msra.mxu0 %v8355
    %8481 = vmatprep.subr.mxu0 0.0
    %8482 = vmatpush1.msra.mxu0 %v8354
    %8483 = vmatprep.subr.mxu0 0.0
    %8484 = vmatpush1.msra.mxu0 %v8353
    %8485 = vmatprep.subr.mxu0 0.0
    %8486 = vmatpush1.msra.mxu0 %v8352
    %8487 = vmatprep.subr.mxu0 0.0
    %8488 = vmatpush1.msra.mxu0 %v8351
    %8489 = vmatprep.subr.mxu0 0.0
    %8490 = vmatpush1.msra.mxu0 %v8350
    %8491 = vmatprep.subr.mxu0 0.0
    %8492 = vmatpush1.msra.mxu0 %v8349
    %8493 = vmatprep.subr.mxu0 0.0
    %8494 = vmatpush1.msra.mxu0 %v8348
    %8495 = vmatprep.subr.mxu0 0.0
    %8496 = vmatpush1.msra.mxu0 %v8347
    %8497 = vmatprep.subr.mxu0 0.0
    %8498 = vmatpush2.msra.mxu0 %v8378
    %8499 = vmatprep.subr.mxu0 0.0
    %8500 = vmatpush2.msra.mxu0 %v8377
    %8501 = vmatprep.subr.mxu0 0.0
    %8502 = vmatpush2.msra.mxu0 %v8376
    %8503 = vmatprep.subr.mxu0 0.0
    %8504 = vmatpush2.msra.mxu0 %v8375
    %8505 = vmatprep.subr.mxu0 0.0
    %8506 = vmatpush2.msra.mxu0 %v8374
    %8507 = vmatprep.subr.mxu0 0.0
    %8508 = vmatpush2.msra.mxu0 %v8373
    %8509 = vmatprep.subr.mxu0 0.0
    %8510 = vmatpush2.msra.mxu0 %v8372
    %8511 = vmatprep.subr.mxu0 0.0
    %8512 = vmatpush2.msra.mxu0 %v8371
    %8513 = vmatprep.subr.mxu0 0.0
    %8514 = vmatpush2.msra.mxu0 %v8370
    %8515 = vmatprep.subr.mxu0 0.0
    %8516 = vmatpush2.msra.mxu0 %v8369
    %8517 = vmatprep.subr.mxu0 0.0
    %8518 = vmatpush2.msra.mxu0 %v8368
    %8519 = vmatprep.subr.mxu0 0.0
    %8520 = vmatpush2.msra.mxu0 %v8367
    %8521 = vmatprep.subr.mxu0 0.0
    %8522 = vmatpush2.msra.mxu0 %v8366
    %8523 = vmatprep.subr.mxu0 0.0
    %8524 = vmatpush2.msra.mxu0 %v8365
    %8525 = vmatprep.subr.mxu0 0.0
    %8526 = vmatpush2.msra.mxu0 %v8364
    %8527 = vmatprep.subr.mxu0 0.0
    %8528 = vmatpush2.msra.mxu0 %v8363
    %8529 = vmatprep.mubr.f32.mxu0 %v8312
    %8530 = vmatmul.mubr.f32.gmra.mxu0 %v8311
    %v8531 = vpop.f32.mrf.mxu0
    %v8532 = vadd.f32 %v8462, %v8531
    %v8533 = vpop.f32.mrf.mxu0
    %8534 = vdwg.mxu0
    %8535 = vmatprep.subr.mxu0 0.0
    %8536 = vmatpush1.msra.mxu0 %v8394
    %8537 = vmatprep.subr.mxu0 0.0
    %8538 = vmatpush1.msra.mxu0 %v8393
    %8539 = vmatprep.subr.mxu0 0.0
    %8540 = vmatpush1.msra.mxu0 %v8392
    %8541 = vmatprep.subr.mxu0 0.0
    %8542 = vmatpush1.msra.mxu0 %v8391
    %8543 = vmatprep.subr.mxu0 0.0
    %8544 = vmatpush1.msra.mxu0 %v8390
    %8545 = vmatprep.subr.mxu0 0.0
    %8546 = vmatpush1.msra.mxu0 %v8389
    %8547 = vmatprep.subr.mxu0 0.0
    %8548 = vmatpush1.msra.mxu0 %v8388
    %8549 = vmatprep.subr.mxu0 0.0
    %8550 = vmatpush1.msra.mxu0 %v8387
    %8551 = vmatprep.subr.mxu0 0.0
    %8552 = vmatpush1.msra.mxu0 %v8386
    %8553 = vmatprep.subr.mxu0 0.0
    %8554 = vmatpush1.msra.mxu0 %v8385
    %8555 = vmatprep.subr.mxu0 0.0
    %8556 = vmatpush1.msra.mxu0 %v8384
    %8557 = vmatprep.subr.mxu0 0.0
    %8558 = vmatpush1.msra.mxu0 %v8383
    %8559 = vmatprep.subr.mxu0 0.0
    %8560 = vmatpush1.msra.mxu0 %v8382
    %8561 = vmatprep.subr.mxu0 0.0
    %8562 = vmatpush1.msra.mxu0 %v8381
    %8563 = vmatprep.subr.mxu0 0.0
    %8564 = vmatpush1.msra.mxu0 %v8380
    %8565 = vmatprep.subr.mxu0 0.0
    %8566 = vmatpush1.msra.mxu0 %v8379
    %8567 = vmatprep.subr.mxu0 0.0
    %8568 = vmatpush2.msra.mxu0 0.0
    %8569 = vmatprep.subr.mxu0 0.0
    %8570 = vmatpush2.msra.mxu0 0.0
    %8571 = vmatprep.subr.mxu0 0.0
    %8572 = vmatpush2.msra.mxu0 0.0
    %8573 = vmatprep.subr.mxu0 0.0
    %8574 = vmatpush2.msra.mxu0 0.0
    %8575 = vmatprep.subr.mxu0 0.0
    %8576 = vmatpush2.msra.mxu0 0.0
    %8577 = vmatprep.subr.mxu0 0.0
    %8578 = vmatpush2.msra.mxu0 0.0
    %8579 = vmatprep.subr.mxu0 0.0
    %8580 = vmatpush2.msra.mxu0 0.0
    %8581 = vmatprep.subr.mxu0 0.0
    %8582 = vmatpush2.msra.mxu0 0.0
    %8583 = vmatprep.subr.mxu0 0.0
    %8584 = vmatpush2.msra.mxu0 0.0
    %8585 = vmatprep.subr.mxu0 0.0
    %8586 = vmatpush2.msra.mxu0 0.0
    %8587 = vmatprep.subr.mxu0 0.0
    %8588 = vmatpush2.msra.mxu0 0.0
    %8589 = vmatprep.subr.mxu0 0.0
    %8590 = vmatpush2.msra.mxu0 0.0
    %8591 = vmatprep.subr.mxu0 0.0
    %8592 = vmatpush2.msra.mxu0 0.0
    %8593 = vmatprep.subr.mxu0 0.0
    %8594 = vmatpush2.msra.mxu0 0.0
    %8595 = vmatprep.subr.mxu0 0.0
    %8596 = vmatpush2.msra.mxu0 0.0
    %8597 = vmatprep.subr.mxu0 0.0
    %8598 = vmatpush2.msra.mxu0 0.0
    %8599 = vmatprep.mubr.f32.mxu0 0.0
    %8600 = vmatmul.mubr.f32.gmra.mxu0 %v8313
    %v8601 = vpop.f32.mrf.mxu0
    %v8602 = vadd.f32 %v8532, %v8601
    %v8603 = vpop.f32.mrf.mxu0
    %8604 = vdwg.mxu0
    %v8605 = vadd.f32 %v8243, %v8602
    %8612 = vrot.lane.b32.xlu0 %v7523, 100
    %v8613 = vpop.permute.xlu0 %8612
    %8614 = vrot.lane.b32.xlu0 %v7524, 100
    %v8615 = vpop.permute.xlu0 %8614
    %8616 = vrot.lane.b32.xlu0 %v7525, 100
    %v8617 = vpop.permute.xlu0 %8616
    %8618 = vrot.lane.b32.xlu0 %v7526, 100
    %v8619 = vpop.permute.xlu0 %8618
    %8620 = vrot.lane.b32.xlu0 %v7527, 100
    %v8621 = vpop.permute.xlu0 %8620
    %8622 = vrot.lane.b32.xlu0 %v7528, 100
    %v8623 = vpop.permute.xlu0 %8622
    %v8624 = vsel %vm561, %v8613, %v8615
    %v8625 = vsel %vm561, %v8615, %v8617
    %v8626 = vsel %vm561, %v8617, %v8619
    %v8627 = vsel %vm561, %v8619, %v8621
    %v8628 = vsel %vm561, %v8621, %v8623
    %v8635 = vmax.f32 %v7523, %v8624
    %v8636 = vmax.f32 %v7524, %v8625
    %v8637 = vmax.f32 %v7525, %v8626
    %v8638 = vmax.f32 %v7526, %v8627
    %v8639 = vmax.f32 %v7527, %v8628
    %v8640 = vmax.f32 %v7528, %v8623
    %8647 = vrot.lane.b32.xlu0 %v8635, 127
    %v8648 = vpop.permute.xlu0 %8647
    %8649 = vrot.lane.b32.xlu0 %v8636, 127
    %v8650 = vpop.permute.xlu0 %8649
    %8651 = vrot.lane.b32.xlu0 %v8637, 127
    %v8652 = vpop.permute.xlu0 %8651
    %8653 = vrot.lane.b32.xlu0 %v8638, 127
    %v8654 = vpop.permute.xlu0 %8653
    %8655 = vrot.lane.b32.xlu0 %v8639, 127
    %v8656 = vpop.permute.xlu0 %8655
    %8657 = vrot.lane.b32.xlu0 %v8640, 127
    %v8658 = vpop.permute.xlu0 %8657
    %v8659 = vsel %vm175, %v8648, %v8650
    %v8660 = vsel %vm175, %v8650, %v8652
    %v8661 = vsel %vm175, %v8652, %v8654
    %v8662 = vsel %vm175, %v8654, %v8656
    %v8663 = vsel %vm175, %v8656, %v8658
    %v8669 = vmax.f32 %v8635, %v8659
    %v8670 = vmax.f32 %v8636, %v8660
    %v8671 = vmax.f32 %v8637, %v8661
    %v8672 = vmax.f32 %v8638, %v8662
    %v8673 = vmax.f32 %v8639, %v8663
    %s8674 = scalar_lea.vmem %s5, 1920
    %v8675 = vld [vmem:[%s8674] sm:$0xff]
    %v8676 = vld [vmem:[%s8674 + $0x8] sm:$0xff]
    %v8677 = vld [vmem:[%s8674 + $0x10] sm:$0xff]
    %v8678 = vld [vmem:[%s8674 + $0x18] sm:$0xff]
    %v8679 = vld [vmem:[%s8674 + $0x20] sm:$0xff]
    %v8680 = vld [vmem:[%s8674 + $0x28] sm:$0xff]
    %v8681 = vld [vmem:[%s8674 + $0x30] sm:$0xff]
    %v8682 = vld [vmem:[%s8674 + $0x38] sm:$0xff]
    %v8683 = vld [vmem:[%s8674 + $0x40] sm:$0xff]
    %v8684 = vld [vmem:[%s8674 + $0x48] sm:$0xff]
    %v8685 = vld [vmem:[%s8674 + $0x50] sm:$0xff]
    %v8686 = vld [vmem:[%s8674 + $0x58] sm:$0xff]
    %v8687 = vld [vmem:[%s8674 + $0x60] sm:$0xff]
    %v8688 = vld [vmem:[%s8674 + $0x68] sm:$0xff]
    %v8689 = vld [vmem:[%s8674 + $0x70] sm:$0xff]
    %v8690 = vld [vmem:[%s8674 + $0x78] sm:$0xff]
    %v8691 = vld [vmem:[%s8674 + $0x80] sm:$0xff]
    %v8692 = vld [vmem:[%s8674 + $0x88] sm:$0xff]
    %v8693 = vld [vmem:[%s8674 + $0x90] sm:$0xff]
    %v8694 = vld [vmem:[%s8674 + $0x98] sm:$0xff]
    %v8695 = vld [vmem:[%s8674 + $0xa0] sm:$0xff]
    %v8696 = vld [vmem:[%s8674 + $0xa8] sm:$0xff]
    %v8697 = vld [vmem:[%s8674 + $0xb0] sm:$0xff]
    %v8698 = vld [vmem:[%s8674 + $0xb8] sm:$0xff]
    %v8699 = vld [vmem:[%s8674 + $0xc0] sm:$0xff]
    %v8700 = vld [vmem:[%s8674 + $0xc8] sm:$0xff]
    %v8701 = vld [vmem:[%s8674 + $0xd0] sm:$0xff]
    %v8702 = vld [vmem:[%s8674 + $0xd8] sm:$0xff]
    %v8703 = vld [vmem:[%s8674 + $0xe0] sm:$0xff]
    %v8704 = vld [vmem:[%s8674 + $0xe8] sm:$0xff]
    %v8705 = vld [vmem:[%s8674 + $0xf0] sm:$0xff]
    %v8706 = vld [vmem:[%s8674 + $0xf8] sm:$0xff]
    %v8707 = vld [vmem:[%s8674 + $0x100] sm:$0xff]
    %v8708 = vld [vmem:[%s8674 + $0x108] sm:$0xff]
    %v8709 = vld [vmem:[%s8674 + $0x110] sm:$0xff]
    %v8710 = vld [vmem:[%s8674 + $0x118] sm:$0xff]
    %v8711 = vld [vmem:[%s8674 + $0x120] sm:$0xff]
    %v8712 = vld [vmem:[%s8674 + $0x128] sm:$0xff]
    %v8713 = vld [vmem:[%s8674 + $0x130] sm:$0xff]
    %v8714 = vld [vmem:[%s8674 + $0x138] sm:$0xff]
    %v8715 = vld [vmem:[%s8674 + $0x140] sm:$0xff]
    %v8716 = vld [vmem:[%s8674 + $0x148] sm:$0xff]
    %v8717 = vld [vmem:[%s8674 + $0x150] sm:$0xff]
    %v8718 = vld [vmem:[%s8674 + $0x158] sm:$0xff]
    %v8719 = vld [vmem:[%s8674 + $0x160] sm:$0xff]
    %v8720 = vld [vmem:[%s8674 + $0x168] sm:$0xff]
    %v8721 = vld [vmem:[%s8674 + $0x170] sm:$0xff]
    %v8722 = vld [vmem:[%s8674 + $0x178] sm:$0xff]
    %v8723 = vld [vmem:[%s8674 + $0x180] sm:$0xff]
    %v8724 = vld [vmem:[%s8674 + $0x188] sm:$0xff]
    %v8725 = vld [vmem:[%s8674 + $0x190] sm:$0xff]
    %v8726 = vld [vmem:[%s8674 + $0x198] sm:$0xff]
    %v8727 = vld [vmem:[%s8674 + $0x1a0] sm:$0xff]
    %v8728 = vld [vmem:[%s8674 + $0x1a8] sm:$0xff]
    %v8729 = vld [vmem:[%s8674 + $0x1b0] sm:$0xff]
    %v8730 = vld [vmem:[%s8674 + $0x1b8] sm:$0xff]
    %v8731 = vld [vmem:[%s8674 + $0x1c0] sm:$0xff]
    %v8732 = vld [vmem:[%s8674 + $0x1c8] sm:$0xff]
    %v8733 = vld [vmem:[%s8674 + $0x1d0] sm:$0xff]
    %v8734 = vld [vmem:[%s8674 + $0x1d8] sm:$0xff]
    %v8735 = vld [vmem:[%s8674 + $0x1e0] sm:$0xff]
    %v8736 = vld [vmem:[%s8674 + $0x1e8] sm:$0xff]
    %v8737 = vld [vmem:[%s8674 + $0x1f0] sm:$0xff]
    %v8738 = vld [vmem:[%s8674 + $0x1f8] sm:$0xff]
    %v8739 = vld [vmem:[%s8674 + $0x200] sm:$0xff]
    %v8740 = vld [vmem:[%s8674 + $0x208] sm:$0xff]
    %v8741 = vld [vmem:[%s8674 + $0x210] sm:$0xff]
    %v8742 = vld [vmem:[%s8674 + $0x218] sm:$0xff]
    %v8743 = vld [vmem:[%s8674 + $0x220] sm:$0xff]
    %v8744 = vld [vmem:[%s8674 + $0x228] sm:$0xff]
    %v8745 = vld [vmem:[%s8674 + $0x230] sm:$0xff]
    %v8746 = vld [vmem:[%s8674 + $0x238] sm:$0xff]
    %v8747 = vld [vmem:[%s8674 + $0x240] sm:$0xff]
    %v8748 = vld [vmem:[%s8674 + $0x248] sm:$0xff]
    %v8749 = vld [vmem:[%s8674 + $0x250] sm:$0xff]
    %v8750 = vld [vmem:[%s8674 + $0x258] sm:$0xff]
    %v8751 = vld [vmem:[%s8674 + $0x260] sm:$0xff]
    %v8752 = vld [vmem:[%s8674 + $0x268] sm:$0xff]
    %v8753 = vld [vmem:[%s8674 + $0x270] sm:$0xff]
    %v8754 = vld [vmem:[%s8674 + $0x278] sm:$0xff]
    %8755 = vmatprep.subr.mxu0 0.0
    %8756 = vmatpush1.msra.mxu0 %v8690
    %8757 = vmatprep.subr.mxu0 0.0
    %8758 = vmatpush1.msra.mxu0 %v8689
    %8759 = vmatprep.subr.mxu0 0.0
    %8760 = vmatpush1.msra.mxu0 %v8688
    %8761 = vmatprep.subr.mxu0 0.0
    %8762 = vmatpush1.msra.mxu0 %v8687
    %8763 = vmatprep.subr.mxu0 0.0
    %8764 = vmatpush1.msra.mxu0 %v8686
    %8765 = vmatprep.subr.mxu0 0.0
    %8766 = vmatpush1.msra.mxu0 %v8685
    %8767 = vmatprep.subr.mxu0 0.0
    %8768 = vmatpush1.msra.mxu0 %v8684
    %8769 = vmatprep.subr.mxu0 0.0
    %8770 = vmatpush1.msra.mxu0 %v8683
    %8771 = vmatprep.subr.mxu0 0.0
    %8772 = vmatpush1.msra.mxu0 %v8682
    %8773 = vmatprep.subr.mxu0 0.0
    %8774 = vmatpush1.msra.mxu0 %v8681
    %8775 = vmatprep.subr.mxu0 0.0
    %8776 = vmatpush1.msra.mxu0 %v8680
    %8777 = vmatprep.subr.mxu0 0.0
    %8778 = vmatpush1.msra.mxu0 %v8679
    %8779 = vmatprep.subr.mxu0 0.0
    %8780 = vmatpush1.msra.mxu0 %v8678
    %8781 = vmatprep.subr.mxu0 0.0
    %8782 = vmatpush1.msra.mxu0 %v8677
    %8783 = vmatprep.subr.mxu0 0.0
    %8784 = vmatpush1.msra.mxu0 %v8676
    %8785 = vmatprep.subr.mxu0 0.0
    %8786 = vmatpush1.msra.mxu0 %v8675
    %8787 = vmatprep.subr.mxu0 0.0
    %8788 = vmatpush2.msra.mxu0 %v8706
    %8789 = vmatprep.subr.mxu0 0.0
    %8790 = vmatpush2.msra.mxu0 %v8705
    %8791 = vmatprep.subr.mxu0 0.0
    %8792 = vmatpush2.msra.mxu0 %v8704
    %8793 = vmatprep.subr.mxu0 0.0
    %8794 = vmatpush2.msra.mxu0 %v8703
    %8795 = vmatprep.subr.mxu0 0.0
    %8796 = vmatpush2.msra.mxu0 %v8702
    %8797 = vmatprep.subr.mxu0 0.0
    %8798 = vmatpush2.msra.mxu0 %v8701
    %8799 = vmatprep.subr.mxu0 0.0
    %8800 = vmatpush2.msra.mxu0 %v8700
    %8801 = vmatprep.subr.mxu0 0.0
    %8802 = vmatpush2.msra.mxu0 %v8699
    %8803 = vmatprep.subr.mxu0 0.0
    %8804 = vmatpush2.msra.mxu0 %v8698
    %8805 = vmatprep.subr.mxu0 0.0
    %8806 = vmatpush2.msra.mxu0 %v8697
    %8807 = vmatprep.subr.mxu0 0.0
    %8808 = vmatpush2.msra.mxu0 %v8696
    %8809 = vmatprep.subr.mxu0 0.0
    %8810 = vmatpush2.msra.mxu0 %v8695
    %8811 = vmatprep.subr.mxu0 0.0
    %8812 = vmatpush2.msra.mxu0 %v8694
    %8813 = vmatprep.subr.mxu0 0.0
    %8814 = vmatpush2.msra.mxu0 %v8693
    %8815 = vmatprep.subr.mxu0 0.0
    %8816 = vmatpush2.msra.mxu0 %v8692
    %8817 = vmatprep.subr.mxu0 0.0
    %8818 = vmatpush2.msra.mxu0 %v8691
    %8819 = vmatprep.mubr.f32.mxu0 %v8670
    %8820 = vmatmul.mubr.f32.gmra.mxu0 %v8669
    %v8821 = vpop.f32.mrf.mxu0
    %v8822 = vadd.f32 0.0, %v8821
    %v8823 = vpop.f32.mrf.mxu0
    %8824 = vdwg.mxu0
    %8825 = vmatprep.subr.mxu0 0.0
    %8826 = vmatpush1.msra.mxu0 %v8722
    %8827 = vmatprep.subr.mxu0 0.0
    %8828 = vmatpush1.msra.mxu0 %v8721
    %8829 = vmatprep.subr.mxu0 0.0
    %8830 = vmatpush1.msra.mxu0 %v8720
    %8831 = vmatprep.subr.mxu0 0.0
    %8832 = vmatpush1.msra.mxu0 %v8719
    %8833 = vmatprep.subr.mxu0 0.0
    %8834 = vmatpush1.msra.mxu0 %v8718
    %8835 = vmatprep.subr.mxu0 0.0
    %8836 = vmatpush1.msra.mxu0 %v8717
    %8837 = vmatprep.subr.mxu0 0.0
    %8838 = vmatpush1.msra.mxu0 %v8716
    %8839 = vmatprep.subr.mxu0 0.0
    %8840 = vmatpush1.msra.mxu0 %v8715
    %8841 = vmatprep.subr.mxu0 0.0
    %8842 = vmatpush1.msra.mxu0 %v8714
    %8843 = vmatprep.subr.mxu0 0.0
    %8844 = vmatpush1.msra.mxu0 %v8713
    %8845 = vmatprep.subr.mxu0 0.0
    %8846 = vmatpush1.msra.mxu0 %v8712
    %8847 = vmatprep.subr.mxu0 0.0
    %8848 = vmatpush1.msra.mxu0 %v8711
    %8849 = vmatprep.subr.mxu0 0.0
    %8850 = vmatpush1.msra.mxu0 %v8710
    %8851 = vmatprep.subr.mxu0 0.0
    %8852 = vmatpush1.msra.mxu0 %v8709
    %8853 = vmatprep.subr.mxu0 0.0
    %8854 = vmatpush1.msra.mxu0 %v8708
    %8855 = vmatprep.subr.mxu0 0.0
    %8856 = vmatpush1.msra.mxu0 %v8707
    %8857 = vmatprep.subr.mxu0 0.0
    %8858 = vmatpush2.msra.mxu0 %v8738
    %8859 = vmatprep.subr.mxu0 0.0
    %8860 = vmatpush2.msra.mxu0 %v8737
    %8861 = vmatprep.subr.mxu0 0.0
    %8862 = vmatpush2.msra.mxu0 %v8736
    %8863 = vmatprep.subr.mxu0 0.0
    %8864 = vmatpush2.msra.mxu0 %v8735
    %8865 = vmatprep.subr.mxu0 0.0
    %8866 = vmatpush2.msra.mxu0 %v8734
    %8867 = vmatprep.subr.mxu0 0.0
    %8868 = vmatpush2.msra.mxu0 %v8733
    %8869 = vmatprep.subr.mxu0 0.0
    %8870 = vmatpush2.msra.mxu0 %v8732
    %8871 = vmatprep.subr.mxu0 0.0
    %8872 = vmatpush2.msra.mxu0 %v8731
    %8873 = vmatprep.subr.mxu0 0.0
    %8874 = vmatpush2.msra.mxu0 %v8730
    %8875 = vmatprep.subr.mxu0 0.0
    %8876 = vmatpush2.msra.mxu0 %v8729
    %8877 = vmatprep.subr.mxu0 0.0
    %8878 = vmatpush2.msra.mxu0 %v8728
    %8879 = vmatprep.subr.mxu0 0.0
    %8880 = vmatpush2.msra.mxu0 %v8727
    %8881 = vmatprep.subr.mxu0 0.0
    %8882 = vmatpush2.msra.mxu0 %v8726
    %8883 = vmatprep.subr.mxu0 0.0
    %8884 = vmatpush2.msra.mxu0 %v8725
    %8885 = vmatprep.subr.mxu0 0.0
    %8886 = vmatpush2.msra.mxu0 %v8724
    %8887 = vmatprep.subr.mxu0 0.0
    %8888 = vmatpush2.msra.mxu0 %v8723
    %8889 = vmatprep.mubr.f32.mxu0 %v8672
    %8890 = vmatmul.mubr.f32.gmra.mxu0 %v8671
    %v8891 = vpop.f32.mrf.mxu0
    %v8892 = vadd.f32 %v8822, %v8891
    %v8893 = vpop.f32.mrf.mxu0
    %8894 = vdwg.mxu0
    %8895 = vmatprep.subr.mxu0 0.0
    %8896 = vmatpush1.msra.mxu0 %v8754
    %8897 = vmatprep.subr.mxu0 0.0
    %8898 = vmatpush1.msra.mxu0 %v8753
    %8899 = vmatprep.subr.mxu0 0.0
    %8900 = vmatpush1.msra.mxu0 %v8752
    %8901 = vmatprep.subr.mxu0 0.0
    %8902 = vmatpush1.msra.mxu0 %v8751
    %8903 = vmatprep.subr.mxu0 0.0
    %8904 = vmatpush1.msra.mxu0 %v8750
    %8905 = vmatprep.subr.mxu0 0.0
    %8906 = vmatpush1.msra.mxu0 %v8749
    %8907 = vmatprep.subr.mxu0 0.0
    %8908 = vmatpush1.msra.mxu0 %v8748
    %8909 = vmatprep.subr.mxu0 0.0
    %8910 = vmatpush1.msra.mxu0 %v8747
    %8911 = vmatprep.subr.mxu0 0.0
    %8912 = vmatpush1.msra.mxu0 %v8746
    %8913 = vmatprep.subr.mxu0 0.0
    %8914 = vmatpush1.msra.mxu0 %v8745
    %8915 = vmatprep.subr.mxu0 0.0
    %8916 = vmatpush1.msra.mxu0 %v8744
    %8917 = vmatprep.subr.mxu0 0.0
    %8918 = vmatpush1.msra.mxu0 %v8743
    %8919 = vmatprep.subr.mxu0 0.0
    %8920 = vmatpush1.msra.mxu0 %v8742
    %8921 = vmatprep.subr.mxu0 0.0
    %8922 = vmatpush1.msra.mxu0 %v8741
    %8923 = vmatprep.subr.mxu0 0.0
    %8924 = vmatpush1.msra.mxu0 %v8740
    %8925 = vmatprep.subr.mxu0 0.0
    %8926 = vmatpush1.msra.mxu0 %v8739
    %8927 = vmatprep.subr.mxu0 0.0
    %8928 = vmatpush2.msra.mxu0 0.0
    %8929 = vmatprep.subr.mxu0 0.0
    %8930 = vmatpush2.msra.mxu0 0.0
    %8931 = vmatprep.subr.mxu0 0.0
    %8932 = vmatpush2.msra.mxu0 0.0
    %8933 = vmatprep.subr.mxu0 0.0
    %8934 = vmatpush2.msra.mxu0 0.0
    %8935 = vmatprep.subr.mxu0 0.0
    %8936 = vmatpush2.msra.mxu0 0.0
    %8937 = vmatprep.subr.mxu0 0.0
    %8938 = vmatpush2.msra.mxu0 0.0
    %8939 = vmatprep.subr.mxu0 0.0
    %8940 = vmatpush2.msra.mxu0 0.0
    %8941 = vmatprep.subr.mxu0 0.0
    %8942 = vmatpush2.msra.mxu0 0.0
    %8943 = vmatprep.subr.mxu0 0.0
    %8944 = vmatpush2.msra.mxu0 0.0
    %8945 = vmatprep.subr.mxu0 0.0
    %8946 = vmatpush2.msra.mxu0 0.0
    %8947 = vmatprep.subr.mxu0 0.0
    %8948 = vmatpush2.msra.mxu0 0.0
    %8949 = vmatprep.subr.mxu0 0.0
    %8950 = vmatpush2.msra.mxu0 0.0
    %8951 = vmatprep.subr.mxu0 0.0
    %8952 = vmatpush2.msra.mxu0 0.0
    %8953 = vmatprep.subr.mxu0 0.0
    %8954 = vmatpush2.msra.mxu0 0.0
    %8955 = vmatprep.subr.mxu0 0.0
    %8956 = vmatpush2.msra.mxu0 0.0
    %8957 = vmatprep.subr.mxu0 0.0
    %8958 = vmatpush2.msra.mxu0 0.0
    %8959 = vmatprep.mubr.f32.mxu0 0.0
    %8960 = vmatmul.mubr.f32.gmra.mxu0 %v8673
    %v8961 = vpop.f32.mrf.mxu0
    %v8962 = vadd.f32 %v8892, %v8961
    %v8963 = vpop.f32.mrf.mxu0
    %8964 = vdwg.mxu0
    %v8965 = vadd.f32 %v8605, %v8962
    %v8966 = vld [vmem:[%s6] sm:$0x1]
    %v8968 = vlaneseq
    %v8969 = vshrl.u32 %v8968, 7
    %v8970 = vsub.s32 0, %v8969
    %v8971 = vrot.slane %v8966, %v8970
    %v8973 = vadd.f32 %v8965, %v8971
    %v8974 = vmax.f32 %v8973, 0.0
    %v8975 = vld [vmem:[%s7] sm:$0xff]
    %v8976 = vld [vmem:[%s7 + $0x8] sm:$0xff]
    %v8977 = vld [vmem:[%s7 + $0x10] sm:$0xff]
    %v8978 = vld [vmem:[%s7 + $0x18] sm:$0xff]
    %v8979 = vld [vmem:[%s8] sm:$0x1]
    %v8981 = vlaneseq
    %v8982 = vshrl.u32 %v8981, 7
    %v8983 = vsub.s32 0, %v8982
    %v8984 = vrot.slane %v8979, %v8983
    %vm8986 = vcmask 261120
    %v8988 = vsel %vm8986, %v8974, 0
    %8990 = vmatprep.subr.mxu0 0.0
    %8991 = vmatpush1.msra.mxu0 0.0
    %8992 = vmatprep.subr.mxu0 0.0
    %8993 = vmatpush1.msra.mxu0 0.0
    %8994 = vmatprep.subr.mxu0 0.0
    %8995 = vmatpush1.msra.mxu0 0.0
    %8996 = vmatprep.subr.mxu0 0.0
    %8997 = vmatpush1.msra.mxu0 0.0
    %8998 = vmatprep.subr.mxu0 0.0
    %8999 = vmatpush1.msra.mxu0 0.0
    %9000 = vmatprep.subr.mxu0 0.0
    %9001 = vmatpush1.msra.mxu0 0.0
    %9002 = vmatprep.subr.mxu0 0.0
    %9003 = vmatpush1.msra.mxu0 0.0
    %9004 = vmatprep.subr.mxu0 0.0
    %9005 = vmatpush1.msra.mxu0 0.0
    %9006 = vmatprep.subr.mxu0 0.0
    %9007 = vmatpush1.msra.mxu0 0.0
    %9008 = vmatprep.subr.mxu0 0.0
    %9009 = vmatpush1.msra.mxu0 0.0
    %9010 = vmatprep.subr.mxu0 0.0
    %9011 = vmatpush1.msra.mxu0 0.0
    %9012 = vmatprep.subr.mxu0 0.0
    %9013 = vmatpush1.msra.mxu0 0.0
    %9014 = vmatprep.subr.mxu0 0.0
    %9015 = vmatpush1.msra.mxu0 %v8978
    %9016 = vmatprep.subr.mxu0 0.0
    %9017 = vmatpush1.msra.mxu0 %v8977
    %9018 = vmatprep.subr.mxu0 0.0
    %9019 = vmatpush1.msra.mxu0 %v8976
    %9020 = vmatprep.subr.mxu0 0.0
    %9021 = vmatpush1.msra.mxu0 %v8975
    %9022 = vmatprep.subr.mxu0 0.0
    %9023 = vmatpush2.msra.mxu0 0.0
    %9024 = vmatprep.subr.mxu0 0.0
    %9025 = vmatpush2.msra.mxu0 0.0
    %9026 = vmatprep.subr.mxu0 0.0
    %9027 = vmatpush2.msra.mxu0 0.0
    %9028 = vmatprep.subr.mxu0 0.0
    %9029 = vmatpush2.msra.mxu0 0.0
    %9030 = vmatprep.subr.mxu0 0.0
    %9031 = vmatpush2.msra.mxu0 0.0
    %9032 = vmatprep.subr.mxu0 0.0
    %9033 = vmatpush2.msra.mxu0 0.0
    %9034 = vmatprep.subr.mxu0 0.0
    %9035 = vmatpush2.msra.mxu0 0.0
    %9036 = vmatprep.subr.mxu0 0.0
    %9037 = vmatpush2.msra.mxu0 0.0
    %9038 = vmatprep.subr.mxu0 0.0
    %9039 = vmatpush2.msra.mxu0 0.0
    %9040 = vmatprep.subr.mxu0 0.0
    %9041 = vmatpush2.msra.mxu0 0.0
    %9042 = vmatprep.subr.mxu0 0.0
    %9043 = vmatpush2.msra.mxu0 0.0
    %9044 = vmatprep.subr.mxu0 0.0
    %9045 = vmatpush2.msra.mxu0 0.0
    %9046 = vmatprep.subr.mxu0 0.0
    %9047 = vmatpush2.msra.mxu0 0.0
    %9048 = vmatprep.subr.mxu0 0.0
    %9049 = vmatpush2.msra.mxu0 0.0
    %9050 = vmatprep.subr.mxu0 0.0
    %9051 = vmatpush2.msra.mxu0 0.0
    %9052 = vmatprep.subr.mxu0 0.0
    %9053 = vmatpush2.msra.mxu0 0.0
    %9054 = vmatprep.mubr.f32.mxu0 0.0
    %9055 = vmatmul.mubr.f32.gmra.mxu0 %v8988
    %v9056 = vpop.f32.mrf.mxu0
    %v9057 = vadd.f32 %v8984, %v9056
    %v9058 = vpop.f32.mrf.mxu0
    %9059 = vdwg.mxu0
    %vm9060 = vcmask 72704
    %9061 = vst.msk [vmem:[%s9] sm:$0xff] %vm9060, %v9057
    // Predicated region
    $region54: #{cnn_forward.1} parent=1 // pred_check
      _
    $region55: #{cnn_forward.1} parent=1 // pred_check_branch
      %9063 = sbr.rel (0) target = $region57
    $region56: #{cnn_forward.1} parent=1 // pred_region
      _
    $region57: #{cnn_forward.1} parent=1 // pred_fallthru
      _
    // Predicated region
    $region58: #{cnn_forward.1} parent=1 // pred_check
      _
    $region59: #{cnn_forward.1} parent=1 // pred_check_branch
      %9065 = sbr.rel (0) target = $region61
    $region60: #{cnn_forward.1} parent=1 // pred_region
      _
    $region61: #{cnn_forward.1} parent=1 // pred_fallthru
      _
    %9066 = vsyncpa [#allocation3], 1
    %9067 = vsyncpa [#allocation5], 1
    %9068 = vsyncpa [#allocation8], 1

</llo_original>
